<compile_context>
chip_gen: v7x
topology: tpu7x:2x2x1
jax: 0.10.0
libtpu: 0.0.40
codegen_flags: <defaults>
</compile_context>

<pallas_src>
import jax
import jax.numpy as jnp
from jax import lax
from jax.experimental import pallas as pl
from jax.experimental.pallas import tpu as pltpu

LN_EPS = 1e-5


def _layernorm(x, g, b):
    mu = jnp.mean(x, axis=-1, keepdims=True)
    var = jnp.mean((x - mu) ** 2, axis=-1, keepdims=True)
    return (x - mu) * lax.rsqrt(var + LN_EPS) * g + b


def _make_transformer_kernel(heads, dim_head, b_tile, seq):
    inner = heads * dim_head

    def kernel(x_ref, attn2_ref,
               ln1g_ref, ln1b_ref, wqkv_ref, wouta_ref, woutb_ref, bout_ref,
               ln2g_ref, ln2b_ref, w1_ref, b1_ref, w2_ref, b2_ref,
               o_ref):
        layer = pl.program_id(1)
        dim = x_ref.shape[-1]
        m = b_tile * seq

        # First layer for this batch tile: load x into the resident output slab.
        @pl.when(layer == 0)
        def _():
            o_ref[...] = x_ref[...]

        x = o_ref[...].reshape(m, dim)                       # f32 resident activations

        # ----------------- PreNorm multi-head attention ---------------------
        h = _layernorm(x, ln1g_ref[0], ln1b_ref[0]).astype(jnp.bfloat16)
        qkvt = jnp.dot(h, wqkv_ref[0], preferred_element_type=jnp.float32)
        # single cast, then 128-aligned lane slices per head (scale already in wqkv)
        qkvt = qkvt.astype(jnp.bfloat16).reshape(b_tile, seq, 4 * inner)

        head_outs = []
        for hd in range(heads):                              # small static unroll; batched over b_tile
            s0 = hd * dim_head
            q = qkvt[:, :, s0:s0 + dim_head]                               # (b, T, dh)
            k = qkvt[:, :, inner + s0:inner + s0 + dim_head]
            v = qkvt[:, :, 2 * inner + s0:2 * inner + s0 + dim_head]
            s = jnp.einsum('bqd,bkd->bqk', q, k,
                           preferred_element_type=jnp.float32)             # (b, T, T) f32
            s = s - jnp.max(s, axis=-1, keepdims=True)
            e = jnp.exp(s)
            p = e * pl.reciprocal(jnp.sum(e, axis=-1, keepdims=True), approx=True)
            head_outs.append(jnp.einsum('bqk,bkd->bqd', p.astype(jnp.bfloat16), v,
                                        preferred_element_type=jnp.float32))
        slab1 = head_outs[0] if heads == 1 else jnp.concatenate(head_outs, axis=-1)
        slab1 = slab1.reshape(m, inner).astype(jnp.bfloat16)               # (M, inner)

        # attn2 (fixed distance kernel) is head- and batch-independent:
        # one batched (T,T)@(T,inner) matmul over the whole batch tile.
        t_all = qkvt[:, :, 3 * inner:]                                     # (b, T, inner)
        a2 = jnp.broadcast_to(attn2_ref[...], (b_tile, seq, seq))
        slab2 = jnp.einsum('bqk,bkd->bqd', a2, t_all,
                           preferred_element_type=jnp.float32)
        slab2 = slab2.reshape(m, inner).astype(jnp.bfloat16)

        attn_out = (jnp.dot(slab1, wouta_ref[0], preferred_element_type=jnp.float32)
                    + jnp.dot(slab2, woutb_ref[0], preferred_element_type=jnp.float32)
                    + bout_ref[0])
        x = x + attn_out

        # ----------------- PreNorm feed-forward (exact GELU) ----------------
        h2 = _layernorm(x, ln2g_ref[0], ln2b_ref[0]).astype(jnp.bfloat16)
        f = jnp.dot(h2, w1_ref[0], preferred_element_type=jnp.float32) + b1_ref[0]
        f = 0.5 * f * (1.0 + lax.erf(f * (2.0 ** -0.5)))     # torch nn.GELU() default
        f = jnp.dot(f.astype(jnp.bfloat16), w2_ref[0],
                    preferred_element_type=jnp.float32) + b2_ref[0]
        x = x + f

        o_ref[...] = x.reshape(b_tile, seq, dim).astype(o_ref.dtype)

    return kernel


def transformer_forward(x, params, *, heads, dim_head, b_tile):
    """x: (B, T, dim) -> (B, T, dim).  Equivalent to Transformer.forward (eval)."""
    B, T, dim = x.shape
    depth = params["wqkv"].shape[0]
    assert B % b_tile == 0

    # Fixed distance-decay attention matrix (same for every batch / head / layer),
    # built exactly like the reference: attn2 / attn2.sum(-1)  (torch broadcast).
    pos = jnp.linspace(1.0, float(T), T, dtype=jnp.float32)
    tg = jnp.abs(pos[None, :] - pos[:, None])
    attn2 = jnp.exp(-tg / jnp.exp(jnp.asarray(1.0, jnp.float32)))
    attn2 = (attn2 / attn2.sum(-1)).astype(jnp.bfloat16)

    weights = [params["ln1_g"], params["ln1_b"], params["wqkv"],
               params["wout_a"], params["wout_b"], params["bout"],
               params["ln2_g"], params["ln2_b"],
               params["ff_w1"], params["ff_b1"], params["ff_w2"], params["ff_b2"]]

    def layer_spec(w):
        # one layer of the (depth, ...)-stacked weight per grid step along axis 1
        blk = (1,) + tuple(w.shape[1:])
        zeros = (0,) * (w.ndim - 1)
        return pl.BlockSpec(blk, lambda i, l, _z=zeros: (l,) + _z)

    kernel = _make_transformer_kernel(heads, dim_head, b_tile, T)
    return pl.pallas_call(
        kernel,
        out_shape=jax.ShapeDtypeStruct((B, T, dim), jnp.float32),
        grid=(B // b_tile, depth),
        in_specs=[pl.BlockSpec((b_tile, T, dim), lambda i, l: (i, 0, 0)),
                  pl.BlockSpec(attn2.shape, lambda i, l: (0, 0))]
                 + [layer_spec(w) for w in weights],
        out_specs=pl.BlockSpec((b_tile, T, dim), lambda i, l: (i, 0, 0)),
        compiler_params=pltpu.CompilerParams(
            dimension_semantics=("parallel", "arbitrary"),
            vmem_limit_bytes=48 * 1024 * 1024),
    )(x, attn2, *weights)


# ----------------------------------------------------------------------------
# Deterministic synthetic parameters (torch layouts -> kernel layouts).
# ----------------------------------------------------------------------------
def init_params(key, dim, depth, heads, dim_head, mlp_dim):
    inner = heads * dim_head
    scale = dim_head ** -0.5
    keys = iter(jax.random.split(key, 16 * depth + 4))
    nrm = lambda shape, s=0.05: s * jax.random.normal(next(keys), shape, jnp.float32)

    # Row maps splitting torch's interleaved to_out input ordering
    # [head0:(a1,a2), head1:(a1,a2), ...] into two contiguous slabs.
    idx = jnp.arange(2 * inner).reshape(heads, 2, dim_head)
    a_rows = idx[:, 0, :].reshape(-1)
    b_rows = idx[:, 1, :].reshape(-1)

    ln1_g, ln1_b, wqkv, wout_a, wout_b, bout = [], [], [], [], [], []
    ln2_g, ln2_b, w1, b1, w2, b2 = [], [], [], [], [], []
    for _ in range(depth):
        # torch Linear layouts (out_features, in_features)
        w_qkv_t = nrm((4 * inner, dim))          # to_qkv (no bias)
        w_out_t = nrm((dim, 2 * inner))          # to_out
        b_out_t = nrm((dim,))
        w_ff1_t = nrm((mlp_dim, dim))
        b_ff1_t = nrm((mlp_dim,))
        w_ff2_t = nrm((dim, mlp_dim))
        b_ff2_t = nrm((dim,))

        wq = w_qkv_t.T                           # (dim, 4*inner) for x @ W
        wq = wq.at[:, :inner].multiply(scale)    # fold softmax scale into q columns
        wqkv.append(wq.astype(jnp.bfloat16))

        wo = w_out_t.T                           # (2*inner, dim)
        wout_a.append(wo[a_rows, :].astype(jnp.bfloat16))
        wout_b.append(wo[b_rows, :].astype(jnp.bfloat16))
        bout.append(b_out_t.reshape(1, dim))

        ln1_g.append(1.0 + nrm((1, dim)))
        ln1_b.append(nrm((1, dim)))
        ln2_g.append(1.0 + nrm((1, dim)))
        ln2_b.append(nrm((1, dim)))

        w1.append(w_ff1_t.T.astype(jnp.bfloat16))   # (dim, mlp)
        b1.append(b_ff1_t.reshape(1, mlp_dim))
        w2.append(w_ff2_t.T.astype(jnp.bfloat16))   # (mlp, dim)
        b2.append(b_ff2_t.reshape(1, dim))

    stk = lambda xs: jnp.stack(xs, axis=0)
    return {
        "ln1_g": stk(ln1_g), "ln1_b": stk(ln1_b),
        "wqkv": stk(wqkv), "wout_a": stk(wout_a), "wout_b": stk(wout_b),
        "bout": stk(bout),
        "ln2_g": stk(ln2_g), "ln2_b": stk(ln2_b),
        "ff_w1": stk(w1), "ff_b1": stk(b1),
        "ff_w2": stk(w2), "ff_b2": stk(b2),
    }


if __name__ == "__main__":
    # MXU/lane-friendly shapes: dim=256, 2 heads x 128, depth=2.
    # b_tile=16, T=16 -> M=256 rows per MXU matmul; grid = (4, 2).
    dim, depth, heads, dim_head, mlp_dim = 256, 2, 2, 128, 256
    B, T, b_tile = 64, 16, 16
    kx, kp = jax.random.split(jax.random.PRNGKey(0))
    x = jax.random.normal(kx, (B, T, dim), dtype=jnp.float32)
    params = init_params(kp, dim, depth, heads, dim_head, mlp_dim)

    out = transformer_forward(x, params, heads=heads, dim_head=dim_head, b_tile=b_tile)
    jax.block_until_ready(out)
    assert out.shape == (B, T, dim)
    assert bool(jnp.all(jnp.isfinite(out)))
    print("KERNEL_OK")
</pallas_src>

<mosaic_0001>
module attributes {stable_mosaic.version = 11 : i64} {
  func.func @kernel(%arg0: i32, %arg1: i32, %arg2: memref<16x16x256xf32, #tpu.memory_space<vmem>>, %arg3: memref<16x16xbf16, #tpu.memory_space<vmem>>, %arg4: memref<1x1x256xf32, #tpu.memory_space<vmem>>, %arg5: memref<1x1x256xf32, #tpu.memory_space<vmem>>, %arg6: memref<1x256x1024xbf16, #tpu.memory_space<vmem>>, %arg7: memref<1x256x256xbf16, #tpu.memory_space<vmem>>, %arg8: memref<1x256x256xbf16, #tpu.memory_space<vmem>>, %arg9: memref<1x1x256xf32, #tpu.memory_space<vmem>>, %arg10: memref<1x1x256xf32, #tpu.memory_space<vmem>>, %arg11: memref<1x1x256xf32, #tpu.memory_space<vmem>>, %arg12: memref<1x256x256xbf16, #tpu.memory_space<vmem>>, %arg13: memref<1x1x256xf32, #tpu.memory_space<vmem>>, %arg14: memref<1x256x256xbf16, #tpu.memory_space<vmem>>, %arg15: memref<1x1x256xf32, #tpu.memory_space<vmem>>, %arg16: memref<16x16x256xf32, #tpu.memory_space<vmem>>) attributes {dimension_semantics = [#tpu.dimension_semantics<parallel>, #tpu.dimension_semantics<arbitrary>], iteration_bounds = array<i64: 4, 2>, scalar_prefetch = 0 : i64, scratch_operands = 0 : i64, tpu.core_type = #tpu.core_type<tc>, window_params = [{transform_indices = @transform_0, window_bounds = array<i64: 16, 16, 256>}, {pipeline_mode = #tpu.pipeline_mode<synchronous>, transform_indices = @transform_1, window_bounds = array<i64: 16, 16>}, {transform_indices = @transform_2, window_bounds = array<i64: 1, 1, 256>}, {transform_indices = @transform_3, window_bounds = array<i64: 1, 1, 256>}, {transform_indices = @transform_4, window_bounds = array<i64: 1, 256, 1024>}, {transform_indices = @transform_5, window_bounds = array<i64: 1, 256, 256>}, {transform_indices = @transform_6, window_bounds = array<i64: 1, 256, 256>}, {transform_indices = @transform_7, window_bounds = array<i64: 1, 1, 256>}, {transform_indices = @transform_8, window_bounds = array<i64: 1, 1, 256>}, {transform_indices = @transform_9, window_bounds = array<i64: 1, 1, 256>}, {transform_indices = @transform_10, window_bounds = array<i64: 1, 256, 256>}, {transform_indices = @transform_11, window_bounds = array<i64: 1, 1, 256>}, {transform_indices = @transform_12, window_bounds = array<i64: 1, 256, 256>}, {transform_indices = @transform_13, window_bounds = array<i64: 1, 1, 256>}, {transform_indices = @transform_14, window_bounds = array<i64: 16, 16, 256>}]} {
    %c0_i32 = arith.constant 0 : i32
    %0 = arith.cmpi eq, %arg1, %c0_i32 : i32
    %1 = arith.extui %0 : i1 to i32
    %c0_i32_0 = arith.constant 0 : i32
    %2 = arith.cmpi ne, %1, %c0_i32_0 : i32
    scf.if %2 {
      %c0_70 = arith.constant 0 : index
      %c0_71 = arith.constant 0 : index
      %c0_72 = arith.constant 0 : index
      %144 = vector.load %arg2[%c0_70, %c0_71, %c0_72] : memref<16x16x256xf32, #tpu.memory_space<vmem>>, vector<16x16x256xf32>
      %c0_73 = arith.constant 0 : index
      %c0_74 = arith.constant 0 : index
      %c0_75 = arith.constant 0 : index
      %145 = vector.load %arg16[%c0_73, %c0_74, %c0_75] : memref<16x16x256xf32, #tpu.memory_space<vmem>>, vector<16x16x256xf32>
      tpu.vector_store %arg16[%c0_73, %c0_74, %c0_75], %144 {strides = array<i32>} : memref<16x16x256xf32, #tpu.memory_space<vmem>>, vector<16x16x256xf32>,
    } else {
    }
    %c0 = arith.constant 0 : index
    %c0_1 = arith.constant 0 : index
    %c0_2 = arith.constant 0 : index
    %3 = vector.load %arg16[%c0, %c0_1, %c0_2] : memref<16x16x256xf32, #tpu.memory_space<vmem>>, vector<16x16x256xf32>
    %4 = vector.shape_cast %3 : vector<16x16x256xf32> to vector<256x256xf32>
    %c0_3 = arith.constant 0 : index
    %c0_4 = arith.constant 0 : index
    %c0_5 = arith.constant 0 : index
    %5 = vector.load %arg4[%c0_3, %c0_4, %c0_5] : memref<1x1x256xf32, #tpu.memory_space<vmem>>, vector<1x1x256xf32>
    %6 = vector.shape_cast %5 : vector<1x1x256xf32> to vector<1x256xf32>
    %c0_6 = arith.constant 0 : index
    %c0_7 = arith.constant 0 : index
    %c0_8 = arith.constant 0 : index
    %7 = vector.load %arg5[%c0_6, %c0_7, %c0_8] : memref<1x1x256xf32, #tpu.memory_space<vmem>>, vector<1x1x256xf32>
    %8 = vector.shape_cast %7 : vector<1x1x256xf32> to vector<1x256xf32>
    %cst = arith.constant dense<0.000000e+00> : vector<256xf32>
    %9 = vector.multi_reduction <add>, %4, %cst [1] : vector<256x256xf32> to vector<256xf32>
    %10 = vector.shape_cast %9 : vector<256xf32> to vector<256x1xf32>
    %cst_9 = arith.constant 2.560000e+02 : f32
    %11 = vector.broadcast %cst_9 : f32 to vector<256x1xf32>
    %12 = arith.divf %10, %11 : vector<256x1xf32>
    %13 = vector.broadcast %12 : vector<256x1xf32> to vector<256x256xf32>
    %14 = arith.subf %4, %13 : vector<256x256xf32>
    %15 = arith.mulf %14, %14 : vector<256x256xf32>
    %cst_10 = arith.constant dense<0.000000e+00> : vector<256xf32>
    %16 = vector.multi_reduction <add>, %15, %cst_10 [1] : vector<256x256xf32> to vector<256xf32>
    %17 = vector.shape_cast %16 : vector<256xf32> to vector<256x1xf32>
    %cst_11 = arith.constant 2.560000e+02 : f32
    %18 = vector.broadcast %cst_11 : f32 to vector<256x1xf32>
    %19 = arith.divf %17, %18 : vector<256x1xf32>
    %20 = vector.broadcast %12 : vector<256x1xf32> to vector<256x256xf32>
    %21 = arith.subf %4, %20 : vector<256x256xf32>
    %cst_12 = arith.constant 9.99999974E-6 : f32
    %22 = vector.broadcast %cst_12 : f32 to vector<256x1xf32>
    %23 = arith.addf %19, %22 : vector<256x1xf32>
    %24 = math.rsqrt %23 : vector<256x1xf32>
    %25 = vector.broadcast %24 : vector<256x1xf32> to vector<256x256xf32>
    %26 = arith.mulf %21, %25 : vector<256x256xf32>
    %27 = vector.broadcast %6 : vector<1x256xf32> to vector<256x256xf32>
    %28 = arith.mulf %26, %27 : vector<256x256xf32>
    %29 = vector.broadcast %8 : vector<1x256xf32> to vector<256x256xf32>
    %30 = arith.addf %28, %29 : vector<256x256xf32>
    %31 = arith.truncf %30 : vector<256x256xf32> to vector<256x256xbf16>
    %c0_13 = arith.constant 0 : index
    %c0_14 = arith.constant 0 : index
    %c0_15 = arith.constant 0 : index
    %32 = vector.load %arg6[%c0_13, %c0_14, %c0_15] : memref<1x256x1024xbf16, #tpu.memory_space<vmem>>, vector<1x256x1024xbf16>
    %33 = vector.shape_cast %32 : vector<1x256x1024xbf16> to vector<256x1024xbf16>
    %cst_16 = arith.constant dense<0.000000e+00> : vector<256x1024xf32>
    %34 = tpu.matmul %31, %33, %cst_16 {dimension_numbers = #tpu.dot_dimension_numbers<[1], [0], [0], [1], [0, 0, 1, 1], [], []>} : vector<256x256xbf16>, vector<256x1024xbf16>, vector<256x1024xf32> -> vector<256x1024xf32>
    %35 = arith.truncf %34 : vector<256x1024xf32> to vector<256x1024xbf16>
    %36 = vector.shape_cast %35 : vector<256x1024xbf16> to vector<16x16x1024xbf16>
    %37 = vector.extract_strided_slice %36 {offsets = [0, 0, 0], sizes = [16, 16, 128], strides = [1, 1, 1]} : vector<16x16x1024xbf16> to vector<16x16x128xbf16>
    %38 = vector.extract_strided_slice %36 {offsets = [0, 0, 256], sizes = [16, 16, 128], strides = [1, 1, 1]} : vector<16x16x1024xbf16> to vector<16x16x128xbf16>
    %39 = vector.extract_strided_slice %36 {offsets = [0, 0, 512], sizes = [16, 16, 128], strides = [1, 1, 1]} : vector<16x16x1024xbf16> to vector<16x16x128xbf16>
    "tpu.trace_start"() <{level = 10 : i32, message = "bqd,bkd->bqk"}> : () -> ()
    %cst_17 = arith.constant dense<0.000000e+00> : vector<16x16x16xf32>
    %40 = tpu.matmul %37, %38, %cst_17 {dimension_numbers = #tpu.dot_dimension_numbers<[2], [2], [1], [1], [0, 0, 0, 1, 1, 1], [0], [0]>} : vector<16x16x128xbf16>, vector<16x16x128xbf16>, vector<16x16x16xf32> -> vector<16x16x16xf32>
    "tpu.trace_stop"() : () -> ()
    %cst_18 = arith.constant dense<0xFF800000> : vector<16x16xf32>
    %41 = vector.multi_reduction <maximumf>, %40, %cst_18 [2] : vector<16x16x16xf32> to vector<16x16xf32>
    %42 = vector.shape_cast %41 : vector<16x16xf32> to vector<16x16x1xf32>
    %43 = vector.broadcast %42 : vector<16x16x1xf32> to vector<16x16x16xf32>
    %44 = arith.subf %40, %43 : vector<16x16x16xf32>
    %45 = math.exp %44 : vector<16x16x16xf32>
    %cst_19 = arith.constant dense<0.000000e+00> : vector<16x16xf32>
    %46 = vector.multi_reduction <add>, %45, %cst_19 [2] : vector<16x16x16xf32> to vector<16x16xf32>
    %47 = vector.shape_cast %46 : vector<16x16xf32> to vector<16x16x1xf32>
    %48 = tpu.reciprocal %47 {approx = true} : vector<16x16x1xf32> -> vector<16x16x1xf32>
    %49 = vector.broadcast %48 : vector<16x16x1xf32> to vector<16x16x16xf32>
    %50 = arith.mulf %45, %49 : vector<16x16x16xf32>
    %51 = arith.truncf %50 : vector<16x16x16xf32> to vector<16x16x16xbf16>
    "tpu.trace_start"() <{level = 10 : i32, message = "bqk,bkd->bqd"}> : () -> ()
    %cst_20 = arith.constant dense<0.000000e+00> : vector<16x16x128xf32>
    %52 = tpu.matmul %51, %39, %cst_20 {dimension_numbers = #tpu.dot_dimension_numbers<[2], [1], [1], [2], [0, 0, 0, 1, 1, 2], [0], [0]>} : vector<16x16x16xbf16>, vector<16x16x128xbf16>, vector<16x16x128xf32> -> vector<16x16x128xf32>
    "tpu.trace_stop"() : () -> ()
    %53 = vector.extract_strided_slice %36 {offsets = [0, 0, 128], sizes = [16, 16, 128], strides = [1, 1, 1]} : vector<16x16x1024xbf16> to vector<16x16x128xbf16>
    %54 = vector.extract_strided_slice %36 {offsets = [0, 0, 384], sizes = [16, 16, 128], strides = [1, 1, 1]} : vector<16x16x1024xbf16> to vector<16x16x128xbf16>
    %55 = vector.extract_strided_slice %36 {offsets = [0, 0, 640], sizes = [16, 16, 128], strides = [1, 1, 1]} : vector<16x16x1024xbf16> to vector<16x16x128xbf16>
    "tpu.trace_start"() <{level = 10 : i32, message = "bqd,bkd->bqk"}> : () -> ()
    %cst_21 = arith.constant dense<0.000000e+00> : vector<16x16x16xf32>
    %56 = tpu.matmul %53, %54, %cst_21 {dimension_numbers = #tpu.dot_dimension_numbers<[2], [2], [1], [1], [0, 0, 0, 1, 1, 1], [0], [0]>} : vector<16x16x128xbf16>, vector<16x16x128xbf16>, vector<16x16x16xf32> -> vector<16x16x16xf32>
    "tpu.trace_stop"() : () -> ()
    %cst_22 = arith.constant dense<0xFF800000> : vector<16x16xf32>
    %57 = vector.multi_reduction <maximumf>, %56, %cst_22 [2] : vector<16x16x16xf32> to vector<16x16xf32>
    %58 = vector.shape_cast %57 : vector<16x16xf32> to vector<16x16x1xf32>
    %59 = vector.broadcast %58 : vector<16x16x1xf32> to vector<16x16x16xf32>
    %60 = arith.subf %56, %59 : vector<16x16x16xf32>
    %61 = math.exp %60 : vector<16x16x16xf32>
    %cst_23 = arith.constant dense<0.000000e+00> : vector<16x16xf32>
    %62 = vector.multi_reduction <add>, %61, %cst_23 [2] : vector<16x16x16xf32> to vector<16x16xf32>
    %63 = vector.shape_cast %62 : vector<16x16xf32> to vector<16x16x1xf32>
    %64 = tpu.reciprocal %63 {approx = true} : vector<16x16x1xf32> -> vector<16x16x1xf32>
    %65 = vector.broadcast %64 : vector<16x16x1xf32> to vector<16x16x16xf32>
    %66 = arith.mulf %61, %65 : vector<16x16x16xf32>
    %67 = arith.truncf %66 : vector<16x16x16xf32> to vector<16x16x16xbf16>
    "tpu.trace_start"() <{level = 10 : i32, message = "bqk,bkd->bqd"}> : () -> ()
    %cst_24 = arith.constant dense<0.000000e+00> : vector<16x16x128xf32>
    %68 = tpu.matmul %67, %55, %cst_24 {dimension_numbers = #tpu.dot_dimension_numbers<[2], [1], [1], [2], [0, 0, 0, 1, 1, 2], [0], [0]>} : vector<16x16x16xbf16>, vector<16x16x128xbf16>, vector<16x16x128xf32> -> vector<16x16x128xf32>
    "tpu.trace_stop"() : () -> ()
    %69 = tpu.concatenate %52, %68 in 2 : vector<16x16x128xf32>, vector<16x16x128xf32> -> vector<16x16x256xf32>
    %70 = vector.shape_cast %69 : vector<16x16x256xf32> to vector<256x256xf32>
    %71 = arith.truncf %70 : vector<256x256xf32> to vector<256x256xbf16>
    %72 = vector.extract_strided_slice %36 {offsets = [0, 0, 768], sizes = [16, 16, 256], strides = [1, 1, 1]} : vector<16x16x1024xbf16> to vector<16x16x256xbf16>
    %c0_25 = arith.constant 0 : index
    %c0_26 = arith.constant 0 : index
    %73 = vector.load %arg3[%c0_25, %c0_26] : memref<16x16xbf16, #tpu.memory_space<vmem>>, vector<16x16xbf16>
    %74 = vector.shape_cast %73 : vector<16x16xbf16> to vector<1x16x16xbf16>
    %75 = vector.broadcast %74 : vector<1x16x16xbf16> to vector<16x16x16xbf16>
    "tpu.trace_start"() <{level = 10 : i32, message = "bqk,bkd->bqd"}> : () -> ()
    %cst_27 = arith.constant dense<0.000000e+00> : vector<16x16x256xf32>
    %76 = tpu.matmul %75, %72, %cst_27 {dimension_numbers = #tpu.dot_dimension_numbers<[2], [1], [1], [2], [0, 0, 0, 1, 1, 2], [0], [0]>} : vector<16x16x16xbf16>, vector<16x16x256xbf16>, vector<16x16x256xf32> -> vector<16x16x256xf32>
    "tpu.trace_stop"() : () -> ()
    %77 = vector.shape_cast %76 : vector<16x16x256xf32> to vector<256x256xf32>
    %78 = arith.truncf %77 : vector<256x256xf32> to vector<256x256xbf16>
    %c0_28 = arith.constant 0 : index
    %c0_29 = arith.constant 0 : index
    %c0_30 = arith.constant 0 : index
    %79 = vector.load %arg7[%c0_28, %c0_29, %c0_30] : memref<1x256x256xbf16, #tpu.memory_space<vmem>>, vector<1x256x256xbf16>
    %80 = vector.shape_cast %79 : vector<1x256x256xbf16> to vector<256x256xbf16>
    %cst_31 = arith.constant dense<0.000000e+00> : vector<256x256xf32>
    %81 = tpu.matmul %71, %80, %cst_31 {dimension_numbers = #tpu.dot_dimension_numbers<[1], [0], [0], [1], [0, 0, 1, 1], [], []>} : vector<256x256xbf16>, vector<256x256xbf16>, vector<256x256xf32> -> vector<256x256xf32>
    %c0_32 = arith.constant 0 : index
    %c0_33 = arith.constant 0 : index
    %c0_34 = arith.constant 0 : index
    %82 = vector.load %arg8[%c0_32, %c0_33, %c0_34] : memref<1x256x256xbf16, #tpu.memory_space<vmem>>, vector<1x256x256xbf16>
    %83 = vector.shape_cast %82 : vector<1x256x256xbf16> to vector<256x256xbf16>
    %cst_35 = arith.constant dense<0.000000e+00> : vector<256x256xf32>
    %84 = tpu.matmul %78, %83, %cst_35 {dimension_numbers = #tpu.dot_dimension_numbers<[1], [0], [0], [1], [0, 0, 1, 1], [], []>} : vector<256x256xbf16>, vector<256x256xbf16>, vector<256x256xf32> -> vector<256x256xf32>
    %85 = arith.addf %81, %84 : vector<256x256xf32>
    %c0_36 = arith.constant 0 : index
    %c0_37 = arith.constant 0 : index
    %c0_38 = arith.constant 0 : index
    %86 = vector.load %arg9[%c0_36, %c0_37, %c0_38] : memref<1x1x256xf32, #tpu.memory_space<vmem>>, vector<1x1x256xf32>
    %87 = vector.shape_cast %86 : vector<1x1x256xf32> to vector<1x256xf32>
    %88 = vector.broadcast %87 : vector<1x256xf32> to vector<256x256xf32>
    %89 = arith.addf %85, %88 : vector<256x256xf32>
    %90 = arith.addf %4, %89 : vector<256x256xf32>
    %c0_39 = arith.constant 0 : index
    %c0_40 = arith.constant 0 : index
    %c0_41 = arith.constant 0 : index
    %91 = vector.load %arg10[%c0_39, %c0_40, %c0_41] : memref<1x1x256xf32, #tpu.memory_space<vmem>>, vector<1x1x256xf32>
    %92 = vector.shape_cast %91 : vector<1x1x256xf32> to vector<1x256xf32>
    %c0_42 = arith.constant 0 : index
    %c0_43 = arith.constant 0 : index
    %c0_44 = arith.constant 0 : index
    %93 = vector.load %arg11[%c0_42, %c0_43, %c0_44] : memref<1x1x256xf32, #tpu.memory_space<vmem>>, vector<1x1x256xf32>
    %94 = vector.shape_cast %93 : vector<1x1x256xf32> to vector<1x256xf32>
    %cst_45 = arith.constant dense<0.000000e+00> : vector<256xf32>
    %95 = vector.multi_reduction <add>, %90, %cst_45 [1] : vector<256x256xf32> to vector<256xf32>
    %96 = vector.shape_cast %95 : vector<256xf32> to vector<256x1xf32>
    %cst_46 = arith.constant 2.560000e+02 : f32
    %97 = vector.broadcast %cst_46 : f32 to vector<256x1xf32>
    %98 = arith.divf %96, %97 : vector<256x1xf32>
    %99 = vector.broadcast %98 : vector<256x1xf32> to vector<256x256xf32>
    %100 = arith.subf %90, %99 : vector<256x256xf32>
    %101 = arith.mulf %100, %100 : vector<256x256xf32>
    %cst_47 = arith.constant dense<0.000000e+00> : vector<256xf32>
    %102 = vector.multi_reduction <add>, %101, %cst_47 [1] : vector<256x256xf32> to vector<256xf32>
    %103 = vector.shape_cast %102 : vector<256xf32> to vector<256x1xf32>
    %cst_48 = arith.constant 2.560000e+02 : f32
    %104 = vector.broadcast %cst_48 : f32 to vector<256x1xf32>
    %105 = arith.divf %103, %104 : vector<256x1xf32>
    %106 = vector.broadcast %98 : vector<256x1xf32> to vector<256x256xf32>
    %107 = arith.subf %90, %106 : vector<256x256xf32>
    %cst_49 = arith.constant 9.99999974E-6 : f32
    %108 = vector.broadcast %cst_49 : f32 to vector<256x1xf32>
    %109 = arith.addf %105, %108 : vector<256x1xf32>
    %110 = math.rsqrt %109 : vector<256x1xf32>
    %111 = vector.broadcast %110 : vector<256x1xf32> to vector<256x256xf32>
    %112 = arith.mulf %107, %111 : vector<256x256xf32>
    %113 = vector.broadcast %92 : vector<1x256xf32> to vector<256x256xf32>
    %114 = arith.mulf %112, %113 : vector<256x256xf32>
    %115 = vector.broadcast %94 : vector<1x256xf32> to vector<256x256xf32>
    %116 = arith.addf %114, %115 : vector<256x256xf32>
    %117 = arith.truncf %116 : vector<256x256xf32> to vector<256x256xbf16>
    %c0_50 = arith.constant 0 : index
    %c0_51 = arith.constant 0 : index
    %c0_52 = arith.constant 0 : index
    %118 = vector.load %arg12[%c0_50, %c0_51, %c0_52] : memref<1x256x256xbf16, #tpu.memory_space<vmem>>, vector<1x256x256xbf16>
    %119 = vector.shape_cast %118 : vector<1x256x256xbf16> to vector<256x256xbf16>
    %cst_53 = arith.constant dense<0.000000e+00> : vector<256x256xf32>
    %120 = tpu.matmul %117, %119, %cst_53 {dimension_numbers = #tpu.dot_dimension_numbers<[1], [0], [0], [1], [0, 0, 1, 1], [], []>} : vector<256x256xbf16>, vector<256x256xbf16>, vector<256x256xf32> -> vector<256x256xf32>
    %c0_54 = arith.constant 0 : index
    %c0_55 = arith.constant 0 : index
    %c0_56 = arith.constant 0 : index
    %121 = vector.load %arg13[%c0_54, %c0_55, %c0_56] : memref<1x1x256xf32, #tpu.memory_space<vmem>>, vector<1x1x256xf32>
    %122 = vector.shape_cast %121 : vector<1x1x256xf32> to vector<1x256xf32>
    %123 = vector.broadcast %122 : vector<1x256xf32> to vector<256x256xf32>
    %124 = arith.addf %120, %123 : vector<256x256xf32>
    %cst_57 = arith.constant 5.000000e-01 : f32
    %125 = vector.broadcast %cst_57 : f32 to vector<256x256xf32>
    %126 = arith.mulf %125, %124 : vector<256x256xf32>
    %cst_58 = arith.constant 0.707106769 : f32
    %127 = vector.broadcast %cst_58 : f32 to vector<256x256xf32>
    %128 = arith.mulf %124, %127 : vector<256x256xf32>
    %129 = math.erf %128 : vector<256x256xf32>
    %cst_59 = arith.constant 1.000000e+00 : f32
    %130 = vector.broadcast %cst_59 : f32 to vector<256x256xf32>
    %131 = arith.addf %130, %129 : vector<256x256xf32>
    %132 = arith.mulf %126, %131 : vector<256x256xf32>
    %133 = arith.truncf %132 : vector<256x256xf32> to vector<256x256xbf16>
    %c0_60 = arith.constant 0 : index
    %c0_61 = arith.constant 0 : index
    %c0_62 = arith.constant 0 : index
    %134 = vector.load %arg14[%c0_60, %c0_61, %c0_62] : memref<1x256x256xbf16, #tpu.memory_space<vmem>>, vector<1x256x256xbf16>
    %135 = vector.shape_cast %134 : vector<1x256x256xbf16> to vector<256x256xbf16>
    %cst_63 = arith.constant dense<0.000000e+00> : vector<256x256xf32>
    %136 = tpu.matmul %133, %135, %cst_63 {dimension_numbers = #tpu.dot_dimension_numbers<[1], [0], [0], [1], [0, 0, 1, 1], [], []>} : vector<256x256xbf16>, vector<256x256xbf16>, vector<256x256xf32> -> vector<256x256xf32>
    %c0_64 = arith.constant 0 : index
    %c0_65 = arith.constant 0 : index
    %c0_66 = arith.constant 0 : index
    %137 = vector.load %arg15[%c0_64, %c0_65, %c0_66] : memref<1x1x256xf32, #tpu.memory_space<vmem>>, vector<1x1x256xf32>
    %138 = vector.shape_cast %137 : vector<1x1x256xf32> to vector<1x256xf32>
    %139 = vector.broadcast %138 : vector<1x256xf32> to vector<256x256xf32>
    %140 = arith.addf %136, %139 : vector<256x256xf32>
    %141 = arith.addf %90, %140 : vector<256x256xf32>
    %142 = vector.shape_cast %141 : vector<256x256xf32> to vector<16x16x256xf32>
    %c0_67 = arith.constant 0 : index
    %c0_68 = arith.constant 0 : index
    %c0_69 = arith.constant 0 : index
    %143 = vector.load %arg16[%c0_67, %c0_68, %c0_69] : memref<16x16x256xf32, #tpu.memory_space<vmem>>, vector<16x16x256xf32>
    tpu.vector_store %arg16[%c0_67, %c0_68, %c0_69], %142 {strides = array<i32>} : memref<16x16x256xf32, #tpu.memory_space<vmem>>, vector<16x16x256xf32>,
    return
  }
  func.func @transform_0(%arg0: i32, %arg1: i32) -> (i32, i32, i32) {
    %c0_i32 = arith.constant 0 : i32
    %c0_i32_0 = arith.constant 0 : i32
    %c0_i32_1 = arith.constant 0 : i32
    return %arg0, %c0_i32, %c0_i32_0 : i32, i32, i32
  }
  func.func @transform_1(%arg0: i32, %arg1: i32) -> (i32, i32) {
    %c0_i32 = arith.constant 0 : i32
    %c0_i32_0 = arith.constant 0 : i32
    %c0_i32_1 = arith.constant 0 : i32
    return %c0_i32, %c0_i32_0 : i32, i32
  }
  func.func @transform_2(%arg0: i32, %arg1: i32) -> (i32, i32, i32) {
    %c0_i32 = arith.constant 0 : i32
    %c0_i32_0 = arith.constant 0 : i32
    %c0_i32_1 = arith.constant 0 : i32
    return %arg1, %c0_i32, %c0_i32_0 : i32, i32, i32
  }
  func.func @transform_3(%arg0: i32, %arg1: i32) -> (i32, i32, i32) {
    %c0_i32 = arith.constant 0 : i32
    %c0_i32_0 = arith.constant 0 : i32
    %c0_i32_1 = arith.constant 0 : i32
    return %arg1, %c0_i32, %c0_i32_0 : i32, i32, i32
  }
  func.func @transform_4(%arg0: i32, %arg1: i32) -> (i32, i32, i32) {
    %c0_i32 = arith.constant 0 : i32
    %c0_i32_0 = arith.constant 0 : i32
    %c0_i32_1 = arith.constant 0 : i32
    return %arg1, %c0_i32, %c0_i32_0 : i32, i32, i32
  }
  func.func @transform_5(%arg0: i32, %arg1: i32) -> (i32, i32, i32) {
    %c0_i32 = arith.constant 0 : i32
    %c0_i32_0 = arith.constant 0 : i32
    %c0_i32_1 = arith.constant 0 : i32
    return %arg1, %c0_i32, %c0_i32_0 : i32, i32, i32
  }
  func.func @transform_6(%arg0: i32, %arg1: i32) -> (i32, i32, i32) {
    %c0_i32 = arith.constant 0 : i32
    %c0_i32_0 = arith.constant 0 : i32
    %c0_i32_1 = arith.constant 0 : i32
    return %arg1, %c0_i32, %c0_i32_0 : i32, i32, i32
  }
  func.func @transform_7(%arg0: i32, %arg1: i32) -> (i32, i32, i32) {
    %c0_i32 = arith.constant 0 : i32
    %c0_i32_0 = arith.constant 0 : i32
    %c0_i32_1 = arith.constant 0 : i32
    return %arg1, %c0_i32, %c0_i32_0 : i32, i32, i32
  }
  func.func @transform_8(%arg0: i32, %arg1: i32) -> (i32, i32, i32) {
    %c0_i32 = arith.constant 0 : i32
    %c0_i32_0 = arith.constant 0 : i32
    %c0_i32_1 = arith.constant 0 : i32
    return %arg1, %c0_i32, %c0_i32_0 : i32, i32, i32
  }
  func.func @transform_9(%arg0: i32, %arg1: i32) -> (i32, i32, i32) {
    %c0_i32 = arith.constant 0 : i32
    %c0_i32_0 = arith.constant 0 : i32
    %c0_i32_1 = arith.constant 0 : i32
    return %arg1, %c0_i32, %c0_i32_0 : i32, i32, i32
  }
  func.func @transform_10(%arg0: i32, %arg1: i32) -> (i32, i32, i32) {
    %c0_i32 = arith.constant 0 : i32
    %c0_i32_0 = arith.constant 0 : i32
    %c0_i32_1 = arith.constant 0 : i32
    return %arg1, %c0_i32, %c0_i32_0 : i32, i32, i32
  }
  func.func @transform_11(%arg0: i32, %arg1: i32) -> (i32, i32, i32) {
    %c0_i32 = arith.constant 0 : i32
    %c0_i32_0 = arith.constant 0 : i32
    %c0_i32_1 = arith.constant 0 : i32
    return %arg1, %c0_i32, %c0_i32_0 : i32, i32, i32
  }
  func.func @transform_12(%arg0: i32, %arg1: i32) -> (i32, i32, i32) {
    %c0_i32 = arith.constant 0 : i32
    %c0_i32_0 = arith.constant 0 : i32
    %c0_i32_1 = arith.constant 0 : i32
    return %arg1, %c0_i32, %c0_i32_0 : i32, i32, i32
  }
  func.func @transform_13(%arg0: i32, %arg1: i32) -> (i32, i32, i32) {
    %c0_i32 = arith.constant 0 : i32
    %c0_i32_0 = arith.constant 0 : i32
    %c0_i32_1 = arith.constant 0 : i32
    return %arg1, %c0_i32, %c0_i32_0 : i32, i32, i32
  }
  func.func @transform_14(%arg0: i32, %arg1: i32) -> (i32, i32, i32) {
    %c0_i32 = arith.constant 0 : i32
    %c0_i32_0 = arith.constant 0 : i32
    %c0_i32_1 = arith.constant 0 : i32
    return %arg0, %c0_i32, %c0_i32_0 : i32, i32, i32
  }
}

</mosaic_0001>

<llo_original>
// kernel: tpu_custom_call.1
$region0: #{tpu_custom_call.1}
  #allocation0 [shape = 'u32[]', space=smem, size = 0x4, offset = 0x4, fixed_abs, tag = 'smem constant byte address 0x4 - core index']
  #allocation1 [shape = 'u32[144,128]{1,0:T(1,128)}', space=vmem, size = 0x12000, scoped, tag = 'internal scratch']
  %s0 = inlined_call_operand.hbm [shape: f32[64,16,256], index: 0, kind: input, shape index: {}]
  %s1 = inlined_call_operand.hbm [shape: bf16[16,16], index: 1, kind: input, shape index: {}]
  %s2 = inlined_call_operand.vmem [shape: f32[2,1,256], index: 2, kind: input, shape index: {}]
  %s3 = inlined_call_operand.vmem [shape: f32[2,1,256], index: 3, kind: input, shape index: {}]
  %s4 = inlined_call_operand.hbm [shape: bf16[2,256,1024], index: 4, kind: input, shape index: {}]
  %s5 = inlined_call_operand.hbm [shape: bf16[2,256,256], index: 5, kind: input, shape index: {}]
  %s6 = inlined_call_operand.hbm [shape: bf16[2,256,256], index: 6, kind: input, shape index: {}]
  %s7 = inlined_call_operand.vmem [shape: f32[2,1,256], index: 7, kind: input, shape index: {}]
  %s8 = inlined_call_operand.vmem [shape: f32[2,1,256], index: 8, kind: input, shape index: {}]
  %s9 = inlined_call_operand.vmem [shape: f32[2,1,256], index: 9, kind: input, shape index: {}]
  %s10 = inlined_call_operand.hbm [shape: bf16[2,256,256], index: 10, kind: input, shape index: {}]
  %s11 = inlined_call_operand.vmem [shape: f32[2,1,256], index: 11, kind: input, shape index: {}]
  %s12 = inlined_call_operand.hbm [shape: bf16[2,256,256], index: 12, kind: input, shape index: {}]
  %s13 = inlined_call_operand.vmem [shape: f32[2,1,256], index: 13, kind: input, shape index: {}]
  %s14 = inlined_call_operand.hbm [shape: f32[64,16,256], index: 14, kind: output, shape index: {}]
  %s15 = sld [smem:[#allocation0]]
  $region121: #{tpu_custom_call.1} parent=0
    _
  %s17 = ssub.s32 1, %s15
  %s18 = scalar_select 0, %s17, %s15
  $region1: #{tpu_custom_call.1} parent=0
    #allocation2 [shape = 'u8[524288]{0}', space=vmem, size = 0x80000, scoped, tag = 'input window, operand 0']
    #allocation3 [shape = 's32[2]{0}', space=sflag, size = 0x8, scoped, tag = 'scoped memory for tpu_custom_call.1']
    #allocation4 [shape = 's32[2]{0}', space=sflag, size = 0x8, scoped, tag = 'scoped memory for tpu_custom_call.1']
    #allocation5 [shape = 'u8[4096]{0}', space=vmem, size = 0x1000, scoped, tag = 'input window, operand 1, single buffered']
    #allocation6 [shape = 's32[1]{0}', space=sflag, size = 0x4, scoped, tag = 'scoped memory for tpu_custom_call.1']
    #allocation7 [shape = 'u8[1048576]{0}', space=vmem, size = 0x100000, scoped, tag = 'input window, operand 4']
    #allocation8 [shape = 'u8[262144]{0}', space=vmem, size = 0x40000, scoped, tag = 'input window, operand 5']
    #allocation9 [shape = 'u8[262144]{0}', space=vmem, size = 0x40000, scoped, tag = 'input window, operand 6']
    #allocation10 [shape = 'u8[262144]{0}', space=vmem, size = 0x40000, scoped, tag = 'input window, operand 10']
    #allocation11 [shape = 'u8[262144]{0}', space=vmem, size = 0x40000, scoped, tag = 'input window, operand 12']
    #allocation12 [shape = 'u8[524288]{0}', space=vmem, size = 0x80000, scoped, tag = 'output window, operand 0']
    %19 = vsyncpa [#allocation3], 0
    %s20 = scalar_lea.sflag [#allocation3], 1
    %21 = vsyncpa %s20, 0
    %22 = vsyncpa [#allocation6], 0
    %23 = vsyncpa [#allocation4], 0
    %s24 = scalar_lea.sflag [#allocation4], 1
    %25 = vsyncpa %s24, 0
    loop: start=0, step=1, limit=10
    $region2: #{tpu_custom_call.1} parent=1 // loop_pre_header
      _
    $region3: #{tpu_custom_call.1} parent=1 // loop_header
      %s27 = sphi 0, %s31
      %p28 = scmp.ge.s32.totalorder %s27, 10
      %s34 = sphi 0, %s46
      %s35 = sphi 0, %s42
      %s36 = sphi 0, %s34
      %s37 = sphi 0, %s35
      %s38 = sphi 0, %s36
      %s39 = sphi 0, %s37
      %s49 = sphi 0, %s51
      %s52 = sphi 0, %s49
      %s53 = sphi 0, %s52
      %s69 = sphi 0, %s53
      %s73 = sphi 0, %s73
      %s75 = sphi 0, %s73
      %s76 = sphi 0, %s75
      %s90 = sphi 0, %s76
      %s96 = sphi 0, %s98
      %s99 = sphi 0, %s96
      %s100 = sphi 0, %s99
      %s116 = sphi 0, %s100
      %s122 = sphi 0, %s124
      %s125 = sphi 0, %s122
      %s126 = sphi 0, %s125
      %s142 = sphi 0, %s126
      %s148 = sphi 0, %s150
      %s151 = sphi 0, %s148
      %s152 = sphi 0, %s151
      %s168 = sphi 0, %s152
      %s174 = sphi 0, %s176
      %s177 = sphi 0, %s174
      %s178 = sphi 0, %s177
      %s194 = sphi 0, %s178
      %s200 = sphi 0, %s202
      %s203 = sphi 0, %s200
      %s204 = sphi 0, %s203
      %s220 = sphi 0, %s204
      %s226 = sphi 0, %s228
      %s229 = sphi 0, %s226
      %s230 = sphi 0, %s229
      %s246 = sphi 0, %s230
      %s252 = sphi 0, %s254
      %s255 = sphi 0, %s252
      %s256 = sphi 0, %s255
      %s272 = sphi 0, %s256
      %s278 = sphi 0, %s280
      %s281 = sphi 0, %s278
      %s282 = sphi 0, %s281
      %s298 = sphi 0, %s282
      %s304 = sphi 0, %s306
      %s307 = sphi 0, %s304
      %s308 = sphi 0, %s307
      %s324 = sphi 0, %s308
      %s330 = sphi 0, %s332
      %s333 = sphi 0, %s330
      %s334 = sphi 0, %s333
      %s350 = sphi 0, %s334
      %s356 = sphi 0, %s358
      %s359 = sphi 0, %s356
      %s360 = sphi 0, %s359
      %s376 = sphi 0, %s360
      %s382 = sphi 0, %s384
      %s385 = sphi 0, %s382
      %s386 = sphi 0, %s385
      %s402 = sphi 0, %s386
      %s408 = sphi 0, %s410
      %s411 = sphi 0, %s408
      %s412 = sphi 0, %s411
      %s428 = sphi 0, %s412
    $region4: #{tpu_custom_call.1} parent=1 // loop_header_branch
      %30 = sbr.rel (%p28) target = $region8
    $region5: #{tpu_custom_call.1} parent=1 // loop_body
      %s32 = ssub.s32 %s27, 1
      %s33 = ssub.s32 %s27, 2
      %s40 = sadd.s32 1, %s35
      %p41 = scmp.ge.s32.totalorder %s40, 2
      %s42 = scalar_select %p41, 0, %s40
      %s43 = sadd.s32 1, %s34
      %s44 = scalar_select %p41, %s43, %s34
      %p45 = scmp.ge.s32.totalorder %s44, 4
      %s46 = scalar_select %p45, 0, %s44
      %s47 = ssub.s32 %s34, %s46
      %p48 = scmp.eq.s32.totalorder %s47, 0
      %s50 = sadd.s32 %s49, 1
      %s51 = scalar_select %p48, %s49, %s50
      %p54 = pneg %p48
      %p55 = scmp.eq.s32.totalorder %s27, 7
      %p56 = por %p54, %p55
      %p57 = scmp.ne.s32.totalorder %s49, %s52
      %p58 = scmp.eq.s32.totalorder %s27, 0
      %p59 = por %p57, %p58
      %p60 = scmp.ne.s32.totalorder %s49, %s52
      %p61 = scmp.eq.s32.totalorder %s32, 7
      %p62 = por %p60, %p61
      %p63 = scmp.ne.s32.totalorder %s52, %s53
      %p64 = scmp.eq.s32.totalorder %s32, 0
      %p65 = por %p63, %p64
      %p66 = scmp.ne.s32.totalorder %s52, %s53
      %p67 = scmp.eq.s32.totalorder %s33, 7
      %p68 = por %p66, %p67
      %p70 = scmp.ne.s32.totalorder %s53, %s69
      %p71 = scmp.eq.s32.totalorder %s33, 0
      %p72 = por %p70, %p71
      %s74 = sadd.s32 %s73, 1
      %p77 = scmp.eq.s32.totalorder %s27, 7
      %p78 = scmp.ne.s32.totalorder %s73, %s75
      %p79 = scmp.eq.s32.totalorder %s27, 0
      %p80 = por %p78, %p79
      %p81 = scmp.ne.s32.totalorder %s73, %s75
      %p82 = scmp.eq.s32.totalorder %s32, 7
      %p83 = por %p81, %p82
      %p84 = scmp.ne.s32.totalorder %s75, %s76
      %p85 = scmp.eq.s32.totalorder %s32, 0
      %p86 = por %p84, %p85
      %p87 = scmp.ne.s32.totalorder %s75, %s76
      %p88 = scmp.eq.s32.totalorder %s33, 7
      %p89 = por %p87, %p88
      %p91 = scmp.ne.s32.totalorder %s76, %s90
      %p92 = scmp.eq.s32.totalorder %s33, 0
      %p93 = por %p91, %p92
      %s94 = ssub.s32 %s35, %s42
      %p95 = scmp.eq.s32.totalorder %s94, 0
      %s97 = sadd.s32 %s96, 1
      %s98 = scalar_select %p95, %s96, %s97
      %p101 = pneg %p95
      %p102 = scmp.eq.s32.totalorder %s27, 7
      %p103 = por %p101, %p102
      %p104 = scmp.ne.s32.totalorder %s96, %s99
      %p105 = scmp.eq.s32.totalorder %s27, 0
      %p106 = por %p104, %p105
      %p107 = scmp.ne.s32.totalorder %s96, %s99
      %p108 = scmp.eq.s32.totalorder %s32, 7
      %p109 = por %p107, %p108
      %p110 = scmp.ne.s32.totalorder %s99, %s100
      %p111 = scmp.eq.s32.totalorder %s32, 0
      %p112 = por %p110, %p111
      %p113 = scmp.ne.s32.totalorder %s99, %s100
      %p114 = scmp.eq.s32.totalorder %s33, 7
      %p115 = por %p113, %p114
      %p117 = scmp.ne.s32.totalorder %s100, %s116
      %p118 = scmp.eq.s32.totalorder %s33, 0
      %p119 = por %p117, %p118
      %s120 = ssub.s32 %s35, %s42
      %p121 = scmp.eq.s32.totalorder %s120, 0
      %s123 = sadd.s32 %s122, 1
      %s124 = scalar_select %p121, %s122, %s123
      %p127 = pneg %p121
      %p128 = scmp.eq.s32.totalorder %s27, 7
      %p129 = por %p127, %p128
      %p130 = scmp.ne.s32.totalorder %s122, %s125
      %p131 = scmp.eq.s32.totalorder %s27, 0
      %p132 = por %p130, %p131
      %p133 = scmp.ne.s32.totalorder %s122, %s125
      %p134 = scmp.eq.s32.totalorder %s32, 7
      %p135 = por %p133, %p134
      %p136 = scmp.ne.s32.totalorder %s125, %s126
      %p137 = scmp.eq.s32.totalorder %s32, 0
      %p138 = por %p136, %p137
      %p139 = scmp.ne.s32.totalorder %s125, %s126
      %p140 = scmp.eq.s32.totalorder %s33, 7
      %p141 = por %p139, %p140
      %p143 = scmp.ne.s32.totalorder %s126, %s142
      %p144 = scmp.eq.s32.totalorder %s33, 0
      %p145 = por %p143, %p144
      %s146 = ssub.s32 %s35, %s42
      %p147 = scmp.eq.s32.totalorder %s146, 0
      %s149 = sadd.s32 %s148, 1
      %s150 = scalar_select %p147, %s148, %s149
      %p153 = pneg %p147
      %p154 = scmp.eq.s32.totalorder %s27, 7
      %p155 = por %p153, %p154
      %p156 = scmp.ne.s32.totalorder %s148, %s151
      %p157 = scmp.eq.s32.totalorder %s27, 0
      %p158 = por %p156, %p157
      %p159 = scmp.ne.s32.totalorder %s148, %s151
      %p160 = scmp.eq.s32.totalorder %s32, 7
      %p161 = por %p159, %p160
      %p162 = scmp.ne.s32.totalorder %s151, %s152
      %p163 = scmp.eq.s32.totalorder %s32, 0
      %p164 = por %p162, %p163
      %p165 = scmp.ne.s32.totalorder %s151, %s152
      %p166 = scmp.eq.s32.totalorder %s33, 7
      %p167 = por %p165, %p166
      %p169 = scmp.ne.s32.totalorder %s152, %s168
      %p170 = scmp.eq.s32.totalorder %s33, 0
      %p171 = por %p169, %p170
      %s172 = ssub.s32 %s35, %s42
      %p173 = scmp.eq.s32.totalorder %s172, 0
      %s175 = sadd.s32 %s174, 1
      %s176 = scalar_select %p173, %s174, %s175
      %p179 = pneg %p173
      %p180 = scmp.eq.s32.totalorder %s27, 7
      %p181 = por %p179, %p180
      %p182 = scmp.ne.s32.totalorder %s174, %s177
      %p183 = scmp.eq.s32.totalorder %s27, 0
      %p184 = por %p182, %p183
      %p185 = scmp.ne.s32.totalorder %s174, %s177
      %p186 = scmp.eq.s32.totalorder %s32, 7
      %p187 = por %p185, %p186
      %p188 = scmp.ne.s32.totalorder %s177, %s178
      %p189 = scmp.eq.s32.totalorder %s32, 0
      %p190 = por %p188, %p189
      %p191 = scmp.ne.s32.totalorder %s177, %s178
      %p192 = scmp.eq.s32.totalorder %s33, 7
      %p193 = por %p191, %p192
      %p195 = scmp.ne.s32.totalorder %s178, %s194
      %p196 = scmp.eq.s32.totalorder %s33, 0
      %p197 = por %p195, %p196
      %s198 = ssub.s32 %s35, %s42
      %p199 = scmp.eq.s32.totalorder %s198, 0
      %s201 = sadd.s32 %s200, 1
      %s202 = scalar_select %p199, %s200, %s201
      %p205 = pneg %p199
      %p206 = scmp.eq.s32.totalorder %s27, 7
      %p207 = por %p205, %p206
      %p208 = scmp.ne.s32.totalorder %s200, %s203
      %p209 = scmp.eq.s32.totalorder %s27, 0
      %p210 = por %p208, %p209
      %p211 = scmp.ne.s32.totalorder %s200, %s203
      %p212 = scmp.eq.s32.totalorder %s32, 7
      %p213 = por %p211, %p212
      %p214 = scmp.ne.s32.totalorder %s203, %s204
      %p215 = scmp.eq.s32.totalorder %s32, 0
      %p216 = por %p214, %p215
      %p217 = scmp.ne.s32.totalorder %s203, %s204
      %p218 = scmp.eq.s32.totalorder %s33, 7
      %p219 = por %p217, %p218
      %p221 = scmp.ne.s32.totalorder %s204, %s220
      %p222 = scmp.eq.s32.totalorder %s33, 0
      %p223 = por %p221, %p222
      %s224 = ssub.s32 %s35, %s42
      %p225 = scmp.eq.s32.totalorder %s224, 0
      %s227 = sadd.s32 %s226, 1
      %s228 = scalar_select %p225, %s226, %s227
      %p231 = pneg %p225
      %p232 = scmp.eq.s32.totalorder %s27, 7
      %p233 = por %p231, %p232
      %p234 = scmp.ne.s32.totalorder %s226, %s229
      %p235 = scmp.eq.s32.totalorder %s27, 0
      %p236 = por %p234, %p235
      %p237 = scmp.ne.s32.totalorder %s226, %s229
      %p238 = scmp.eq.s32.totalorder %s32, 7
      %p239 = por %p237, %p238
      %p240 = scmp.ne.s32.totalorder %s229, %s230
      %p241 = scmp.eq.s32.totalorder %s32, 0
      %p242 = por %p240, %p241
      %p243 = scmp.ne.s32.totalorder %s229, %s230
      %p244 = scmp.eq.s32.totalorder %s33, 7
      %p245 = por %p243, %p244
      %p247 = scmp.ne.s32.totalorder %s230, %s246
      %p248 = scmp.eq.s32.totalorder %s33, 0
      %p249 = por %p247, %p248
      %s250 = ssub.s32 %s35, %s42
      %p251 = scmp.eq.s32.totalorder %s250, 0
      %s253 = sadd.s32 %s252, 1
      %s254 = scalar_select %p251, %s252, %s253
      %p257 = pneg %p251
      %p258 = scmp.eq.s32.totalorder %s27, 7
      %p259 = por %p257, %p258
      %p260 = scmp.ne.s32.totalorder %s252, %s255
      %p261 = scmp.eq.s32.totalorder %s27, 0
      %p262 = por %p260, %p261
      %p263 = scmp.ne.s32.totalorder %s252, %s255
      %p264 = scmp.eq.s32.totalorder %s32, 7
      %p265 = por %p263, %p264
      %p266 = scmp.ne.s32.totalorder %s255, %s256
      %p267 = scmp.eq.s32.totalorder %s32, 0
      %p268 = por %p266, %p267
      %p269 = scmp.ne.s32.totalorder %s255, %s256
      %p270 = scmp.eq.s32.totalorder %s33, 7
      %p271 = por %p269, %p270
      %p273 = scmp.ne.s32.totalorder %s256, %s272
      %p274 = scmp.eq.s32.totalorder %s33, 0
      %p275 = por %p273, %p274
      %s276 = ssub.s32 %s35, %s42
      %p277 = scmp.eq.s32.totalorder %s276, 0
      %s279 = sadd.s32 %s278, 1
      %s280 = scalar_select %p277, %s278, %s279
      %p283 = pneg %p277
      %p284 = scmp.eq.s32.totalorder %s27, 7
      %p285 = por %p283, %p284
      %p286 = scmp.ne.s32.totalorder %s278, %s281
      %p287 = scmp.eq.s32.totalorder %s27, 0
      %p288 = por %p286, %p287
      %p289 = scmp.ne.s32.totalorder %s278, %s281
      %p290 = scmp.eq.s32.totalorder %s32, 7
      %p291 = por %p289, %p290
      %p292 = scmp.ne.s32.totalorder %s281, %s282
      %p293 = scmp.eq.s32.totalorder %s32, 0
      %p294 = por %p292, %p293
      %p295 = scmp.ne.s32.totalorder %s281, %s282
      %p296 = scmp.eq.s32.totalorder %s33, 7
      %p297 = por %p295, %p296
      %p299 = scmp.ne.s32.totalorder %s282, %s298
      %p300 = scmp.eq.s32.totalorder %s33, 0
      %p301 = por %p299, %p300
      %s302 = ssub.s32 %s35, %s42
      %p303 = scmp.eq.s32.totalorder %s302, 0
      %s305 = sadd.s32 %s304, 1
      %s306 = scalar_select %p303, %s304, %s305
      %p309 = pneg %p303
      %p310 = scmp.eq.s32.totalorder %s27, 7
      %p311 = por %p309, %p310
      %p312 = scmp.ne.s32.totalorder %s304, %s307
      %p313 = scmp.eq.s32.totalorder %s27, 0
      %p314 = por %p312, %p313
      %p315 = scmp.ne.s32.totalorder %s304, %s307
      %p316 = scmp.eq.s32.totalorder %s32, 7
      %p317 = por %p315, %p316
      %p318 = scmp.ne.s32.totalorder %s307, %s308
      %p319 = scmp.eq.s32.totalorder %s32, 0
      %p320 = por %p318, %p319
      %p321 = scmp.ne.s32.totalorder %s307, %s308
      %p322 = scmp.eq.s32.totalorder %s33, 7
      %p323 = por %p321, %p322
      %p325 = scmp.ne.s32.totalorder %s308, %s324
      %p326 = scmp.eq.s32.totalorder %s33, 0
      %p327 = por %p325, %p326
      %s328 = ssub.s32 %s35, %s42
      %p329 = scmp.eq.s32.totalorder %s328, 0
      %s331 = sadd.s32 %s330, 1
      %s332 = scalar_select %p329, %s330, %s331
      %p335 = pneg %p329
      %p336 = scmp.eq.s32.totalorder %s27, 7
      %p337 = por %p335, %p336
      %p338 = scmp.ne.s32.totalorder %s330, %s333
      %p339 = scmp.eq.s32.totalorder %s27, 0
      %p340 = por %p338, %p339
      %p341 = scmp.ne.s32.totalorder %s330, %s333
      %p342 = scmp.eq.s32.totalorder %s32, 7
      %p343 = por %p341, %p342
      %p344 = scmp.ne.s32.totalorder %s333, %s334
      %p345 = scmp.eq.s32.totalorder %s32, 0
      %p346 = por %p344, %p345
      %p347 = scmp.ne.s32.totalorder %s333, %s334
      %p348 = scmp.eq.s32.totalorder %s33, 7
      %p349 = por %p347, %p348
      %p351 = scmp.ne.s32.totalorder %s334, %s350
      %p352 = scmp.eq.s32.totalorder %s33, 0
      %p353 = por %p351, %p352
      %s354 = ssub.s32 %s35, %s42
      %p355 = scmp.eq.s32.totalorder %s354, 0
      %s357 = sadd.s32 %s356, 1
      %s358 = scalar_select %p355, %s356, %s357
      %p361 = pneg %p355
      %p362 = scmp.eq.s32.totalorder %s27, 7
      %p363 = por %p361, %p362
      %p364 = scmp.ne.s32.totalorder %s356, %s359
      %p365 = scmp.eq.s32.totalorder %s27, 0
      %p366 = por %p364, %p365
      %p367 = scmp.ne.s32.totalorder %s356, %s359
      %p368 = scmp.eq.s32.totalorder %s32, 7
      %p369 = por %p367, %p368
      %p370 = scmp.ne.s32.totalorder %s359, %s360
      %p371 = scmp.eq.s32.totalorder %s32, 0
      %p372 = por %p370, %p371
      %p373 = scmp.ne.s32.totalorder %s359, %s360
      %p374 = scmp.eq.s32.totalorder %s33, 7
      %p375 = por %p373, %p374
      %p377 = scmp.ne.s32.totalorder %s360, %s376
      %p378 = scmp.eq.s32.totalorder %s33, 0
      %p379 = por %p377, %p378
      %s380 = ssub.s32 %s35, %s42
      %p381 = scmp.eq.s32.totalorder %s380, 0
      %s383 = sadd.s32 %s382, 1
      %s384 = scalar_select %p381, %s382, %s383
      %p387 = pneg %p381
      %p388 = scmp.eq.s32.totalorder %s27, 7
      %p389 = por %p387, %p388
      %p390 = scmp.ne.s32.totalorder %s382, %s385
      %p391 = scmp.eq.s32.totalorder %s27, 0
      %p392 = por %p390, %p391
      %p393 = scmp.ne.s32.totalorder %s382, %s385
      %p394 = scmp.eq.s32.totalorder %s32, 7
      %p395 = por %p393, %p394
      %p396 = scmp.ne.s32.totalorder %s385, %s386
      %p397 = scmp.eq.s32.totalorder %s32, 0
      %p398 = por %p396, %p397
      %p399 = scmp.ne.s32.totalorder %s385, %s386
      %p400 = scmp.eq.s32.totalorder %s33, 7
      %p401 = por %p399, %p400
      %p403 = scmp.ne.s32.totalorder %s386, %s402
      %p404 = scmp.eq.s32.totalorder %s33, 0
      %p405 = por %p403, %p404
      %s406 = ssub.s32 %s34, %s46
      %p407 = scmp.eq.s32.totalorder %s406, 0
      %s409 = sadd.s32 %s408, 1
      %s410 = scalar_select %p407, %s408, %s409
      %p413 = pneg %p407
      %p414 = scmp.eq.s32.totalorder %s27, 7
      %p415 = por %p413, %p414
      %p416 = scmp.ne.s32.totalorder %s408, %s411
      %p417 = scmp.eq.s32.totalorder %s27, 0
      %p418 = por %p416, %p417
      %p419 = scmp.ne.s32.totalorder %s408, %s411
      %p420 = scmp.eq.s32.totalorder %s32, 7
      %p421 = por %p419, %p420
      %p422 = scmp.ne.s32.totalorder %s411, %s412
      %p423 = scmp.eq.s32.totalorder %s32, 0
      %p424 = por %p422, %p423
      %p425 = scmp.ne.s32.totalorder %s411, %s412
      %p426 = scmp.eq.s32.totalorder %s33, 7
      %p427 = por %p425, %p426
      %p429 = scmp.ne.s32.totalorder %s412, %s428
      %p430 = scmp.eq.s32.totalorder %s33, 0
      %p431 = por %p429, %p430
      %p432 = scmp.le.s32.totalorder 1, %s27
      %p433 = scmp.lt.s32.totalorder %s27, 9
      %p434 = pnand %p432, %p433
      %p435 = pneg %p434
      // Predicated region
      $region9: #{tpu_custom_call.1} parent=5 // pred_check
        _
      $region10: #{tpu_custom_call.1} parent=5 // pred_check_branch
        %437 = sbr.rel (%p434) target = $region12
      $region11: #{tpu_custom_call.1} parent=5 // pred_region
        %s438 = ssub.s32 %s27, 1
        // Predicated region
        $region13: #{tpu_custom_call.1} parent=11 // pred_check
          %p439 = pneg %p86
        $region14: #{tpu_custom_call.1} parent=11 // pred_check_branch
          %441 = sbr.rel (%p439) target = $region16
        $region15: #{tpu_custom_call.1} parent=11 // pred_region
          %s443 = ssub.s32 128, 128
          %444 = vsyncadd [#allocation6], %s443
          %s445 = sshll.u32 [#allocation5], 4
          %s446 = int_to_ptr.vmem [resolvable:$true] %s445
          %451 = dma.hbm_to_vmem [thread:$0]  %s1, 128, %s446, [#allocation6], 64, 64, 4
        $region16: #{tpu_custom_call.1} parent=11 // pred_fallthru
          _
      $region12: #{tpu_custom_call.1} parent=5 // pred_fallthru
        _
      %p452 = scmp.lt.s32.totalorder %s27, 8
      // Predicated region
      $region17: #{tpu_custom_call.1} parent=5 // pred_check
        %p453 = pneg %p452
      $region18: #{tpu_custom_call.1} parent=5 // pred_check_branch
        %455 = sbr.rel (%p453) target = $region20
      $region19: #{tpu_custom_call.1} parent=5 // pred_region
        // Predicated region
        $region21: #{tpu_custom_call.1} parent=19 // pred_check
          %p456 = pneg %p59
        $region22: #{tpu_custom_call.1} parent=19 // pred_check_branch
          %458 = sbr.rel (%p456) target = $region24
        $region23: #{tpu_custom_call.1} parent=19 // pred_region
          %s459 = sand.u32 %s27, 1
          %s460 = scalar_lea.sflag [#allocation3], %s459
          %s461 = sand.u32 %s49, 1
          %s462 = smul.addr %s461, 512
          %s463 = scalar_lea.vmem [#allocation2], %s462
          %s464 = smul.u32 16, %s34
          %s466 = ssub.s32 8192, 8192
          %467 = vsyncadd %s460, %s466
          %s468 = smul.addr %s464, 4
          %s469 = smul.addr %s468, 128
          %s470 = scalar_lea.hbm %s0, %s469
          %s471 = sshll.u32 %s463, 4
          %s472 = int_to_ptr.vmem [resolvable:$true] %s471
          %477 = dma.hbm_to_vmem [thread:$0]  %s470, 8192, %s472, %s460, 256, 256, 16
        $region24: #{tpu_custom_call.1} parent=19 // pred_fallthru
          _
        // Predicated region
        $region25: #{tpu_custom_call.1} parent=19 // pred_check
          %p478 = pneg %p106
        $region26: #{tpu_custom_call.1} parent=19 // pred_check_branch
          %480 = sbr.rel (%p478) target = $region28
        $region27: #{tpu_custom_call.1} parent=19 // pred_region
          %p481 = scmp.lt.s32.totalorder %s35, 1
          %s482 = scalar_select %p481, %s35, 1
          %s483 = smul.addr %s482, 2
          %s484 = scalar_lea.vmem %s2, %s483
        $region28: #{tpu_custom_call.1} parent=19 // pred_fallthru
          _
        // Predicated region
        $region29: #{tpu_custom_call.1} parent=19 // pred_check
          %p485 = pneg %p132
        $region30: #{tpu_custom_call.1} parent=19 // pred_check_branch
          %487 = sbr.rel (%p485) target = $region32
        $region31: #{tpu_custom_call.1} parent=19 // pred_region
          %p488 = scmp.lt.s32.totalorder %s35, 1
          %s489 = scalar_select %p488, %s35, 1
          %s490 = smul.addr %s489, 2
          %s491 = scalar_lea.vmem %s3, %s490
        $region32: #{tpu_custom_call.1} parent=19 // pred_fallthru
          _
        // Predicated region
        $region33: #{tpu_custom_call.1} parent=19 // pred_check
          %p492 = pneg %p158
        $region34: #{tpu_custom_call.1} parent=19 // pred_check_branch
          %494 = sbr.rel (%p492) target = $region36
        $region35: #{tpu_custom_call.1} parent=19 // pred_region
          %s495 = sand.u32 %s27, 1
          %s496 = scalar_lea.sflag [#allocation3], %s495
          %s497 = sand.u32 %s148, 1
          %s498 = smul.addr %s497, 1024
          %s499 = scalar_lea.vmem [#allocation7], %s498
          %s501 = ssub.s32 16384, 16384
          %502 = vsyncadd %s496, %s501
          %s503 = smul.addr %s35, 256
          %s504 = smul.addr %s503, 64
          %s505 = scalar_lea.hbm %s4, %s504
          %s506 = sshll.u32 %s499, 4
          %s507 = int_to_ptr.vmem [resolvable:$true] %s506
          %512 = dma.hbm_to_vmem [thread:$0]  %s505, 16384, %s507, %s496, 512, 512, 32
        $region36: #{tpu_custom_call.1} parent=19 // pred_fallthru
          _
        // Predicated region
        $region37: #{tpu_custom_call.1} parent=19 // pred_check
          %p513 = pneg %p184
        $region38: #{tpu_custom_call.1} parent=19 // pred_check_branch
          %515 = sbr.rel (%p513) target = $region40
        $region39: #{tpu_custom_call.1} parent=19 // pred_region
          %s516 = sand.u32 %s27, 1
          %s517 = scalar_lea.sflag [#allocation3], %s516
          %s518 = sand.u32 %s174, 1
          %s519 = smul.addr %s518, 256
          %s520 = scalar_lea.vmem [#allocation8], %s519
          %s522 = ssub.s32 4096, 4096
          %523 = vsyncadd %s517, %s522
          %s524 = smul.addr %s35, 64
          %s525 = smul.addr %s524, 64
          %s526 = scalar_lea.hbm %s5, %s525
          %s527 = sshll.u32 %s520, 4
          %s528 = int_to_ptr.vmem [resolvable:$true] %s527
          %533 = dma.hbm_to_vmem [thread:$0]  %s526, 4096, %s528, %s517, 128, 128, 8
        $region40: #{tpu_custom_call.1} parent=19 // pred_fallthru
          _
        // Predicated region
        $region41: #{tpu_custom_call.1} parent=19 // pred_check
          %p534 = pneg %p210
        $region42: #{tpu_custom_call.1} parent=19 // pred_check_branch
          %536 = sbr.rel (%p534) target = $region44
        $region43: #{tpu_custom_call.1} parent=19 // pred_region
          %s537 = sand.u32 %s27, 1
          %s538 = scalar_lea.sflag [#allocation3], %s537
          %s539 = sand.u32 %s200, 1
          %s540 = smul.addr %s539, 256
          %s541 = scalar_lea.vmem [#allocation9], %s540
          %s543 = ssub.s32 4096, 4096
          %544 = vsyncadd %s538, %s543
          %s545 = smul.addr %s35, 64
          %s546 = smul.addr %s545, 64
          %s547 = scalar_lea.hbm %s6, %s546
          %s548 = sshll.u32 %s541, 4
          %s549 = int_to_ptr.vmem [resolvable:$true] %s548
          %554 = dma.hbm_to_vmem [thread:$0]  %s547, 4096, %s549, %s538, 128, 128, 8
        $region44: #{tpu_custom_call.1} parent=19 // pred_fallthru
          _
        // Predicated region
        $region45: #{tpu_custom_call.1} parent=19 // pred_check
          %p555 = pneg %p236
        $region46: #{tpu_custom_call.1} parent=19 // pred_check_branch
          %557 = sbr.rel (%p555) target = $region48
        $region47: #{tpu_custom_call.1} parent=19 // pred_region
          %p558 = scmp.lt.s32.totalorder %s35, 1
          %s559 = scalar_select %p558, %s35, 1
          %s560 = smul.addr %s559, 2
          %s561 = scalar_lea.vmem %s7, %s560
        $region48: #{tpu_custom_call.1} parent=19 // pred_fallthru
          _
        // Predicated region
        $region49: #{tpu_custom_call.1} parent=19 // pred_check
          %p562 = pneg %p262
        $region50: #{tpu_custom_call.1} parent=19 // pred_check_branch
          %564 = sbr.rel (%p562) target = $region52
        $region51: #{tpu_custom_call.1} parent=19 // pred_region
          %p565 = scmp.lt.s32.totalorder %s35, 1
          %s566 = scalar_select %p565, %s35, 1
          %s567 = smul.addr %s566, 2
          %s568 = scalar_lea.vmem %s8, %s567
        $region52: #{tpu_custom_call.1} parent=19 // pred_fallthru
          _
        // Predicated region
        $region53: #{tpu_custom_call.1} parent=19 // pred_check
          %p569 = pneg %p288
        $region54: #{tpu_custom_call.1} parent=19 // pred_check_branch
          %571 = sbr.rel (%p569) target = $region56
        $region55: #{tpu_custom_call.1} parent=19 // pred_region
          %p572 = scmp.lt.s32.totalorder %s35, 1
          %s573 = scalar_select %p572, %s35, 1
          %s574 = smul.addr %s573, 2
          %s575 = scalar_lea.vmem %s9, %s574
        $region56: #{tpu_custom_call.1} parent=19 // pred_fallthru
          _
        // Predicated region
        $region57: #{tpu_custom_call.1} parent=19 // pred_check
          %p576 = pneg %p314
        $region58: #{tpu_custom_call.1} parent=19 // pred_check_branch
          %578 = sbr.rel (%p576) target = $region60
        $region59: #{tpu_custom_call.1} parent=19 // pred_region
          %s579 = sand.u32 %s27, 1
          %s580 = scalar_lea.sflag [#allocation3], %s579
          %s581 = sand.u32 %s304, 1
          %s582 = smul.addr %s581, 256
          %s583 = scalar_lea.vmem [#allocation10], %s582
          %s585 = ssub.s32 4096, 4096
          %586 = vsyncadd %s580, %s585
          %s587 = smul.addr %s35, 64
          %s588 = smul.addr %s587, 64
          %s589 = scalar_lea.hbm %s10, %s588
          %s590 = sshll.u32 %s583, 4
          %s591 = int_to_ptr.vmem [resolvable:$true] %s590
          %596 = dma.hbm_to_vmem [thread:$0]  %s589, 4096, %s591, %s580, 128, 128, 8
        $region60: #{tpu_custom_call.1} parent=19 // pred_fallthru
          _
        // Predicated region
        $region61: #{tpu_custom_call.1} parent=19 // pred_check
          %p597 = pneg %p340
        $region62: #{tpu_custom_call.1} parent=19 // pred_check_branch
          %599 = sbr.rel (%p597) target = $region64
        $region63: #{tpu_custom_call.1} parent=19 // pred_region
          %p600 = scmp.lt.s32.totalorder %s35, 1
          %s601 = scalar_select %p600, %s35, 1
          %s602 = smul.addr %s601, 2
          %s603 = scalar_lea.vmem %s11, %s602
        $region64: #{tpu_custom_call.1} parent=19 // pred_fallthru
          _
        // Predicated region
        $region65: #{tpu_custom_call.1} parent=19 // pred_check
          %p604 = pneg %p366
        $region66: #{tpu_custom_call.1} parent=19 // pred_check_branch
          %606 = sbr.rel (%p604) target = $region68
        $region67: #{tpu_custom_call.1} parent=19 // pred_region
          %s607 = sand.u32 %s27, 1
          %s608 = scalar_lea.sflag [#allocation3], %s607
          %s609 = sand.u32 %s356, 1
          %s610 = smul.addr %s609, 256
          %s611 = scalar_lea.vmem [#allocation11], %s610
          %s613 = ssub.s32 4096, 4096
          %614 = vsyncadd %s608, %s613
          %s615 = smul.addr %s35, 64
          %s616 = smul.addr %s615, 64
          %s617 = scalar_lea.hbm %s12, %s616
          %s618 = sshll.u32 %s611, 4
          %s619 = int_to_ptr.vmem [resolvable:$true] %s618
          %624 = dma.hbm_to_vmem [thread:$0]  %s617, 4096, %s619, %s608, 128, 128, 8
        $region68: #{tpu_custom_call.1} parent=19 // pred_fallthru
          _
        // Predicated region
        $region69: #{tpu_custom_call.1} parent=19 // pred_check
          %p625 = pneg %p392
        $region70: #{tpu_custom_call.1} parent=19 // pred_check_branch
          %627 = sbr.rel (%p625) target = $region72
        $region71: #{tpu_custom_call.1} parent=19 // pred_region
          %p628 = scmp.lt.s32.totalorder %s35, 1
          %s629 = scalar_select %p628, %s35, 1
          %s630 = smul.addr %s629, 2
          %s631 = scalar_lea.vmem %s13, %s630
        $region72: #{tpu_custom_call.1} parent=19 // pred_fallthru
          _
      $region20: #{tpu_custom_call.1} parent=5 // pred_fallthru
        _
      %p632 = scmp.le.s32.totalorder 1, %s27
      %p633 = scmp.lt.s32.totalorder %s27, 9
      %p634 = pnand %p632, %p633
      %p635 = pneg %p634
      // Predicated region
      $region73: #{tpu_custom_call.1} parent=5 // pred_check
        _
      $region74: #{tpu_custom_call.1} parent=5 // pred_check_branch
        %637 = sbr.rel (%p634) target = $region76
      $region75: #{tpu_custom_call.1} parent=5 // pred_region
        %s638 = ssub.s32 %s27, 1
        %s639 = sand.u32 %s32, 1
        %s640 = scalar_lea.sflag [#allocation3], %s639
        %s641 = sand.u32 %s52, 1
        %s642 = smul.addr %s641, 512
        %s643 = scalar_lea.vmem [#allocation2], %s642
        // Predicated region
        $region77: #{tpu_custom_call.1} parent=75 // pred_check
          %p644 = pneg %p65
        $region78: #{tpu_custom_call.1} parent=75 // pred_check_branch
          %646 = sbr.rel (%p644) target = $region80
        $region79: #{tpu_custom_call.1} parent=75 // pred_region
          %647 = dma.done %s640, 8192
        $region80: #{tpu_custom_call.1} parent=75 // pred_fallthru
          _
        // Predicated region
        $region81: #{tpu_custom_call.1} parent=75 // pred_check
          %p648 = pneg %p86
        $region82: #{tpu_custom_call.1} parent=75 // pred_check_branch
          %650 = sbr.rel (%p648) target = $region84
        $region83: #{tpu_custom_call.1} parent=75 // pred_region
          %651 = dma.done [#allocation6], 128
        $region84: #{tpu_custom_call.1} parent=75 // pred_fallthru
          _
        %s652 = sand.u32 %s32, 1
        %s653 = scalar_lea.sflag [#allocation3], %s652
        %s654 = sand.u32 %s151, 1
        %s655 = smul.addr %s654, 1024
        %s656 = scalar_lea.vmem [#allocation7], %s655
        // Predicated region
        $region85: #{tpu_custom_call.1} parent=75 // pred_check
          %p657 = pneg %p164
        $region86: #{tpu_custom_call.1} parent=75 // pred_check_branch
          %659 = sbr.rel (%p657) target = $region88
        $region87: #{tpu_custom_call.1} parent=75 // pred_region
          %660 = dma.done %s653, 16384
        $region88: #{tpu_custom_call.1} parent=75 // pred_fallthru
          _
        %s661 = sand.u32 %s32, 1
        %s662 = scalar_lea.sflag [#allocation3], %s661
        %s663 = sand.u32 %s177, 1
        %s664 = smul.addr %s663, 256
        %s665 = scalar_lea.vmem [#allocation8], %s664
        // Predicated region
        $region89: #{tpu_custom_call.1} parent=75 // pred_check
          %p666 = pneg %p190
        $region90: #{tpu_custom_call.1} parent=75 // pred_check_branch
          %668 = sbr.rel (%p666) target = $region92
        $region91: #{tpu_custom_call.1} parent=75 // pred_region
          %669 = dma.done %s662, 4096
        $region92: #{tpu_custom_call.1} parent=75 // pred_fallthru
          _
        %s670 = sand.u32 %s32, 1
        %s671 = scalar_lea.sflag [#allocation3], %s670
        %s672 = sand.u32 %s203, 1
        %s673 = smul.addr %s672, 256
        %s674 = scalar_lea.vmem [#allocation9], %s673
        // Predicated region
        $region93: #{tpu_custom_call.1} parent=75 // pred_check
          %p675 = pneg %p216
        $region94: #{tpu_custom_call.1} parent=75 // pred_check_branch
          %677 = sbr.rel (%p675) target = $region96
        $region95: #{tpu_custom_call.1} parent=75 // pred_region
          %678 = dma.done %s671, 4096
        $region96: #{tpu_custom_call.1} parent=75 // pred_fallthru
          _
        %s679 = sand.u32 %s32, 1
        %s680 = scalar_lea.sflag [#allocation3], %s679
        %s681 = sand.u32 %s307, 1
        %s682 = smul.addr %s681, 256
        %s683 = scalar_lea.vmem [#allocation10], %s682
        // Predicated region
        $region97: #{tpu_custom_call.1} parent=75 // pred_check
          %p684 = pneg %p320
        $region98: #{tpu_custom_call.1} parent=75 // pred_check_branch
          %686 = sbr.rel (%p684) target = $region100
        $region99: #{tpu_custom_call.1} parent=75 // pred_region
          %687 = dma.done %s680, 4096
        $region100: #{tpu_custom_call.1} parent=75 // pred_fallthru
          _
        %s688 = sand.u32 %s32, 1
        %s689 = scalar_lea.sflag [#allocation3], %s688
        %s690 = sand.u32 %s359, 1
        %s691 = smul.addr %s690, 256
        %s692 = scalar_lea.vmem [#allocation11], %s691
        // Predicated region
        $region101: #{tpu_custom_call.1} parent=75 // pred_check
          %p693 = pneg %p372
        $region102: #{tpu_custom_call.1} parent=75 // pred_check_branch
          %695 = sbr.rel (%p693) target = $region104
        $region103: #{tpu_custom_call.1} parent=75 // pred_region
          %696 = dma.done %s689, 4096
        $region104: #{tpu_custom_call.1} parent=75 // pred_fallthru
          _
        %s697 = sand.u32 %s32, 1
        %s698 = scalar_lea.sflag [#allocation3], %s697
        %s699 = sand.u32 %s52, 1
        %s700 = smul.addr %s699, 512
        %s701 = scalar_lea.vmem [#allocation2], %s700
        %p702 = pneg %p65
        %p703 = pneg %p62
        %p704 = pneg %p86
        %p705 = pneg %p83
        %p706 = scmp.lt.s32.totalorder %s37, 1
        %s707 = scalar_select %p706, %s37, 1
        %s708 = smul.addr %s707, 2
        %s709 = scalar_lea.vmem %s2, %s708
        %p710 = pneg %p112
        %p711 = pneg %p109
        %p712 = scmp.lt.s32.totalorder %s37, 1
        %s713 = scalar_select %p712, %s37, 1
        %s714 = smul.addr %s713, 2
        %s715 = scalar_lea.vmem %s3, %s714
        %p716 = pneg %p138
        %p717 = pneg %p135
        %s718 = sand.u32 %s32, 1
        %s719 = scalar_lea.sflag [#allocation3], %s718
        %s720 = sand.u32 %s151, 1
        %s721 = smul.addr %s720, 1024
        %s722 = scalar_lea.vmem [#allocation7], %s721
        %p723 = pneg %p164
        %p724 = pneg %p161
        %s725 = sand.u32 %s32, 1
        %s726 = scalar_lea.sflag [#allocation3], %s725
        %s727 = sand.u32 %s177, 1
        %s728 = smul.addr %s727, 256
        %s729 = scalar_lea.vmem [#allocation8], %s728
        %p730 = pneg %p190
        %p731 = pneg %p187
        %s732 = sand.u32 %s32, 1
        %s733 = scalar_lea.sflag [#allocation3], %s732
        %s734 = sand.u32 %s203, 1
        %s735 = smul.addr %s734, 256
        %s736 = scalar_lea.vmem [#allocation9], %s735
        %p737 = pneg %p216
        %p738 = pneg %p213
        %p739 = scmp.lt.s32.totalorder %s37, 1
        %s740 = scalar_select %p739, %s37, 1
        %s741 = smul.addr %s740, 2
        %s742 = scalar_lea.vmem %s7, %s741
        %p743 = pneg %p242
        %p744 = pneg %p239
        %p745 = scmp.lt.s32.totalorder %s37, 1
        %s746 = scalar_select %p745, %s37, 1
        %s747 = smul.addr %s746, 2
        %s748 = scalar_lea.vmem %s8, %s747
        %p749 = pneg %p268
        %p750 = pneg %p265
        %p751 = scmp.lt.s32.totalorder %s37, 1
        %s752 = scalar_select %p751, %s37, 1
        %s753 = smul.addr %s752, 2
        %s754 = scalar_lea.vmem %s9, %s753
        %p755 = pneg %p294
        %p756 = pneg %p291
        %s757 = sand.u32 %s32, 1
        %s758 = scalar_lea.sflag [#allocation3], %s757
        %s759 = sand.u32 %s307, 1
        %s760 = smul.addr %s759, 256
        %s761 = scalar_lea.vmem [#allocation10], %s760
        %p762 = pneg %p320
        %p763 = pneg %p317
        %p764 = scmp.lt.s32.totalorder %s37, 1
        %s765 = scalar_select %p764, %s37, 1
        %s766 = smul.addr %s765, 2
        %s767 = scalar_lea.vmem %s11, %s766
        %p768 = pneg %p346
        %p769 = pneg %p343
        %s770 = sand.u32 %s32, 1
        %s771 = scalar_lea.sflag [#allocation3], %s770
        %s772 = sand.u32 %s359, 1
        %s773 = smul.addr %s772, 256
        %s774 = scalar_lea.vmem [#allocation11], %s773
        %p775 = pneg %p372
        %p776 = pneg %p369
        %p777 = scmp.lt.s32.totalorder %s37, 1
        %s778 = scalar_select %p777, %s37, 1
        %s779 = smul.addr %s778, 2
        %s780 = scalar_lea.vmem %s13, %s779
        %p781 = pneg %p398
        %p782 = pneg %p395
        %p783 = pneg %p424
        %p784 = pneg %p421
        %s785 = sand.u32 %s411, 1
        %s786 = scalar_lea.sflag [#allocation4], %s785
        %s787 = sand.u32 %s411, 1
        %s788 = smul.addr %s787, 512
        %s789 = scalar_lea.vmem [#allocation12], %s788
        %s790 = smul.u32 16, %s36
        %p791 = scmp.lt.s32.totalorder %s37, 1
        %s792 = scalar_select %p791, %s37, 1
        %s793 = smul.addr %s792, 2
        %s794 = scalar_lea.vmem %s2, %s793
        %p795 = scmp.lt.s32.totalorder %s37, 1
        %s796 = scalar_select %p795, %s37, 1
        %s797 = smul.addr %s796, 2
        %s798 = scalar_lea.vmem %s3, %s797
        %p799 = scmp.lt.s32.totalorder %s37, 1
        %s800 = scalar_select %p799, %s37, 1
        %s801 = smul.addr %s800, 2
        %s802 = scalar_lea.vmem %s7, %s801
        %p803 = scmp.lt.s32.totalorder %s37, 1
        %s804 = scalar_select %p803, %s37, 1
        %s805 = smul.addr %s804, 2
        %s806 = scalar_lea.vmem %s8, %s805
        %p807 = scmp.lt.s32.totalorder %s37, 1
        %s808 = scalar_select %p807, %s37, 1
        %s809 = smul.addr %s808, 2
        %s810 = scalar_lea.vmem %s9, %s809
        %p811 = scmp.lt.s32.totalorder %s37, 1
        %s812 = scalar_select %p811, %s37, 1
        %s813 = smul.addr %s812, 2
        %s814 = scalar_lea.vmem %s11, %s813
        %p815 = scmp.lt.s32.totalorder %s37, 1
        %s816 = scalar_select %p815, %s37, 1
        %s817 = smul.addr %s816, 2
        %s818 = scalar_lea.vmem %s13, %s817
        %s819 = smul.u32 16, %s36
        %p821 = scmp.eq.s32.totalorder %s37, 0
        // Predicated region
        $region105: #{tpu_custom_call.1} parent=75 // pred_check
          %p822 = pneg %p821
        $region106: #{tpu_custom_call.1} parent=75 // pred_check_branch
          %824 = sbr.rel (%p822) target = $region108
        $region107: #{tpu_custom_call.1} parent=75 // pred_region
          %v825 = vld [vmem:[%s643] sm:$0xff]
          %v826 = vld [vmem:[%s643 + $0x8] sm:$0xff]
          %v827 = vld [vmem:[%s643 + $0x10] sm:$0xff]
          %v828 = vld [vmem:[%s643 + $0x18] sm:$0xff]
          %v829 = vld [vmem:[%s643 + $0x20] sm:$0xff]
          %v830 = vld [vmem:[%s643 + $0x28] sm:$0xff]
          %v831 = vld [vmem:[%s643 + $0x30] sm:$0xff]
          %v832 = vld [vmem:[%s643 + $0x38] sm:$0xff]
          %v833 = vld [vmem:[%s643 + $0x40] sm:$0xff]
          %v834 = vld [vmem:[%s643 + $0x48] sm:$0xff]
          %v835 = vld [vmem:[%s643 + $0x50] sm:$0xff]
          %v836 = vld [vmem:[%s643 + $0x58] sm:$0xff]
          %v837 = vld [vmem:[%s643 + $0x60] sm:$0xff]
          %v838 = vld [vmem:[%s643 + $0x68] sm:$0xff]
          %v839 = vld [vmem:[%s643 + $0x70] sm:$0xff]
          %v840 = vld [vmem:[%s643 + $0x78] sm:$0xff]
          %v841 = vld [vmem:[%s643 + $0x80] sm:$0xff]
          %v842 = vld [vmem:[%s643 + $0x88] sm:$0xff]
          %v843 = vld [vmem:[%s643 + $0x90] sm:$0xff]
          %v844 = vld [vmem:[%s643 + $0x98] sm:$0xff]
          %v845 = vld [vmem:[%s643 + $0xa0] sm:$0xff]
          %v846 = vld [vmem:[%s643 + $0xa8] sm:$0xff]
          %v847 = vld [vmem:[%s643 + $0xb0] sm:$0xff]
          %v848 = vld [vmem:[%s643 + $0xb8] sm:$0xff]
          %v849 = vld [vmem:[%s643 + $0xc0] sm:$0xff]
          %v850 = vld [vmem:[%s643 + $0xc8] sm:$0xff]
          %v851 = vld [vmem:[%s643 + $0xd0] sm:$0xff]
          %v852 = vld [vmem:[%s643 + $0xd8] sm:$0xff]
          %v853 = vld [vmem:[%s643 + $0xe0] sm:$0xff]
          %v854 = vld [vmem:[%s643 + $0xe8] sm:$0xff]
          %v855 = vld [vmem:[%s643 + $0xf0] sm:$0xff]
          %v856 = vld [vmem:[%s643 + $0xf8] sm:$0xff]
          %v857 = vld [vmem:[%s643 + $0x100] sm:$0xff]
          %v858 = vld [vmem:[%s643 + $0x108] sm:$0xff]
          %v859 = vld [vmem:[%s643 + $0x110] sm:$0xff]
          %v860 = vld [vmem:[%s643 + $0x118] sm:$0xff]
          %v861 = vld [vmem:[%s643 + $0x120] sm:$0xff]
          %v862 = vld [vmem:[%s643 + $0x128] sm:$0xff]
          %v863 = vld [vmem:[%s643 + $0x130] sm:$0xff]
          %v864 = vld [vmem:[%s643 + $0x138] sm:$0xff]
          %v865 = vld [vmem:[%s643 + $0x140] sm:$0xff]
          %v866 = vld [vmem:[%s643 + $0x148] sm:$0xff]
          %v867 = vld [vmem:[%s643 + $0x150] sm:$0xff]
          %v868 = vld [vmem:[%s643 + $0x158] sm:$0xff]
          %v869 = vld [vmem:[%s643 + $0x160] sm:$0xff]
          %v870 = vld [vmem:[%s643 + $0x168] sm:$0xff]
          %v871 = vld [vmem:[%s643 + $0x170] sm:$0xff]
          %v872 = vld [vmem:[%s643 + $0x178] sm:$0xff]
          %v873 = vld [vmem:[%s643 + $0x180] sm:$0xff]
          %v874 = vld [vmem:[%s643 + $0x188] sm:$0xff]
          %v875 = vld [vmem:[%s643 + $0x190] sm:$0xff]
          %v876 = vld [vmem:[%s643 + $0x198] sm:$0xff]
          %v877 = vld [vmem:[%s643 + $0x1a0] sm:$0xff]
          %v878 = vld [vmem:[%s643 + $0x1a8] sm:$0xff]
          %v879 = vld [vmem:[%s643 + $0x1b0] sm:$0xff]
          %v880 = vld [vmem:[%s643 + $0x1b8] sm:$0xff]
          %v881 = vld [vmem:[%s643 + $0x1c0] sm:$0xff]
          %v882 = vld [vmem:[%s643 + $0x1c8] sm:$0xff]
          %v883 = vld [vmem:[%s643 + $0x1d0] sm:$0xff]
          %v884 = vld [vmem:[%s643 + $0x1d8] sm:$0xff]
          %v885 = vld [vmem:[%s643 + $0x1e0] sm:$0xff]
          %v886 = vld [vmem:[%s643 + $0x1e8] sm:$0xff]
          %v887 = vld [vmem:[%s643 + $0x1f0] sm:$0xff]
          %v888 = vld [vmem:[%s643 + $0x1f8] sm:$0xff]
          %889 = vst [vmem:[%s789] sm:$0xff] %v825
          %890 = vst [vmem:[%s789 + $0x8] sm:$0xff] %v826
          %891 = vst [vmem:[%s789 + $0x10] sm:$0xff] %v827
          %892 = vst [vmem:[%s789 + $0x18] sm:$0xff] %v828
          %893 = vst [vmem:[%s789 + $0x20] sm:$0xff] %v829
          %894 = vst [vmem:[%s789 + $0x28] sm:$0xff] %v830
          %895 = vst [vmem:[%s789 + $0x30] sm:$0xff] %v831
          %896 = vst [vmem:[%s789 + $0x38] sm:$0xff] %v832
          %897 = vst [vmem:[%s789 + $0x40] sm:$0xff] %v833
          %898 = vst [vmem:[%s789 + $0x48] sm:$0xff] %v834
          %899 = vst [vmem:[%s789 + $0x50] sm:$0xff] %v835
          %900 = vst [vmem:[%s789 + $0x58] sm:$0xff] %v836
          %901 = vst [vmem:[%s789 + $0x60] sm:$0xff] %v837
          %902 = vst [vmem:[%s789 + $0x68] sm:$0xff] %v838
          %903 = vst [vmem:[%s789 + $0x70] sm:$0xff] %v839
          %904 = vst [vmem:[%s789 + $0x78] sm:$0xff] %v840
          %905 = vst [vmem:[%s789 + $0x80] sm:$0xff] %v841
          %906 = vst [vmem:[%s789 + $0x88] sm:$0xff] %v842
          %907 = vst [vmem:[%s789 + $0x90] sm:$0xff] %v843
          %908 = vst [vmem:[%s789 + $0x98] sm:$0xff] %v844
          %909 = vst [vmem:[%s789 + $0xa0] sm:$0xff] %v845
          %910 = vst [vmem:[%s789 + $0xa8] sm:$0xff] %v846
          %911 = vst [vmem:[%s789 + $0xb0] sm:$0xff] %v847
          %912 = vst [vmem:[%s789 + $0xb8] sm:$0xff] %v848
          %913 = vst [vmem:[%s789 + $0xc0] sm:$0xff] %v849
          %914 = vst [vmem:[%s789 + $0xc8] sm:$0xff] %v850
          %915 = vst [vmem:[%s789 + $0xd0] sm:$0xff] %v851
          %916 = vst [vmem:[%s789 + $0xd8] sm:$0xff] %v852
          %917 = vst [vmem:[%s789 + $0xe0] sm:$0xff] %v853
          %918 = vst [vmem:[%s789 + $0xe8] sm:$0xff] %v854
          %919 = vst [vmem:[%s789 + $0xf0] sm:$0xff] %v855
          %920 = vst [vmem:[%s789 + $0xf8] sm:$0xff] %v856
          %921 = vst [vmem:[%s789 + $0x100] sm:$0xff] %v857
          %922 = vst [vmem:[%s789 + $0x108] sm:$0xff] %v858
          %923 = vst [vmem:[%s789 + $0x110] sm:$0xff] %v859
          %924 = vst [vmem:[%s789 + $0x118] sm:$0xff] %v860
          %925 = vst [vmem:[%s789 + $0x120] sm:$0xff] %v861
          %926 = vst [vmem:[%s789 + $0x128] sm:$0xff] %v862
          %927 = vst [vmem:[%s789 + $0x130] sm:$0xff] %v863
          %928 = vst [vmem:[%s789 + $0x138] sm:$0xff] %v864
          %929 = vst [vmem:[%s789 + $0x140] sm:$0xff] %v865
          %930 = vst [vmem:[%s789 + $0x148] sm:$0xff] %v866
          %931 = vst [vmem:[%s789 + $0x150] sm:$0xff] %v867
          %932 = vst [vmem:[%s789 + $0x158] sm:$0xff] %v868
          %933 = vst [vmem:[%s789 + $0x160] sm:$0xff] %v869
          %934 = vst [vmem:[%s789 + $0x168] sm:$0xff] %v870
          %935 = vst [vmem:[%s789 + $0x170] sm:$0xff] %v871
          %936 = vst [vmem:[%s789 + $0x178] sm:$0xff] %v872
          %937 = vst [vmem:[%s789 + $0x180] sm:$0xff] %v873
          %938 = vst [vmem:[%s789 + $0x188] sm:$0xff] %v874
          %939 = vst [vmem:[%s789 + $0x190] sm:$0xff] %v875
          %940 = vst [vmem:[%s789 + $0x198] sm:$0xff] %v876
          %941 = vst [vmem:[%s789 + $0x1a0] sm:$0xff] %v877
          %942 = vst [vmem:[%s789 + $0x1a8] sm:$0xff] %v878
          %943 = vst [vmem:[%s789 + $0x1b0] sm:$0xff] %v879
          %944 = vst [vmem:[%s789 + $0x1b8] sm:$0xff] %v880
          %945 = vst [vmem:[%s789 + $0x1c0] sm:$0xff] %v881
          %946 = vst [vmem:[%s789 + $0x1c8] sm:$0xff] %v882
          %947 = vst [vmem:[%s789 + $0x1d0] sm:$0xff] %v883
          %948 = vst [vmem:[%s789 + $0x1d8] sm:$0xff] %v884
          %949 = vst [vmem:[%s789 + $0x1e0] sm:$0xff] %v885
          %950 = vst [vmem:[%s789 + $0x1e8] sm:$0xff] %v886
          %951 = vst [vmem:[%s789 + $0x1f0] sm:$0xff] %v887
          %952 = vst [vmem:[%s789 + $0x1f8] sm:$0xff] %v888
        $region108: #{tpu_custom_call.1} parent=75 // pred_fallthru
          _
        %v953 = vld [vmem:[%s789] sm:$0xff]
        %v954 = vld [vmem:[%s789 + $0x8] sm:$0xff]
        %v955 = vld [vmem:[%s789 + $0x10] sm:$0xff]
        %v956 = vld [vmem:[%s789 + $0x18] sm:$0xff]
        %v957 = vld [vmem:[%s789 + $0x20] sm:$0xff]
        %v958 = vld [vmem:[%s789 + $0x28] sm:$0xff]
        %v959 = vld [vmem:[%s789 + $0x30] sm:$0xff]
        %v960 = vld [vmem:[%s789 + $0x38] sm:$0xff]
        %v961 = vld [vmem:[%s789 + $0x40] sm:$0xff]
        %v962 = vld [vmem:[%s789 + $0x48] sm:$0xff]
        %v963 = vld [vmem:[%s789 + $0x50] sm:$0xff]
        %v964 = vld [vmem:[%s789 + $0x58] sm:$0xff]
        %v965 = vld [vmem:[%s789 + $0x60] sm:$0xff]
        %v966 = vld [vmem:[%s789 + $0x68] sm:$0xff]
        %v967 = vld [vmem:[%s789 + $0x70] sm:$0xff]
        %v968 = vld [vmem:[%s789 + $0x78] sm:$0xff]
        %v969 = vld [vmem:[%s789 + $0x80] sm:$0xff]
        %v970 = vld [vmem:[%s789 + $0x88] sm:$0xff]
        %v971 = vld [vmem:[%s789 + $0x90] sm:$0xff]
        %v972 = vld [vmem:[%s789 + $0x98] sm:$0xff]
        %v973 = vld [vmem:[%s789 + $0xa0] sm:$0xff]
        %v974 = vld [vmem:[%s789 + $0xa8] sm:$0xff]
        %v975 = vld [vmem:[%s789 + $0xb0] sm:$0xff]
        %v976 = vld [vmem:[%s789 + $0xb8] sm:$0xff]
        %v977 = vld [vmem:[%s789 + $0xc0] sm:$0xff]
        %v978 = vld [vmem:[%s789 + $0xc8] sm:$0xff]
        %v979 = vld [vmem:[%s789 + $0xd0] sm:$0xff]
        %v980 = vld [vmem:[%s789 + $0xd8] sm:$0xff]
        %v981 = vld [vmem:[%s789 + $0xe0] sm:$0xff]
        %v982 = vld [vmem:[%s789 + $0xe8] sm:$0xff]
        %v983 = vld [vmem:[%s789 + $0xf0] sm:$0xff]
        %v984 = vld [vmem:[%s789 + $0xf8] sm:$0xff]
        %v985 = vld [vmem:[%s789 + $0x100] sm:$0xff]
        %v986 = vld [vmem:[%s789 + $0x108] sm:$0xff]
        %v987 = vld [vmem:[%s789 + $0x110] sm:$0xff]
        %v988 = vld [vmem:[%s789 + $0x118] sm:$0xff]
        %v989 = vld [vmem:[%s789 + $0x120] sm:$0xff]
        %v990 = vld [vmem:[%s789 + $0x128] sm:$0xff]
        %v991 = vld [vmem:[%s789 + $0x130] sm:$0xff]
        %v992 = vld [vmem:[%s789 + $0x138] sm:$0xff]
        %v993 = vld [vmem:[%s789 + $0x140] sm:$0xff]
        %v994 = vld [vmem:[%s789 + $0x148] sm:$0xff]
        %v995 = vld [vmem:[%s789 + $0x150] sm:$0xff]
        %v996 = vld [vmem:[%s789 + $0x158] sm:$0xff]
        %v997 = vld [vmem:[%s789 + $0x160] sm:$0xff]
        %v998 = vld [vmem:[%s789 + $0x168] sm:$0xff]
        %v999 = vld [vmem:[%s789 + $0x170] sm:$0xff]
        %v1000 = vld [vmem:[%s789 + $0x178] sm:$0xff]
        %v1001 = vld [vmem:[%s789 + $0x180] sm:$0xff]
        %v1002 = vld [vmem:[%s789 + $0x188] sm:$0xff]
        %v1003 = vld [vmem:[%s789 + $0x190] sm:$0xff]
        %v1004 = vld [vmem:[%s789 + $0x198] sm:$0xff]
        %v1005 = vld [vmem:[%s789 + $0x1a0] sm:$0xff]
        %v1006 = vld [vmem:[%s789 + $0x1a8] sm:$0xff]
        %v1007 = vld [vmem:[%s789 + $0x1b0] sm:$0xff]
        %v1008 = vld [vmem:[%s789 + $0x1b8] sm:$0xff]
        %v1009 = vld [vmem:[%s789 + $0x1c0] sm:$0xff]
        %v1010 = vld [vmem:[%s789 + $0x1c8] sm:$0xff]
        %v1011 = vld [vmem:[%s789 + $0x1d0] sm:$0xff]
        %v1012 = vld [vmem:[%s789 + $0x1d8] sm:$0xff]
        %v1013 = vld [vmem:[%s789 + $0x1e0] sm:$0xff]
        %v1014 = vld [vmem:[%s789 + $0x1e8] sm:$0xff]
        %v1015 = vld [vmem:[%s789 + $0x1f0] sm:$0xff]
        %v1016 = vld [vmem:[%s789 + $0x1f8] sm:$0xff]
        %v1017 = vld [vmem:[%s794] sm:$0x3]
        %v1018 = vld [vmem:[%s798] sm:$0x3]
        %v1019 = vadd.f32 %v953, %v954
        %1020 = vadd.xlane.f32.xlu0 %v1019
        %v1021 = vpop.xlane.xlu0 %1020
        %v1022 = vadd.f32 %v955, %v956
        %1023 = vadd.xlane.f32.xlu0 %v1022
        %v1024 = vpop.xlane.xlu0 %1023
        %v1025 = vadd.f32 %v957, %v958
        %1026 = vadd.xlane.f32.xlu0 %v1025
        %v1027 = vpop.xlane.xlu0 %1026
        %v1028 = vadd.f32 %v959, %v960
        %1029 = vadd.xlane.f32.xlu0 %v1028
        %v1030 = vpop.xlane.xlu0 %1029
        %v1031 = vadd.f32 %v961, %v962
        %1032 = vadd.xlane.f32.xlu0 %v1031
        %v1033 = vpop.xlane.xlu0 %1032
        %v1034 = vadd.f32 %v963, %v964
        %1035 = vadd.xlane.f32.xlu0 %v1034
        %v1036 = vpop.xlane.xlu0 %1035
        %v1037 = vadd.f32 %v965, %v966
        %1038 = vadd.xlane.f32.xlu0 %v1037
        %v1039 = vpop.xlane.xlu0 %1038
        %v1040 = vadd.f32 %v967, %v968
        %1041 = vadd.xlane.f32.xlu0 %v1040
        %v1042 = vpop.xlane.xlu0 %1041
        %v1043 = vadd.f32 %v969, %v970
        %1044 = vadd.xlane.f32.xlu0 %v1043
        %v1045 = vpop.xlane.xlu0 %1044
        %v1046 = vadd.f32 %v971, %v972
        %1047 = vadd.xlane.f32.xlu0 %v1046
        %v1048 = vpop.xlane.xlu0 %1047
        %v1049 = vadd.f32 %v973, %v974
        %1050 = vadd.xlane.f32.xlu0 %v1049
        %v1051 = vpop.xlane.xlu0 %1050
        %v1052 = vadd.f32 %v975, %v976
        %1053 = vadd.xlane.f32.xlu0 %v1052
        %v1054 = vpop.xlane.xlu0 %1053
        %v1055 = vadd.f32 %v977, %v978
        %1056 = vadd.xlane.f32.xlu0 %v1055
        %v1057 = vpop.xlane.xlu0 %1056
        %v1058 = vadd.f32 %v979, %v980
        %1059 = vadd.xlane.f32.xlu0 %v1058
        %v1060 = vpop.xlane.xlu0 %1059
        %v1061 = vadd.f32 %v981, %v982
        %1062 = vadd.xlane.f32.xlu0 %v1061
        %v1063 = vpop.xlane.xlu0 %1062
        %v1064 = vadd.f32 %v983, %v984
        %1065 = vadd.xlane.f32.xlu0 %v1064
        %v1066 = vpop.xlane.xlu0 %1065
        %v1067 = vadd.f32 %v985, %v986
        %1068 = vadd.xlane.f32.xlu0 %v1067
        %v1069 = vpop.xlane.xlu0 %1068
        %v1070 = vadd.f32 %v987, %v988
        %1071 = vadd.xlane.f32.xlu0 %v1070
        %v1072 = vpop.xlane.xlu0 %1071
        %v1073 = vadd.f32 %v989, %v990
        %1074 = vadd.xlane.f32.xlu0 %v1073
        %v1075 = vpop.xlane.xlu0 %1074
        %v1076 = vadd.f32 %v991, %v992
        %1077 = vadd.xlane.f32.xlu0 %v1076
        %v1078 = vpop.xlane.xlu0 %1077
        %v1079 = vadd.f32 %v993, %v994
        %1080 = vadd.xlane.f32.xlu0 %v1079
        %v1081 = vpop.xlane.xlu0 %1080
        %v1082 = vadd.f32 %v995, %v996
        %1083 = vadd.xlane.f32.xlu0 %v1082
        %v1084 = vpop.xlane.xlu0 %1083
        %v1085 = vadd.f32 %v997, %v998
        %1086 = vadd.xlane.f32.xlu0 %v1085
        %v1087 = vpop.xlane.xlu0 %1086
        %v1088 = vadd.f32 %v999, %v1000
        %1089 = vadd.xlane.f32.xlu0 %v1088
        %v1090 = vpop.xlane.xlu0 %1089
        %v1091 = vadd.f32 %v1001, %v1002
        %1092 = vadd.xlane.f32.xlu0 %v1091
        %v1093 = vpop.xlane.xlu0 %1092
        %v1094 = vadd.f32 %v1003, %v1004
        %1095 = vadd.xlane.f32.xlu0 %v1094
        %v1096 = vpop.xlane.xlu0 %1095
        %v1097 = vadd.f32 %v1005, %v1006
        %1098 = vadd.xlane.f32.xlu0 %v1097
        %v1099 = vpop.xlane.xlu0 %1098
        %v1100 = vadd.f32 %v1007, %v1008
        %1101 = vadd.xlane.f32.xlu0 %v1100
        %v1102 = vpop.xlane.xlu0 %1101
        %v1103 = vadd.f32 %v1009, %v1010
        %1104 = vadd.xlane.f32.xlu0 %v1103
        %v1105 = vpop.xlane.xlu0 %1104
        %v1106 = vadd.f32 %v1011, %v1012
        %1107 = vadd.xlane.f32.xlu0 %v1106
        %v1108 = vpop.xlane.xlu0 %1107
        %v1109 = vadd.f32 %v1013, %v1014
        %1110 = vadd.xlane.f32.xlu0 %v1109
        %v1111 = vpop.xlane.xlu0 %1110
        %v1112 = vadd.f32 %v1015, %v1016
        %1113 = vadd.xlane.f32.xlu0 %v1112
        %v1114 = vpop.xlane.xlu0 %1113
        %v1115 = vrcp.pop 256.0
        %v1116 = vmul.f32 %v1021, %v1115
        %v1117 = vmul.f32 %v1024, %v1115
        %v1118 = vmul.f32 %v1027, %v1115
        %v1119 = vmul.f32 %v1030, %v1115
        %v1120 = vmul.f32 %v1033, %v1115
        %v1121 = vmul.f32 %v1036, %v1115
        %v1122 = vmul.f32 %v1039, %v1115
        %v1123 = vmul.f32 %v1042, %v1115
        %v1124 = vmul.f32 %v1045, %v1115
        %v1125 = vmul.f32 %v1048, %v1115
        %v1126 = vmul.f32 %v1051, %v1115
        %v1127 = vmul.f32 %v1054, %v1115
        %v1128 = vmul.f32 %v1057, %v1115
        %v1129 = vmul.f32 %v1060, %v1115
        %v1130 = vmul.f32 %v1063, %v1115
        %v1131 = vmul.f32 %v1066, %v1115
        %v1132 = vmul.f32 %v1069, %v1115
        %v1133 = vmul.f32 %v1072, %v1115
        %v1134 = vmul.f32 %v1075, %v1115
        %v1135 = vmul.f32 %v1078, %v1115
        %v1136 = vmul.f32 %v1081, %v1115
        %v1137 = vmul.f32 %v1084, %v1115
        %v1138 = vmul.f32 %v1087, %v1115
        %v1139 = vmul.f32 %v1090, %v1115
        %v1140 = vmul.f32 %v1093, %v1115
        %v1141 = vmul.f32 %v1096, %v1115
        %v1142 = vmul.f32 %v1099, %v1115
        %v1143 = vmul.f32 %v1102, %v1115
        %v1144 = vmul.f32 %v1105, %v1115
        %v1145 = vmul.f32 %v1108, %v1115
        %v1146 = vmul.f32 %v1111, %v1115
        %v1147 = vmul.f32 %v1114, %v1115
        %v1148 = vsub.f32 %v953, %v1116
        %v1149 = vsub.f32 %v954, %v1116
        %v1150 = vsub.f32 %v955, %v1117
        %v1151 = vsub.f32 %v956, %v1117
        %v1152 = vsub.f32 %v957, %v1118
        %v1153 = vsub.f32 %v958, %v1118
        %v1154 = vsub.f32 %v959, %v1119
        %v1155 = vsub.f32 %v960, %v1119
        %v1156 = vsub.f32 %v961, %v1120
        %v1157 = vsub.f32 %v962, %v1120
        %v1158 = vsub.f32 %v963, %v1121
        %v1159 = vsub.f32 %v964, %v1121
        %v1160 = vsub.f32 %v965, %v1122
        %v1161 = vsub.f32 %v966, %v1122
        %v1162 = vsub.f32 %v967, %v1123
        %v1163 = vsub.f32 %v968, %v1123
        %v1164 = vsub.f32 %v969, %v1124
        %v1165 = vsub.f32 %v970, %v1124
        %v1166 = vsub.f32 %v971, %v1125
        %v1167 = vsub.f32 %v972, %v1125
        %v1168 = vsub.f32 %v973, %v1126
        %v1169 = vsub.f32 %v974, %v1126
        %v1170 = vsub.f32 %v975, %v1127
        %v1171 = vsub.f32 %v976, %v1127
        %v1172 = vsub.f32 %v977, %v1128
        %v1173 = vsub.f32 %v978, %v1128
        %v1174 = vsub.f32 %v979, %v1129
        %v1175 = vsub.f32 %v980, %v1129
        %v1176 = vsub.f32 %v981, %v1130
        %v1177 = vsub.f32 %v982, %v1130
        %v1178 = vsub.f32 %v983, %v1131
        %v1179 = vsub.f32 %v984, %v1131
        %v1180 = vsub.f32 %v985, %v1132
        %v1181 = vsub.f32 %v986, %v1132
        %v1182 = vsub.f32 %v987, %v1133
        %v1183 = vsub.f32 %v988, %v1133
        %v1184 = vsub.f32 %v989, %v1134
        %v1185 = vsub.f32 %v990, %v1134
        %v1186 = vsub.f32 %v991, %v1135
        %v1187 = vsub.f32 %v992, %v1135
        %v1188 = vsub.f32 %v993, %v1136
        %v1189 = vsub.f32 %v994, %v1136
        %v1190 = vsub.f32 %v995, %v1137
        %v1191 = vsub.f32 %v996, %v1137
        %v1192 = vsub.f32 %v997, %v1138
        %v1193 = vsub.f32 %v998, %v1138
        %v1194 = vsub.f32 %v999, %v1139
        %v1195 = vsub.f32 %v1000, %v1139
        %v1196 = vsub.f32 %v1001, %v1140
        %v1197 = vsub.f32 %v1002, %v1140
        %v1198 = vsub.f32 %v1003, %v1141
        %v1199 = vsub.f32 %v1004, %v1141
        %v1200 = vsub.f32 %v1005, %v1142
        %v1201 = vsub.f32 %v1006, %v1142
        %v1202 = vsub.f32 %v1007, %v1143
        %v1203 = vsub.f32 %v1008, %v1143
        %v1204 = vsub.f32 %v1009, %v1144
        %v1205 = vsub.f32 %v1010, %v1144
        %v1206 = vsub.f32 %v1011, %v1145
        %v1207 = vsub.f32 %v1012, %v1145
        %v1208 = vsub.f32 %v1013, %v1146
        %v1209 = vsub.f32 %v1014, %v1146
        %v1210 = vsub.f32 %v1015, %v1147
        %v1211 = vsub.f32 %v1016, %v1147
        %v1212 = vmul.f32 %v1148, %v1148
        %v1213 = vmul.f32 %v1149, %v1149
        %v1214 = vmul.f32 %v1150, %v1150
        %v1215 = vmul.f32 %v1151, %v1151
        %v1216 = vmul.f32 %v1152, %v1152
        %v1217 = vmul.f32 %v1153, %v1153
        %v1218 = vmul.f32 %v1154, %v1154
        %v1219 = vmul.f32 %v1155, %v1155
        %v1220 = vmul.f32 %v1156, %v1156
        %v1221 = vmul.f32 %v1157, %v1157
        %v1222 = vmul.f32 %v1158, %v1158
        %v1223 = vmul.f32 %v1159, %v1159
        %v1224 = vmul.f32 %v1160, %v1160
        %v1225 = vmul.f32 %v1161, %v1161
        %v1226 = vmul.f32 %v1162, %v1162
        %v1227 = vmul.f32 %v1163, %v1163
        %v1228 = vmul.f32 %v1164, %v1164
        %v1229 = vmul.f32 %v1165, %v1165
        %v1230 = vmul.f32 %v1166, %v1166
        %v1231 = vmul.f32 %v1167, %v1167
        %v1232 = vmul.f32 %v1168, %v1168
        %v1233 = vmul.f32 %v1169, %v1169
        %v1234 = vmul.f32 %v1170, %v1170
        %v1235 = vmul.f32 %v1171, %v1171
        %v1236 = vmul.f32 %v1172, %v1172
        %v1237 = vmul.f32 %v1173, %v1173
        %v1238 = vmul.f32 %v1174, %v1174
        %v1239 = vmul.f32 %v1175, %v1175
        %v1240 = vmul.f32 %v1176, %v1176
        %v1241 = vmul.f32 %v1177, %v1177
        %v1242 = vmul.f32 %v1178, %v1178
        %v1243 = vmul.f32 %v1179, %v1179
        %v1244 = vmul.f32 %v1180, %v1180
        %v1245 = vmul.f32 %v1181, %v1181
        %v1246 = vmul.f32 %v1182, %v1182
        %v1247 = vmul.f32 %v1183, %v1183
        %v1248 = vmul.f32 %v1184, %v1184
        %v1249 = vmul.f32 %v1185, %v1185
        %v1250 = vmul.f32 %v1186, %v1186
        %v1251 = vmul.f32 %v1187, %v1187
        %v1252 = vmul.f32 %v1188, %v1188
        %v1253 = vmul.f32 %v1189, %v1189
        %v1254 = vmul.f32 %v1190, %v1190
        %v1255 = vmul.f32 %v1191, %v1191
        %v1256 = vmul.f32 %v1192, %v1192
        %v1257 = vmul.f32 %v1193, %v1193
        %v1258 = vmul.f32 %v1194, %v1194
        %v1259 = vmul.f32 %v1195, %v1195
        %v1260 = vmul.f32 %v1196, %v1196
        %v1261 = vmul.f32 %v1197, %v1197
        %v1262 = vmul.f32 %v1198, %v1198
        %v1263 = vmul.f32 %v1199, %v1199
        %v1264 = vmul.f32 %v1200, %v1200
        %v1265 = vmul.f32 %v1201, %v1201
        %v1266 = vmul.f32 %v1202, %v1202
        %v1267 = vmul.f32 %v1203, %v1203
        %v1268 = vmul.f32 %v1204, %v1204
        %v1269 = vmul.f32 %v1205, %v1205
        %v1270 = vmul.f32 %v1206, %v1206
        %v1271 = vmul.f32 %v1207, %v1207
        %v1272 = vmul.f32 %v1208, %v1208
        %v1273 = vmul.f32 %v1209, %v1209
        %v1274 = vmul.f32 %v1210, %v1210
        %v1275 = vmul.f32 %v1211, %v1211
        %v1276 = vadd.f32 %v1212, %v1213
        %1277 = vadd.xlane.f32.xlu0 %v1276
        %v1278 = vpop.xlane.xlu0 %1277
        %v1279 = vadd.f32 %v1214, %v1215
        %1280 = vadd.xlane.f32.xlu0 %v1279
        %v1281 = vpop.xlane.xlu0 %1280
        %v1282 = vadd.f32 %v1216, %v1217
        %1283 = vadd.xlane.f32.xlu0 %v1282
        %v1284 = vpop.xlane.xlu0 %1283
        %v1285 = vadd.f32 %v1218, %v1219
        %1286 = vadd.xlane.f32.xlu0 %v1285
        %v1287 = vpop.xlane.xlu0 %1286
        %v1288 = vadd.f32 %v1220, %v1221
        %1289 = vadd.xlane.f32.xlu0 %v1288
        %v1290 = vpop.xlane.xlu0 %1289
        %v1291 = vadd.f32 %v1222, %v1223
        %1292 = vadd.xlane.f32.xlu0 %v1291
        %v1293 = vpop.xlane.xlu0 %1292
        %v1294 = vadd.f32 %v1224, %v1225
        %1295 = vadd.xlane.f32.xlu0 %v1294
        %v1296 = vpop.xlane.xlu0 %1295
        %v1297 = vadd.f32 %v1226, %v1227
        %1298 = vadd.xlane.f32.xlu0 %v1297
        %v1299 = vpop.xlane.xlu0 %1298
        %v1300 = vadd.f32 %v1228, %v1229
        %1301 = vadd.xlane.f32.xlu0 %v1300
        %v1302 = vpop.xlane.xlu0 %1301
        %v1303 = vadd.f32 %v1230, %v1231
        %1304 = vadd.xlane.f32.xlu0 %v1303
        %v1305 = vpop.xlane.xlu0 %1304
        %v1306 = vadd.f32 %v1232, %v1233
        %1307 = vadd.xlane.f32.xlu0 %v1306
        %v1308 = vpop.xlane.xlu0 %1307
        %v1309 = vadd.f32 %v1234, %v1235
        %1310 = vadd.xlane.f32.xlu0 %v1309
        %v1311 = vpop.xlane.xlu0 %1310
        %v1312 = vadd.f32 %v1236, %v1237
        %1313 = vadd.xlane.f32.xlu0 %v1312
        %v1314 = vpop.xlane.xlu0 %1313
        %v1315 = vadd.f32 %v1238, %v1239
        %1316 = vadd.xlane.f32.xlu0 %v1315
        %v1317 = vpop.xlane.xlu0 %1316
        %v1318 = vadd.f32 %v1240, %v1241
        %1319 = vadd.xlane.f32.xlu0 %v1318
        %v1320 = vpop.xlane.xlu0 %1319
        %v1321 = vadd.f32 %v1242, %v1243
        %1322 = vadd.xlane.f32.xlu0 %v1321
        %v1323 = vpop.xlane.xlu0 %1322
        %v1324 = vadd.f32 %v1244, %v1245
        %1325 = vadd.xlane.f32.xlu0 %v1324
        %v1326 = vpop.xlane.xlu0 %1325
        %v1327 = vadd.f32 %v1246, %v1247
        %1328 = vadd.xlane.f32.xlu0 %v1327
        %v1329 = vpop.xlane.xlu0 %1328
        %v1330 = vadd.f32 %v1248, %v1249
        %1331 = vadd.xlane.f32.xlu0 %v1330
        %v1332 = vpop.xlane.xlu0 %1331
        %v1333 = vadd.f32 %v1250, %v1251
        %1334 = vadd.xlane.f32.xlu0 %v1333
        %v1335 = vpop.xlane.xlu0 %1334
        %v1336 = vadd.f32 %v1252, %v1253
        %1337 = vadd.xlane.f32.xlu0 %v1336
        %v1338 = vpop.xlane.xlu0 %1337
        %v1339 = vadd.f32 %v1254, %v1255
        %1340 = vadd.xlane.f32.xlu0 %v1339
        %v1341 = vpop.xlane.xlu0 %1340
        %v1342 = vadd.f32 %v1256, %v1257
        %1343 = vadd.xlane.f32.xlu0 %v1342
        %v1344 = vpop.xlane.xlu0 %1343
        %v1345 = vadd.f32 %v1258, %v1259
        %1346 = vadd.xlane.f32.xlu0 %v1345
        %v1347 = vpop.xlane.xlu0 %1346
        %v1348 = vadd.f32 %v1260, %v1261
        %1349 = vadd.xlane.f32.xlu0 %v1348
        %v1350 = vpop.xlane.xlu0 %1349
        %v1351 = vadd.f32 %v1262, %v1263
        %1352 = vadd.xlane.f32.xlu0 %v1351
        %v1353 = vpop.xlane.xlu0 %1352
        %v1354 = vadd.f32 %v1264, %v1265
        %1355 = vadd.xlane.f32.xlu0 %v1354
        %v1356 = vpop.xlane.xlu0 %1355
        %v1357 = vadd.f32 %v1266, %v1267
        %1358 = vadd.xlane.f32.xlu0 %v1357
        %v1359 = vpop.xlane.xlu0 %1358
        %v1360 = vadd.f32 %v1268, %v1269
        %1361 = vadd.xlane.f32.xlu0 %v1360
        %v1362 = vpop.xlane.xlu0 %1361
        %v1363 = vadd.f32 %v1270, %v1271
        %1364 = vadd.xlane.f32.xlu0 %v1363
        %v1365 = vpop.xlane.xlu0 %1364
        %v1366 = vadd.f32 %v1272, %v1273
        %1367 = vadd.xlane.f32.xlu0 %v1366
        %v1368 = vpop.xlane.xlu0 %1367
        %v1369 = vadd.f32 %v1274, %v1275
        %1370 = vadd.xlane.f32.xlu0 %v1369
        %v1371 = vpop.xlane.xlu0 %1370
        %v1372 = vmul.f32 %v1278, %v1115
        %v1373 = vmul.f32 %v1281, %v1115
        %v1374 = vmul.f32 %v1284, %v1115
        %v1375 = vmul.f32 %v1287, %v1115
        %v1376 = vmul.f32 %v1290, %v1115
        %v1377 = vmul.f32 %v1293, %v1115
        %v1378 = vmul.f32 %v1296, %v1115
        %v1379 = vmul.f32 %v1299, %v1115
        %v1380 = vmul.f32 %v1302, %v1115
        %v1381 = vmul.f32 %v1305, %v1115
        %v1382 = vmul.f32 %v1308, %v1115
        %v1383 = vmul.f32 %v1311, %v1115
        %v1384 = vmul.f32 %v1314, %v1115
        %v1385 = vmul.f32 %v1317, %v1115
        %v1386 = vmul.f32 %v1320, %v1115
        %v1387 = vmul.f32 %v1323, %v1115
        %v1388 = vmul.f32 %v1326, %v1115
        %v1389 = vmul.f32 %v1329, %v1115
        %v1390 = vmul.f32 %v1332, %v1115
        %v1391 = vmul.f32 %v1335, %v1115
        %v1392 = vmul.f32 %v1338, %v1115
        %v1393 = vmul.f32 %v1341, %v1115
        %v1394 = vmul.f32 %v1344, %v1115
        %v1395 = vmul.f32 %v1347, %v1115
        %v1396 = vmul.f32 %v1350, %v1115
        %v1397 = vmul.f32 %v1353, %v1115
        %v1398 = vmul.f32 %v1356, %v1115
        %v1399 = vmul.f32 %v1359, %v1115
        %v1400 = vmul.f32 %v1362, %v1115
        %v1401 = vmul.f32 %v1365, %v1115
        %v1402 = vmul.f32 %v1368, %v1115
        %v1403 = vmul.f32 %v1371, %v1115
        %v1404 = vadd.f32 %v1372, 1e-05
        %v1405 = vadd.f32 %v1373, 1e-05
        %v1406 = vadd.f32 %v1374, 1e-05
        %v1407 = vadd.f32 %v1375, 1e-05
        %v1408 = vadd.f32 %v1376, 1e-05
        %v1409 = vadd.f32 %v1377, 1e-05
        %v1410 = vadd.f32 %v1378, 1e-05
        %v1411 = vadd.f32 %v1379, 1e-05
        %v1412 = vadd.f32 %v1380, 1e-05
        %v1413 = vadd.f32 %v1381, 1e-05
        %v1414 = vadd.f32 %v1382, 1e-05
        %v1415 = vadd.f32 %v1383, 1e-05
        %v1416 = vadd.f32 %v1384, 1e-05
        %v1417 = vadd.f32 %v1385, 1e-05
        %v1418 = vadd.f32 %v1386, 1e-05
        %v1419 = vadd.f32 %v1387, 1e-05
        %v1420 = vadd.f32 %v1388, 1e-05
        %v1421 = vadd.f32 %v1389, 1e-05
        %v1422 = vadd.f32 %v1390, 1e-05
        %v1423 = vadd.f32 %v1391, 1e-05
        %v1424 = vadd.f32 %v1392, 1e-05
        %v1425 = vadd.f32 %v1393, 1e-05
        %v1426 = vadd.f32 %v1394, 1e-05
        %v1427 = vadd.f32 %v1395, 1e-05
        %v1428 = vadd.f32 %v1396, 1e-05
        %v1429 = vadd.f32 %v1397, 1e-05
        %v1430 = vadd.f32 %v1398, 1e-05
        %v1431 = vadd.f32 %v1399, 1e-05
        %v1432 = vadd.f32 %v1400, 1e-05
        %v1433 = vadd.f32 %v1401, 1e-05
        %v1434 = vadd.f32 %v1402, 1e-05
        %v1435 = vadd.f32 %v1403, 1e-05
        %v1436 = vrsqrt.pop %v1404
        %v1437 = vrsqrt.pop %v1405
        %v1438 = vrsqrt.pop %v1406
        %v1439 = vrsqrt.pop %v1407
        %v1440 = vrsqrt.pop %v1408
        %v1441 = vrsqrt.pop %v1409
        %v1442 = vrsqrt.pop %v1410
        %v1443 = vrsqrt.pop %v1411
        %v1444 = vrsqrt.pop %v1412
        %v1445 = vrsqrt.pop %v1413
        %v1446 = vrsqrt.pop %v1414
        %v1447 = vrsqrt.pop %v1415
        %v1448 = vrsqrt.pop %v1416
        %v1449 = vrsqrt.pop %v1417
        %v1450 = vrsqrt.pop %v1418
        %v1451 = vrsqrt.pop %v1419
        %v1452 = vrsqrt.pop %v1420
        %v1453 = vrsqrt.pop %v1421
        %v1454 = vrsqrt.pop %v1422
        %v1455 = vrsqrt.pop %v1423
        %v1456 = vrsqrt.pop %v1424
        %v1457 = vrsqrt.pop %v1425
        %v1458 = vrsqrt.pop %v1426
        %v1459 = vrsqrt.pop %v1427
        %v1460 = vrsqrt.pop %v1428
        %v1461 = vrsqrt.pop %v1429
        %v1462 = vrsqrt.pop %v1430
        %v1463 = vrsqrt.pop %v1431
        %v1464 = vrsqrt.pop %v1432
        %v1465 = vrsqrt.pop %v1433
        %v1466 = vrsqrt.pop %v1434
        %v1467 = vrsqrt.pop %v1435
        %v1468 = vmul.f32 %v1148, %v1436
        %v1469 = vmul.f32 %v1149, %v1436
        %v1470 = vmul.f32 %v1150, %v1437
        %v1471 = vmul.f32 %v1151, %v1437
        %v1472 = vmul.f32 %v1152, %v1438
        %v1473 = vmul.f32 %v1153, %v1438
        %v1474 = vmul.f32 %v1154, %v1439
        %v1475 = vmul.f32 %v1155, %v1439
        %v1476 = vmul.f32 %v1156, %v1440
        %v1477 = vmul.f32 %v1157, %v1440
        %v1478 = vmul.f32 %v1158, %v1441
        %v1479 = vmul.f32 %v1159, %v1441
        %v1480 = vmul.f32 %v1160, %v1442
        %v1481 = vmul.f32 %v1161, %v1442
        %v1482 = vmul.f32 %v1162, %v1443
        %v1483 = vmul.f32 %v1163, %v1443
        %v1484 = vmul.f32 %v1164, %v1444
        %v1485 = vmul.f32 %v1165, %v1444
        %v1486 = vmul.f32 %v1166, %v1445
        %v1487 = vmul.f32 %v1167, %v1445
        %v1488 = vmul.f32 %v1168, %v1446
        %v1489 = vmul.f32 %v1169, %v1446
        %v1490 = vmul.f32 %v1170, %v1447
        %v1491 = vmul.f32 %v1171, %v1447
        %v1492 = vmul.f32 %v1172, %v1448
        %v1493 = vmul.f32 %v1173, %v1448
        %v1494 = vmul.f32 %v1174, %v1449
        %v1495 = vmul.f32 %v1175, %v1449
        %v1496 = vmul.f32 %v1176, %v1450
        %v1497 = vmul.f32 %v1177, %v1450
        %v1498 = vmul.f32 %v1178, %v1451
        %v1499 = vmul.f32 %v1179, %v1451
        %v1500 = vmul.f32 %v1180, %v1452
        %v1501 = vmul.f32 %v1181, %v1452
        %v1502 = vmul.f32 %v1182, %v1453
        %v1503 = vmul.f32 %v1183, %v1453
        %v1504 = vmul.f32 %v1184, %v1454
        %v1505 = vmul.f32 %v1185, %v1454
        %v1506 = vmul.f32 %v1186, %v1455
        %v1507 = vmul.f32 %v1187, %v1455
        %v1508 = vmul.f32 %v1188, %v1456
        %v1509 = vmul.f32 %v1189, %v1456
        %v1510 = vmul.f32 %v1190, %v1457
        %v1511 = vmul.f32 %v1191, %v1457
        %v1512 = vmul.f32 %v1192, %v1458
        %v1513 = vmul.f32 %v1193, %v1458
        %v1514 = vmul.f32 %v1194, %v1459
        %v1515 = vmul.f32 %v1195, %v1459
        %v1516 = vmul.f32 %v1196, %v1460
        %v1517 = vmul.f32 %v1197, %v1460
        %v1518 = vmul.f32 %v1198, %v1461
        %v1519 = vmul.f32 %v1199, %v1461
        %v1520 = vmul.f32 %v1200, %v1462
        %v1521 = vmul.f32 %v1201, %v1462
        %v1522 = vmul.f32 %v1202, %v1463
        %v1523 = vmul.f32 %v1203, %v1463
        %v1524 = vmul.f32 %v1204, %v1464
        %v1525 = vmul.f32 %v1205, %v1464
        %v1526 = vmul.f32 %v1206, %v1465
        %v1527 = vmul.f32 %v1207, %v1465
        %v1528 = vmul.f32 %v1208, %v1466
        %v1529 = vmul.f32 %v1209, %v1466
        %v1530 = vmul.f32 %v1210, %v1467
        %v1531 = vmul.f32 %v1211, %v1467
        %v1533 = vlaneseq
        %v1534 = vshrl.u32 %v1533, 7
        %v1535 = vsub.s32 0, %v1534
        %v1536 = vrot.slane %v1017, %v1535
        %v1537 = vlaneseq
        %v1538 = vshrl.u32 %v1537, 7
        %v1539 = vsub.s32 1, %v1538
        %v1540 = vrot.slane %v1017, %v1539
        %v1543 = vmul.f32 %v1468, %v1536
        %v1544 = vmul.f32 %v1469, %v1540
        %v1545 = vmul.f32 %v1470, %v1536
        %v1546 = vmul.f32 %v1471, %v1540
        %v1547 = vmul.f32 %v1472, %v1536
        %v1548 = vmul.f32 %v1473, %v1540
        %v1549 = vmul.f32 %v1474, %v1536
        %v1550 = vmul.f32 %v1475, %v1540
        %v1551 = vmul.f32 %v1476, %v1536
        %v1552 = vmul.f32 %v1477, %v1540
        %v1553 = vmul.f32 %v1478, %v1536
        %v1554 = vmul.f32 %v1479, %v1540
        %v1555 = vmul.f32 %v1480, %v1536
        %v1556 = vmul.f32 %v1481, %v1540
        %v1557 = vmul.f32 %v1482, %v1536
        %v1558 = vmul.f32 %v1483, %v1540
        %v1559 = vmul.f32 %v1484, %v1536
        %v1560 = vmul.f32 %v1485, %v1540
        %v1561 = vmul.f32 %v1486, %v1536
        %v1562 = vmul.f32 %v1487, %v1540
        %v1563 = vmul.f32 %v1488, %v1536
        %v1564 = vmul.f32 %v1489, %v1540
        %v1565 = vmul.f32 %v1490, %v1536
        %v1566 = vmul.f32 %v1491, %v1540
        %v1567 = vmul.f32 %v1492, %v1536
        %v1568 = vmul.f32 %v1493, %v1540
        %v1569 = vmul.f32 %v1494, %v1536
        %v1570 = vmul.f32 %v1495, %v1540
        %v1571 = vmul.f32 %v1496, %v1536
        %v1572 = vmul.f32 %v1497, %v1540
        %v1573 = vmul.f32 %v1498, %v1536
        %v1574 = vmul.f32 %v1499, %v1540
        %v1575 = vmul.f32 %v1500, %v1536
        %v1576 = vmul.f32 %v1501, %v1540
        %v1577 = vmul.f32 %v1502, %v1536
        %v1578 = vmul.f32 %v1503, %v1540
        %v1579 = vmul.f32 %v1504, %v1536
        %v1580 = vmul.f32 %v1505, %v1540
        %v1581 = vmul.f32 %v1506, %v1536
        %v1582 = vmul.f32 %v1507, %v1540
        %v1583 = vmul.f32 %v1508, %v1536
        %v1584 = vmul.f32 %v1509, %v1540
        %v1585 = vmul.f32 %v1510, %v1536
        %v1586 = vmul.f32 %v1511, %v1540
        %v1587 = vmul.f32 %v1512, %v1536
        %v1588 = vmul.f32 %v1513, %v1540
        %v1589 = vmul.f32 %v1514, %v1536
        %v1590 = vmul.f32 %v1515, %v1540
        %v1591 = vmul.f32 %v1516, %v1536
        %v1592 = vmul.f32 %v1517, %v1540
        %v1593 = vmul.f32 %v1518, %v1536
        %v1594 = vmul.f32 %v1519, %v1540
        %v1595 = vmul.f32 %v1520, %v1536
        %v1596 = vmul.f32 %v1521, %v1540
        %v1597 = vmul.f32 %v1522, %v1536
        %v1598 = vmul.f32 %v1523, %v1540
        %v1599 = vmul.f32 %v1524, %v1536
        %v1600 = vmul.f32 %v1525, %v1540
        %v1601 = vmul.f32 %v1526, %v1536
        %v1602 = vmul.f32 %v1527, %v1540
        %v1603 = vmul.f32 %v1528, %v1536
        %v1604 = vmul.f32 %v1529, %v1540
        %v1605 = vmul.f32 %v1530, %v1536
        %v1606 = vmul.f32 %v1531, %v1540
        %v1608 = vlaneseq
        %v1609 = vshrl.u32 %v1608, 7
        %v1610 = vsub.s32 0, %v1609
        %v1611 = vrot.slane %v1018, %v1610
        %v1612 = vlaneseq
        %v1613 = vshrl.u32 %v1612, 7
        %v1614 = vsub.s32 1, %v1613
        %v1615 = vrot.slane %v1018, %v1614
        %v1618 = vadd.f32 %v1543, %v1611
        %v1619 = vadd.f32 %v1544, %v1615
        %v1620 = vadd.f32 %v1545, %v1611
        %v1621 = vadd.f32 %v1546, %v1615
        %v1622 = vadd.f32 %v1547, %v1611
        %v1623 = vadd.f32 %v1548, %v1615
        %v1624 = vadd.f32 %v1549, %v1611
        %v1625 = vadd.f32 %v1550, %v1615
        %v1626 = vadd.f32 %v1551, %v1611
        %v1627 = vadd.f32 %v1552, %v1615
        %v1628 = vadd.f32 %v1553, %v1611
        %v1629 = vadd.f32 %v1554, %v1615
        %v1630 = vadd.f32 %v1555, %v1611
        %v1631 = vadd.f32 %v1556, %v1615
        %v1632 = vadd.f32 %v1557, %v1611
        %v1633 = vadd.f32 %v1558, %v1615
        %v1634 = vadd.f32 %v1559, %v1611
        %v1635 = vadd.f32 %v1560, %v1615
        %v1636 = vadd.f32 %v1561, %v1611
        %v1637 = vadd.f32 %v1562, %v1615
        %v1638 = vadd.f32 %v1563, %v1611
        %v1639 = vadd.f32 %v1564, %v1615
        %v1640 = vadd.f32 %v1565, %v1611
        %v1641 = vadd.f32 %v1566, %v1615
        %v1642 = vadd.f32 %v1567, %v1611
        %v1643 = vadd.f32 %v1568, %v1615
        %v1644 = vadd.f32 %v1569, %v1611
        %v1645 = vadd.f32 %v1570, %v1615
        %v1646 = vadd.f32 %v1571, %v1611
        %v1647 = vadd.f32 %v1572, %v1615
        %v1648 = vadd.f32 %v1573, %v1611
        %v1649 = vadd.f32 %v1574, %v1615
        %v1650 = vadd.f32 %v1575, %v1611
        %v1651 = vadd.f32 %v1576, %v1615
        %v1652 = vadd.f32 %v1577, %v1611
        %v1653 = vadd.f32 %v1578, %v1615
        %v1654 = vadd.f32 %v1579, %v1611
        %v1655 = vadd.f32 %v1580, %v1615
        %v1656 = vadd.f32 %v1581, %v1611
        %v1657 = vadd.f32 %v1582, %v1615
        %v1658 = vadd.f32 %v1583, %v1611
        %v1659 = vadd.f32 %v1584, %v1615
        %v1660 = vadd.f32 %v1585, %v1611
        %v1661 = vadd.f32 %v1586, %v1615
        %v1662 = vadd.f32 %v1587, %v1611
        %v1663 = vadd.f32 %v1588, %v1615
        %v1664 = vadd.f32 %v1589, %v1611
        %v1665 = vadd.f32 %v1590, %v1615
        %v1666 = vadd.f32 %v1591, %v1611
        %v1667 = vadd.f32 %v1592, %v1615
        %v1668 = vadd.f32 %v1593, %v1611
        %v1669 = vadd.f32 %v1594, %v1615
        %v1670 = vadd.f32 %v1595, %v1611
        %v1671 = vadd.f32 %v1596, %v1615
        %v1672 = vadd.f32 %v1597, %v1611
        %v1673 = vadd.f32 %v1598, %v1615
        %v1674 = vadd.f32 %v1599, %v1611
        %v1675 = vadd.f32 %v1600, %v1615
        %v1676 = vadd.f32 %v1601, %v1611
        %v1677 = vadd.f32 %v1602, %v1615
        %v1678 = vadd.f32 %v1603, %v1611
        %v1679 = vadd.f32 %v1604, %v1615
        %v1680 = vadd.f32 %v1605, %v1611
        %v1681 = vadd.f32 %v1606, %v1615
        %v1682 = vpack.c.bf16 %v1620, %v1618
        %v1683 = vpack.c.bf16 %v1621, %v1619
        %v1684 = vpack.c.bf16 %v1624, %v1622
        %v1685 = vpack.c.bf16 %v1625, %v1623
        %v1686 = vpack.c.bf16 %v1628, %v1626
        %v1687 = vpack.c.bf16 %v1629, %v1627
        %v1688 = vpack.c.bf16 %v1632, %v1630
        %v1689 = vpack.c.bf16 %v1633, %v1631
        %v1690 = vpack.c.bf16 %v1636, %v1634
        %v1691 = vpack.c.bf16 %v1637, %v1635
        %v1692 = vpack.c.bf16 %v1640, %v1638
        %v1693 = vpack.c.bf16 %v1641, %v1639
        %v1694 = vpack.c.bf16 %v1644, %v1642
        %v1695 = vpack.c.bf16 %v1645, %v1643
        %v1696 = vpack.c.bf16 %v1648, %v1646
        %v1697 = vpack.c.bf16 %v1649, %v1647
        %v1698 = vpack.c.bf16 %v1652, %v1650
        %v1699 = vpack.c.bf16 %v1653, %v1651
        %v1700 = vpack.c.bf16 %v1656, %v1654
        %v1701 = vpack.c.bf16 %v1657, %v1655
        %v1702 = vpack.c.bf16 %v1660, %v1658
        %v1703 = vpack.c.bf16 %v1661, %v1659
        %v1704 = vpack.c.bf16 %v1664, %v1662
        %v1705 = vpack.c.bf16 %v1665, %v1663
        %v1706 = vpack.c.bf16 %v1668, %v1666
        %v1707 = vpack.c.bf16 %v1669, %v1667
        %v1708 = vpack.c.bf16 %v1672, %v1670
        %v1709 = vpack.c.bf16 %v1673, %v1671
        %v1710 = vpack.c.bf16 %v1676, %v1674
        %v1711 = vpack.c.bf16 %v1677, %v1675
        %v1712 = vpack.c.bf16 %v1680, %v1678
        %v1713 = vpack.c.bf16 %v1681, %v1679
        %v1714 = vld [vmem:[%s656] sm:$0xff]
        %v1715 = vld [vmem:[%s656 + $0x8] sm:$0xff]
        %v1716 = vld [vmem:[%s656 + $0x10] sm:$0xff]
        %v1717 = vld [vmem:[%s656 + $0x18] sm:$0xff]
        %v1718 = vld [vmem:[%s656 + $0x20] sm:$0xff]
        %v1719 = vld [vmem:[%s656 + $0x28] sm:$0xff]
        %v1720 = vld [vmem:[%s656 + $0x30] sm:$0xff]
        %v1721 = vld [vmem:[%s656 + $0x38] sm:$0xff]
        %v1722 = vld [vmem:[%s656 + $0x40] sm:$0xff]
        %v1723 = vld [vmem:[%s656 + $0x48] sm:$0xff]
        %v1724 = vld [vmem:[%s656 + $0x50] sm:$0xff]
        %v1725 = vld [vmem:[%s656 + $0x58] sm:$0xff]
        %v1726 = vld [vmem:[%s656 + $0x60] sm:$0xff]
        %v1727 = vld [vmem:[%s656 + $0x68] sm:$0xff]
        %v1728 = vld [vmem:[%s656 + $0x70] sm:$0xff]
        %v1729 = vld [vmem:[%s656 + $0x78] sm:$0xff]
        %v1730 = vld [vmem:[%s656 + $0x80] sm:$0xff]
        %v1731 = vld [vmem:[%s656 + $0x88] sm:$0xff]
        %v1732 = vld [vmem:[%s656 + $0x90] sm:$0xff]
        %v1733 = vld [vmem:[%s656 + $0x98] sm:$0xff]
        %v1734 = vld [vmem:[%s656 + $0xa0] sm:$0xff]
        %v1735 = vld [vmem:[%s656 + $0xa8] sm:$0xff]
        %v1736 = vld [vmem:[%s656 + $0xb0] sm:$0xff]
        %v1737 = vld [vmem:[%s656 + $0xb8] sm:$0xff]
        %v1738 = vld [vmem:[%s656 + $0xc0] sm:$0xff]
        %v1739 = vld [vmem:[%s656 + $0xc8] sm:$0xff]
        %v1740 = vld [vmem:[%s656 + $0xd0] sm:$0xff]
        %v1741 = vld [vmem:[%s656 + $0xd8] sm:$0xff]
        %v1742 = vld [vmem:[%s656 + $0xe0] sm:$0xff]
        %v1743 = vld [vmem:[%s656 + $0xe8] sm:$0xff]
        %v1744 = vld [vmem:[%s656 + $0xf0] sm:$0xff]
        %v1745 = vld [vmem:[%s656 + $0xf8] sm:$0xff]
        %v1746 = vld [vmem:[%s656 + $0x100] sm:$0xff]
        %v1747 = vld [vmem:[%s656 + $0x108] sm:$0xff]
        %v1748 = vld [vmem:[%s656 + $0x110] sm:$0xff]
        %v1749 = vld [vmem:[%s656 + $0x118] sm:$0xff]
        %v1750 = vld [vmem:[%s656 + $0x120] sm:$0xff]
        %v1751 = vld [vmem:[%s656 + $0x128] sm:$0xff]
        %v1752 = vld [vmem:[%s656 + $0x130] sm:$0xff]
        %v1753 = vld [vmem:[%s656 + $0x138] sm:$0xff]
        %v1754 = vld [vmem:[%s656 + $0x140] sm:$0xff]
        %v1755 = vld [vmem:[%s656 + $0x148] sm:$0xff]
        %v1756 = vld [vmem:[%s656 + $0x150] sm:$0xff]
        %v1757 = vld [vmem:[%s656 + $0x158] sm:$0xff]
        %v1758 = vld [vmem:[%s656 + $0x160] sm:$0xff]
        %v1759 = vld [vmem:[%s656 + $0x168] sm:$0xff]
        %v1760 = vld [vmem:[%s656 + $0x170] sm:$0xff]
        %v1761 = vld [vmem:[%s656 + $0x178] sm:$0xff]
        %v1762 = vld [vmem:[%s656 + $0x180] sm:$0xff]
        %v1763 = vld [vmem:[%s656 + $0x188] sm:$0xff]
        %v1764 = vld [vmem:[%s656 + $0x190] sm:$0xff]
        %v1765 = vld [vmem:[%s656 + $0x198] sm:$0xff]
        %v1766 = vld [vmem:[%s656 + $0x1a0] sm:$0xff]
        %v1767 = vld [vmem:[%s656 + $0x1a8] sm:$0xff]
        %v1768 = vld [vmem:[%s656 + $0x1b0] sm:$0xff]
        %v1769 = vld [vmem:[%s656 + $0x1b8] sm:$0xff]
        %v1770 = vld [vmem:[%s656 + $0x1c0] sm:$0xff]
        %v1771 = vld [vmem:[%s656 + $0x1c8] sm:$0xff]
        %v1772 = vld [vmem:[%s656 + $0x1d0] sm:$0xff]
        %v1773 = vld [vmem:[%s656 + $0x1d8] sm:$0xff]
        %v1774 = vld [vmem:[%s656 + $0x1e0] sm:$0xff]
        %v1775 = vld [vmem:[%s656 + $0x1e8] sm:$0xff]
        %v1776 = vld [vmem:[%s656 + $0x1f0] sm:$0xff]
        %v1777 = vld [vmem:[%s656 + $0x1f8] sm:$0xff]
        %v1778 = vld [vmem:[%s656 + $0x200] sm:$0xff]
        %v1779 = vld [vmem:[%s656 + $0x208] sm:$0xff]
        %v1780 = vld [vmem:[%s656 + $0x210] sm:$0xff]
        %v1781 = vld [vmem:[%s656 + $0x218] sm:$0xff]
        %v1782 = vld [vmem:[%s656 + $0x220] sm:$0xff]
        %v1783 = vld [vmem:[%s656 + $0x228] sm:$0xff]
        %v1784 = vld [vmem:[%s656 + $0x230] sm:$0xff]
        %v1785 = vld [vmem:[%s656 + $0x238] sm:$0xff]
        %v1786 = vld [vmem:[%s656 + $0x240] sm:$0xff]
        %v1787 = vld [vmem:[%s656 + $0x248] sm:$0xff]
        %v1788 = vld [vmem:[%s656 + $0x250] sm:$0xff]
        %v1789 = vld [vmem:[%s656 + $0x258] sm:$0xff]
        %v1790 = vld [vmem:[%s656 + $0x260] sm:$0xff]
        %v1791 = vld [vmem:[%s656 + $0x268] sm:$0xff]
        %v1792 = vld [vmem:[%s656 + $0x270] sm:$0xff]
        %v1793 = vld [vmem:[%s656 + $0x278] sm:$0xff]
        %v1794 = vld [vmem:[%s656 + $0x280] sm:$0xff]
        %v1795 = vld [vmem:[%s656 + $0x288] sm:$0xff]
        %v1796 = vld [vmem:[%s656 + $0x290] sm:$0xff]
        %v1797 = vld [vmem:[%s656 + $0x298] sm:$0xff]
        %v1798 = vld [vmem:[%s656 + $0x2a0] sm:$0xff]
        %v1799 = vld [vmem:[%s656 + $0x2a8] sm:$0xff]
        %v1800 = vld [vmem:[%s656 + $0x2b0] sm:$0xff]
        %v1801 = vld [vmem:[%s656 + $0x2b8] sm:$0xff]
        %v1802 = vld [vmem:[%s656 + $0x2c0] sm:$0xff]
        %v1803 = vld [vmem:[%s656 + $0x2c8] sm:$0xff]
        %v1804 = vld [vmem:[%s656 + $0x2d0] sm:$0xff]
        %v1805 = vld [vmem:[%s656 + $0x2d8] sm:$0xff]
        %v1806 = vld [vmem:[%s656 + $0x2e0] sm:$0xff]
        %v1807 = vld [vmem:[%s656 + $0x2e8] sm:$0xff]
        %v1808 = vld [vmem:[%s656 + $0x2f0] sm:$0xff]
        %v1809 = vld [vmem:[%s656 + $0x2f8] sm:$0xff]
        %v1810 = vld [vmem:[%s656 + $0x300] sm:$0xff]
        %v1811 = vld [vmem:[%s656 + $0x308] sm:$0xff]
        %v1812 = vld [vmem:[%s656 + $0x310] sm:$0xff]
        %v1813 = vld [vmem:[%s656 + $0x318] sm:$0xff]
        %v1814 = vld [vmem:[%s656 + $0x320] sm:$0xff]
        %v1815 = vld [vmem:[%s656 + $0x328] sm:$0xff]
        %v1816 = vld [vmem:[%s656 + $0x330] sm:$0xff]
        %v1817 = vld [vmem:[%s656 + $0x338] sm:$0xff]
        %v1818 = vld [vmem:[%s656 + $0x340] sm:$0xff]
        %v1819 = vld [vmem:[%s656 + $0x348] sm:$0xff]
        %v1820 = vld [vmem:[%s656 + $0x350] sm:$0xff]
        %v1821 = vld [vmem:[%s656 + $0x358] sm:$0xff]
        %v1822 = vld [vmem:[%s656 + $0x360] sm:$0xff]
        %v1823 = vld [vmem:[%s656 + $0x368] sm:$0xff]
        %v1824 = vld [vmem:[%s656 + $0x370] sm:$0xff]
        %v1825 = vld [vmem:[%s656 + $0x378] sm:$0xff]
        %v1826 = vld [vmem:[%s656 + $0x380] sm:$0xff]
        %v1827 = vld [vmem:[%s656 + $0x388] sm:$0xff]
        %v1828 = vld [vmem:[%s656 + $0x390] sm:$0xff]
        %v1829 = vld [vmem:[%s656 + $0x398] sm:$0xff]
        %v1830 = vld [vmem:[%s656 + $0x3a0] sm:$0xff]
        %v1831 = vld [vmem:[%s656 + $0x3a8] sm:$0xff]
        %v1832 = vld [vmem:[%s656 + $0x3b0] sm:$0xff]
        %v1833 = vld [vmem:[%s656 + $0x3b8] sm:$0xff]
        %v1834 = vld [vmem:[%s656 + $0x3c0] sm:$0xff]
        %v1835 = vld [vmem:[%s656 + $0x3c8] sm:$0xff]
        %v1836 = vld [vmem:[%s656 + $0x3d0] sm:$0xff]
        %v1837 = vld [vmem:[%s656 + $0x3d8] sm:$0xff]
        %v1838 = vld [vmem:[%s656 + $0x3e0] sm:$0xff]
        %v1839 = vld [vmem:[%s656 + $0x3e8] sm:$0xff]
        %v1840 = vld [vmem:[%s656 + $0x3f0] sm:$0xff]
        %v1841 = vld [vmem:[%s656 + $0x3f8] sm:$0xff]
        %v1970 = vunpack.c.l.b16 %v1714
        %v1971 = vunpack.c.h.b16 %v1714
        %v1972 = vunpack.c.l.b16 %v1715
        %v1973 = vunpack.c.h.b16 %v1715
        %v1974 = vunpack.c.l.b16 %v1716
        %v1975 = vunpack.c.h.b16 %v1716
        %v1976 = vunpack.c.l.b16 %v1717
        %v1977 = vunpack.c.h.b16 %v1717
        %v1978 = vunpack.c.l.b16 %v1718
        %v1979 = vunpack.c.h.b16 %v1718
        %v1980 = vunpack.c.l.b16 %v1719
        %v1981 = vunpack.c.h.b16 %v1719
        %v1982 = vunpack.c.l.b16 %v1720
        %v1983 = vunpack.c.h.b16 %v1720
        %v1984 = vunpack.c.l.b16 %v1721
        %v1985 = vunpack.c.h.b16 %v1721
        %v1986 = vunpack.c.l.b16 %v1722
        %v1987 = vunpack.c.h.b16 %v1722
        %v1988 = vunpack.c.l.b16 %v1723
        %v1989 = vunpack.c.h.b16 %v1723
        %v1990 = vunpack.c.l.b16 %v1724
        %v1991 = vunpack.c.h.b16 %v1724
        %v1992 = vunpack.c.l.b16 %v1725
        %v1993 = vunpack.c.h.b16 %v1725
        %v1994 = vunpack.c.l.b16 %v1726
        %v1995 = vunpack.c.h.b16 %v1726
        %v1996 = vunpack.c.l.b16 %v1727
        %v1997 = vunpack.c.h.b16 %v1727
        %v1998 = vunpack.c.l.b16 %v1728
        %v1999 = vunpack.c.h.b16 %v1728
        %v2000 = vunpack.c.l.b16 %v1729
        %v2001 = vunpack.c.h.b16 %v1729
        %v2002 = vunpack.c.l.b16 %v1730
        %v2003 = vunpack.c.h.b16 %v1730
        %v2004 = vunpack.c.l.b16 %v1731
        %v2005 = vunpack.c.h.b16 %v1731
        %v2006 = vunpack.c.l.b16 %v1732
        %v2007 = vunpack.c.h.b16 %v1732
        %v2008 = vunpack.c.l.b16 %v1733
        %v2009 = vunpack.c.h.b16 %v1733
        %v2010 = vunpack.c.l.b16 %v1734
        %v2011 = vunpack.c.h.b16 %v1734
        %v2012 = vunpack.c.l.b16 %v1735
        %v2013 = vunpack.c.h.b16 %v1735
        %v2014 = vunpack.c.l.b16 %v1736
        %v2015 = vunpack.c.h.b16 %v1736
        %v2016 = vunpack.c.l.b16 %v1737
        %v2017 = vunpack.c.h.b16 %v1737
        %v2018 = vunpack.c.l.b16 %v1738
        %v2019 = vunpack.c.h.b16 %v1738
        %v2020 = vunpack.c.l.b16 %v1739
        %v2021 = vunpack.c.h.b16 %v1739
        %v2022 = vunpack.c.l.b16 %v1740
        %v2023 = vunpack.c.h.b16 %v1740
        %v2024 = vunpack.c.l.b16 %v1741
        %v2025 = vunpack.c.h.b16 %v1741
        %v2026 = vunpack.c.l.b16 %v1742
        %v2027 = vunpack.c.h.b16 %v1742
        %v2028 = vunpack.c.l.b16 %v1743
        %v2029 = vunpack.c.h.b16 %v1743
        %v2030 = vunpack.c.l.b16 %v1744
        %v2031 = vunpack.c.h.b16 %v1744
        %v2032 = vunpack.c.l.b16 %v1745
        %v2033 = vunpack.c.h.b16 %v1745
        %v2034 = vunpack.c.l.b16 %v1746
        %v2035 = vunpack.c.h.b16 %v1746
        %v2036 = vunpack.c.l.b16 %v1747
        %v2037 = vunpack.c.h.b16 %v1747
        %v2038 = vunpack.c.l.b16 %v1748
        %v2039 = vunpack.c.h.b16 %v1748
        %v2040 = vunpack.c.l.b16 %v1749
        %v2041 = vunpack.c.h.b16 %v1749
        %v2042 = vunpack.c.l.b16 %v1750
        %v2043 = vunpack.c.h.b16 %v1750
        %v2044 = vunpack.c.l.b16 %v1751
        %v2045 = vunpack.c.h.b16 %v1751
        %v2046 = vunpack.c.l.b16 %v1752
        %v2047 = vunpack.c.h.b16 %v1752
        %v2048 = vunpack.c.l.b16 %v1753
        %v2049 = vunpack.c.h.b16 %v1753
        %v2050 = vunpack.c.l.b16 %v1754
        %v2051 = vunpack.c.h.b16 %v1754
        %v2052 = vunpack.c.l.b16 %v1755
        %v2053 = vunpack.c.h.b16 %v1755
        %v2054 = vunpack.c.l.b16 %v1756
        %v2055 = vunpack.c.h.b16 %v1756
        %v2056 = vunpack.c.l.b16 %v1757
        %v2057 = vunpack.c.h.b16 %v1757
        %v2058 = vunpack.c.l.b16 %v1758
        %v2059 = vunpack.c.h.b16 %v1758
        %v2060 = vunpack.c.l.b16 %v1759
        %v2061 = vunpack.c.h.b16 %v1759
        %v2062 = vunpack.c.l.b16 %v1760
        %v2063 = vunpack.c.h.b16 %v1760
        %v2064 = vunpack.c.l.b16 %v1761
        %v2065 = vunpack.c.h.b16 %v1761
        %v2066 = vunpack.c.l.b16 %v1762
        %v2067 = vunpack.c.h.b16 %v1762
        %v2068 = vunpack.c.l.b16 %v1763
        %v2069 = vunpack.c.h.b16 %v1763
        %v2070 = vunpack.c.l.b16 %v1764
        %v2071 = vunpack.c.h.b16 %v1764
        %v2072 = vunpack.c.l.b16 %v1765
        %v2073 = vunpack.c.h.b16 %v1765
        %v2074 = vunpack.c.l.b16 %v1766
        %v2075 = vunpack.c.h.b16 %v1766
        %v2076 = vunpack.c.l.b16 %v1767
        %v2077 = vunpack.c.h.b16 %v1767
        %v2078 = vunpack.c.l.b16 %v1768
        %v2079 = vunpack.c.h.b16 %v1768
        %v2080 = vunpack.c.l.b16 %v1769
        %v2081 = vunpack.c.h.b16 %v1769
        %v2082 = vunpack.c.l.b16 %v1770
        %v2083 = vunpack.c.h.b16 %v1770
        %v2084 = vunpack.c.l.b16 %v1771
        %v2085 = vunpack.c.h.b16 %v1771
        %v2086 = vunpack.c.l.b16 %v1772
        %v2087 = vunpack.c.h.b16 %v1772
        %v2088 = vunpack.c.l.b16 %v1773
        %v2089 = vunpack.c.h.b16 %v1773
        %v2090 = vunpack.c.l.b16 %v1774
        %v2091 = vunpack.c.h.b16 %v1774
        %v2092 = vunpack.c.l.b16 %v1775
        %v2093 = vunpack.c.h.b16 %v1775
        %v2094 = vunpack.c.l.b16 %v1776
        %v2095 = vunpack.c.h.b16 %v1776
        %v2096 = vunpack.c.l.b16 %v1777
        %v2097 = vunpack.c.h.b16 %v1777
        %v2098 = vunpack.c.l.b16 %v1778
        %v2099 = vunpack.c.h.b16 %v1778
        %v2100 = vunpack.c.l.b16 %v1779
        %v2101 = vunpack.c.h.b16 %v1779
        %v2102 = vunpack.c.l.b16 %v1780
        %v2103 = vunpack.c.h.b16 %v1780
        %v2104 = vunpack.c.l.b16 %v1781
        %v2105 = vunpack.c.h.b16 %v1781
        %v2106 = vunpack.c.l.b16 %v1782
        %v2107 = vunpack.c.h.b16 %v1782
        %v2108 = vunpack.c.l.b16 %v1783
        %v2109 = vunpack.c.h.b16 %v1783
        %v2110 = vunpack.c.l.b16 %v1784
        %v2111 = vunpack.c.h.b16 %v1784
        %v2112 = vunpack.c.l.b16 %v1785
        %v2113 = vunpack.c.h.b16 %v1785
        %v2114 = vunpack.c.l.b16 %v1786
        %v2115 = vunpack.c.h.b16 %v1786
        %v2116 = vunpack.c.l.b16 %v1787
        %v2117 = vunpack.c.h.b16 %v1787
        %v2118 = vunpack.c.l.b16 %v1788
        %v2119 = vunpack.c.h.b16 %v1788
        %v2120 = vunpack.c.l.b16 %v1789
        %v2121 = vunpack.c.h.b16 %v1789
        %v2122 = vunpack.c.l.b16 %v1790
        %v2123 = vunpack.c.h.b16 %v1790
        %v2124 = vunpack.c.l.b16 %v1791
        %v2125 = vunpack.c.h.b16 %v1791
        %v2126 = vunpack.c.l.b16 %v1792
        %v2127 = vunpack.c.h.b16 %v1792
        %v2128 = vunpack.c.l.b16 %v1793
        %v2129 = vunpack.c.h.b16 %v1793
        %v2130 = vunpack.c.l.b16 %v1794
        %v2131 = vunpack.c.h.b16 %v1794
        %v2132 = vunpack.c.l.b16 %v1795
        %v2133 = vunpack.c.h.b16 %v1795
        %v2134 = vunpack.c.l.b16 %v1796
        %v2135 = vunpack.c.h.b16 %v1796
        %v2136 = vunpack.c.l.b16 %v1797
        %v2137 = vunpack.c.h.b16 %v1797
        %v2138 = vunpack.c.l.b16 %v1798
        %v2139 = vunpack.c.h.b16 %v1798
        %v2140 = vunpack.c.l.b16 %v1799
        %v2141 = vunpack.c.h.b16 %v1799
        %v2142 = vunpack.c.l.b16 %v1800
        %v2143 = vunpack.c.h.b16 %v1800
        %v2144 = vunpack.c.l.b16 %v1801
        %v2145 = vunpack.c.h.b16 %v1801
        %v2146 = vunpack.c.l.b16 %v1802
        %v2147 = vunpack.c.h.b16 %v1802
        %v2148 = vunpack.c.l.b16 %v1803
        %v2149 = vunpack.c.h.b16 %v1803
        %v2150 = vunpack.c.l.b16 %v1804
        %v2151 = vunpack.c.h.b16 %v1804
        %v2152 = vunpack.c.l.b16 %v1805
        %v2153 = vunpack.c.h.b16 %v1805
        %v2154 = vunpack.c.l.b16 %v1806
        %v2155 = vunpack.c.h.b16 %v1806
        %v2156 = vunpack.c.l.b16 %v1807
        %v2157 = vunpack.c.h.b16 %v1807
        %v2158 = vunpack.c.l.b16 %v1808
        %v2159 = vunpack.c.h.b16 %v1808
        %v2160 = vunpack.c.l.b16 %v1809
        %v2161 = vunpack.c.h.b16 %v1809
        %v2162 = vunpack.c.l.b16 %v1810
        %v2163 = vunpack.c.h.b16 %v1810
        %v2164 = vunpack.c.l.b16 %v1811
        %v2165 = vunpack.c.h.b16 %v1811
        %v2166 = vunpack.c.l.b16 %v1812
        %v2167 = vunpack.c.h.b16 %v1812
        %v2168 = vunpack.c.l.b16 %v1813
        %v2169 = vunpack.c.h.b16 %v1813
        %v2170 = vunpack.c.l.b16 %v1814
        %v2171 = vunpack.c.h.b16 %v1814
        %v2172 = vunpack.c.l.b16 %v1815
        %v2173 = vunpack.c.h.b16 %v1815
        %v2174 = vunpack.c.l.b16 %v1816
        %v2175 = vunpack.c.h.b16 %v1816
        %v2176 = vunpack.c.l.b16 %v1817
        %v2177 = vunpack.c.h.b16 %v1817
        %v2178 = vunpack.c.l.b16 %v1818
        %v2179 = vunpack.c.h.b16 %v1818
        %v2180 = vunpack.c.l.b16 %v1819
        %v2181 = vunpack.c.h.b16 %v1819
        %v2182 = vunpack.c.l.b16 %v1820
        %v2183 = vunpack.c.h.b16 %v1820
        %v2184 = vunpack.c.l.b16 %v1821
        %v2185 = vunpack.c.h.b16 %v1821
        %v2186 = vunpack.c.l.b16 %v1822
        %v2187 = vunpack.c.h.b16 %v1822
        %v2188 = vunpack.c.l.b16 %v1823
        %v2189 = vunpack.c.h.b16 %v1823
        %v2190 = vunpack.c.l.b16 %v1824
        %v2191 = vunpack.c.h.b16 %v1824
        %v2192 = vunpack.c.l.b16 %v1825
        %v2193 = vunpack.c.h.b16 %v1825
        %v2194 = vunpack.c.l.b16 %v1826
        %v2195 = vunpack.c.h.b16 %v1826
        %v2196 = vunpack.c.l.b16 %v1827
        %v2197 = vunpack.c.h.b16 %v1827
        %v2198 = vunpack.c.l.b16 %v1828
        %v2199 = vunpack.c.h.b16 %v1828
        %v2200 = vunpack.c.l.b16 %v1829
        %v2201 = vunpack.c.h.b16 %v1829
        %v2202 = vunpack.c.l.b16 %v1830
        %v2203 = vunpack.c.h.b16 %v1830
        %v2204 = vunpack.c.l.b16 %v1831
        %v2205 = vunpack.c.h.b16 %v1831
        %v2206 = vunpack.c.l.b16 %v1832
        %v2207 = vunpack.c.h.b16 %v1832
        %v2208 = vunpack.c.l.b16 %v1833
        %v2209 = vunpack.c.h.b16 %v1833
        %v2210 = vunpack.c.l.b16 %v1834
        %v2211 = vunpack.c.h.b16 %v1834
        %v2212 = vunpack.c.l.b16 %v1835
        %v2213 = vunpack.c.h.b16 %v1835
        %v2214 = vunpack.c.l.b16 %v1836
        %v2215 = vunpack.c.h.b16 %v1836
        %v2216 = vunpack.c.l.b16 %v1837
        %v2217 = vunpack.c.h.b16 %v1837
        %v2218 = vunpack.c.l.b16 %v1838
        %v2219 = vunpack.c.h.b16 %v1838
        %v2220 = vunpack.c.l.b16 %v1839
        %v2221 = vunpack.c.h.b16 %v1839
        %v2222 = vunpack.c.l.b16 %v1840
        %v2223 = vunpack.c.h.b16 %v1840
        %v2224 = vunpack.c.l.b16 %v1841
        %v2225 = vunpack.c.h.b16 %v1841
        %v2226 = vpack.c.b16 %v1978, %v1970
        %v2227 = vpack.c.b16 %v1979, %v1971
        %v2228 = vpack.c.b16 %v1980, %v1972
        %v2229 = vpack.c.b16 %v1981, %v1973
        %v2230 = vpack.c.b16 %v1982, %v1974
        %v2231 = vpack.c.b16 %v1983, %v1975
        %v2232 = vpack.c.b16 %v1984, %v1976
        %v2233 = vpack.c.b16 %v1985, %v1977
        %v2234 = vpack.c.b16 %v1994, %v1986
        %v2235 = vpack.c.b16 %v1995, %v1987
        %v2236 = vpack.c.b16 %v1996, %v1988
        %v2237 = vpack.c.b16 %v1997, %v1989
        %v2238 = vpack.c.b16 %v1998, %v1990
        %v2239 = vpack.c.b16 %v1999, %v1991
        %v2240 = vpack.c.b16 %v2000, %v1992
        %v2241 = vpack.c.b16 %v2001, %v1993
        %v2242 = vpack.c.b16 %v2010, %v2002
        %v2243 = vpack.c.b16 %v2011, %v2003
        %v2244 = vpack.c.b16 %v2012, %v2004
        %v2245 = vpack.c.b16 %v2013, %v2005
        %v2246 = vpack.c.b16 %v2014, %v2006
        %v2247 = vpack.c.b16 %v2015, %v2007
        %v2248 = vpack.c.b16 %v2016, %v2008
        %v2249 = vpack.c.b16 %v2017, %v2009
        %v2250 = vpack.c.b16 %v2026, %v2018
        %v2251 = vpack.c.b16 %v2027, %v2019
        %v2252 = vpack.c.b16 %v2028, %v2020
        %v2253 = vpack.c.b16 %v2029, %v2021
        %v2254 = vpack.c.b16 %v2030, %v2022
        %v2255 = vpack.c.b16 %v2031, %v2023
        %v2256 = vpack.c.b16 %v2032, %v2024
        %v2257 = vpack.c.b16 %v2033, %v2025
        %v2258 = vpack.c.b16 %v2042, %v2034
        %v2259 = vpack.c.b16 %v2043, %v2035
        %v2260 = vpack.c.b16 %v2044, %v2036
        %v2261 = vpack.c.b16 %v2045, %v2037
        %v2262 = vpack.c.b16 %v2046, %v2038
        %v2263 = vpack.c.b16 %v2047, %v2039
        %v2264 = vpack.c.b16 %v2048, %v2040
        %v2265 = vpack.c.b16 %v2049, %v2041
        %v2266 = vpack.c.b16 %v2058, %v2050
        %v2267 = vpack.c.b16 %v2059, %v2051
        %v2268 = vpack.c.b16 %v2060, %v2052
        %v2269 = vpack.c.b16 %v2061, %v2053
        %v2270 = vpack.c.b16 %v2062, %v2054
        %v2271 = vpack.c.b16 %v2063, %v2055
        %v2272 = vpack.c.b16 %v2064, %v2056
        %v2273 = vpack.c.b16 %v2065, %v2057
        %v2274 = vpack.c.b16 %v2074, %v2066
        %v2275 = vpack.c.b16 %v2075, %v2067
        %v2276 = vpack.c.b16 %v2076, %v2068
        %v2277 = vpack.c.b16 %v2077, %v2069
        %v2278 = vpack.c.b16 %v2078, %v2070
        %v2279 = vpack.c.b16 %v2079, %v2071
        %v2280 = vpack.c.b16 %v2080, %v2072
        %v2281 = vpack.c.b16 %v2081, %v2073
        %v2282 = vpack.c.b16 %v2090, %v2082
        %v2283 = vpack.c.b16 %v2091, %v2083
        %v2284 = vpack.c.b16 %v2092, %v2084
        %v2285 = vpack.c.b16 %v2093, %v2085
        %v2286 = vpack.c.b16 %v2094, %v2086
        %v2287 = vpack.c.b16 %v2095, %v2087
        %v2288 = vpack.c.b16 %v2096, %v2088
        %v2289 = vpack.c.b16 %v2097, %v2089
        %v2290 = vpack.c.b16 %v2106, %v2098
        %v2291 = vpack.c.b16 %v2107, %v2099
        %v2292 = vpack.c.b16 %v2108, %v2100
        %v2293 = vpack.c.b16 %v2109, %v2101
        %v2294 = vpack.c.b16 %v2110, %v2102
        %v2295 = vpack.c.b16 %v2111, %v2103
        %v2296 = vpack.c.b16 %v2112, %v2104
        %v2297 = vpack.c.b16 %v2113, %v2105
        %v2298 = vpack.c.b16 %v2122, %v2114
        %v2299 = vpack.c.b16 %v2123, %v2115
        %v2300 = vpack.c.b16 %v2124, %v2116
        %v2301 = vpack.c.b16 %v2125, %v2117
        %v2302 = vpack.c.b16 %v2126, %v2118
        %v2303 = vpack.c.b16 %v2127, %v2119
        %v2304 = vpack.c.b16 %v2128, %v2120
        %v2305 = vpack.c.b16 %v2129, %v2121
        %v2306 = vpack.c.b16 %v2138, %v2130
        %v2307 = vpack.c.b16 %v2139, %v2131
        %v2308 = vpack.c.b16 %v2140, %v2132
        %v2309 = vpack.c.b16 %v2141, %v2133
        %v2310 = vpack.c.b16 %v2142, %v2134
        %v2311 = vpack.c.b16 %v2143, %v2135
        %v2312 = vpack.c.b16 %v2144, %v2136
        %v2313 = vpack.c.b16 %v2145, %v2137
        %v2314 = vpack.c.b16 %v2154, %v2146
        %v2315 = vpack.c.b16 %v2155, %v2147
        %v2316 = vpack.c.b16 %v2156, %v2148
        %v2317 = vpack.c.b16 %v2157, %v2149
        %v2318 = vpack.c.b16 %v2158, %v2150
        %v2319 = vpack.c.b16 %v2159, %v2151
        %v2320 = vpack.c.b16 %v2160, %v2152
        %v2321 = vpack.c.b16 %v2161, %v2153
        %v2322 = vpack.c.b16 %v2170, %v2162
        %v2323 = vpack.c.b16 %v2171, %v2163
        %v2324 = vpack.c.b16 %v2172, %v2164
        %v2325 = vpack.c.b16 %v2173, %v2165
        %v2326 = vpack.c.b16 %v2174, %v2166
        %v2327 = vpack.c.b16 %v2175, %v2167
        %v2328 = vpack.c.b16 %v2176, %v2168
        %v2329 = vpack.c.b16 %v2177, %v2169
        %v2330 = vpack.c.b16 %v2186, %v2178
        %v2331 = vpack.c.b16 %v2187, %v2179
        %v2332 = vpack.c.b16 %v2188, %v2180
        %v2333 = vpack.c.b16 %v2189, %v2181
        %v2334 = vpack.c.b16 %v2190, %v2182
        %v2335 = vpack.c.b16 %v2191, %v2183
        %v2336 = vpack.c.b16 %v2192, %v2184
        %v2337 = vpack.c.b16 %v2193, %v2185
        %v2338 = vpack.c.b16 %v2202, %v2194
        %v2339 = vpack.c.b16 %v2203, %v2195
        %v2340 = vpack.c.b16 %v2204, %v2196
        %v2341 = vpack.c.b16 %v2205, %v2197
        %v2342 = vpack.c.b16 %v2206, %v2198
        %v2343 = vpack.c.b16 %v2207, %v2199
        %v2344 = vpack.c.b16 %v2208, %v2200
        %v2345 = vpack.c.b16 %v2209, %v2201
        %v2346 = vpack.c.b16 %v2218, %v2210
        %v2347 = vpack.c.b16 %v2219, %v2211
        %v2348 = vpack.c.b16 %v2220, %v2212
        %v2349 = vpack.c.b16 %v2221, %v2213
        %v2350 = vpack.c.b16 %v2222, %v2214
        %v2351 = vpack.c.b16 %v2223, %v2215
        %v2352 = vpack.c.b16 %v2224, %v2216
        %v2353 = vpack.c.b16 %v2225, %v2217
        %2482 = vmatprep.subr.bf16.mxu0 %v2227
        %2483 = vmatpush1.bf16.msra.mxu0 %v2226
        %2484 = vmatprep.subr.bf16.mxu0 %v2235
        %2485 = vmatpush1.bf16.msra.mxu0 %v2234
        %2486 = vmatprep.subr.bf16.mxu0 %v2243
        %2487 = vmatpush1.bf16.msra.mxu0 %v2242
        %2488 = vmatprep.subr.bf16.mxu0 %v2251
        %2489 = vmatpush1.bf16.msra.mxu0 %v2250
        %2490 = vmatprep.subr.bf16.mxu0 %v2259
        %2491 = vmatpush1.bf16.msra.mxu0 %v2258
        %2492 = vmatprep.subr.bf16.mxu0 %v2267
        %2493 = vmatpush1.bf16.msra.mxu0 %v2266
        %2494 = vmatprep.subr.bf16.mxu0 %v2275
        %2495 = vmatpush1.bf16.msra.mxu0 %v2274
        %2496 = vmatprep.subr.bf16.mxu0 %v2283
        %2497 = vmatpush1.bf16.msra.mxu0 %v2282
        %2498 = vmatprep.subr.bf16.mxu0 %v2291
        %2499 = vmatpush1.bf16.msra.mxu0 %v2290
        %2500 = vmatprep.subr.bf16.mxu0 %v2299
        %2501 = vmatpush1.bf16.msra.mxu0 %v2298
        %2502 = vmatprep.subr.bf16.mxu0 %v2307
        %2503 = vmatpush1.bf16.msra.mxu0 %v2306
        %2504 = vmatprep.subr.bf16.mxu0 %v2315
        %2505 = vmatpush1.bf16.msra.mxu0 %v2314
        %2506 = vmatprep.subr.bf16.mxu0 %v2323
        %2507 = vmatpush1.bf16.msra.mxu0 %v2322
        %2508 = vmatprep.subr.bf16.mxu0 %v2331
        %2509 = vmatpush1.bf16.msra.mxu0 %v2330
        %2510 = vmatprep.subr.bf16.mxu0 %v2339
        %2511 = vmatpush1.bf16.msra.mxu0 %v2338
        %2512 = vmatprep.subr.bf16.mxu0 %v2347
        %2513 = vmatpush1.bf16.msra.mxu0 %v2346
        %2514 = vmatprep.mubr.bf16.mxu0 %v1683
        %2515 = vmatmul.mubr.bf16.gmra.mrb[0].mxu0 %v1682
        %v2516 = vpop.f32.mrb[0].mxu0
        %v2517 = vadd.f32 0.0, %v2516
        %v2518 = vpop.f32.mrb[0].mxu0
        %v2519 = vadd.f32 0.0, %v2518
        %v2520 = vpop.f32.mrb[0].mxu0
        %v2521 = vadd.f32 0.0, %v2520
        %v2522 = vpop.f32.mrb[0].mxu0
        %v2523 = vadd.f32 0.0, %v2522
        %2524 = vmatprep.mubr.bf16.mxu0 %v1685
        %2525 = vmatmul.mubr.bf16.gmra.mrb[0].mxu0 %v1684
        %v2526 = vpop.f32.mrb[0].mxu0
        %v2527 = vadd.f32 0.0, %v2526
        %v2528 = vpop.f32.mrb[0].mxu0
        %v2529 = vadd.f32 0.0, %v2528
        %v2530 = vpop.f32.mrb[0].mxu0
        %v2531 = vadd.f32 0.0, %v2530
        %v2532 = vpop.f32.mrb[0].mxu0
        %v2533 = vadd.f32 0.0, %v2532
        %2534 = vmatprep.mubr.bf16.mxu0 %v1687
        %2535 = vmatmul.mubr.bf16.gmra.mrb[0].mxu0 %v1686
        %v2536 = vpop.f32.mrb[0].mxu0
        %v2537 = vadd.f32 0.0, %v2536
        %v2538 = vpop.f32.mrb[0].mxu0
        %v2539 = vadd.f32 0.0, %v2538
        %v2540 = vpop.f32.mrb[0].mxu0
        %v2541 = vadd.f32 0.0, %v2540
        %v2542 = vpop.f32.mrb[0].mxu0
        %v2543 = vadd.f32 0.0, %v2542
        %2544 = vmatprep.mubr.bf16.mxu0 %v1689
        %2545 = vmatmul.mubr.bf16.gmra.mrb[0].mxu0 %v1688
        %v2546 = vpop.f32.mrb[0].mxu0
        %v2547 = vadd.f32 0.0, %v2546
        %v2548 = vpop.f32.mrb[0].mxu0
        %v2549 = vadd.f32 0.0, %v2548
        %v2550 = vpop.f32.mrb[0].mxu0
        %v2551 = vadd.f32 0.0, %v2550
        %v2552 = vpop.f32.mrb[0].mxu0
        %v2553 = vadd.f32 0.0, %v2552
        %2554 = vmatprep.mubr.bf16.mxu0 %v1691
        %2555 = vmatmul.mubr.bf16.gmra.mrb[0].mxu0 %v1690
        %v2556 = vpop.f32.mrb[0].mxu0
        %v2557 = vadd.f32 0.0, %v2556
        %v2558 = vpop.f32.mrb[0].mxu0
        %v2559 = vadd.f32 0.0, %v2558
        %v2560 = vpop.f32.mrb[0].mxu0
        %v2561 = vadd.f32 0.0, %v2560
        %v2562 = vpop.f32.mrb[0].mxu0
        %v2563 = vadd.f32 0.0, %v2562
        %2564 = vmatprep.mubr.bf16.mxu0 %v1693
        %2565 = vmatmul.mubr.bf16.gmra.mrb[0].mxu0 %v1692
        %v2566 = vpop.f32.mrb[0].mxu0
        %v2567 = vadd.f32 0.0, %v2566
        %v2568 = vpop.f32.mrb[0].mxu0
        %v2569 = vadd.f32 0.0, %v2568
        %v2570 = vpop.f32.mrb[0].mxu0
        %v2571 = vadd.f32 0.0, %v2570
        %v2572 = vpop.f32.mrb[0].mxu0
        %v2573 = vadd.f32 0.0, %v2572
        %2574 = vmatprep.mubr.bf16.mxu0 %v1695
        %2575 = vmatmul.mubr.bf16.gmra.mrb[0].mxu0 %v1694
        %v2576 = vpop.f32.mrb[0].mxu0
        %v2577 = vadd.f32 0.0, %v2576
        %v2578 = vpop.f32.mrb[0].mxu0
        %v2579 = vadd.f32 0.0, %v2578
        %v2580 = vpop.f32.mrb[0].mxu0
        %v2581 = vadd.f32 0.0, %v2580
        %v2582 = vpop.f32.mrb[0].mxu0
        %v2583 = vadd.f32 0.0, %v2582
        %2584 = vmatprep.mubr.bf16.mxu0 %v1697
        %2585 = vmatmul.mubr.bf16.gmra.mrb[0].mxu0 %v1696
        %v2586 = vpop.f32.mrb[0].mxu0
        %v2587 = vadd.f32 0.0, %v2586
        %v2588 = vpop.f32.mrb[0].mxu0
        %v2589 = vadd.f32 0.0, %v2588
        %v2590 = vpop.f32.mrb[0].mxu0
        %v2591 = vadd.f32 0.0, %v2590
        %v2592 = vpop.f32.mrb[0].mxu0
        %v2593 = vadd.f32 0.0, %v2592
        %2594 = vmatprep.mubr.bf16.mxu0 %v1699
        %2595 = vmatmul.mubr.bf16.gmra.mrb[0].mxu0 %v1698
        %v2596 = vpop.f32.mrb[0].mxu0
        %v2597 = vadd.f32 0.0, %v2596
        %v2598 = vpop.f32.mrb[0].mxu0
        %v2599 = vadd.f32 0.0, %v2598
        %v2600 = vpop.f32.mrb[0].mxu0
        %v2601 = vadd.f32 0.0, %v2600
        %v2602 = vpop.f32.mrb[0].mxu0
        %v2603 = vadd.f32 0.0, %v2602
        %2604 = vmatprep.mubr.bf16.mxu0 %v1701
        %2605 = vmatmul.mubr.bf16.gmra.mrb[0].mxu0 %v1700
        %v2606 = vpop.f32.mrb[0].mxu0
        %v2607 = vadd.f32 0.0, %v2606
        %v2608 = vpop.f32.mrb[0].mxu0
        %v2609 = vadd.f32 0.0, %v2608
        %v2610 = vpop.f32.mrb[0].mxu0
        %v2611 = vadd.f32 0.0, %v2610
        %v2612 = vpop.f32.mrb[0].mxu0
        %v2613 = vadd.f32 0.0, %v2612
        %2614 = vmatprep.mubr.bf16.mxu0 %v1703
        %2615 = vmatmul.mubr.bf16.gmra.mrb[0].mxu0 %v1702
        %v2616 = vpop.f32.mrb[0].mxu0
        %v2617 = vadd.f32 0.0, %v2616
        %v2618 = vpop.f32.mrb[0].mxu0
        %v2619 = vadd.f32 0.0, %v2618
        %v2620 = vpop.f32.mrb[0].mxu0
        %v2621 = vadd.f32 0.0, %v2620
        %v2622 = vpop.f32.mrb[0].mxu0
        %v2623 = vadd.f32 0.0, %v2622
        %2624 = vmatprep.mubr.bf16.mxu0 %v1705
        %2625 = vmatmul.mubr.bf16.gmra.mrb[0].mxu0 %v1704
        %v2626 = vpop.f32.mrb[0].mxu0
        %v2627 = vadd.f32 0.0, %v2626
        %v2628 = vpop.f32.mrb[0].mxu0
        %v2629 = vadd.f32 0.0, %v2628
        %v2630 = vpop.f32.mrb[0].mxu0
        %v2631 = vadd.f32 0.0, %v2630
        %v2632 = vpop.f32.mrb[0].mxu0
        %v2633 = vadd.f32 0.0, %v2632
        %2634 = vmatprep.mubr.bf16.mxu0 %v1707
        %2635 = vmatmul.mubr.bf16.gmra.mrb[0].mxu0 %v1706
        %v2636 = vpop.f32.mrb[0].mxu0
        %v2637 = vadd.f32 0.0, %v2636
        %v2638 = vpop.f32.mrb[0].mxu0
        %v2639 = vadd.f32 0.0, %v2638
        %v2640 = vpop.f32.mrb[0].mxu0
        %v2641 = vadd.f32 0.0, %v2640
        %v2642 = vpop.f32.mrb[0].mxu0
        %v2643 = vadd.f32 0.0, %v2642
        %2644 = vmatprep.mubr.bf16.mxu0 %v1709
        %2645 = vmatmul.mubr.bf16.gmra.mrb[0].mxu0 %v1708
        %v2646 = vpop.f32.mrb[0].mxu0
        %v2647 = vadd.f32 0.0, %v2646
        %v2648 = vpop.f32.mrb[0].mxu0
        %v2649 = vadd.f32 0.0, %v2648
        %v2650 = vpop.f32.mrb[0].mxu0
        %v2651 = vadd.f32 0.0, %v2650
        %v2652 = vpop.f32.mrb[0].mxu0
        %v2653 = vadd.f32 0.0, %v2652
        %2654 = vmatprep.mubr.bf16.mxu0 %v1711
        %2655 = vmatmul.mubr.bf16.gmra.mrb[0].mxu0 %v1710
        %v2656 = vpop.f32.mrb[0].mxu0
        %v2657 = vadd.f32 0.0, %v2656
        %v2658 = vpop.f32.mrb[0].mxu0
        %v2659 = vadd.f32 0.0, %v2658
        %v2660 = vpop.f32.mrb[0].mxu0
        %v2661 = vadd.f32 0.0, %v2660
        %v2662 = vpop.f32.mrb[0].mxu0
        %v2663 = vadd.f32 0.0, %v2662
        %2664 = vmatprep.mubr.bf16.mxu0 %v1713
        %2665 = vmatmul.mubr.bf16.gmra.mrb[0].mxu0 %v1712
        %v2666 = vpop.f32.mrb[0].mxu0
        %v2667 = vadd.f32 0.0, %v2666
        %v2668 = vpop.f32.mrb[0].mxu0
        %v2669 = vadd.f32 0.0, %v2668
        %v2670 = vpop.f32.mrb[0].mxu0
        %v2671 = vadd.f32 0.0, %v2670
        %v2672 = vpop.f32.mrb[0].mxu0
        %v2673 = vadd.f32 0.0, %v2672
        %2674 = vdwg.mxu0
        %2675 = vmatprep.subr.bf16.mxu0 %v2229
        %2676 = vmatpush1.bf16.msra.mxu0 %v2228
        %2677 = vmatprep.subr.bf16.mxu0 %v2237
        %2678 = vmatpush1.bf16.msra.mxu0 %v2236
        %2679 = vmatprep.subr.bf16.mxu0 %v2245
        %2680 = vmatpush1.bf16.msra.mxu0 %v2244
        %2681 = vmatprep.subr.bf16.mxu0 %v2253
        %2682 = vmatpush1.bf16.msra.mxu0 %v2252
        %2683 = vmatprep.subr.bf16.mxu0 %v2261
        %2684 = vmatpush1.bf16.msra.mxu0 %v2260
        %2685 = vmatprep.subr.bf16.mxu0 %v2269
        %2686 = vmatpush1.bf16.msra.mxu0 %v2268
        %2687 = vmatprep.subr.bf16.mxu0 %v2277
        %2688 = vmatpush1.bf16.msra.mxu0 %v2276
        %2689 = vmatprep.subr.bf16.mxu0 %v2285
        %2690 = vmatpush1.bf16.msra.mxu0 %v2284
        %2691 = vmatprep.subr.bf16.mxu0 %v2293
        %2692 = vmatpush1.bf16.msra.mxu0 %v2292
        %2693 = vmatprep.subr.bf16.mxu0 %v2301
        %2694 = vmatpush1.bf16.msra.mxu0 %v2300
        %2695 = vmatprep.subr.bf16.mxu0 %v2309
        %2696 = vmatpush1.bf16.msra.mxu0 %v2308
        %2697 = vmatprep.subr.bf16.mxu0 %v2317
        %2698 = vmatpush1.bf16.msra.mxu0 %v2316
        %2699 = vmatprep.subr.bf16.mxu0 %v2325
        %2700 = vmatpush1.bf16.msra.mxu0 %v2324
        %2701 = vmatprep.subr.bf16.mxu0 %v2333
        %2702 = vmatpush1.bf16.msra.mxu0 %v2332
        %2703 = vmatprep.subr.bf16.mxu0 %v2341
        %2704 = vmatpush1.bf16.msra.mxu0 %v2340
        %2705 = vmatprep.subr.bf16.mxu0 %v2349
        %2706 = vmatpush1.bf16.msra.mxu0 %v2348
        %2707 = vmatprep.mubr.bf16.mxu0 %v1683
        %2708 = vmatmul.mubr.bf16.gmra.mrb[0].mxu0 %v1682
        %v2709 = vpop.f32.mrb[0].mxu0
        %v2710 = vadd.f32 0.0, %v2709
        %v2711 = vpop.f32.mrb[0].mxu0
        %v2712 = vadd.f32 0.0, %v2711
        %v2713 = vpop.f32.mrb[0].mxu0
        %v2714 = vadd.f32 0.0, %v2713
        %v2715 = vpop.f32.mrb[0].mxu0
        %v2716 = vadd.f32 0.0, %v2715
        %2717 = vmatprep.mubr.bf16.mxu0 %v1685
        %2718 = vmatmul.mubr.bf16.gmra.mrb[0].mxu0 %v1684
        %v2719 = vpop.f32.mrb[0].mxu0
        %v2720 = vadd.f32 0.0, %v2719
        %v2721 = vpop.f32.mrb[0].mxu0
        %v2722 = vadd.f32 0.0, %v2721
        %v2723 = vpop.f32.mrb[0].mxu0
        %v2724 = vadd.f32 0.0, %v2723
        %v2725 = vpop.f32.mrb[0].mxu0
        %v2726 = vadd.f32 0.0, %v2725
        %2727 = vmatprep.mubr.bf16.mxu0 %v1687
        %2728 = vmatmul.mubr.bf16.gmra.mrb[0].mxu0 %v1686
        %v2729 = vpop.f32.mrb[0].mxu0
        %v2730 = vadd.f32 0.0, %v2729
        %v2731 = vpop.f32.mrb[0].mxu0
        %v2732 = vadd.f32 0.0, %v2731
        %v2733 = vpop.f32.mrb[0].mxu0
        %v2734 = vadd.f32 0.0, %v2733
        %v2735 = vpop.f32.mrb[0].mxu0
        %v2736 = vadd.f32 0.0, %v2735
        %2737 = vmatprep.mubr.bf16.mxu0 %v1689
        %2738 = vmatmul.mubr.bf16.gmra.mrb[0].mxu0 %v1688
        %v2739 = vpop.f32.mrb[0].mxu0
        %v2740 = vadd.f32 0.0, %v2739
        %v2741 = vpop.f32.mrb[0].mxu0
        %v2742 = vadd.f32 0.0, %v2741
        %v2743 = vpop.f32.mrb[0].mxu0
        %v2744 = vadd.f32 0.0, %v2743
        %v2745 = vpop.f32.mrb[0].mxu0
        %v2746 = vadd.f32 0.0, %v2745
        %2747 = vmatprep.mubr.bf16.mxu0 %v1691
        %2748 = vmatmul.mubr.bf16.gmra.mrb[0].mxu0 %v1690
        %v2749 = vpop.f32.mrb[0].mxu0
        %v2750 = vadd.f32 0.0, %v2749
        %v2751 = vpop.f32.mrb[0].mxu0
        %v2752 = vadd.f32 0.0, %v2751
        %v2753 = vpop.f32.mrb[0].mxu0
        %v2754 = vadd.f32 0.0, %v2753
        %v2755 = vpop.f32.mrb[0].mxu0
        %v2756 = vadd.f32 0.0, %v2755
        %2757 = vmatprep.mubr.bf16.mxu0 %v1693
        %2758 = vmatmul.mubr.bf16.gmra.mrb[0].mxu0 %v1692
        %v2759 = vpop.f32.mrb[0].mxu0
        %v2760 = vadd.f32 0.0, %v2759
        %v2761 = vpop.f32.mrb[0].mxu0
        %v2762 = vadd.f32 0.0, %v2761
        %v2763 = vpop.f32.mrb[0].mxu0
        %v2764 = vadd.f32 0.0, %v2763
        %v2765 = vpop.f32.mrb[0].mxu0
        %v2766 = vadd.f32 0.0, %v2765
        %2767 = vmatprep.mubr.bf16.mxu0 %v1695
        %2768 = vmatmul.mubr.bf16.gmra.mrb[0].mxu0 %v1694
        %v2769 = vpop.f32.mrb[0].mxu0
        %v2770 = vadd.f32 0.0, %v2769
        %v2771 = vpop.f32.mrb[0].mxu0
        %v2772 = vadd.f32 0.0, %v2771
        %v2773 = vpop.f32.mrb[0].mxu0
        %v2774 = vadd.f32 0.0, %v2773
        %v2775 = vpop.f32.mrb[0].mxu0
        %v2776 = vadd.f32 0.0, %v2775
        %2777 = vmatprep.mubr.bf16.mxu0 %v1697
        %2778 = vmatmul.mubr.bf16.gmra.mrb[0].mxu0 %v1696
        %v2779 = vpop.f32.mrb[0].mxu0
        %v2780 = vadd.f32 0.0, %v2779
        %v2781 = vpop.f32.mrb[0].mxu0
        %v2782 = vadd.f32 0.0, %v2781
        %v2783 = vpop.f32.mrb[0].mxu0
        %v2784 = vadd.f32 0.0, %v2783
        %v2785 = vpop.f32.mrb[0].mxu0
        %v2786 = vadd.f32 0.0, %v2785
        %2787 = vmatprep.mubr.bf16.mxu0 %v1699
        %2788 = vmatmul.mubr.bf16.gmra.mrb[0].mxu0 %v1698
        %v2789 = vpop.f32.mrb[0].mxu0
        %v2790 = vadd.f32 0.0, %v2789
        %v2791 = vpop.f32.mrb[0].mxu0
        %v2792 = vadd.f32 0.0, %v2791
        %v2793 = vpop.f32.mrb[0].mxu0
        %v2794 = vadd.f32 0.0, %v2793
        %v2795 = vpop.f32.mrb[0].mxu0
        %v2796 = vadd.f32 0.0, %v2795
        %2797 = vmatprep.mubr.bf16.mxu0 %v1701
        %2798 = vmatmul.mubr.bf16.gmra.mrb[0].mxu0 %v1700
        %v2799 = vpop.f32.mrb[0].mxu0
        %v2800 = vadd.f32 0.0, %v2799
        %v2801 = vpop.f32.mrb[0].mxu0
        %v2802 = vadd.f32 0.0, %v2801
        %v2803 = vpop.f32.mrb[0].mxu0
        %v2804 = vadd.f32 0.0, %v2803
        %v2805 = vpop.f32.mrb[0].mxu0
        %v2806 = vadd.f32 0.0, %v2805
        %2807 = vmatprep.mubr.bf16.mxu0 %v1703
        %2808 = vmatmul.mubr.bf16.gmra.mrb[0].mxu0 %v1702
        %v2809 = vpop.f32.mrb[0].mxu0
        %v2810 = vadd.f32 0.0, %v2809
        %v2811 = vpop.f32.mrb[0].mxu0
        %v2812 = vadd.f32 0.0, %v2811
        %v2813 = vpop.f32.mrb[0].mxu0
        %v2814 = vadd.f32 0.0, %v2813
        %v2815 = vpop.f32.mrb[0].mxu0
        %v2816 = vadd.f32 0.0, %v2815
        %2817 = vmatprep.mubr.bf16.mxu0 %v1705
        %2818 = vmatmul.mubr.bf16.gmra.mrb[0].mxu0 %v1704
        %v2819 = vpop.f32.mrb[0].mxu0
        %v2820 = vadd.f32 0.0, %v2819
        %v2821 = vpop.f32.mrb[0].mxu0
        %v2822 = vadd.f32 0.0, %v2821
        %v2823 = vpop.f32.mrb[0].mxu0
        %v2824 = vadd.f32 0.0, %v2823
        %v2825 = vpop.f32.mrb[0].mxu0
        %v2826 = vadd.f32 0.0, %v2825
        %2827 = vmatprep.mubr.bf16.mxu0 %v1707
        %2828 = vmatmul.mubr.bf16.gmra.mrb[0].mxu0 %v1706
        %v2829 = vpop.f32.mrb[0].mxu0
        %v2830 = vadd.f32 0.0, %v2829
        %v2831 = vpop.f32.mrb[0].mxu0
        %v2832 = vadd.f32 0.0, %v2831
        %v2833 = vpop.f32.mrb[0].mxu0
        %v2834 = vadd.f32 0.0, %v2833
        %v2835 = vpop.f32.mrb[0].mxu0
        %v2836 = vadd.f32 0.0, %v2835
        %2837 = vmatprep.mubr.bf16.mxu0 %v1709
        %2838 = vmatmul.mubr.bf16.gmra.mrb[0].mxu0 %v1708
        %v2839 = vpop.f32.mrb[0].mxu0
        %v2840 = vadd.f32 0.0, %v2839
        %v2841 = vpop.f32.mrb[0].mxu0
        %v2842 = vadd.f32 0.0, %v2841
        %v2843 = vpop.f32.mrb[0].mxu0
        %v2844 = vadd.f32 0.0, %v2843
        %v2845 = vpop.f32.mrb[0].mxu0
        %v2846 = vadd.f32 0.0, %v2845
        %2847 = vmatprep.mubr.bf16.mxu0 %v1711
        %2848 = vmatmul.mubr.bf16.gmra.mrb[0].mxu0 %v1710
        %v2849 = vpop.f32.mrb[0].mxu0
        %v2850 = vadd.f32 0.0, %v2849
        %v2851 = vpop.f32.mrb[0].mxu0
        %v2852 = vadd.f32 0.0, %v2851
        %v2853 = vpop.f32.mrb[0].mxu0
        %v2854 = vadd.f32 0.0, %v2853
        %v2855 = vpop.f32.mrb[0].mxu0
        %v2856 = vadd.f32 0.0, %v2855
        %2857 = vmatprep.mubr.bf16.mxu0 %v1713
        %2858 = vmatmul.mubr.bf16.gmra.mrb[0].mxu0 %v1712
        %v2859 = vpop.f32.mrb[0].mxu0
        %v2860 = vadd.f32 0.0, %v2859
        %v2861 = vpop.f32.mrb[0].mxu0
        %v2862 = vadd.f32 0.0, %v2861
        %v2863 = vpop.f32.mrb[0].mxu0
        %v2864 = vadd.f32 0.0, %v2863
        %v2865 = vpop.f32.mrb[0].mxu0
        %v2866 = vadd.f32 0.0, %v2865
        %2867 = vdwg.mxu0
        %2868 = vmatprep.subr.bf16.mxu0 %v2231
        %2869 = vmatpush1.bf16.msra.mxu0 %v2230
        %2870 = vmatprep.subr.bf16.mxu0 %v2239
        %2871 = vmatpush1.bf16.msra.mxu0 %v2238
        %2872 = vmatprep.subr.bf16.mxu0 %v2247
        %2873 = vmatpush1.bf16.msra.mxu0 %v2246
        %2874 = vmatprep.subr.bf16.mxu0 %v2255
        %2875 = vmatpush1.bf16.msra.mxu0 %v2254
        %2876 = vmatprep.subr.bf16.mxu0 %v2263
        %2877 = vmatpush1.bf16.msra.mxu0 %v2262
        %2878 = vmatprep.subr.bf16.mxu0 %v2271
        %2879 = vmatpush1.bf16.msra.mxu0 %v2270
        %2880 = vmatprep.subr.bf16.mxu0 %v2279
        %2881 = vmatpush1.bf16.msra.mxu0 %v2278
        %2882 = vmatprep.subr.bf16.mxu0 %v2287
        %2883 = vmatpush1.bf16.msra.mxu0 %v2286
        %2884 = vmatprep.subr.bf16.mxu0 %v2295
        %2885 = vmatpush1.bf16.msra.mxu0 %v2294
        %2886 = vmatprep.subr.bf16.mxu0 %v2303
        %2887 = vmatpush1.bf16.msra.mxu0 %v2302
        %2888 = vmatprep.subr.bf16.mxu0 %v2311
        %2889 = vmatpush1.bf16.msra.mxu0 %v2310
        %2890 = vmatprep.subr.bf16.mxu0 %v2319
        %2891 = vmatpush1.bf16.msra.mxu0 %v2318
        %2892 = vmatprep.subr.bf16.mxu0 %v2327
        %2893 = vmatpush1.bf16.msra.mxu0 %v2326
        %2894 = vmatprep.subr.bf16.mxu0 %v2335
        %2895 = vmatpush1.bf16.msra.mxu0 %v2334
        %2896 = vmatprep.subr.bf16.mxu0 %v2343
        %2897 = vmatpush1.bf16.msra.mxu0 %v2342
        %2898 = vmatprep.subr.bf16.mxu0 %v2351
        %2899 = vmatpush1.bf16.msra.mxu0 %v2350
        %2900 = vmatprep.mubr.bf16.mxu0 %v1683
        %2901 = vmatmul.mubr.bf16.gmra.mrb[0].mxu0 %v1682
        %v2902 = vpop.f32.mrb[0].mxu0
        %v2903 = vadd.f32 0.0, %v2902
        %v2904 = vpop.f32.mrb[0].mxu0
        %v2905 = vadd.f32 0.0, %v2904
        %v2906 = vpop.f32.mrb[0].mxu0
        %v2907 = vadd.f32 0.0, %v2906
        %v2908 = vpop.f32.mrb[0].mxu0
        %v2909 = vadd.f32 0.0, %v2908
        %2910 = vmatprep.mubr.bf16.mxu0 %v1685
        %2911 = vmatmul.mubr.bf16.gmra.mrb[0].mxu0 %v1684
        %v2912 = vpop.f32.mrb[0].mxu0
        %v2913 = vadd.f32 0.0, %v2912
        %v2914 = vpop.f32.mrb[0].mxu0
        %v2915 = vadd.f32 0.0, %v2914
        %v2916 = vpop.f32.mrb[0].mxu0
        %v2917 = vadd.f32 0.0, %v2916
        %v2918 = vpop.f32.mrb[0].mxu0
        %v2919 = vadd.f32 0.0, %v2918
        %2920 = vmatprep.mubr.bf16.mxu0 %v1687
        %2921 = vmatmul.mubr.bf16.gmra.mrb[0].mxu0 %v1686
        %v2922 = vpop.f32.mrb[0].mxu0
        %v2923 = vadd.f32 0.0, %v2922
        %v2924 = vpop.f32.mrb[0].mxu0
        %v2925 = vadd.f32 0.0, %v2924
        %v2926 = vpop.f32.mrb[0].mxu0
        %v2927 = vadd.f32 0.0, %v2926
        %v2928 = vpop.f32.mrb[0].mxu0
        %v2929 = vadd.f32 0.0, %v2928
        %2930 = vmatprep.mubr.bf16.mxu0 %v1689
        %2931 = vmatmul.mubr.bf16.gmra.mrb[0].mxu0 %v1688
        %v2932 = vpop.f32.mrb[0].mxu0
        %v2933 = vadd.f32 0.0, %v2932
        %v2934 = vpop.f32.mrb[0].mxu0
        %v2935 = vadd.f32 0.0, %v2934
        %v2936 = vpop.f32.mrb[0].mxu0
        %v2937 = vadd.f32 0.0, %v2936
        %v2938 = vpop.f32.mrb[0].mxu0
        %v2939 = vadd.f32 0.0, %v2938
        %2940 = vmatprep.mubr.bf16.mxu0 %v1691
        %2941 = vmatmul.mubr.bf16.gmra.mrb[0].mxu0 %v1690
        %v2942 = vpop.f32.mrb[0].mxu0
        %v2943 = vadd.f32 0.0, %v2942
        %v2944 = vpop.f32.mrb[0].mxu0
        %v2945 = vadd.f32 0.0, %v2944
        %v2946 = vpop.f32.mrb[0].mxu0
        %v2947 = vadd.f32 0.0, %v2946
        %v2948 = vpop.f32.mrb[0].mxu0
        %v2949 = vadd.f32 0.0, %v2948
        %2950 = vmatprep.mubr.bf16.mxu0 %v1693
        %2951 = vmatmul.mubr.bf16.gmra.mrb[0].mxu0 %v1692
        %v2952 = vpop.f32.mrb[0].mxu0
        %v2953 = vadd.f32 0.0, %v2952
        %v2954 = vpop.f32.mrb[0].mxu0
        %v2955 = vadd.f32 0.0, %v2954
        %v2956 = vpop.f32.mrb[0].mxu0
        %v2957 = vadd.f32 0.0, %v2956
        %v2958 = vpop.f32.mrb[0].mxu0
        %v2959 = vadd.f32 0.0, %v2958
        %2960 = vmatprep.mubr.bf16.mxu0 %v1695
        %2961 = vmatmul.mubr.bf16.gmra.mrb[0].mxu0 %v1694
        %v2962 = vpop.f32.mrb[0].mxu0
        %v2963 = vadd.f32 0.0, %v2962
        %v2964 = vpop.f32.mrb[0].mxu0
        %v2965 = vadd.f32 0.0, %v2964
        %v2966 = vpop.f32.mrb[0].mxu0
        %v2967 = vadd.f32 0.0, %v2966
        %v2968 = vpop.f32.mrb[0].mxu0
        %v2969 = vadd.f32 0.0, %v2968
        %2970 = vmatprep.mubr.bf16.mxu0 %v1697
        %2971 = vmatmul.mubr.bf16.gmra.mrb[0].mxu0 %v1696
        %v2972 = vpop.f32.mrb[0].mxu0
        %v2973 = vadd.f32 0.0, %v2972
        %v2974 = vpop.f32.mrb[0].mxu0
        %v2975 = vadd.f32 0.0, %v2974
        %v2976 = vpop.f32.mrb[0].mxu0
        %v2977 = vadd.f32 0.0, %v2976
        %v2978 = vpop.f32.mrb[0].mxu0
        %v2979 = vadd.f32 0.0, %v2978
        %2980 = vmatprep.mubr.bf16.mxu0 %v1699
        %2981 = vmatmul.mubr.bf16.gmra.mrb[0].mxu0 %v1698
        %v2982 = vpop.f32.mrb[0].mxu0
        %v2983 = vadd.f32 0.0, %v2982
        %v2984 = vpop.f32.mrb[0].mxu0
        %v2985 = vadd.f32 0.0, %v2984
        %v2986 = vpop.f32.mrb[0].mxu0
        %v2987 = vadd.f32 0.0, %v2986
        %v2988 = vpop.f32.mrb[0].mxu0
        %v2989 = vadd.f32 0.0, %v2988
        %2990 = vmatprep.mubr.bf16.mxu0 %v1701
        %2991 = vmatmul.mubr.bf16.gmra.mrb[0].mxu0 %v1700
        %v2992 = vpop.f32.mrb[0].mxu0
        %v2993 = vadd.f32 0.0, %v2992
        %v2994 = vpop.f32.mrb[0].mxu0
        %v2995 = vadd.f32 0.0, %v2994
        %v2996 = vpop.f32.mrb[0].mxu0
        %v2997 = vadd.f32 0.0, %v2996
        %v2998 = vpop.f32.mrb[0].mxu0
        %v2999 = vadd.f32 0.0, %v2998
        %3000 = vmatprep.mubr.bf16.mxu0 %v1703
        %3001 = vmatmul.mubr.bf16.gmra.mrb[0].mxu0 %v1702
        %v3002 = vpop.f32.mrb[0].mxu0
        %v3003 = vadd.f32 0.0, %v3002
        %v3004 = vpop.f32.mrb[0].mxu0
        %v3005 = vadd.f32 0.0, %v3004
        %v3006 = vpop.f32.mrb[0].mxu0
        %v3007 = vadd.f32 0.0, %v3006
        %v3008 = vpop.f32.mrb[0].mxu0
        %v3009 = vadd.f32 0.0, %v3008
        %3010 = vmatprep.mubr.bf16.mxu0 %v1705
        %3011 = vmatmul.mubr.bf16.gmra.mrb[0].mxu0 %v1704
        %v3012 = vpop.f32.mrb[0].mxu0
        %v3013 = vadd.f32 0.0, %v3012
        %v3014 = vpop.f32.mrb[0].mxu0
        %v3015 = vadd.f32 0.0, %v3014
        %v3016 = vpop.f32.mrb[0].mxu0
        %v3017 = vadd.f32 0.0, %v3016
        %v3018 = vpop.f32.mrb[0].mxu0
        %v3019 = vadd.f32 0.0, %v3018
        %3020 = vmatprep.mubr.bf16.mxu0 %v1707
        %3021 = vmatmul.mubr.bf16.gmra.mrb[0].mxu0 %v1706
        %v3022 = vpop.f32.mrb[0].mxu0
        %v3023 = vadd.f32 0.0, %v3022
        %v3024 = vpop.f32.mrb[0].mxu0
        %v3025 = vadd.f32 0.0, %v3024
        %v3026 = vpop.f32.mrb[0].mxu0
        %v3027 = vadd.f32 0.0, %v3026
        %v3028 = vpop.f32.mrb[0].mxu0
        %v3029 = vadd.f32 0.0, %v3028
        %3030 = vmatprep.mubr.bf16.mxu0 %v1709
        %3031 = vmatmul.mubr.bf16.gmra.mrb[0].mxu0 %v1708
        %v3032 = vpop.f32.mrb[0].mxu0
        %v3033 = vadd.f32 0.0, %v3032
        %v3034 = vpop.f32.mrb[0].mxu0
        %v3035 = vadd.f32 0.0, %v3034
        %v3036 = vpop.f32.mrb[0].mxu0
        %v3037 = vadd.f32 0.0, %v3036
        %v3038 = vpop.f32.mrb[0].mxu0
        %v3039 = vadd.f32 0.0, %v3038
        %3040 = vmatprep.mubr.bf16.mxu0 %v1711
        %3041 = vmatmul.mubr.bf16.gmra.mrb[0].mxu0 %v1710
        %v3042 = vpop.f32.mrb[0].mxu0
        %v3043 = vadd.f32 0.0, %v3042
        %v3044 = vpop.f32.mrb[0].mxu0
        %v3045 = vadd.f32 0.0, %v3044
        %v3046 = vpop.f32.mrb[0].mxu0
        %v3047 = vadd.f32 0.0, %v3046
        %v3048 = vpop.f32.mrb[0].mxu0
        %v3049 = vadd.f32 0.0, %v3048
        %3050 = vmatprep.mubr.bf16.mxu0 %v1713
        %3051 = vmatmul.mubr.bf16.gmra.mrb[0].mxu0 %v1712
        %v3052 = vpop.f32.mrb[0].mxu0
        %v3053 = vadd.f32 0.0, %v3052
        %v3054 = vpop.f32.mrb[0].mxu0
        %v3055 = vadd.f32 0.0, %v3054
        %v3056 = vpop.f32.mrb[0].mxu0
        %v3057 = vadd.f32 0.0, %v3056
        %v3058 = vpop.f32.mrb[0].mxu0
        %v3059 = vadd.f32 0.0, %v3058
        %3060 = vdwg.mxu0
        %3061 = vmatprep.subr.bf16.mxu0 %v2233
        %3062 = vmatpush1.bf16.msra.mxu0 %v2232
        %3063 = vmatprep.subr.bf16.mxu0 %v2241
        %3064 = vmatpush1.bf16.msra.mxu0 %v2240
        %3065 = vmatprep.subr.bf16.mxu0 %v2249
        %3066 = vmatpush1.bf16.msra.mxu0 %v2248
        %3067 = vmatprep.subr.bf16.mxu0 %v2257
        %3068 = vmatpush1.bf16.msra.mxu0 %v2256
        %3069 = vmatprep.subr.bf16.mxu0 %v2265
        %3070 = vmatpush1.bf16.msra.mxu0 %v2264
        %3071 = vmatprep.subr.bf16.mxu0 %v2273
        %3072 = vmatpush1.bf16.msra.mxu0 %v2272
        %3073 = vmatprep.subr.bf16.mxu0 %v2281
        %3074 = vmatpush1.bf16.msra.mxu0 %v2280
        %3075 = vmatprep.subr.bf16.mxu0 %v2289
        %3076 = vmatpush1.bf16.msra.mxu0 %v2288
        %3077 = vmatprep.subr.bf16.mxu0 %v2297
        %3078 = vmatpush1.bf16.msra.mxu0 %v2296
        %3079 = vmatprep.subr.bf16.mxu0 %v2305
        %3080 = vmatpush1.bf16.msra.mxu0 %v2304
        %3081 = vmatprep.subr.bf16.mxu0 %v2313
        %3082 = vmatpush1.bf16.msra.mxu0 %v2312
        %3083 = vmatprep.subr.bf16.mxu0 %v2321
        %3084 = vmatpush1.bf16.msra.mxu0 %v2320
        %3085 = vmatprep.subr.bf16.mxu0 %v2329
        %3086 = vmatpush1.bf16.msra.mxu0 %v2328
        %3087 = vmatprep.subr.bf16.mxu0 %v2337
        %3088 = vmatpush1.bf16.msra.mxu0 %v2336
        %3089 = vmatprep.subr.bf16.mxu0 %v2345
        %3090 = vmatpush1.bf16.msra.mxu0 %v2344
        %3091 = vmatprep.subr.bf16.mxu0 %v2353
        %3092 = vmatpush1.bf16.msra.mxu0 %v2352
        %3093 = vmatprep.mubr.bf16.mxu0 %v1683
        %3094 = vmatmul.mubr.bf16.gmra.mrb[0].mxu0 %v1682
        %v3095 = vpop.f32.mrb[0].mxu0
        %v3096 = vadd.f32 0.0, %v3095
        %v3097 = vpop.f32.mrb[0].mxu0
        %v3098 = vadd.f32 0.0, %v3097
        %v3099 = vpop.f32.mrb[0].mxu0
        %v3100 = vadd.f32 0.0, %v3099
        %v3101 = vpop.f32.mrb[0].mxu0
        %v3102 = vadd.f32 0.0, %v3101
        %3103 = vmatprep.mubr.bf16.mxu0 %v1685
        %3104 = vmatmul.mubr.bf16.gmra.mrb[0].mxu0 %v1684
        %v3105 = vpop.f32.mrb[0].mxu0
        %v3106 = vadd.f32 0.0, %v3105
        %v3107 = vpop.f32.mrb[0].mxu0
        %v3108 = vadd.f32 0.0, %v3107
        %v3109 = vpop.f32.mrb[0].mxu0
        %v3110 = vadd.f32 0.0, %v3109
        %v3111 = vpop.f32.mrb[0].mxu0
        %v3112 = vadd.f32 0.0, %v3111
        %3113 = vmatprep.mubr.bf16.mxu0 %v1687
        %3114 = vmatmul.mubr.bf16.gmra.mrb[0].mxu0 %v1686
        %v3115 = vpop.f32.mrb[0].mxu0
        %v3116 = vadd.f32 0.0, %v3115
        %v3117 = vpop.f32.mrb[0].mxu0
        %v3118 = vadd.f32 0.0, %v3117
        %v3119 = vpop.f32.mrb[0].mxu0
        %v3120 = vadd.f32 0.0, %v3119
        %v3121 = vpop.f32.mrb[0].mxu0
        %v3122 = vadd.f32 0.0, %v3121
        %3123 = vmatprep.mubr.bf16.mxu0 %v1689
        %3124 = vmatmul.mubr.bf16.gmra.mrb[0].mxu0 %v1688
        %v3125 = vpop.f32.mrb[0].mxu0
        %v3126 = vadd.f32 0.0, %v3125
        %v3127 = vpop.f32.mrb[0].mxu0
        %v3128 = vadd.f32 0.0, %v3127
        %v3129 = vpop.f32.mrb[0].mxu0
        %v3130 = vadd.f32 0.0, %v3129
        %v3131 = vpop.f32.mrb[0].mxu0
        %v3132 = vadd.f32 0.0, %v3131
        %3133 = vmatprep.mubr.bf16.mxu0 %v1691
        %3134 = vmatmul.mubr.bf16.gmra.mrb[0].mxu0 %v1690
        %v3135 = vpop.f32.mrb[0].mxu0
        %v3136 = vadd.f32 0.0, %v3135
        %v3137 = vpop.f32.mrb[0].mxu0
        %v3138 = vadd.f32 0.0, %v3137
        %v3139 = vpop.f32.mrb[0].mxu0
        %v3140 = vadd.f32 0.0, %v3139
        %v3141 = vpop.f32.mrb[0].mxu0
        %v3142 = vadd.f32 0.0, %v3141
        %3143 = vmatprep.mubr.bf16.mxu0 %v1693
        %3144 = vmatmul.mubr.bf16.gmra.mrb[0].mxu0 %v1692
        %v3145 = vpop.f32.mrb[0].mxu0
        %v3146 = vadd.f32 0.0, %v3145
        %v3147 = vpop.f32.mrb[0].mxu0
        %v3148 = vadd.f32 0.0, %v3147
        %v3149 = vpop.f32.mrb[0].mxu0
        %v3150 = vadd.f32 0.0, %v3149
        %v3151 = vpop.f32.mrb[0].mxu0
        %v3152 = vadd.f32 0.0, %v3151
        %3153 = vmatprep.mubr.bf16.mxu0 %v1695
        %3154 = vmatmul.mubr.bf16.gmra.mrb[0].mxu0 %v1694
        %v3155 = vpop.f32.mrb[0].mxu0
        %v3156 = vadd.f32 0.0, %v3155
        %v3157 = vpop.f32.mrb[0].mxu0
        %v3158 = vadd.f32 0.0, %v3157
        %v3159 = vpop.f32.mrb[0].mxu0
        %v3160 = vadd.f32 0.0, %v3159
        %v3161 = vpop.f32.mrb[0].mxu0
        %v3162 = vadd.f32 0.0, %v3161
        %3163 = vmatprep.mubr.bf16.mxu0 %v1697
        %3164 = vmatmul.mubr.bf16.gmra.mrb[0].mxu0 %v1696
        %v3165 = vpop.f32.mrb[0].mxu0
        %v3166 = vadd.f32 0.0, %v3165
        %v3167 = vpop.f32.mrb[0].mxu0
        %v3168 = vadd.f32 0.0, %v3167
        %v3169 = vpop.f32.mrb[0].mxu0
        %v3170 = vadd.f32 0.0, %v3169
        %v3171 = vpop.f32.mrb[0].mxu0
        %v3172 = vadd.f32 0.0, %v3171
        %3173 = vmatprep.mubr.bf16.mxu0 %v1699
        %3174 = vmatmul.mubr.bf16.gmra.mrb[0].mxu0 %v1698
        %v3175 = vpop.f32.mrb[0].mxu0
        %v3176 = vadd.f32 0.0, %v3175
        %v3177 = vpop.f32.mrb[0].mxu0
        %v3178 = vadd.f32 0.0, %v3177
        %v3179 = vpop.f32.mrb[0].mxu0
        %v3180 = vadd.f32 0.0, %v3179
        %v3181 = vpop.f32.mrb[0].mxu0
        %v3182 = vadd.f32 0.0, %v3181
        %3183 = vmatprep.mubr.bf16.mxu0 %v1701
        %3184 = vmatmul.mubr.bf16.gmra.mrb[0].mxu0 %v1700
        %v3185 = vpop.f32.mrb[0].mxu0
        %v3186 = vadd.f32 0.0, %v3185
        %v3187 = vpop.f32.mrb[0].mxu0
        %v3188 = vadd.f32 0.0, %v3187
        %v3189 = vpop.f32.mrb[0].mxu0
        %v3190 = vadd.f32 0.0, %v3189
        %v3191 = vpop.f32.mrb[0].mxu0
        %v3192 = vadd.f32 0.0, %v3191
        %3193 = vmatprep.mubr.bf16.mxu0 %v1703
        %3194 = vmatmul.mubr.bf16.gmra.mrb[0].mxu0 %v1702
        %v3195 = vpop.f32.mrb[0].mxu0
        %v3196 = vadd.f32 0.0, %v3195
        %v3197 = vpop.f32.mrb[0].mxu0
        %v3198 = vadd.f32 0.0, %v3197
        %v3199 = vpop.f32.mrb[0].mxu0
        %v3200 = vadd.f32 0.0, %v3199
        %v3201 = vpop.f32.mrb[0].mxu0
        %v3202 = vadd.f32 0.0, %v3201
        %3203 = vmatprep.mubr.bf16.mxu0 %v1705
        %3204 = vmatmul.mubr.bf16.gmra.mrb[0].mxu0 %v1704
        %v3205 = vpop.f32.mrb[0].mxu0
        %v3206 = vadd.f32 0.0, %v3205
        %v3207 = vpop.f32.mrb[0].mxu0
        %v3208 = vadd.f32 0.0, %v3207
        %v3209 = vpop.f32.mrb[0].mxu0
        %v3210 = vadd.f32 0.0, %v3209
        %v3211 = vpop.f32.mrb[0].mxu0
        %v3212 = vadd.f32 0.0, %v3211
        %3213 = vmatprep.mubr.bf16.mxu0 %v1707
        %3214 = vmatmul.mubr.bf16.gmra.mrb[0].mxu0 %v1706
        %v3215 = vpop.f32.mrb[0].mxu0
        %v3216 = vadd.f32 0.0, %v3215
        %v3217 = vpop.f32.mrb[0].mxu0
        %v3218 = vadd.f32 0.0, %v3217
        %v3219 = vpop.f32.mrb[0].mxu0
        %v3220 = vadd.f32 0.0, %v3219
        %v3221 = vpop.f32.mrb[0].mxu0
        %v3222 = vadd.f32 0.0, %v3221
        %3223 = vmatprep.mubr.bf16.mxu0 %v1709
        %3224 = vmatmul.mubr.bf16.gmra.mrb[0].mxu0 %v1708
        %v3225 = vpop.f32.mrb[0].mxu0
        %v3226 = vadd.f32 0.0, %v3225
        %v3227 = vpop.f32.mrb[0].mxu0
        %v3228 = vadd.f32 0.0, %v3227
        %v3229 = vpop.f32.mrb[0].mxu0
        %v3230 = vadd.f32 0.0, %v3229
        %v3231 = vpop.f32.mrb[0].mxu0
        %v3232 = vadd.f32 0.0, %v3231
        %3233 = vmatprep.mubr.bf16.mxu0 %v1711
        %3234 = vmatmul.mubr.bf16.gmra.mrb[0].mxu0 %v1710
        %v3235 = vpop.f32.mrb[0].mxu0
        %v3236 = vadd.f32 0.0, %v3235
        %v3237 = vpop.f32.mrb[0].mxu0
        %v3238 = vadd.f32 0.0, %v3237
        %v3239 = vpop.f32.mrb[0].mxu0
        %v3240 = vadd.f32 0.0, %v3239
        %v3241 = vpop.f32.mrb[0].mxu0
        %v3242 = vadd.f32 0.0, %v3241
        %3243 = vmatprep.mubr.bf16.mxu0 %v1713
        %3244 = vmatmul.mubr.bf16.gmra.mrb[0].mxu0 %v1712
        %v3245 = vpop.f32.mrb[0].mxu0
        %v3246 = vadd.f32 0.0, %v3245
        %v3247 = vpop.f32.mrb[0].mxu0
        %v3248 = vadd.f32 0.0, %v3247
        %v3249 = vpop.f32.mrb[0].mxu0
        %v3250 = vadd.f32 0.0, %v3249
        %v3251 = vpop.f32.mrb[0].mxu0
        %v3252 = vadd.f32 0.0, %v3251
        %3253 = vdwg.mxu0
        %v3254 = vpack.c.bf16 %v2521, %v2517
        %v3255 = vpack.c.bf16 %v2523, %v2519
        %v3256 = vpack.c.bf16 %v2714, %v2710
        %v3257 = vpack.c.bf16 %v2716, %v2712
        %v3258 = vpack.c.bf16 %v2907, %v2903
        %v3259 = vpack.c.bf16 %v2909, %v2905
        %v3260 = vpack.c.bf16 %v3100, %v3096
        %v3261 = vpack.c.bf16 %v3102, %v3098
        %v3262 = vpack.c.bf16 %v2531, %v2527
        %v3263 = vpack.c.bf16 %v2533, %v2529
        %v3264 = vpack.c.bf16 %v2724, %v2720
        %v3265 = vpack.c.bf16 %v2726, %v2722
        %v3266 = vpack.c.bf16 %v2917, %v2913
        %v3267 = vpack.c.bf16 %v2919, %v2915
        %v3268 = vpack.c.bf16 %v3110, %v3106
        %v3269 = vpack.c.bf16 %v3112, %v3108
        %v3270 = vpack.c.bf16 %v2541, %v2537
        %v3271 = vpack.c.bf16 %v2543, %v2539
        %v3272 = vpack.c.bf16 %v2734, %v2730
        %v3273 = vpack.c.bf16 %v2736, %v2732
        %v3274 = vpack.c.bf16 %v2927, %v2923
        %v3275 = vpack.c.bf16 %v2929, %v2925
        %v3276 = vpack.c.bf16 %v3120, %v3116
        %v3277 = vpack.c.bf16 %v3122, %v3118
        %v3278 = vpack.c.bf16 %v2551, %v2547
        %v3279 = vpack.c.bf16 %v2553, %v2549
        %v3280 = vpack.c.bf16 %v2744, %v2740
        %v3281 = vpack.c.bf16 %v2746, %v2742
        %v3282 = vpack.c.bf16 %v2937, %v2933
        %v3283 = vpack.c.bf16 %v2939, %v2935
        %v3284 = vpack.c.bf16 %v3130, %v3126
        %v3285 = vpack.c.bf16 %v3132, %v3128
        %v3286 = vpack.c.bf16 %v2561, %v2557
        %v3287 = vpack.c.bf16 %v2563, %v2559
        %v3288 = vpack.c.bf16 %v2754, %v2750
        %v3289 = vpack.c.bf16 %v2756, %v2752
        %v3290 = vpack.c.bf16 %v2947, %v2943
        %v3291 = vpack.c.bf16 %v2949, %v2945
        %v3292 = vpack.c.bf16 %v3140, %v3136
        %v3293 = vpack.c.bf16 %v3142, %v3138
        %v3294 = vpack.c.bf16 %v2571, %v2567
        %v3295 = vpack.c.bf16 %v2573, %v2569
        %v3296 = vpack.c.bf16 %v2764, %v2760
        %v3297 = vpack.c.bf16 %v2766, %v2762
        %v3298 = vpack.c.bf16 %v2957, %v2953
        %v3299 = vpack.c.bf16 %v2959, %v2955
        %v3300 = vpack.c.bf16 %v3150, %v3146
        %v3301 = vpack.c.bf16 %v3152, %v3148
        %v3302 = vpack.c.bf16 %v2581, %v2577
        %v3303 = vpack.c.bf16 %v2583, %v2579
        %v3304 = vpack.c.bf16 %v2774, %v2770
        %v3305 = vpack.c.bf16 %v2776, %v2772
        %v3306 = vpack.c.bf16 %v2967, %v2963
        %v3307 = vpack.c.bf16 %v2969, %v2965
        %v3308 = vpack.c.bf16 %v3160, %v3156
        %v3309 = vpack.c.bf16 %v3162, %v3158
        %v3310 = vpack.c.bf16 %v2591, %v2587
        %v3311 = vpack.c.bf16 %v2593, %v2589
        %v3312 = vpack.c.bf16 %v2784, %v2780
        %v3313 = vpack.c.bf16 %v2786, %v2782
        %v3314 = vpack.c.bf16 %v2977, %v2973
        %v3315 = vpack.c.bf16 %v2979, %v2975
        %v3316 = vpack.c.bf16 %v3170, %v3166
        %v3317 = vpack.c.bf16 %v3172, %v3168
        %v3318 = vpack.c.bf16 %v2601, %v2597
        %v3319 = vpack.c.bf16 %v2603, %v2599
        %v3320 = vpack.c.bf16 %v2794, %v2790
        %v3321 = vpack.c.bf16 %v2796, %v2792
        %v3322 = vpack.c.bf16 %v2987, %v2983
        %v3323 = vpack.c.bf16 %v2989, %v2985
        %v3324 = vpack.c.bf16 %v3180, %v3176
        %v3325 = vpack.c.bf16 %v3182, %v3178
        %v3326 = vpack.c.bf16 %v2611, %v2607
        %v3327 = vpack.c.bf16 %v2613, %v2609
        %v3328 = vpack.c.bf16 %v2804, %v2800
        %v3329 = vpack.c.bf16 %v2806, %v2802
        %v3330 = vpack.c.bf16 %v2997, %v2993
        %v3331 = vpack.c.bf16 %v2999, %v2995
        %v3332 = vpack.c.bf16 %v3190, %v3186
        %v3333 = vpack.c.bf16 %v3192, %v3188
        %v3334 = vpack.c.bf16 %v2621, %v2617
        %v3335 = vpack.c.bf16 %v2623, %v2619
        %v3336 = vpack.c.bf16 %v2814, %v2810
        %v3337 = vpack.c.bf16 %v2816, %v2812
        %v3338 = vpack.c.bf16 %v3007, %v3003
        %v3339 = vpack.c.bf16 %v3009, %v3005
        %v3340 = vpack.c.bf16 %v3200, %v3196
        %v3341 = vpack.c.bf16 %v3202, %v3198
        %v3342 = vpack.c.bf16 %v2631, %v2627
        %v3343 = vpack.c.bf16 %v2633, %v2629
        %v3344 = vpack.c.bf16 %v2824, %v2820
        %v3345 = vpack.c.bf16 %v2826, %v2822
        %v3346 = vpack.c.bf16 %v3017, %v3013
        %v3347 = vpack.c.bf16 %v3019, %v3015
        %v3348 = vpack.c.bf16 %v3210, %v3206
        %v3349 = vpack.c.bf16 %v3212, %v3208
        %v3350 = vpack.c.bf16 %v2641, %v2637
        %v3351 = vpack.c.bf16 %v2643, %v2639
        %v3352 = vpack.c.bf16 %v2834, %v2830
        %v3353 = vpack.c.bf16 %v2836, %v2832
        %v3354 = vpack.c.bf16 %v3027, %v3023
        %v3355 = vpack.c.bf16 %v3029, %v3025
        %v3356 = vpack.c.bf16 %v3220, %v3216
        %v3357 = vpack.c.bf16 %v3222, %v3218
        %v3358 = vpack.c.bf16 %v2651, %v2647
        %v3359 = vpack.c.bf16 %v2653, %v2649
        %v3360 = vpack.c.bf16 %v2844, %v2840
        %v3361 = vpack.c.bf16 %v2846, %v2842
        %v3362 = vpack.c.bf16 %v3037, %v3033
        %v3363 = vpack.c.bf16 %v3039, %v3035
        %v3364 = vpack.c.bf16 %v3230, %v3226
        %v3365 = vpack.c.bf16 %v3232, %v3228
        %v3366 = vpack.c.bf16 %v2661, %v2657
        %v3367 = vpack.c.bf16 %v2663, %v2659
        %v3368 = vpack.c.bf16 %v2854, %v2850
        %v3369 = vpack.c.bf16 %v2856, %v2852
        %v3370 = vpack.c.bf16 %v3047, %v3043
        %v3371 = vpack.c.bf16 %v3049, %v3045
        %v3372 = vpack.c.bf16 %v3240, %v3236
        %v3373 = vpack.c.bf16 %v3242, %v3238
        %v3374 = vpack.c.bf16 %v2671, %v2667
        %v3375 = vpack.c.bf16 %v2673, %v2669
        %v3376 = vpack.c.bf16 %v2864, %v2860
        %v3377 = vpack.c.bf16 %v2866, %v2862
        %v3378 = vpack.c.bf16 %v3057, %v3053
        %v3379 = vpack.c.bf16 %v3059, %v3055
        %v3380 = vpack.c.bf16 %v3250, %v3246
        %v3381 = vpack.c.bf16 %v3252, %v3248
        %3382 = vmatprep.subr.bf16.mxu0 0
        %3383 = vmatpush1.bf16.xpose.msra.mxu0 %v3256
        %3384 = vmatprep.subr.bf16.mxu0 0
        %3385 = vmatpush1.bf16.xpose.msra.mxu0 0
        %3386 = vmatprep.subr.bf16.mxu0 0
        %3387 = vmatpush1.bf16.xpose.msra.mxu0 0
        %3388 = vmatprep.subr.bf16.mxu0 0
        %3389 = vmatpush1.bf16.xpose.msra.mxu0 0
        %3390 = vmatprep.subr.bf16.mxu0 0
        %3391 = vmatpush1.bf16.xpose.msra.mxu0 0
        %3392 = vmatprep.subr.bf16.mxu0 0
        %3393 = vmatpush1.bf16.xpose.msra.mxu0 0
        %3394 = vmatprep.subr.bf16.mxu0 0
        %3395 = vmatpush1.bf16.xpose.msra.mxu0 0
        %3396 = vmatprep.subr.bf16.mxu0 0
        %3397 = vmatpush1.bf16.xpose.msra.mxu0 0
        %3398 = vmatprep.subr.bf16.mxu0 0
        %3399 = vmatpush1.bf16.xpose.msra.mxu0 0
        %3400 = vmatprep.subr.bf16.mxu0 0
        %3401 = vmatpush1.bf16.xpose.msra.mxu0 0
        %3402 = vmatprep.subr.bf16.mxu0 0
        %3403 = vmatpush1.bf16.xpose.msra.mxu0 0
        %3404 = vmatprep.subr.bf16.mxu0 0
        %3405 = vmatpush1.bf16.xpose.msra.mxu0 0
        %3406 = vmatprep.subr.bf16.mxu0 0
        %3407 = vmatpush1.bf16.xpose.msra.mxu0 0
        %3408 = vmatprep.subr.bf16.mxu0 0
        %3409 = vmatpush1.bf16.xpose.msra.mxu0 0
        %3410 = vmatprep.subr.bf16.mxu0 0
        %3411 = vmatpush1.bf16.xpose.msra.mxu0 0
        %3412 = vmatprep.subr.bf16.mxu0 0
        %3413 = vmatpush1.bf16.xpose.msra.mxu0 0
        %3414 = vmatprep.mubr.bf16.mxu0 0
        %3415 = vmatmul.mubr.bf16.gmra.mrb[0].mxu0 %v3254
        %v3416 = vpop.f32.mrb[0].mxu0
        %v3417 = vadd.f32 0.0, %v3416
        %v3418 = vpop.f32.mrb[0].mxu0
        %v3419 = vpop.f32.mrb[0].mxu0
        %v3420 = vadd.f32 0.0, %v3419
        %v3421 = vpop.f32.mrb[0].mxu0
        %3422 = vdwg.mxu0
        %3423 = vmatprep.subr.bf16.mxu0 0
        %3424 = vmatpush1.bf16.xpose.msra.mxu0 %v3264
        %3425 = vmatprep.subr.bf16.mxu0 0
        %3426 = vmatpush1.bf16.xpose.msra.mxu0 0
        %3427 = vmatprep.subr.bf16.mxu0 0
        %3428 = vmatpush1.bf16.xpose.msra.mxu0 0
        %3429 = vmatprep.subr.bf16.mxu0 0
        %3430 = vmatpush1.bf16.xpose.msra.mxu0 0
        %3431 = vmatprep.subr.bf16.mxu0 0
        %3432 = vmatpush1.bf16.xpose.msra.mxu0 0
        %3433 = vmatprep.subr.bf16.mxu0 0
        %3434 = vmatpush1.bf16.xpose.msra.mxu0 0
        %3435 = vmatprep.subr.bf16.mxu0 0
        %3436 = vmatpush1.bf16.xpose.msra.mxu0 0
        %3437 = vmatprep.subr.bf16.mxu0 0
        %3438 = vmatpush1.bf16.xpose.msra.mxu0 0
        %3439 = vmatprep.subr.bf16.mxu0 0
        %3440 = vmatpush1.bf16.xpose.msra.mxu0 0
        %3441 = vmatprep.subr.bf16.mxu0 0
        %3442 = vmatpush1.bf16.xpose.msra.mxu0 0
        %3443 = vmatprep.subr.bf16.mxu0 0
        %3444 = vmatpush1.bf16.xpose.msra.mxu0 0
        %3445 = vmatprep.subr.bf16.mxu0 0
        %3446 = vmatpush1.bf16.xpose.msra.mxu0 0
        %3447 = vmatprep.subr.bf16.mxu0 0
        %3448 = vmatpush1.bf16.xpose.msra.mxu0 0
        %3449 = vmatprep.subr.bf16.mxu0 0
        %3450 = vmatpush1.bf16.xpose.msra.mxu0 0
        %3451 = vmatprep.subr.bf16.mxu0 0
        %3452 = vmatpush1.bf16.xpose.msra.mxu0 0
        %3453 = vmatprep.subr.bf16.mxu0 0
        %3454 = vmatpush1.bf16.xpose.msra.mxu0 0
        %3455 = vmatprep.mubr.bf16.mxu0 0
        %3456 = vmatmul.mubr.bf16.gmra.mrb[0].mxu0 %v3262
        %v3457 = vpop.f32.mrb[0].mxu0
        %v3458 = vadd.f32 0.0, %v3457
        %v3459 = vpop.f32.mrb[0].mxu0
        %v3460 = vpop.f32.mrb[0].mxu0
        %v3461 = vadd.f32 0.0, %v3460
        %v3462 = vpop.f32.mrb[0].mxu0
        %3463 = vdwg.mxu0
        %3464 = vmatprep.subr.bf16.mxu0 0
        %3465 = vmatpush1.bf16.xpose.msra.mxu0 %v3272
        %3466 = vmatprep.subr.bf16.mxu0 0
        %3467 = vmatpush1.bf16.xpose.msra.mxu0 0
        %3468 = vmatprep.subr.bf16.mxu0 0
        %3469 = vmatpush1.bf16.xpose.msra.mxu0 0
        %3470 = vmatprep.subr.bf16.mxu0 0
        %3471 = vmatpush1.bf16.xpose.msra.mxu0 0
        %3472 = vmatprep.subr.bf16.mxu0 0
        %3473 = vmatpush1.bf16.xpose.msra.mxu0 0
        %3474 = vmatprep.subr.bf16.mxu0 0
        %3475 = vmatpush1.bf16.xpose.msra.mxu0 0
        %3476 = vmatprep.subr.bf16.mxu0 0
        %3477 = vmatpush1.bf16.xpose.msra.mxu0 0
        %3478 = vmatprep.subr.bf16.mxu0 0
        %3479 = vmatpush1.bf16.xpose.msra.mxu0 0
        %3480 = vmatprep.subr.bf16.mxu0 0
        %3481 = vmatpush1.bf16.xpose.msra.mxu0 0
        %3482 = vmatprep.subr.bf16.mxu0 0
        %3483 = vmatpush1.bf16.xpose.msra.mxu0 0
        %3484 = vmatprep.subr.bf16.mxu0 0
        %3485 = vmatpush1.bf16.xpose.msra.mxu0 0
        %3486 = vmatprep.subr.bf16.mxu0 0
        %3487 = vmatpush1.bf16.xpose.msra.mxu0 0
        %3488 = vmatprep.subr.bf16.mxu0 0
        %3489 = vmatpush1.bf16.xpose.msra.mxu0 0
        %3490 = vmatprep.subr.bf16.mxu0 0
        %3491 = vmatpush1.bf16.xpose.msra.mxu0 0
        %3492 = vmatprep.subr.bf16.mxu0 0
        %3493 = vmatpush1.bf16.xpose.msra.mxu0 0
        %3494 = vmatprep.subr.bf16.mxu0 0
        %3495 = vmatpush1.bf16.xpose.msra.mxu0 0
        %3496 = vmatprep.mubr.bf16.mxu0 0
        %3497 = vmatmul.mubr.bf16.gmra.mrb[0].mxu0 %v3270
        %v3498 = vpop.f32.mrb[0].mxu0
        %v3499 = vadd.f32 0.0, %v3498
        %v3500 = vpop.f32.mrb[0].mxu0
        %v3501 = vpop.f32.mrb[0].mxu0
        %v3502 = vadd.f32 0.0, %v3501
        %v3503 = vpop.f32.mrb[0].mxu0
        %3504 = vdwg.mxu0
        %3505 = vmatprep.subr.bf16.mxu0 0
        %3506 = vmatpush1.bf16.xpose.msra.mxu0 %v3280
        %3507 = vmatprep.subr.bf16.mxu0 0
        %3508 = vmatpush1.bf16.xpose.msra.mxu0 0
        %3509 = vmatprep.subr.bf16.mxu0 0
        %3510 = vmatpush1.bf16.xpose.msra.mxu0 0
        %3511 = vmatprep.subr.bf16.mxu0 0
        %3512 = vmatpush1.bf16.xpose.msra.mxu0 0
        %3513 = vmatprep.subr.bf16.mxu0 0
        %3514 = vmatpush1.bf16.xpose.msra.mxu0 0
        %3515 = vmatprep.subr.bf16.mxu0 0
        %3516 = vmatpush1.bf16.xpose.msra.mxu0 0
        %3517 = vmatprep.subr.bf16.mxu0 0
        %3518 = vmatpush1.bf16.xpose.msra.mxu0 0
        %3519 = vmatprep.subr.bf16.mxu0 0
        %3520 = vmatpush1.bf16.xpose.msra.mxu0 0
        %3521 = vmatprep.subr.bf16.mxu0 0
        %3522 = vmatpush1.bf16.xpose.msra.mxu0 0
        %3523 = vmatprep.subr.bf16.mxu0 0
        %3524 = vmatpush1.bf16.xpose.msra.mxu0 0
        %3525 = vmatprep.subr.bf16.mxu0 0
        %3526 = vmatpush1.bf16.xpose.msra.mxu0 0
        %3527 = vmatprep.subr.bf16.mxu0 0
        %3528 = vmatpush1.bf16.xpose.msra.mxu0 0
        %3529 = vmatprep.subr.bf16.mxu0 0
        %3530 = vmatpush1.bf16.xpose.msra.mxu0 0
        %3531 = vmatprep.subr.bf16.mxu0 0
        %3532 = vmatpush1.bf16.xpose.msra.mxu0 0
        %3533 = vmatprep.subr.bf16.mxu0 0
        %3534 = vmatpush1.bf16.xpose.msra.mxu0 0
        %3535 = vmatprep.subr.bf16.mxu0 0
        %3536 = vmatpush1.bf16.xpose.msra.mxu0 0
        %3537 = vmatprep.mubr.bf16.mxu0 0
        %3538 = vmatmul.mubr.bf16.gmra.mrb[0].mxu0 %v3278
        %v3539 = vpop.f32.mrb[0].mxu0
        %v3540 = vadd.f32 0.0, %v3539
        %v3541 = vpop.f32.mrb[0].mxu0
        %v3542 = vpop.f32.mrb[0].mxu0
        %v3543 = vadd.f32 0.0, %v3542
        %v3544 = vpop.f32.mrb[0].mxu0
        %3545 = vdwg.mxu0
        %3546 = vmatprep.subr.bf16.mxu0 0
        %3547 = vmatpush1.bf16.xpose.msra.mxu0 %v3288
        %3548 = vmatprep.subr.bf16.mxu0 0
        %3549 = vmatpush1.bf16.xpose.msra.mxu0 0
        %3550 = vmatprep.subr.bf16.mxu0 0
        %3551 = vmatpush1.bf16.xpose.msra.mxu0 0
        %3552 = vmatprep.subr.bf16.mxu0 0
        %3553 = vmatpush1.bf16.xpose.msra.mxu0 0
        %3554 = vmatprep.subr.bf16.mxu0 0
        %3555 = vmatpush1.bf16.xpose.msra.mxu0 0
        %3556 = vmatprep.subr.bf16.mxu0 0
        %3557 = vmatpush1.bf16.xpose.msra.mxu0 0
        %3558 = vmatprep.subr.bf16.mxu0 0
        %3559 = vmatpush1.bf16.xpose.msra.mxu0 0
        %3560 = vmatprep.subr.bf16.mxu0 0
        %3561 = vmatpush1.bf16.xpose.msra.mxu0 0
        %3562 = vmatprep.subr.bf16.mxu0 0
        %3563 = vmatpush1.bf16.xpose.msra.mxu0 0
        %3564 = vmatprep.subr.bf16.mxu0 0
        %3565 = vmatpush1.bf16.xpose.msra.mxu0 0
        %3566 = vmatprep.subr.bf16.mxu0 0
        %3567 = vmatpush1.bf16.xpose.msra.mxu0 0
        %3568 = vmatprep.subr.bf16.mxu0 0
        %3569 = vmatpush1.bf16.xpose.msra.mxu0 0
        %3570 = vmatprep.subr.bf16.mxu0 0
        %3571 = vmatpush1.bf16.xpose.msra.mxu0 0
        %3572 = vmatprep.subr.bf16.mxu0 0
        %3573 = vmatpush1.bf16.xpose.msra.mxu0 0
        %3574 = vmatprep.subr.bf16.mxu0 0
        %3575 = vmatpush1.bf16.xpose.msra.mxu0 0
        %3576 = vmatprep.subr.bf16.mxu0 0
        %3577 = vmatpush1.bf16.xpose.msra.mxu0 0
        %3578 = vmatprep.mubr.bf16.mxu0 0
        %3579 = vmatmul.mubr.bf16.gmra.mrb[0].mxu0 %v3286
        %v3580 = vpop.f32.mrb[0].mxu0
        %v3581 = vadd.f32 0.0, %v3580
        %v3582 = vpop.f32.mrb[0].mxu0
        %v3583 = vpop.f32.mrb[0].mxu0
        %v3584 = vadd.f32 0.0, %v3583
        %v3585 = vpop.f32.mrb[0].mxu0
        %3586 = vdwg.mxu0
        %3587 = vmatprep.subr.bf16.mxu0 0
        %3588 = vmatpush1.bf16.xpose.msra.mxu0 %v3296
        %3589 = vmatprep.subr.bf16.mxu0 0
        %3590 = vmatpush1.bf16.xpose.msra.mxu0 0
        %3591 = vmatprep.subr.bf16.mxu0 0
        %3592 = vmatpush1.bf16.xpose.msra.mxu0 0
        %3593 = vmatprep.subr.bf16.mxu0 0
        %3594 = vmatpush1.bf16.xpose.msra.mxu0 0
        %3595 = vmatprep.subr.bf16.mxu0 0
        %3596 = vmatpush1.bf16.xpose.msra.mxu0 0
        %3597 = vmatprep.subr.bf16.mxu0 0
        %3598 = vmatpush1.bf16.xpose.msra.mxu0 0
        %3599 = vmatprep.subr.bf16.mxu0 0
        %3600 = vmatpush1.bf16.xpose.msra.mxu0 0
        %3601 = vmatprep.subr.bf16.mxu0 0
        %3602 = vmatpush1.bf16.xpose.msra.mxu0 0
        %3603 = vmatprep.subr.bf16.mxu0 0
        %3604 = vmatpush1.bf16.xpose.msra.mxu0 0
        %3605 = vmatprep.subr.bf16.mxu0 0
        %3606 = vmatpush1.bf16.xpose.msra.mxu0 0
        %3607 = vmatprep.subr.bf16.mxu0 0
        %3608 = vmatpush1.bf16.xpose.msra.mxu0 0
        %3609 = vmatprep.subr.bf16.mxu0 0
        %3610 = vmatpush1.bf16.xpose.msra.mxu0 0
        %3611 = vmatprep.subr.bf16.mxu0 0
        %3612 = vmatpush1.bf16.xpose.msra.mxu0 0
        %3613 = vmatprep.subr.bf16.mxu0 0
        %3614 = vmatpush1.bf16.xpose.msra.mxu0 0
        %3615 = vmatprep.subr.bf16.mxu0 0
        %3616 = vmatpush1.bf16.xpose.msra.mxu0 0
        %3617 = vmatprep.subr.bf16.mxu0 0
        %3618 = vmatpush1.bf16.xpose.msra.mxu0 0
        %3619 = vmatprep.mubr.bf16.mxu0 0
        %3620 = vmatmul.mubr.bf16.gmra.mrb[0].mxu0 %v3294
        %v3621 = vpop.f32.mrb[0].mxu0
        %v3622 = vadd.f32 0.0, %v3621
        %v3623 = vpop.f32.mrb[0].mxu0
        %v3624 = vpop.f32.mrb[0].mxu0
        %v3625 = vadd.f32 0.0, %v3624
        %v3626 = vpop.f32.mrb[0].mxu0
        %3627 = vdwg.mxu0
        %3628 = vmatprep.subr.bf16.mxu0 0
        %3629 = vmatpush1.bf16.xpose.msra.mxu0 %v3304
        %3630 = vmatprep.subr.bf16.mxu0 0
        %3631 = vmatpush1.bf16.xpose.msra.mxu0 0
        %3632 = vmatprep.subr.bf16.mxu0 0
        %3633 = vmatpush1.bf16.xpose.msra.mxu0 0
        %3634 = vmatprep.subr.bf16.mxu0 0
        %3635 = vmatpush1.bf16.xpose.msra.mxu0 0
        %3636 = vmatprep.subr.bf16.mxu0 0
        %3637 = vmatpush1.bf16.xpose.msra.mxu0 0
        %3638 = vmatprep.subr.bf16.mxu0 0
        %3639 = vmatpush1.bf16.xpose.msra.mxu0 0
        %3640 = vmatprep.subr.bf16.mxu0 0
        %3641 = vmatpush1.bf16.xpose.msra.mxu0 0
        %3642 = vmatprep.subr.bf16.mxu0 0
        %3643 = vmatpush1.bf16.xpose.msra.mxu0 0
        %3644 = vmatprep.subr.bf16.mxu0 0
        %3645 = vmatpush1.bf16.xpose.msra.mxu0 0
        %3646 = vmatprep.subr.bf16.mxu0 0
        %3647 = vmatpush1.bf16.xpose.msra.mxu0 0
        %3648 = vmatprep.subr.bf16.mxu0 0
        %3649 = vmatpush1.bf16.xpose.msra.mxu0 0
        %3650 = vmatprep.subr.bf16.mxu0 0
        %3651 = vmatpush1.bf16.xpose.msra.mxu0 0
        %3652 = vmatprep.subr.bf16.mxu0 0
        %3653 = vmatpush1.bf16.xpose.msra.mxu0 0
        %3654 = vmatprep.subr.bf16.mxu0 0
        %3655 = vmatpush1.bf16.xpose.msra.mxu0 0
        %3656 = vmatprep.subr.bf16.mxu0 0
        %3657 = vmatpush1.bf16.xpose.msra.mxu0 0
        %3658 = vmatprep.subr.bf16.mxu0 0
        %3659 = vmatpush1.bf16.xpose.msra.mxu0 0
        %3660 = vmatprep.mubr.bf16.mxu0 0
        %3661 = vmatmul.mubr.bf16.gmra.mrb[0].mxu0 %v3302
        %v3662 = vpop.f32.mrb[0].mxu0
        %v3663 = vadd.f32 0.0, %v3662
        %v3664 = vpop.f32.mrb[0].mxu0
        %v3665 = vpop.f32.mrb[0].mxu0
        %v3666 = vadd.f32 0.0, %v3665
        %v3667 = vpop.f32.mrb[0].mxu0
        %3668 = vdwg.mxu0
        %3669 = vmatprep.subr.bf16.mxu0 0
        %3670 = vmatpush1.bf16.xpose.msra.mxu0 %v3312
        %3671 = vmatprep.subr.bf16.mxu0 0
        %3672 = vmatpush1.bf16.xpose.msra.mxu0 0
        %3673 = vmatprep.subr.bf16.mxu0 0
        %3674 = vmatpush1.bf16.xpose.msra.mxu0 0
        %3675 = vmatprep.subr.bf16.mxu0 0
        %3676 = vmatpush1.bf16.xpose.msra.mxu0 0
        %3677 = vmatprep.subr.bf16.mxu0 0
        %3678 = vmatpush1.bf16.xpose.msra.mxu0 0
        %3679 = vmatprep.subr.bf16.mxu0 0
        %3680 = vmatpush1.bf16.xpose.msra.mxu0 0
        %3681 = vmatprep.subr.bf16.mxu0 0
        %3682 = vmatpush1.bf16.xpose.msra.mxu0 0
        %3683 = vmatprep.subr.bf16.mxu0 0
        %3684 = vmatpush1.bf16.xpose.msra.mxu0 0
        %3685 = vmatprep.subr.bf16.mxu0 0
        %3686 = vmatpush1.bf16.xpose.msra.mxu0 0
        %3687 = vmatprep.subr.bf16.mxu0 0
        %3688 = vmatpush1.bf16.xpose.msra.mxu0 0
        %3689 = vmatprep.subr.bf16.mxu0 0
        %3690 = vmatpush1.bf16.xpose.msra.mxu0 0
        %3691 = vmatprep.subr.bf16.mxu0 0
        %3692 = vmatpush1.bf16.xpose.msra.mxu0 0
        %3693 = vmatprep.subr.bf16.mxu0 0
        %3694 = vmatpush1.bf16.xpose.msra.mxu0 0
        %3695 = vmatprep.subr.bf16.mxu0 0
        %3696 = vmatpush1.bf16.xpose.msra.mxu0 0
        %3697 = vmatprep.subr.bf16.mxu0 0
        %3698 = vmatpush1.bf16.xpose.msra.mxu0 0
        %3699 = vmatprep.subr.bf16.mxu0 0
        %3700 = vmatpush1.bf16.xpose.msra.mxu0 0
        %3701 = vmatprep.mubr.bf16.mxu0 0
        %3702 = vmatmul.mubr.bf16.gmra.mrb[0].mxu0 %v3310
        %v3703 = vpop.f32.mrb[0].mxu0
        %v3704 = vadd.f32 0.0, %v3703
        %v3705 = vpop.f32.mrb[0].mxu0
        %v3706 = vpop.f32.mrb[0].mxu0
        %v3707 = vadd.f32 0.0, %v3706
        %v3708 = vpop.f32.mrb[0].mxu0
        %3709 = vdwg.mxu0
        %3710 = vmatprep.subr.bf16.mxu0 0
        %3711 = vmatpush1.bf16.xpose.msra.mxu0 %v3320
        %3712 = vmatprep.subr.bf16.mxu0 0
        %3713 = vmatpush1.bf16.xpose.msra.mxu0 0
        %3714 = vmatprep.subr.bf16.mxu0 0
        %3715 = vmatpush1.bf16.xpose.msra.mxu0 0
        %3716 = vmatprep.subr.bf16.mxu0 0
        %3717 = vmatpush1.bf16.xpose.msra.mxu0 0
        %3718 = vmatprep.subr.bf16.mxu0 0
        %3719 = vmatpush1.bf16.xpose.msra.mxu0 0
        %3720 = vmatprep.subr.bf16.mxu0 0
        %3721 = vmatpush1.bf16.xpose.msra.mxu0 0
        %3722 = vmatprep.subr.bf16.mxu0 0
        %3723 = vmatpush1.bf16.xpose.msra.mxu0 0
        %3724 = vmatprep.subr.bf16.mxu0 0
        %3725 = vmatpush1.bf16.xpose.msra.mxu0 0
        %3726 = vmatprep.subr.bf16.mxu0 0
        %3727 = vmatpush1.bf16.xpose.msra.mxu0 0
        %3728 = vmatprep.subr.bf16.mxu0 0
        %3729 = vmatpush1.bf16.xpose.msra.mxu0 0
        %3730 = vmatprep.subr.bf16.mxu0 0
        %3731 = vmatpush1.bf16.xpose.msra.mxu0 0
        %3732 = vmatprep.subr.bf16.mxu0 0
        %3733 = vmatpush1.bf16.xpose.msra.mxu0 0
        %3734 = vmatprep.subr.bf16.mxu0 0
        %3735 = vmatpush1.bf16.xpose.msra.mxu0 0
        %3736 = vmatprep.subr.bf16.mxu0 0
        %3737 = vmatpush1.bf16.xpose.msra.mxu0 0
        %3738 = vmatprep.subr.bf16.mxu0 0
        %3739 = vmatpush1.bf16.xpose.msra.mxu0 0
        %3740 = vmatprep.subr.bf16.mxu0 0
        %3741 = vmatpush1.bf16.xpose.msra.mxu0 0
        %3742 = vmatprep.mubr.bf16.mxu0 0
        %3743 = vmatmul.mubr.bf16.gmra.mrb[0].mxu0 %v3318
        %v3744 = vpop.f32.mrb[0].mxu0
        %v3745 = vadd.f32 0.0, %v3744
        %v3746 = vpop.f32.mrb[0].mxu0
        %v3747 = vpop.f32.mrb[0].mxu0
        %v3748 = vadd.f32 0.0, %v3747
        %v3749 = vpop.f32.mrb[0].mxu0
        %3750 = vdwg.mxu0
        %3751 = vmatprep.subr.bf16.mxu0 0
        %3752 = vmatpush1.bf16.xpose.msra.mxu0 %v3328
        %3753 = vmatprep.subr.bf16.mxu0 0
        %3754 = vmatpush1.bf16.xpose.msra.mxu0 0
        %3755 = vmatprep.subr.bf16.mxu0 0
        %3756 = vmatpush1.bf16.xpose.msra.mxu0 0
        %3757 = vmatprep.subr.bf16.mxu0 0
        %3758 = vmatpush1.bf16.xpose.msra.mxu0 0
        %3759 = vmatprep.subr.bf16.mxu0 0
        %3760 = vmatpush1.bf16.xpose.msra.mxu0 0
        %3761 = vmatprep.subr.bf16.mxu0 0
        %3762 = vmatpush1.bf16.xpose.msra.mxu0 0
        %3763 = vmatprep.subr.bf16.mxu0 0
        %3764 = vmatpush1.bf16.xpose.msra.mxu0 0
        %3765 = vmatprep.subr.bf16.mxu0 0
        %3766 = vmatpush1.bf16.xpose.msra.mxu0 0
        %3767 = vmatprep.subr.bf16.mxu0 0
        %3768 = vmatpush1.bf16.xpose.msra.mxu0 0
        %3769 = vmatprep.subr.bf16.mxu0 0
        %3770 = vmatpush1.bf16.xpose.msra.mxu0 0
        %3771 = vmatprep.subr.bf16.mxu0 0
        %3772 = vmatpush1.bf16.xpose.msra.mxu0 0
        %3773 = vmatprep.subr.bf16.mxu0 0
        %3774 = vmatpush1.bf16.xpose.msra.mxu0 0
        %3775 = vmatprep.subr.bf16.mxu0 0
        %3776 = vmatpush1.bf16.xpose.msra.mxu0 0
        %3777 = vmatprep.subr.bf16.mxu0 0
        %3778 = vmatpush1.bf16.xpose.msra.mxu0 0
        %3779 = vmatprep.subr.bf16.mxu0 0
        %3780 = vmatpush1.bf16.xpose.msra.mxu0 0
        %3781 = vmatprep.subr.bf16.mxu0 0
        %3782 = vmatpush1.bf16.xpose.msra.mxu0 0
        %3783 = vmatprep.mubr.bf16.mxu0 0
        %3784 = vmatmul.mubr.bf16.gmra.mrb[0].mxu0 %v3326
        %v3785 = vpop.f32.mrb[0].mxu0
        %v3786 = vadd.f32 0.0, %v3785
        %v3787 = vpop.f32.mrb[0].mxu0
        %v3788 = vpop.f32.mrb[0].mxu0
        %v3789 = vadd.f32 0.0, %v3788
        %v3790 = vpop.f32.mrb[0].mxu0
        %3791 = vdwg.mxu0
        %3792 = vmatprep.subr.bf16.mxu0 0
        %3793 = vmatpush1.bf16.xpose.msra.mxu0 %v3336
        %3794 = vmatprep.subr.bf16.mxu0 0
        %3795 = vmatpush1.bf16.xpose.msra.mxu0 0
        %3796 = vmatprep.subr.bf16.mxu0 0
        %3797 = vmatpush1.bf16.xpose.msra.mxu0 0
        %3798 = vmatprep.subr.bf16.mxu0 0
        %3799 = vmatpush1.bf16.xpose.msra.mxu0 0
        %3800 = vmatprep.subr.bf16.mxu0 0
        %3801 = vmatpush1.bf16.xpose.msra.mxu0 0
        %3802 = vmatprep.subr.bf16.mxu0 0
        %3803 = vmatpush1.bf16.xpose.msra.mxu0 0
        %3804 = vmatprep.subr.bf16.mxu0 0
        %3805 = vmatpush1.bf16.xpose.msra.mxu0 0
        %3806 = vmatprep.subr.bf16.mxu0 0
        %3807 = vmatpush1.bf16.xpose.msra.mxu0 0
        %3808 = vmatprep.subr.bf16.mxu0 0
        %3809 = vmatpush1.bf16.xpose.msra.mxu0 0
        %3810 = vmatprep.subr.bf16.mxu0 0
        %3811 = vmatpush1.bf16.xpose.msra.mxu0 0
        %3812 = vmatprep.subr.bf16.mxu0 0
        %3813 = vmatpush1.bf16.xpose.msra.mxu0 0
        %3814 = vmatprep.subr.bf16.mxu0 0
        %3815 = vmatpush1.bf16.xpose.msra.mxu0 0
        %3816 = vmatprep.subr.bf16.mxu0 0
        %3817 = vmatpush1.bf16.xpose.msra.mxu0 0
        %3818 = vmatprep.subr.bf16.mxu0 0
        %3819 = vmatpush1.bf16.xpose.msra.mxu0 0
        %3820 = vmatprep.subr.bf16.mxu0 0
        %3821 = vmatpush1.bf16.xpose.msra.mxu0 0
        %3822 = vmatprep.subr.bf16.mxu0 0
        %3823 = vmatpush1.bf16.xpose.msra.mxu0 0
        %3824 = vmatprep.mubr.bf16.mxu0 0
        %3825 = vmatmul.mubr.bf16.gmra.mrb[0].mxu0 %v3334
        %v3826 = vpop.f32.mrb[0].mxu0
        %v3827 = vadd.f32 0.0, %v3826
        %v3828 = vpop.f32.mrb[0].mxu0
        %v3829 = vpop.f32.mrb[0].mxu0
        %v3830 = vadd.f32 0.0, %v3829
        %v3831 = vpop.f32.mrb[0].mxu0
        %3832 = vdwg.mxu0
        %3833 = vmatprep.subr.bf16.mxu0 0
        %3834 = vmatpush1.bf16.xpose.msra.mxu0 %v3344
        %3835 = vmatprep.subr.bf16.mxu0 0
        %3836 = vmatpush1.bf16.xpose.msra.mxu0 0
        %3837 = vmatprep.subr.bf16.mxu0 0
        %3838 = vmatpush1.bf16.xpose.msra.mxu0 0
        %3839 = vmatprep.subr.bf16.mxu0 0
        %3840 = vmatpush1.bf16.xpose.msra.mxu0 0
        %3841 = vmatprep.subr.bf16.mxu0 0
        %3842 = vmatpush1.bf16.xpose.msra.mxu0 0
        %3843 = vmatprep.subr.bf16.mxu0 0
        %3844 = vmatpush1.bf16.xpose.msra.mxu0 0
        %3845 = vmatprep.subr.bf16.mxu0 0
        %3846 = vmatpush1.bf16.xpose.msra.mxu0 0
        %3847 = vmatprep.subr.bf16.mxu0 0
        %3848 = vmatpush1.bf16.xpose.msra.mxu0 0
        %3849 = vmatprep.subr.bf16.mxu0 0
        %3850 = vmatpush1.bf16.xpose.msra.mxu0 0
        %3851 = vmatprep.subr.bf16.mxu0 0
        %3852 = vmatpush1.bf16.xpose.msra.mxu0 0
        %3853 = vmatprep.subr.bf16.mxu0 0
        %3854 = vmatpush1.bf16.xpose.msra.mxu0 0
        %3855 = vmatprep.subr.bf16.mxu0 0
        %3856 = vmatpush1.bf16.xpose.msra.mxu0 0
        %3857 = vmatprep.subr.bf16.mxu0 0
        %3858 = vmatpush1.bf16.xpose.msra.mxu0 0
        %3859 = vmatprep.subr.bf16.mxu0 0
        %3860 = vmatpush1.bf16.xpose.msra.mxu0 0
        %3861 = vmatprep.subr.bf16.mxu0 0
        %3862 = vmatpush1.bf16.xpose.msra.mxu0 0
        %3863 = vmatprep.subr.bf16.mxu0 0
        %3864 = vmatpush1.bf16.xpose.msra.mxu0 0
        %3865 = vmatprep.mubr.bf16.mxu0 0
        %3866 = vmatmul.mubr.bf16.gmra.mrb[0].mxu0 %v3342
        %v3867 = vpop.f32.mrb[0].mxu0
        %v3868 = vadd.f32 0.0, %v3867
        %v3869 = vpop.f32.mrb[0].mxu0
        %v3870 = vpop.f32.mrb[0].mxu0
        %v3871 = vadd.f32 0.0, %v3870
        %v3872 = vpop.f32.mrb[0].mxu0
        %3873 = vdwg.mxu0
        %3874 = vmatprep.subr.bf16.mxu0 0
        %3875 = vmatpush1.bf16.xpose.msra.mxu0 %v3352
        %3876 = vmatprep.subr.bf16.mxu0 0
        %3877 = vmatpush1.bf16.xpose.msra.mxu0 0
        %3878 = vmatprep.subr.bf16.mxu0 0
        %3879 = vmatpush1.bf16.xpose.msra.mxu0 0
        %3880 = vmatprep.subr.bf16.mxu0 0
        %3881 = vmatpush1.bf16.xpose.msra.mxu0 0
        %3882 = vmatprep.subr.bf16.mxu0 0
        %3883 = vmatpush1.bf16.xpose.msra.mxu0 0
        %3884 = vmatprep.subr.bf16.mxu0 0
        %3885 = vmatpush1.bf16.xpose.msra.mxu0 0
        %3886 = vmatprep.subr.bf16.mxu0 0
        %3887 = vmatpush1.bf16.xpose.msra.mxu0 0
        %3888 = vmatprep.subr.bf16.mxu0 0
        %3889 = vmatpush1.bf16.xpose.msra.mxu0 0
        %3890 = vmatprep.subr.bf16.mxu0 0
        %3891 = vmatpush1.bf16.xpose.msra.mxu0 0
        %3892 = vmatprep.subr.bf16.mxu0 0
        %3893 = vmatpush1.bf16.xpose.msra.mxu0 0
        %3894 = vmatprep.subr.bf16.mxu0 0
        %3895 = vmatpush1.bf16.xpose.msra.mxu0 0
        %3896 = vmatprep.subr.bf16.mxu0 0
        %3897 = vmatpush1.bf16.xpose.msra.mxu0 0
        %3898 = vmatprep.subr.bf16.mxu0 0
        %3899 = vmatpush1.bf16.xpose.msra.mxu0 0
        %3900 = vmatprep.subr.bf16.mxu0 0
        %3901 = vmatpush1.bf16.xpose.msra.mxu0 0
        %3902 = vmatprep.subr.bf16.mxu0 0
        %3903 = vmatpush1.bf16.xpose.msra.mxu0 0
        %3904 = vmatprep.subr.bf16.mxu0 0
        %3905 = vmatpush1.bf16.xpose.msra.mxu0 0
        %3906 = vmatprep.mubr.bf16.mxu0 0
        %3907 = vmatmul.mubr.bf16.gmra.mrb[0].mxu0 %v3350
        %v3908 = vpop.f32.mrb[0].mxu0
        %v3909 = vadd.f32 0.0, %v3908
        %v3910 = vpop.f32.mrb[0].mxu0
        %v3911 = vpop.f32.mrb[0].mxu0
        %v3912 = vadd.f32 0.0, %v3911
        %v3913 = vpop.f32.mrb[0].mxu0
        %3914 = vdwg.mxu0
        %3915 = vmatprep.subr.bf16.mxu0 0
        %3916 = vmatpush1.bf16.xpose.msra.mxu0 %v3360
        %3917 = vmatprep.subr.bf16.mxu0 0
        %3918 = vmatpush1.bf16.xpose.msra.mxu0 0
        %3919 = vmatprep.subr.bf16.mxu0 0
        %3920 = vmatpush1.bf16.xpose.msra.mxu0 0
        %3921 = vmatprep.subr.bf16.mxu0 0
        %3922 = vmatpush1.bf16.xpose.msra.mxu0 0
        %3923 = vmatprep.subr.bf16.mxu0 0
        %3924 = vmatpush1.bf16.xpose.msra.mxu0 0
        %3925 = vmatprep.subr.bf16.mxu0 0
        %3926 = vmatpush1.bf16.xpose.msra.mxu0 0
        %3927 = vmatprep.subr.bf16.mxu0 0
        %3928 = vmatpush1.bf16.xpose.msra.mxu0 0
        %3929 = vmatprep.subr.bf16.mxu0 0
        %3930 = vmatpush1.bf16.xpose.msra.mxu0 0
        %3931 = vmatprep.subr.bf16.mxu0 0
        %3932 = vmatpush1.bf16.xpose.msra.mxu0 0
        %3933 = vmatprep.subr.bf16.mxu0 0
        %3934 = vmatpush1.bf16.xpose.msra.mxu0 0
        %3935 = vmatprep.subr.bf16.mxu0 0
        %3936 = vmatpush1.bf16.xpose.msra.mxu0 0
        %3937 = vmatprep.subr.bf16.mxu0 0
        %3938 = vmatpush1.bf16.xpose.msra.mxu0 0
        %3939 = vmatprep.subr.bf16.mxu0 0
        %3940 = vmatpush1.bf16.xpose.msra.mxu0 0
        %3941 = vmatprep.subr.bf16.mxu0 0
        %3942 = vmatpush1.bf16.xpose.msra.mxu0 0
        %3943 = vmatprep.subr.bf16.mxu0 0
        %3944 = vmatpush1.bf16.xpose.msra.mxu0 0
        %3945 = vmatprep.subr.bf16.mxu0 0
        %3946 = vmatpush1.bf16.xpose.msra.mxu0 0
        %3947 = vmatprep.mubr.bf16.mxu0 0
        %3948 = vmatmul.mubr.bf16.gmra.mrb[0].mxu0 %v3358
        %v3949 = vpop.f32.mrb[0].mxu0
        %v3950 = vadd.f32 0.0, %v3949
        %v3951 = vpop.f32.mrb[0].mxu0
        %v3952 = vpop.f32.mrb[0].mxu0
        %v3953 = vadd.f32 0.0, %v3952
        %v3954 = vpop.f32.mrb[0].mxu0
        %3955 = vdwg.mxu0
        %3956 = vmatprep.subr.bf16.mxu0 0
        %3957 = vmatpush1.bf16.xpose.msra.mxu0 %v3368
        %3958 = vmatprep.subr.bf16.mxu0 0
        %3959 = vmatpush1.bf16.xpose.msra.mxu0 0
        %3960 = vmatprep.subr.bf16.mxu0 0
        %3961 = vmatpush1.bf16.xpose.msra.mxu0 0
        %3962 = vmatprep.subr.bf16.mxu0 0
        %3963 = vmatpush1.bf16.xpose.msra.mxu0 0
        %3964 = vmatprep.subr.bf16.mxu0 0
        %3965 = vmatpush1.bf16.xpose.msra.mxu0 0
        %3966 = vmatprep.subr.bf16.mxu0 0
        %3967 = vmatpush1.bf16.xpose.msra.mxu0 0
        %3968 = vmatprep.subr.bf16.mxu0 0
        %3969 = vmatpush1.bf16.xpose.msra.mxu0 0
        %3970 = vmatprep.subr.bf16.mxu0 0
        %3971 = vmatpush1.bf16.xpose.msra.mxu0 0
        %3972 = vmatprep.subr.bf16.mxu0 0
        %3973 = vmatpush1.bf16.xpose.msra.mxu0 0
        %3974 = vmatprep.subr.bf16.mxu0 0
        %3975 = vmatpush1.bf16.xpose.msra.mxu0 0
        %3976 = vmatprep.subr.bf16.mxu0 0
        %3977 = vmatpush1.bf16.xpose.msra.mxu0 0
        %3978 = vmatprep.subr.bf16.mxu0 0
        %3979 = vmatpush1.bf16.xpose.msra.mxu0 0
        %3980 = vmatprep.subr.bf16.mxu0 0
        %3981 = vmatpush1.bf16.xpose.msra.mxu0 0
        %3982 = vmatprep.subr.bf16.mxu0 0
        %3983 = vmatpush1.bf16.xpose.msra.mxu0 0
        %3984 = vmatprep.subr.bf16.mxu0 0
        %3985 = vmatpush1.bf16.xpose.msra.mxu0 0
        %3986 = vmatprep.subr.bf16.mxu0 0
        %3987 = vmatpush1.bf16.xpose.msra.mxu0 0
        %3988 = vmatprep.mubr.bf16.mxu0 0
        %3989 = vmatmul.mubr.bf16.gmra.mrb[0].mxu0 %v3366
        %v3990 = vpop.f32.mrb[0].mxu0
        %v3991 = vadd.f32 0.0, %v3990
        %v3992 = vpop.f32.mrb[0].mxu0
        %v3993 = vpop.f32.mrb[0].mxu0
        %v3994 = vadd.f32 0.0, %v3993
        %v3995 = vpop.f32.mrb[0].mxu0
        %3996 = vdwg.mxu0
        %3997 = vmatprep.subr.bf16.mxu0 0
        %3998 = vmatpush1.bf16.xpose.msra.mxu0 %v3376
        %3999 = vmatprep.subr.bf16.mxu0 0
        %4000 = vmatpush1.bf16.xpose.msra.mxu0 0
        %4001 = vmatprep.subr.bf16.mxu0 0
        %4002 = vmatpush1.bf16.xpose.msra.mxu0 0
        %4003 = vmatprep.subr.bf16.mxu0 0
        %4004 = vmatpush1.bf16.xpose.msra.mxu0 0
        %4005 = vmatprep.subr.bf16.mxu0 0
        %4006 = vmatpush1.bf16.xpose.msra.mxu0 0
        %4007 = vmatprep.subr.bf16.mxu0 0
        %4008 = vmatpush1.bf16.xpose.msra.mxu0 0
        %4009 = vmatprep.subr.bf16.mxu0 0
        %4010 = vmatpush1.bf16.xpose.msra.mxu0 0
        %4011 = vmatprep.subr.bf16.mxu0 0
        %4012 = vmatpush1.bf16.xpose.msra.mxu0 0
        %4013 = vmatprep.subr.bf16.mxu0 0
        %4014 = vmatpush1.bf16.xpose.msra.mxu0 0
        %4015 = vmatprep.subr.bf16.mxu0 0
        %4016 = vmatpush1.bf16.xpose.msra.mxu0 0
        %4017 = vmatprep.subr.bf16.mxu0 0
        %4018 = vmatpush1.bf16.xpose.msra.mxu0 0
        %4019 = vmatprep.subr.bf16.mxu0 0
        %4020 = vmatpush1.bf16.xpose.msra.mxu0 0
        %4021 = vmatprep.subr.bf16.mxu0 0
        %4022 = vmatpush1.bf16.xpose.msra.mxu0 0
        %4023 = vmatprep.subr.bf16.mxu0 0
        %4024 = vmatpush1.bf16.xpose.msra.mxu0 0
        %4025 = vmatprep.subr.bf16.mxu0 0
        %4026 = vmatpush1.bf16.xpose.msra.mxu0 0
        %4027 = vmatprep.subr.bf16.mxu0 0
        %4028 = vmatpush1.bf16.xpose.msra.mxu0 0
        %4029 = vmatprep.mubr.bf16.mxu0 0
        %4030 = vmatmul.mubr.bf16.gmra.mrb[0].mxu0 %v3374
        %v4031 = vpop.f32.mrb[0].mxu0
        %v4032 = vadd.f32 0.0, %v4031
        %v4033 = vpop.f32.mrb[0].mxu0
        %v4034 = vpop.f32.mrb[0].mxu0
        %v4035 = vadd.f32 0.0, %v4034
        %v4036 = vpop.f32.mrb[0].mxu0
        %4037 = vdwg.mxu0
        %vm4038 = vcmask 130048
        %v4039 = vsel %vm4038, %v3417, -inf
        %4040 = vmax.xlane.f32.xlu0 %v4039
        %v4041 = vpop.xlane.xlu0 %4040
        %v4042 = vsel %vm4038, %v3420, -inf
        %4043 = vmax.xlane.f32.xlu0 %v4042
        %v4044 = vpop.xlane.xlu0 %4043
        %v4045 = vsel %vm4038, %v3458, -inf
        %4046 = vmax.xlane.f32.xlu0 %v4045
        %v4047 = vpop.xlane.xlu0 %4046
        %v4048 = vsel %vm4038, %v3461, -inf
        %4049 = vmax.xlane.f32.xlu0 %v4048
        %v4050 = vpop.xlane.xlu0 %4049
        %v4051 = vsel %vm4038, %v3499, -inf
        %4052 = vmax.xlane.f32.xlu0 %v4051
        %v4053 = vpop.xlane.xlu0 %4052
        %v4054 = vsel %vm4038, %v3502, -inf
        %4055 = vmax.xlane.f32.xlu0 %v4054
        %v4056 = vpop.xlane.xlu0 %4055
        %v4057 = vsel %vm4038, %v3540, -inf
        %4058 = vmax.xlane.f32.xlu0 %v4057
        %v4059 = vpop.xlane.xlu0 %4058
        %v4060 = vsel %vm4038, %v3543, -inf
        %4061 = vmax.xlane.f32.xlu0 %v4060
        %v4062 = vpop.xlane.xlu0 %4061
        %v4063 = vsel %vm4038, %v3581, -inf
        %4064 = vmax.xlane.f32.xlu0 %v4063
        %v4065 = vpop.xlane.xlu0 %4064
        %v4066 = vsel %vm4038, %v3584, -inf
        %4067 = vmax.xlane.f32.xlu0 %v4066
        %v4068 = vpop.xlane.xlu0 %4067
        %v4069 = vsel %vm4038, %v3622, -inf
        %4070 = vmax.xlane.f32.xlu0 %v4069
        %v4071 = vpop.xlane.xlu0 %4070
        %v4072 = vsel %vm4038, %v3625, -inf
        %4073 = vmax.xlane.f32.xlu0 %v4072
        %v4074 = vpop.xlane.xlu0 %4073
        %v4075 = vsel %vm4038, %v3663, -inf
        %4076 = vmax.xlane.f32.xlu0 %v4075
        %v4077 = vpop.xlane.xlu0 %4076
        %v4078 = vsel %vm4038, %v3666, -inf
        %4079 = vmax.xlane.f32.xlu0 %v4078
        %v4080 = vpop.xlane.xlu0 %4079
        %v4081 = vsel %vm4038, %v3704, -inf
        %4082 = vmax.xlane.f32.xlu0 %v4081
        %v4083 = vpop.xlane.xlu0 %4082
        %v4084 = vsel %vm4038, %v3707, -inf
        %4085 = vmax.xlane.f32.xlu0 %v4084
        %v4086 = vpop.xlane.xlu0 %4085
        %v4087 = vsel %vm4038, %v3745, -inf
        %4088 = vmax.xlane.f32.xlu0 %v4087
        %v4089 = vpop.xlane.xlu0 %4088
        %v4090 = vsel %vm4038, %v3748, -inf
        %4091 = vmax.xlane.f32.xlu0 %v4090
        %v4092 = vpop.xlane.xlu0 %4091
        %v4093 = vsel %vm4038, %v3786, -inf
        %4094 = vmax.xlane.f32.xlu0 %v4093
        %v4095 = vpop.xlane.xlu0 %4094
        %v4096 = vsel %vm4038, %v3789, -inf
        %4097 = vmax.xlane.f32.xlu0 %v4096
        %v4098 = vpop.xlane.xlu0 %4097
        %v4099 = vsel %vm4038, %v3827, -inf
        %4100 = vmax.xlane.f32.xlu0 %v4099
        %v4101 = vpop.xlane.xlu0 %4100
        %v4102 = vsel %vm4038, %v3830, -inf
        %4103 = vmax.xlane.f32.xlu0 %v4102
        %v4104 = vpop.xlane.xlu0 %4103
        %v4105 = vsel %vm4038, %v3868, -inf
        %4106 = vmax.xlane.f32.xlu0 %v4105
        %v4107 = vpop.xlane.xlu0 %4106
        %v4108 = vsel %vm4038, %v3871, -inf
        %4109 = vmax.xlane.f32.xlu0 %v4108
        %v4110 = vpop.xlane.xlu0 %4109
        %v4111 = vsel %vm4038, %v3909, -inf
        %4112 = vmax.xlane.f32.xlu0 %v4111
        %v4113 = vpop.xlane.xlu0 %4112
        %v4114 = vsel %vm4038, %v3912, -inf
        %4115 = vmax.xlane.f32.xlu0 %v4114
        %v4116 = vpop.xlane.xlu0 %4115
        %v4117 = vsel %vm4038, %v3950, -inf
        %4118 = vmax.xlane.f32.xlu0 %v4117
        %v4119 = vpop.xlane.xlu0 %4118
        %v4120 = vsel %vm4038, %v3953, -inf
        %4121 = vmax.xlane.f32.xlu0 %v4120
        %v4122 = vpop.xlane.xlu0 %4121
        %v4123 = vsel %vm4038, %v3991, -inf
        %4124 = vmax.xlane.f32.xlu0 %v4123
        %v4125 = vpop.xlane.xlu0 %4124
        %v4126 = vsel %vm4038, %v3994, -inf
        %4127 = vmax.xlane.f32.xlu0 %v4126
        %v4128 = vpop.xlane.xlu0 %4127
        %v4129 = vsel %vm4038, %v4032, -inf
        %4130 = vmax.xlane.f32.xlu0 %v4129
        %v4131 = vpop.xlane.xlu0 %4130
        %v4132 = vsel %vm4038, %v4035, -inf
        %4133 = vmax.xlane.f32.xlu0 %v4132
        %v4134 = vpop.xlane.xlu0 %4133
        %v4135 = vsub.f32 %v3417, %v4041
        %v4136 = vsub.f32 %v3420, %v4044
        %v4137 = vsub.f32 %v3458, %v4047
        %v4138 = vsub.f32 %v3461, %v4050
        %v4139 = vsub.f32 %v3499, %v4053
        %v4140 = vsub.f32 %v3502, %v4056
        %v4141 = vsub.f32 %v3540, %v4059
        %v4142 = vsub.f32 %v3543, %v4062
        %v4143 = vsub.f32 %v3581, %v4065
        %v4144 = vsub.f32 %v3584, %v4068
        %v4145 = vsub.f32 %v3622, %v4071
        %v4146 = vsub.f32 %v3625, %v4074
        %v4147 = vsub.f32 %v3663, %v4077
        %v4148 = vsub.f32 %v3666, %v4080
        %v4149 = vsub.f32 %v3704, %v4083
        %v4150 = vsub.f32 %v3707, %v4086
        %v4151 = vsub.f32 %v3745, %v4089
        %v4152 = vsub.f32 %v3748, %v4092
        %v4153 = vsub.f32 %v3786, %v4095
        %v4154 = vsub.f32 %v3789, %v4098
        %v4155 = vsub.f32 %v3827, %v4101
        %v4156 = vsub.f32 %v3830, %v4104
        %v4157 = vsub.f32 %v3868, %v4107
        %v4158 = vsub.f32 %v3871, %v4110
        %v4159 = vsub.f32 %v3909, %v4113
        %v4160 = vsub.f32 %v3912, %v4116
        %v4161 = vsub.f32 %v3950, %v4119
        %v4162 = vsub.f32 %v3953, %v4122
        %v4163 = vsub.f32 %v3991, %v4125
        %v4164 = vsub.f32 %v3994, %v4128
        %v4165 = vsub.f32 %v4032, %v4131
        %v4166 = vsub.f32 %v4035, %v4134
        %v4167 = vmul.f32 %v4135, 1.442695
        %v4168 = vpow.pop %v4167
        %v4169 = vmul.f32 %v4136, 1.442695
        %v4170 = vpow.pop %v4169
        %v4171 = vmul.f32 %v4137, 1.442695
        %v4172 = vpow.pop %v4171
        %v4173 = vmul.f32 %v4138, 1.442695
        %v4174 = vpow.pop %v4173
        %v4175 = vmul.f32 %v4139, 1.442695
        %v4176 = vpow.pop %v4175
        %v4177 = vmul.f32 %v4140, 1.442695
        %v4178 = vpow.pop %v4177
        %v4179 = vmul.f32 %v4141, 1.442695
        %v4180 = vpow.pop %v4179
        %v4181 = vmul.f32 %v4142, 1.442695
        %v4182 = vpow.pop %v4181
        %v4183 = vmul.f32 %v4143, 1.442695
        %v4184 = vpow.pop %v4183
        %v4185 = vmul.f32 %v4144, 1.442695
        %v4186 = vpow.pop %v4185
        %v4187 = vmul.f32 %v4145, 1.442695
        %v4188 = vpow.pop %v4187
        %v4189 = vmul.f32 %v4146, 1.442695
        %v4190 = vpow.pop %v4189
        %v4191 = vmul.f32 %v4147, 1.442695
        %v4192 = vpow.pop %v4191
        %v4193 = vmul.f32 %v4148, 1.442695
        %v4194 = vpow.pop %v4193
        %v4195 = vmul.f32 %v4149, 1.442695
        %v4196 = vpow.pop %v4195
        %v4197 = vmul.f32 %v4150, 1.442695
        %v4198 = vpow.pop %v4197
        %v4199 = vmul.f32 %v4151, 1.442695
        %v4200 = vpow.pop %v4199
        %v4201 = vmul.f32 %v4152, 1.442695
        %v4202 = vpow.pop %v4201
        %v4203 = vmul.f32 %v4153, 1.442695
        %v4204 = vpow.pop %v4203
        %v4205 = vmul.f32 %v4154, 1.442695
        %v4206 = vpow.pop %v4205
        %v4207 = vmul.f32 %v4155, 1.442695
        %v4208 = vpow.pop %v4207
        %v4209 = vmul.f32 %v4156, 1.442695
        %v4210 = vpow.pop %v4209
        %v4211 = vmul.f32 %v4157, 1.442695
        %v4212 = vpow.pop %v4211
        %v4213 = vmul.f32 %v4158, 1.442695
        %v4214 = vpow.pop %v4213
        %v4215 = vmul.f32 %v4159, 1.442695
        %v4216 = vpow.pop %v4215
        %v4217 = vmul.f32 %v4160, 1.442695
        %v4218 = vpow.pop %v4217
        %v4219 = vmul.f32 %v4161, 1.442695
        %v4220 = vpow.pop %v4219
        %v4221 = vmul.f32 %v4162, 1.442695
        %v4222 = vpow.pop %v4221
        %v4223 = vmul.f32 %v4163, 1.442695
        %v4224 = vpow.pop %v4223
        %v4225 = vmul.f32 %v4164, 1.442695
        %v4226 = vpow.pop %v4225
        %v4227 = vmul.f32 %v4165, 1.442695
        %v4228 = vpow.pop %v4227
        %v4229 = vmul.f32 %v4166, 1.442695
        %v4230 = vpow.pop %v4229
        %v4231 = vsel %vm4038, %v4168, 0.0
        %4232 = vadd.xlane.f32.xlu0 %v4231
        %v4233 = vpop.xlane.xlu0 %4232
        %v4234 = vsel %vm4038, %v4170, 0.0
        %4235 = vadd.xlane.f32.xlu0 %v4234
        %v4236 = vpop.xlane.xlu0 %4235
        %v4237 = vsel %vm4038, %v4172, 0.0
        %4238 = vadd.xlane.f32.xlu0 %v4237
        %v4239 = vpop.xlane.xlu0 %4238
        %v4240 = vsel %vm4038, %v4174, 0.0
        %4241 = vadd.xlane.f32.xlu0 %v4240
        %v4242 = vpop.xlane.xlu0 %4241
        %v4243 = vsel %vm4038, %v4176, 0.0
        %4244 = vadd.xlane.f32.xlu0 %v4243
        %v4245 = vpop.xlane.xlu0 %4244
        %v4246 = vsel %vm4038, %v4178, 0.0
        %4247 = vadd.xlane.f32.xlu0 %v4246
        %v4248 = vpop.xlane.xlu0 %4247
        %v4249 = vsel %vm4038, %v4180, 0.0
        %4250 = vadd.xlane.f32.xlu0 %v4249
        %v4251 = vpop.xlane.xlu0 %4250
        %v4252 = vsel %vm4038, %v4182, 0.0
        %4253 = vadd.xlane.f32.xlu0 %v4252
        %v4254 = vpop.xlane.xlu0 %4253
        %v4255 = vsel %vm4038, %v4184, 0.0
        %4256 = vadd.xlane.f32.xlu0 %v4255
        %v4257 = vpop.xlane.xlu0 %4256
        %v4258 = vsel %vm4038, %v4186, 0.0
        %4259 = vadd.xlane.f32.xlu0 %v4258
        %v4260 = vpop.xlane.xlu0 %4259
        %v4261 = vsel %vm4038, %v4188, 0.0
        %4262 = vadd.xlane.f32.xlu0 %v4261
        %v4263 = vpop.xlane.xlu0 %4262
        %v4264 = vsel %vm4038, %v4190, 0.0
        %4265 = vadd.xlane.f32.xlu0 %v4264
        %v4266 = vpop.xlane.xlu0 %4265
        %v4267 = vsel %vm4038, %v4192, 0.0
        %4268 = vadd.xlane.f32.xlu0 %v4267
        %v4269 = vpop.xlane.xlu0 %4268
        %v4270 = vsel %vm4038, %v4194, 0.0
        %4271 = vadd.xlane.f32.xlu0 %v4270
        %v4272 = vpop.xlane.xlu0 %4271
        %v4273 = vsel %vm4038, %v4196, 0.0
        %4274 = vadd.xlane.f32.xlu0 %v4273
        %v4275 = vpop.xlane.xlu0 %4274
        %v4276 = vsel %vm4038, %v4198, 0.0
        %4277 = vadd.xlane.f32.xlu0 %v4276
        %v4278 = vpop.xlane.xlu0 %4277
        %v4279 = vsel %vm4038, %v4200, 0.0
        %4280 = vadd.xlane.f32.xlu0 %v4279
        %v4281 = vpop.xlane.xlu0 %4280
        %v4282 = vsel %vm4038, %v4202, 0.0
        %4283 = vadd.xlane.f32.xlu0 %v4282
        %v4284 = vpop.xlane.xlu0 %4283
        %v4285 = vsel %vm4038, %v4204, 0.0
        %4286 = vadd.xlane.f32.xlu0 %v4285
        %v4287 = vpop.xlane.xlu0 %4286
        %v4288 = vsel %vm4038, %v4206, 0.0
        %4289 = vadd.xlane.f32.xlu0 %v4288
        %v4290 = vpop.xlane.xlu0 %4289
        %v4291 = vsel %vm4038, %v4208, 0.0
        %4292 = vadd.xlane.f32.xlu0 %v4291
        %v4293 = vpop.xlane.xlu0 %4292
        %v4294 = vsel %vm4038, %v4210, 0.0
        %4295 = vadd.xlane.f32.xlu0 %v4294
        %v4296 = vpop.xlane.xlu0 %4295
        %v4297 = vsel %vm4038, %v4212, 0.0
        %4298 = vadd.xlane.f32.xlu0 %v4297
        %v4299 = vpop.xlane.xlu0 %4298
        %v4300 = vsel %vm4038, %v4214, 0.0
        %4301 = vadd.xlane.f32.xlu0 %v4300
        %v4302 = vpop.xlane.xlu0 %4301
        %v4303 = vsel %vm4038, %v4216, 0.0
        %4304 = vadd.xlane.f32.xlu0 %v4303
        %v4305 = vpop.xlane.xlu0 %4304
        %v4306 = vsel %vm4038, %v4218, 0.0
        %4307 = vadd.xlane.f32.xlu0 %v4306
        %v4308 = vpop.xlane.xlu0 %4307
        %v4309 = vsel %vm4038, %v4220, 0.0
        %4310 = vadd.xlane.f32.xlu0 %v4309
        %v4311 = vpop.xlane.xlu0 %4310
        %v4312 = vsel %vm4038, %v4222, 0.0
        %4313 = vadd.xlane.f32.xlu0 %v4312
        %v4314 = vpop.xlane.xlu0 %4313
        %v4315 = vsel %vm4038, %v4224, 0.0
        %4316 = vadd.xlane.f32.xlu0 %v4315
        %v4317 = vpop.xlane.xlu0 %4316
        %v4318 = vsel %vm4038, %v4226, 0.0
        %4319 = vadd.xlane.f32.xlu0 %v4318
        %v4320 = vpop.xlane.xlu0 %4319
        %v4321 = vsel %vm4038, %v4228, 0.0
        %4322 = vadd.xlane.f32.xlu0 %v4321
        %v4323 = vpop.xlane.xlu0 %4322
        %v4324 = vsel %vm4038, %v4230, 0.0
        %4325 = vadd.xlane.f32.xlu0 %v4324
        %v4326 = vpop.xlane.xlu0 %4325
        %v4327 = vrcp.pop %v4233
        %v4328 = vrcp.pop %v4236
        %v4329 = vrcp.pop %v4239
        %v4330 = vrcp.pop %v4242
        %v4331 = vrcp.pop %v4245
        %v4332 = vrcp.pop %v4248
        %v4333 = vrcp.pop %v4251
        %v4334 = vrcp.pop %v4254
        %v4335 = vrcp.pop %v4257
        %v4336 = vrcp.pop %v4260
        %v4337 = vrcp.pop %v4263
        %v4338 = vrcp.pop %v4266
        %v4339 = vrcp.pop %v4269
        %v4340 = vrcp.pop %v4272
        %v4341 = vrcp.pop %v4275
        %v4342 = vrcp.pop %v4278
        %v4343 = vrcp.pop %v4281
        %v4344 = vrcp.pop %v4284
        %v4345 = vrcp.pop %v4287
        %v4346 = vrcp.pop %v4290
        %v4347 = vrcp.pop %v4293
        %v4348 = vrcp.pop %v4296
        %v4349 = vrcp.pop %v4299
        %v4350 = vrcp.pop %v4302
        %v4351 = vrcp.pop %v4305
        %v4352 = vrcp.pop %v4308
        %v4353 = vrcp.pop %v4311
        %v4354 = vrcp.pop %v4314
        %v4355 = vrcp.pop %v4317
        %v4356 = vrcp.pop %v4320
        %v4357 = vrcp.pop %v4323
        %v4358 = vrcp.pop %v4326
        %v4359 = vmul.f32 %v4168, %v4327
        %v4360 = vmul.f32 %v4170, %v4328
        %v4361 = vmul.f32 %v4172, %v4329
        %v4362 = vmul.f32 %v4174, %v4330
        %v4363 = vmul.f32 %v4176, %v4331
        %v4364 = vmul.f32 %v4178, %v4332
        %v4365 = vmul.f32 %v4180, %v4333
        %v4366 = vmul.f32 %v4182, %v4334
        %v4367 = vmul.f32 %v4184, %v4335
        %v4368 = vmul.f32 %v4186, %v4336
        %v4369 = vmul.f32 %v4188, %v4337
        %v4370 = vmul.f32 %v4190, %v4338
        %v4371 = vmul.f32 %v4192, %v4339
        %v4372 = vmul.f32 %v4194, %v4340
        %v4373 = vmul.f32 %v4196, %v4341
        %v4374 = vmul.f32 %v4198, %v4342
        %v4375 = vmul.f32 %v4200, %v4343
        %v4376 = vmul.f32 %v4202, %v4344
        %v4377 = vmul.f32 %v4204, %v4345
        %v4378 = vmul.f32 %v4206, %v4346
        %v4379 = vmul.f32 %v4208, %v4347
        %v4380 = vmul.f32 %v4210, %v4348
        %v4381 = vmul.f32 %v4212, %v4349
        %v4382 = vmul.f32 %v4214, %v4350
        %v4383 = vmul.f32 %v4216, %v4351
        %v4384 = vmul.f32 %v4218, %v4352
        %v4385 = vmul.f32 %v4220, %v4353
        %v4386 = vmul.f32 %v4222, %v4354
        %v4387 = vmul.f32 %v4224, %v4355
        %v4388 = vmul.f32 %v4226, %v4356
        %v4389 = vmul.f32 %v4228, %v4357
        %v4390 = vmul.f32 %v4230, %v4358
        %v4391 = vpack.c.bf16 %v4360, %v4359
        %v4392 = vpack.c.bf16 %v4362, %v4361
        %v4393 = vpack.c.bf16 %v4364, %v4363
        %v4394 = vpack.c.bf16 %v4366, %v4365
        %v4395 = vpack.c.bf16 %v4368, %v4367
        %v4396 = vpack.c.bf16 %v4370, %v4369
        %v4397 = vpack.c.bf16 %v4372, %v4371
        %v4398 = vpack.c.bf16 %v4374, %v4373
        %v4399 = vpack.c.bf16 %v4376, %v4375
        %v4400 = vpack.c.bf16 %v4378, %v4377
        %v4401 = vpack.c.bf16 %v4380, %v4379
        %v4402 = vpack.c.bf16 %v4382, %v4381
        %v4403 = vpack.c.bf16 %v4384, %v4383
        %v4404 = vpack.c.bf16 %v4386, %v4385
        %v4405 = vpack.c.bf16 %v4388, %v4387
        %v4406 = vpack.c.bf16 %v4390, %v4389
        %v4408 = vsel %vm4038, %v4391, 0
        %4410 = vmatprep.subr.bf16.mxu0 0
        %4411 = vmatpush1.bf16.msra.mxu0 %v3258
        %4412 = vmatprep.subr.bf16.mxu0 0
        %4413 = vmatpush1.bf16.msra.mxu0 0
        %4414 = vmatprep.subr.bf16.mxu0 0
        %4415 = vmatpush1.bf16.msra.mxu0 0
        %4416 = vmatprep.subr.bf16.mxu0 0
        %4417 = vmatpush1.bf16.msra.mxu0 0
        %4418 = vmatprep.subr.bf16.mxu0 0
        %4419 = vmatpush1.bf16.msra.mxu0 0
        %4420 = vmatprep.subr.bf16.mxu0 0
        %4421 = vmatpush1.bf16.msra.mxu0 0
        %4422 = vmatprep.subr.bf16.mxu0 0
        %4423 = vmatpush1.bf16.msra.mxu0 0
        %4424 = vmatprep.subr.bf16.mxu0 0
        %4425 = vmatpush1.bf16.msra.mxu0 0
        %4426 = vmatprep.subr.bf16.mxu0 0
        %4427 = vmatpush1.bf16.msra.mxu0 0
        %4428 = vmatprep.subr.bf16.mxu0 0
        %4429 = vmatpush1.bf16.msra.mxu0 0
        %4430 = vmatprep.subr.bf16.mxu0 0
        %4431 = vmatpush1.bf16.msra.mxu0 0
        %4432 = vmatprep.subr.bf16.mxu0 0
        %4433 = vmatpush1.bf16.msra.mxu0 0
        %4434 = vmatprep.subr.bf16.mxu0 0
        %4435 = vmatpush1.bf16.msra.mxu0 0
        %4436 = vmatprep.subr.bf16.mxu0 0
        %4437 = vmatpush1.bf16.msra.mxu0 0
        %4438 = vmatprep.subr.bf16.mxu0 0
        %4439 = vmatpush1.bf16.msra.mxu0 0
        %4440 = vmatprep.subr.bf16.mxu0 0
        %4441 = vmatpush1.bf16.msra.mxu0 0
        %4442 = vmatprep.mubr.bf16.mxu0 0
        %4443 = vmatmul.mubr.bf16.gmra.mrb[0].mxu0 %v4408
        %v4444 = vpop.f32.mrb[0].mxu0
        %v4445 = vadd.f32 0.0, %v4444
        %v4446 = vpop.f32.mrb[0].mxu0
        %v4447 = vpop.f32.mrb[0].mxu0
        %v4448 = vadd.f32 0.0, %v4447
        %v4449 = vpop.f32.mrb[0].mxu0
        %4450 = vdwg.mxu0
        %v4452 = vsel %vm4038, %v4392, 0
        %4454 = vmatprep.subr.bf16.mxu0 0
        %4455 = vmatpush1.bf16.msra.mxu0 %v3266
        %4456 = vmatprep.subr.bf16.mxu0 0
        %4457 = vmatpush1.bf16.msra.mxu0 0
        %4458 = vmatprep.subr.bf16.mxu0 0
        %4459 = vmatpush1.bf16.msra.mxu0 0
        %4460 = vmatprep.subr.bf16.mxu0 0
        %4461 = vmatpush1.bf16.msra.mxu0 0
        %4462 = vmatprep.subr.bf16.mxu0 0
        %4463 = vmatpush1.bf16.msra.mxu0 0
        %4464 = vmatprep.subr.bf16.mxu0 0
        %4465 = vmatpush1.bf16.msra.mxu0 0
        %4466 = vmatprep.subr.bf16.mxu0 0
        %4467 = vmatpush1.bf16.msra.mxu0 0
        %4468 = vmatprep.subr.bf16.mxu0 0
        %4469 = vmatpush1.bf16.msra.mxu0 0
        %4470 = vmatprep.subr.bf16.mxu0 0
        %4471 = vmatpush1.bf16.msra.mxu0 0
        %4472 = vmatprep.subr.bf16.mxu0 0
        %4473 = vmatpush1.bf16.msra.mxu0 0
        %4474 = vmatprep.subr.bf16.mxu0 0
        %4475 = vmatpush1.bf16.msra.mxu0 0
        %4476 = vmatprep.subr.bf16.mxu0 0
        %4477 = vmatpush1.bf16.msra.mxu0 0
        %4478 = vmatprep.subr.bf16.mxu0 0
        %4479 = vmatpush1.bf16.msra.mxu0 0
        %4480 = vmatprep.subr.bf16.mxu0 0
        %4481 = vmatpush1.bf16.msra.mxu0 0
        %4482 = vmatprep.subr.bf16.mxu0 0
        %4483 = vmatpush1.bf16.msra.mxu0 0
        %4484 = vmatprep.subr.bf16.mxu0 0
        %4485 = vmatpush1.bf16.msra.mxu0 0
        %4486 = vmatprep.mubr.bf16.mxu0 0
        %4487 = vmatmul.mubr.bf16.gmra.mrb[0].mxu0 %v4452
        %v4488 = vpop.f32.mrb[0].mxu0
        %v4489 = vadd.f32 0.0, %v4488
        %v4490 = vpop.f32.mrb[0].mxu0
        %v4491 = vpop.f32.mrb[0].mxu0
        %v4492 = vadd.f32 0.0, %v4491
        %v4493 = vpop.f32.mrb[0].mxu0
        %4494 = vdwg.mxu0
        %v4496 = vsel %vm4038, %v4393, 0
        %4498 = vmatprep.subr.bf16.mxu0 0
        %4499 = vmatpush1.bf16.msra.mxu0 %v3274
        %4500 = vmatprep.subr.bf16.mxu0 0
        %4501 = vmatpush1.bf16.msra.mxu0 0
        %4502 = vmatprep.subr.bf16.mxu0 0
        %4503 = vmatpush1.bf16.msra.mxu0 0
        %4504 = vmatprep.subr.bf16.mxu0 0
        %4505 = vmatpush1.bf16.msra.mxu0 0
        %4506 = vmatprep.subr.bf16.mxu0 0
        %4507 = vmatpush1.bf16.msra.mxu0 0
        %4508 = vmatprep.subr.bf16.mxu0 0
        %4509 = vmatpush1.bf16.msra.mxu0 0
        %4510 = vmatprep.subr.bf16.mxu0 0
        %4511 = vmatpush1.bf16.msra.mxu0 0
        %4512 = vmatprep.subr.bf16.mxu0 0
        %4513 = vmatpush1.bf16.msra.mxu0 0
        %4514 = vmatprep.subr.bf16.mxu0 0
        %4515 = vmatpush1.bf16.msra.mxu0 0
        %4516 = vmatprep.subr.bf16.mxu0 0
        %4517 = vmatpush1.bf16.msra.mxu0 0
        %4518 = vmatprep.subr.bf16.mxu0 0
        %4519 = vmatpush1.bf16.msra.mxu0 0
        %4520 = vmatprep.subr.bf16.mxu0 0
        %4521 = vmatpush1.bf16.msra.mxu0 0
        %4522 = vmatprep.subr.bf16.mxu0 0
        %4523 = vmatpush1.bf16.msra.mxu0 0
        %4524 = vmatprep.subr.bf16.mxu0 0
        %4525 = vmatpush1.bf16.msra.mxu0 0
        %4526 = vmatprep.subr.bf16.mxu0 0
        %4527 = vmatpush1.bf16.msra.mxu0 0
        %4528 = vmatprep.subr.bf16.mxu0 0
        %4529 = vmatpush1.bf16.msra.mxu0 0
        %4530 = vmatprep.mubr.bf16.mxu0 0
        %4531 = vmatmul.mubr.bf16.gmra.mrb[0].mxu0 %v4496
        %v4532 = vpop.f32.mrb[0].mxu0
        %v4533 = vadd.f32 0.0, %v4532
        %v4534 = vpop.f32.mrb[0].mxu0
        %v4535 = vpop.f32.mrb[0].mxu0
        %v4536 = vadd.f32 0.0, %v4535
        %v4537 = vpop.f32.mrb[0].mxu0
        %4538 = vdwg.mxu0
        %v4540 = vsel %vm4038, %v4394, 0
        %4542 = vmatprep.subr.bf16.mxu0 0
        %4543 = vmatpush1.bf16.msra.mxu0 %v3282
        %4544 = vmatprep.subr.bf16.mxu0 0
        %4545 = vmatpush1.bf16.msra.mxu0 0
        %4546 = vmatprep.subr.bf16.mxu0 0
        %4547 = vmatpush1.bf16.msra.mxu0 0
        %4548 = vmatprep.subr.bf16.mxu0 0
        %4549 = vmatpush1.bf16.msra.mxu0 0
        %4550 = vmatprep.subr.bf16.mxu0 0
        %4551 = vmatpush1.bf16.msra.mxu0 0
        %4552 = vmatprep.subr.bf16.mxu0 0
        %4553 = vmatpush1.bf16.msra.mxu0 0
        %4554 = vmatprep.subr.bf16.mxu0 0
        %4555 = vmatpush1.bf16.msra.mxu0 0
        %4556 = vmatprep.subr.bf16.mxu0 0
        %4557 = vmatpush1.bf16.msra.mxu0 0
        %4558 = vmatprep.subr.bf16.mxu0 0
        %4559 = vmatpush1.bf16.msra.mxu0 0
        %4560 = vmatprep.subr.bf16.mxu0 0
        %4561 = vmatpush1.bf16.msra.mxu0 0
        %4562 = vmatprep.subr.bf16.mxu0 0
        %4563 = vmatpush1.bf16.msra.mxu0 0
        %4564 = vmatprep.subr.bf16.mxu0 0
        %4565 = vmatpush1.bf16.msra.mxu0 0
        %4566 = vmatprep.subr.bf16.mxu0 0
        %4567 = vmatpush1.bf16.msra.mxu0 0
        %4568 = vmatprep.subr.bf16.mxu0 0
        %4569 = vmatpush1.bf16.msra.mxu0 0
        %4570 = vmatprep.subr.bf16.mxu0 0
        %4571 = vmatpush1.bf16.msra.mxu0 0
        %4572 = vmatprep.subr.bf16.mxu0 0
        %4573 = vmatpush1.bf16.msra.mxu0 0
        %4574 = vmatprep.mubr.bf16.mxu0 0
        %4575 = vmatmul.mubr.bf16.gmra.mrb[0].mxu0 %v4540
        %v4576 = vpop.f32.mrb[0].mxu0
        %v4577 = vadd.f32 0.0, %v4576
        %v4578 = vpop.f32.mrb[0].mxu0
        %v4579 = vpop.f32.mrb[0].mxu0
        %v4580 = vadd.f32 0.0, %v4579
        %v4581 = vpop.f32.mrb[0].mxu0
        %4582 = vdwg.mxu0
        %v4584 = vsel %vm4038, %v4395, 0
        %4586 = vmatprep.subr.bf16.mxu0 0
        %4587 = vmatpush1.bf16.msra.mxu0 %v3290
        %4588 = vmatprep.subr.bf16.mxu0 0
        %4589 = vmatpush1.bf16.msra.mxu0 0
        %4590 = vmatprep.subr.bf16.mxu0 0
        %4591 = vmatpush1.bf16.msra.mxu0 0
        %4592 = vmatprep.subr.bf16.mxu0 0
        %4593 = vmatpush1.bf16.msra.mxu0 0
        %4594 = vmatprep.subr.bf16.mxu0 0
        %4595 = vmatpush1.bf16.msra.mxu0 0
        %4596 = vmatprep.subr.bf16.mxu0 0
        %4597 = vmatpush1.bf16.msra.mxu0 0
        %4598 = vmatprep.subr.bf16.mxu0 0
        %4599 = vmatpush1.bf16.msra.mxu0 0
        %4600 = vmatprep.subr.bf16.mxu0 0
        %4601 = vmatpush1.bf16.msra.mxu0 0
        %4602 = vmatprep.subr.bf16.mxu0 0
        %4603 = vmatpush1.bf16.msra.mxu0 0
        %4604 = vmatprep.subr.bf16.mxu0 0
        %4605 = vmatpush1.bf16.msra.mxu0 0
        %4606 = vmatprep.subr.bf16.mxu0 0
        %4607 = vmatpush1.bf16.msra.mxu0 0
        %4608 = vmatprep.subr.bf16.mxu0 0
        %4609 = vmatpush1.bf16.msra.mxu0 0
        %4610 = vmatprep.subr.bf16.mxu0 0
        %4611 = vmatpush1.bf16.msra.mxu0 0
        %4612 = vmatprep.subr.bf16.mxu0 0
        %4613 = vmatpush1.bf16.msra.mxu0 0
        %4614 = vmatprep.subr.bf16.mxu0 0
        %4615 = vmatpush1.bf16.msra.mxu0 0
        %4616 = vmatprep.subr.bf16.mxu0 0
        %4617 = vmatpush1.bf16.msra.mxu0 0
        %4618 = vmatprep.mubr.bf16.mxu0 0
        %4619 = vmatmul.mubr.bf16.gmra.mrb[0].mxu0 %v4584
        %v4620 = vpop.f32.mrb[0].mxu0
        %v4621 = vadd.f32 0.0, %v4620
        %v4622 = vpop.f32.mrb[0].mxu0
        %v4623 = vpop.f32.mrb[0].mxu0
        %v4624 = vadd.f32 0.0, %v4623
        %v4625 = vpop.f32.mrb[0].mxu0
        %4626 = vdwg.mxu0
        %v4628 = vsel %vm4038, %v4396, 0
        %4630 = vmatprep.subr.bf16.mxu0 0
        %4631 = vmatpush1.bf16.msra.mxu0 %v3298
        %4632 = vmatprep.subr.bf16.mxu0 0
        %4633 = vmatpush1.bf16.msra.mxu0 0
        %4634 = vmatprep.subr.bf16.mxu0 0
        %4635 = vmatpush1.bf16.msra.mxu0 0
        %4636 = vmatprep.subr.bf16.mxu0 0
        %4637 = vmatpush1.bf16.msra.mxu0 0
        %4638 = vmatprep.subr.bf16.mxu0 0
        %4639 = vmatpush1.bf16.msra.mxu0 0
        %4640 = vmatprep.subr.bf16.mxu0 0
        %4641 = vmatpush1.bf16.msra.mxu0 0
        %4642 = vmatprep.subr.bf16.mxu0 0
        %4643 = vmatpush1.bf16.msra.mxu0 0
        %4644 = vmatprep.subr.bf16.mxu0 0
        %4645 = vmatpush1.bf16.msra.mxu0 0
        %4646 = vmatprep.subr.bf16.mxu0 0
        %4647 = vmatpush1.bf16.msra.mxu0 0
        %4648 = vmatprep.subr.bf16.mxu0 0
        %4649 = vmatpush1.bf16.msra.mxu0 0
        %4650 = vmatprep.subr.bf16.mxu0 0
        %4651 = vmatpush1.bf16.msra.mxu0 0
        %4652 = vmatprep.subr.bf16.mxu0 0
        %4653 = vmatpush1.bf16.msra.mxu0 0
        %4654 = vmatprep.subr.bf16.mxu0 0
        %4655 = vmatpush1.bf16.msra.mxu0 0
        %4656 = vmatprep.subr.bf16.mxu0 0
        %4657 = vmatpush1.bf16.msra.mxu0 0
        %4658 = vmatprep.subr.bf16.mxu0 0
        %4659 = vmatpush1.bf16.msra.mxu0 0
        %4660 = vmatprep.subr.bf16.mxu0 0
        %4661 = vmatpush1.bf16.msra.mxu0 0
        %4662 = vmatprep.mubr.bf16.mxu0 0
        %4663 = vmatmul.mubr.bf16.gmra.mrb[0].mxu0 %v4628
        %v4664 = vpop.f32.mrb[0].mxu0
        %v4665 = vadd.f32 0.0, %v4664
        %v4666 = vpop.f32.mrb[0].mxu0
        %v4667 = vpop.f32.mrb[0].mxu0
        %v4668 = vadd.f32 0.0, %v4667
        %v4669 = vpop.f32.mrb[0].mxu0
        %4670 = vdwg.mxu0
        %v4672 = vsel %vm4038, %v4397, 0
        %4674 = vmatprep.subr.bf16.mxu0 0
        %4675 = vmatpush1.bf16.msra.mxu0 %v3306
        %4676 = vmatprep.subr.bf16.mxu0 0
        %4677 = vmatpush1.bf16.msra.mxu0 0
        %4678 = vmatprep.subr.bf16.mxu0 0
        %4679 = vmatpush1.bf16.msra.mxu0 0
        %4680 = vmatprep.subr.bf16.mxu0 0
        %4681 = vmatpush1.bf16.msra.mxu0 0
        %4682 = vmatprep.subr.bf16.mxu0 0
        %4683 = vmatpush1.bf16.msra.mxu0 0
        %4684 = vmatprep.subr.bf16.mxu0 0
        %4685 = vmatpush1.bf16.msra.mxu0 0
        %4686 = vmatprep.subr.bf16.mxu0 0
        %4687 = vmatpush1.bf16.msra.mxu0 0
        %4688 = vmatprep.subr.bf16.mxu0 0
        %4689 = vmatpush1.bf16.msra.mxu0 0
        %4690 = vmatprep.subr.bf16.mxu0 0
        %4691 = vmatpush1.bf16.msra.mxu0 0
        %4692 = vmatprep.subr.bf16.mxu0 0
        %4693 = vmatpush1.bf16.msra.mxu0 0
        %4694 = vmatprep.subr.bf16.mxu0 0
        %4695 = vmatpush1.bf16.msra.mxu0 0
        %4696 = vmatprep.subr.bf16.mxu0 0
        %4697 = vmatpush1.bf16.msra.mxu0 0
        %4698 = vmatprep.subr.bf16.mxu0 0
        %4699 = vmatpush1.bf16.msra.mxu0 0
        %4700 = vmatprep.subr.bf16.mxu0 0
        %4701 = vmatpush1.bf16.msra.mxu0 0
        %4702 = vmatprep.subr.bf16.mxu0 0
        %4703 = vmatpush1.bf16.msra.mxu0 0
        %4704 = vmatprep.subr.bf16.mxu0 0
        %4705 = vmatpush1.bf16.msra.mxu0 0
        %4706 = vmatprep.mubr.bf16.mxu0 0
        %4707 = vmatmul.mubr.bf16.gmra.mrb[0].mxu0 %v4672
        %v4708 = vpop.f32.mrb[0].mxu0
        %v4709 = vadd.f32 0.0, %v4708
        %v4710 = vpop.f32.mrb[0].mxu0
        %v4711 = vpop.f32.mrb[0].mxu0
        %v4712 = vadd.f32 0.0, %v4711
        %v4713 = vpop.f32.mrb[0].mxu0
        %4714 = vdwg.mxu0
        %v4716 = vsel %vm4038, %v4398, 0
        %4718 = vmatprep.subr.bf16.mxu0 0
        %4719 = vmatpush1.bf16.msra.mxu0 %v3314
        %4720 = vmatprep.subr.bf16.mxu0 0
        %4721 = vmatpush1.bf16.msra.mxu0 0
        %4722 = vmatprep.subr.bf16.mxu0 0
        %4723 = vmatpush1.bf16.msra.mxu0 0
        %4724 = vmatprep.subr.bf16.mxu0 0
        %4725 = vmatpush1.bf16.msra.mxu0 0
        %4726 = vmatprep.subr.bf16.mxu0 0
        %4727 = vmatpush1.bf16.msra.mxu0 0
        %4728 = vmatprep.subr.bf16.mxu0 0
        %4729 = vmatpush1.bf16.msra.mxu0 0
        %4730 = vmatprep.subr.bf16.mxu0 0
        %4731 = vmatpush1.bf16.msra.mxu0 0
        %4732 = vmatprep.subr.bf16.mxu0 0
        %4733 = vmatpush1.bf16.msra.mxu0 0
        %4734 = vmatprep.subr.bf16.mxu0 0
        %4735 = vmatpush1.bf16.msra.mxu0 0
        %4736 = vmatprep.subr.bf16.mxu0 0
        %4737 = vmatpush1.bf16.msra.mxu0 0
        %4738 = vmatprep.subr.bf16.mxu0 0
        %4739 = vmatpush1.bf16.msra.mxu0 0
        %4740 = vmatprep.subr.bf16.mxu0 0
        %4741 = vmatpush1.bf16.msra.mxu0 0
        %4742 = vmatprep.subr.bf16.mxu0 0
        %4743 = vmatpush1.bf16.msra.mxu0 0
        %4744 = vmatprep.subr.bf16.mxu0 0
        %4745 = vmatpush1.bf16.msra.mxu0 0
        %4746 = vmatprep.subr.bf16.mxu0 0
        %4747 = vmatpush1.bf16.msra.mxu0 0
        %4748 = vmatprep.subr.bf16.mxu0 0
        %4749 = vmatpush1.bf16.msra.mxu0 0
        %4750 = vmatprep.mubr.bf16.mxu0 0
        %4751 = vmatmul.mubr.bf16.gmra.mrb[0].mxu0 %v4716
        %v4752 = vpop.f32.mrb[0].mxu0
        %v4753 = vadd.f32 0.0, %v4752
        %v4754 = vpop.f32.mrb[0].mxu0
        %v4755 = vpop.f32.mrb[0].mxu0
        %v4756 = vadd.f32 0.0, %v4755
        %v4757 = vpop.f32.mrb[0].mxu0
        %4758 = vdwg.mxu0
        %v4760 = vsel %vm4038, %v4399, 0
        %4762 = vmatprep.subr.bf16.mxu0 0
        %4763 = vmatpush1.bf16.msra.mxu0 %v3322
        %4764 = vmatprep.subr.bf16.mxu0 0
        %4765 = vmatpush1.bf16.msra.mxu0 0
        %4766 = vmatprep.subr.bf16.mxu0 0
        %4767 = vmatpush1.bf16.msra.mxu0 0
        %4768 = vmatprep.subr.bf16.mxu0 0
        %4769 = vmatpush1.bf16.msra.mxu0 0
        %4770 = vmatprep.subr.bf16.mxu0 0
        %4771 = vmatpush1.bf16.msra.mxu0 0
        %4772 = vmatprep.subr.bf16.mxu0 0
        %4773 = vmatpush1.bf16.msra.mxu0 0
        %4774 = vmatprep.subr.bf16.mxu0 0
        %4775 = vmatpush1.bf16.msra.mxu0 0
        %4776 = vmatprep.subr.bf16.mxu0 0
        %4777 = vmatpush1.bf16.msra.mxu0 0
        %4778 = vmatprep.subr.bf16.mxu0 0
        %4779 = vmatpush1.bf16.msra.mxu0 0
        %4780 = vmatprep.subr.bf16.mxu0 0
        %4781 = vmatpush1.bf16.msra.mxu0 0
        %4782 = vmatprep.subr.bf16.mxu0 0
        %4783 = vmatpush1.bf16.msra.mxu0 0
        %4784 = vmatprep.subr.bf16.mxu0 0
        %4785 = vmatpush1.bf16.msra.mxu0 0
        %4786 = vmatprep.subr.bf16.mxu0 0
        %4787 = vmatpush1.bf16.msra.mxu0 0
        %4788 = vmatprep.subr.bf16.mxu0 0
        %4789 = vmatpush1.bf16.msra.mxu0 0
        %4790 = vmatprep.subr.bf16.mxu0 0
        %4791 = vmatpush1.bf16.msra.mxu0 0
        %4792 = vmatprep.subr.bf16.mxu0 0
        %4793 = vmatpush1.bf16.msra.mxu0 0
        %4794 = vmatprep.mubr.bf16.mxu0 0
        %4795 = vmatmul.mubr.bf16.gmra.mrb[0].mxu0 %v4760
        %v4796 = vpop.f32.mrb[0].mxu0
        %v4797 = vadd.f32 0.0, %v4796
        %v4798 = vpop.f32.mrb[0].mxu0
        %v4799 = vpop.f32.mrb[0].mxu0
        %v4800 = vadd.f32 0.0, %v4799
        %v4801 = vpop.f32.mrb[0].mxu0
        %4802 = vdwg.mxu0
        %v4804 = vsel %vm4038, %v4400, 0
        %4806 = vmatprep.subr.bf16.mxu0 0
        %4807 = vmatpush1.bf16.msra.mxu0 %v3330
        %4808 = vmatprep.subr.bf16.mxu0 0
        %4809 = vmatpush1.bf16.msra.mxu0 0
        %4810 = vmatprep.subr.bf16.mxu0 0
        %4811 = vmatpush1.bf16.msra.mxu0 0
        %4812 = vmatprep.subr.bf16.mxu0 0
        %4813 = vmatpush1.bf16.msra.mxu0 0
        %4814 = vmatprep.subr.bf16.mxu0 0
        %4815 = vmatpush1.bf16.msra.mxu0 0
        %4816 = vmatprep.subr.bf16.mxu0 0
        %4817 = vmatpush1.bf16.msra.mxu0 0
        %4818 = vmatprep.subr.bf16.mxu0 0
        %4819 = vmatpush1.bf16.msra.mxu0 0
        %4820 = vmatprep.subr.bf16.mxu0 0
        %4821 = vmatpush1.bf16.msra.mxu0 0
        %4822 = vmatprep.subr.bf16.mxu0 0
        %4823 = vmatpush1.bf16.msra.mxu0 0
        %4824 = vmatprep.subr.bf16.mxu0 0
        %4825 = vmatpush1.bf16.msra.mxu0 0
        %4826 = vmatprep.subr.bf16.mxu0 0
        %4827 = vmatpush1.bf16.msra.mxu0 0
        %4828 = vmatprep.subr.bf16.mxu0 0
        %4829 = vmatpush1.bf16.msra.mxu0 0
        %4830 = vmatprep.subr.bf16.mxu0 0
        %4831 = vmatpush1.bf16.msra.mxu0 0
        %4832 = vmatprep.subr.bf16.mxu0 0
        %4833 = vmatpush1.bf16.msra.mxu0 0
        %4834 = vmatprep.subr.bf16.mxu0 0
        %4835 = vmatpush1.bf16.msra.mxu0 0
        %4836 = vmatprep.subr.bf16.mxu0 0
        %4837 = vmatpush1.bf16.msra.mxu0 0
        %4838 = vmatprep.mubr.bf16.mxu0 0
        %4839 = vmatmul.mubr.bf16.gmra.mrb[0].mxu0 %v4804
        %v4840 = vpop.f32.mrb[0].mxu0
        %v4841 = vadd.f32 0.0, %v4840
        %v4842 = vpop.f32.mrb[0].mxu0
        %v4843 = vpop.f32.mrb[0].mxu0
        %v4844 = vadd.f32 0.0, %v4843
        %v4845 = vpop.f32.mrb[0].mxu0
        %4846 = vdwg.mxu0
        %v4848 = vsel %vm4038, %v4401, 0
        %4850 = vmatprep.subr.bf16.mxu0 0
        %4851 = vmatpush1.bf16.msra.mxu0 %v3338
        %4852 = vmatprep.subr.bf16.mxu0 0
        %4853 = vmatpush1.bf16.msra.mxu0 0
        %4854 = vmatprep.subr.bf16.mxu0 0
        %4855 = vmatpush1.bf16.msra.mxu0 0
        %4856 = vmatprep.subr.bf16.mxu0 0
        %4857 = vmatpush1.bf16.msra.mxu0 0
        %4858 = vmatprep.subr.bf16.mxu0 0
        %4859 = vmatpush1.bf16.msra.mxu0 0
        %4860 = vmatprep.subr.bf16.mxu0 0
        %4861 = vmatpush1.bf16.msra.mxu0 0
        %4862 = vmatprep.subr.bf16.mxu0 0
        %4863 = vmatpush1.bf16.msra.mxu0 0
        %4864 = vmatprep.subr.bf16.mxu0 0
        %4865 = vmatpush1.bf16.msra.mxu0 0
        %4866 = vmatprep.subr.bf16.mxu0 0
        %4867 = vmatpush1.bf16.msra.mxu0 0
        %4868 = vmatprep.subr.bf16.mxu0 0
        %4869 = vmatpush1.bf16.msra.mxu0 0
        %4870 = vmatprep.subr.bf16.mxu0 0
        %4871 = vmatpush1.bf16.msra.mxu0 0
        %4872 = vmatprep.subr.bf16.mxu0 0
        %4873 = vmatpush1.bf16.msra.mxu0 0
        %4874 = vmatprep.subr.bf16.mxu0 0
        %4875 = vmatpush1.bf16.msra.mxu0 0
        %4876 = vmatprep.subr.bf16.mxu0 0
        %4877 = vmatpush1.bf16.msra.mxu0 0
        %4878 = vmatprep.subr.bf16.mxu0 0
        %4879 = vmatpush1.bf16.msra.mxu0 0
        %4880 = vmatprep.subr.bf16.mxu0 0
        %4881 = vmatpush1.bf16.msra.mxu0 0
        %4882 = vmatprep.mubr.bf16.mxu0 0
        %4883 = vmatmul.mubr.bf16.gmra.mrb[0].mxu0 %v4848
        %v4884 = vpop.f32.mrb[0].mxu0
        %v4885 = vadd.f32 0.0, %v4884
        %v4886 = vpop.f32.mrb[0].mxu0
        %v4887 = vpop.f32.mrb[0].mxu0
        %v4888 = vadd.f32 0.0, %v4887
        %v4889 = vpop.f32.mrb[0].mxu0
        %4890 = vdwg.mxu0
        %v4892 = vsel %vm4038, %v4402, 0
        %4894 = vmatprep.subr.bf16.mxu0 0
        %4895 = vmatpush1.bf16.msra.mxu0 %v3346
        %4896 = vmatprep.subr.bf16.mxu0 0
        %4897 = vmatpush1.bf16.msra.mxu0 0
        %4898 = vmatprep.subr.bf16.mxu0 0
        %4899 = vmatpush1.bf16.msra.mxu0 0
        %4900 = vmatprep.subr.bf16.mxu0 0
        %4901 = vmatpush1.bf16.msra.mxu0 0
        %4902 = vmatprep.subr.bf16.mxu0 0
        %4903 = vmatpush1.bf16.msra.mxu0 0
        %4904 = vmatprep.subr.bf16.mxu0 0
        %4905 = vmatpush1.bf16.msra.mxu0 0
        %4906 = vmatprep.subr.bf16.mxu0 0
        %4907 = vmatpush1.bf16.msra.mxu0 0
        %4908 = vmatprep.subr.bf16.mxu0 0
        %4909 = vmatpush1.bf16.msra.mxu0 0
        %4910 = vmatprep.subr.bf16.mxu0 0
        %4911 = vmatpush1.bf16.msra.mxu0 0
        %4912 = vmatprep.subr.bf16.mxu0 0
        %4913 = vmatpush1.bf16.msra.mxu0 0
        %4914 = vmatprep.subr.bf16.mxu0 0
        %4915 = vmatpush1.bf16.msra.mxu0 0
        %4916 = vmatprep.subr.bf16.mxu0 0
        %4917 = vmatpush1.bf16.msra.mxu0 0
        %4918 = vmatprep.subr.bf16.mxu0 0
        %4919 = vmatpush1.bf16.msra.mxu0 0
        %4920 = vmatprep.subr.bf16.mxu0 0
        %4921 = vmatpush1.bf16.msra.mxu0 0
        %4922 = vmatprep.subr.bf16.mxu0 0
        %4923 = vmatpush1.bf16.msra.mxu0 0
        %4924 = vmatprep.subr.bf16.mxu0 0
        %4925 = vmatpush1.bf16.msra.mxu0 0
        %4926 = vmatprep.mubr.bf16.mxu0 0
        %4927 = vmatmul.mubr.bf16.gmra.mrb[0].mxu0 %v4892
        %v4928 = vpop.f32.mrb[0].mxu0
        %v4929 = vadd.f32 0.0, %v4928
        %v4930 = vpop.f32.mrb[0].mxu0
        %v4931 = vpop.f32.mrb[0].mxu0
        %v4932 = vadd.f32 0.0, %v4931
        %v4933 = vpop.f32.mrb[0].mxu0
        %4934 = vdwg.mxu0
        %v4936 = vsel %vm4038, %v4403, 0
        %4938 = vmatprep.subr.bf16.mxu0 0
        %4939 = vmatpush1.bf16.msra.mxu0 %v3354
        %4940 = vmatprep.subr.bf16.mxu0 0
        %4941 = vmatpush1.bf16.msra.mxu0 0
        %4942 = vmatprep.subr.bf16.mxu0 0
        %4943 = vmatpush1.bf16.msra.mxu0 0
        %4944 = vmatprep.subr.bf16.mxu0 0
        %4945 = vmatpush1.bf16.msra.mxu0 0
        %4946 = vmatprep.subr.bf16.mxu0 0
        %4947 = vmatpush1.bf16.msra.mxu0 0
        %4948 = vmatprep.subr.bf16.mxu0 0
        %4949 = vmatpush1.bf16.msra.mxu0 0
        %4950 = vmatprep.subr.bf16.mxu0 0
        %4951 = vmatpush1.bf16.msra.mxu0 0
        %4952 = vmatprep.subr.bf16.mxu0 0
        %4953 = vmatpush1.bf16.msra.mxu0 0
        %4954 = vmatprep.subr.bf16.mxu0 0
        %4955 = vmatpush1.bf16.msra.mxu0 0
        %4956 = vmatprep.subr.bf16.mxu0 0
        %4957 = vmatpush1.bf16.msra.mxu0 0
        %4958 = vmatprep.subr.bf16.mxu0 0
        %4959 = vmatpush1.bf16.msra.mxu0 0
        %4960 = vmatprep.subr.bf16.mxu0 0
        %4961 = vmatpush1.bf16.msra.mxu0 0
        %4962 = vmatprep.subr.bf16.mxu0 0
        %4963 = vmatpush1.bf16.msra.mxu0 0
        %4964 = vmatprep.subr.bf16.mxu0 0
        %4965 = vmatpush1.bf16.msra.mxu0 0
        %4966 = vmatprep.subr.bf16.mxu0 0
        %4967 = vmatpush1.bf16.msra.mxu0 0
        %4968 = vmatprep.subr.bf16.mxu0 0
        %4969 = vmatpush1.bf16.msra.mxu0 0
        %4970 = vmatprep.mubr.bf16.mxu0 0
        %4971 = vmatmul.mubr.bf16.gmra.mrb[0].mxu0 %v4936
        %v4972 = vpop.f32.mrb[0].mxu0
        %v4973 = vadd.f32 0.0, %v4972
        %v4974 = vpop.f32.mrb[0].mxu0
        %v4975 = vpop.f32.mrb[0].mxu0
        %v4976 = vadd.f32 0.0, %v4975
        %v4977 = vpop.f32.mrb[0].mxu0
        %4978 = vdwg.mxu0
        %v4980 = vsel %vm4038, %v4404, 0
        %4982 = vmatprep.subr.bf16.mxu0 0
        %4983 = vmatpush1.bf16.msra.mxu0 %v3362
        %4984 = vmatprep.subr.bf16.mxu0 0
        %4985 = vmatpush1.bf16.msra.mxu0 0
        %4986 = vmatprep.subr.bf16.mxu0 0
        %4987 = vmatpush1.bf16.msra.mxu0 0
        %4988 = vmatprep.subr.bf16.mxu0 0
        %4989 = vmatpush1.bf16.msra.mxu0 0
        %4990 = vmatprep.subr.bf16.mxu0 0
        %4991 = vmatpush1.bf16.msra.mxu0 0
        %4992 = vmatprep.subr.bf16.mxu0 0
        %4993 = vmatpush1.bf16.msra.mxu0 0
        %4994 = vmatprep.subr.bf16.mxu0 0
        %4995 = vmatpush1.bf16.msra.mxu0 0
        %4996 = vmatprep.subr.bf16.mxu0 0
        %4997 = vmatpush1.bf16.msra.mxu0 0
        %4998 = vmatprep.subr.bf16.mxu0 0
        %4999 = vmatpush1.bf16.msra.mxu0 0
        %5000 = vmatprep.subr.bf16.mxu0 0
        %5001 = vmatpush1.bf16.msra.mxu0 0
        %5002 = vmatprep.subr.bf16.mxu0 0
        %5003 = vmatpush1.bf16.msra.mxu0 0
        %5004 = vmatprep.subr.bf16.mxu0 0
        %5005 = vmatpush1.bf16.msra.mxu0 0
        %5006 = vmatprep.subr.bf16.mxu0 0
        %5007 = vmatpush1.bf16.msra.mxu0 0
        %5008 = vmatprep.subr.bf16.mxu0 0
        %5009 = vmatpush1.bf16.msra.mxu0 0
        %5010 = vmatprep.subr.bf16.mxu0 0
        %5011 = vmatpush1.bf16.msra.mxu0 0
        %5012 = vmatprep.subr.bf16.mxu0 0
        %5013 = vmatpush1.bf16.msra.mxu0 0
        %5014 = vmatprep.mubr.bf16.mxu0 0
        %5015 = vmatmul.mubr.bf16.gmra.mrb[0].mxu0 %v4980
        %v5016 = vpop.f32.mrb[0].mxu0
        %v5017 = vadd.f32 0.0, %v5016
        %v5018 = vpop.f32.mrb[0].mxu0
        %v5019 = vpop.f32.mrb[0].mxu0
        %v5020 = vadd.f32 0.0, %v5019
        %v5021 = vpop.f32.mrb[0].mxu0
        %5022 = vdwg.mxu0
        %v5024 = vsel %vm4038, %v4405, 0
        %5026 = vmatprep.subr.bf16.mxu0 0
        %5027 = vmatpush1.bf16.msra.mxu0 %v3370
        %5028 = vmatprep.subr.bf16.mxu0 0
        %5029 = vmatpush1.bf16.msra.mxu0 0
        %5030 = vmatprep.subr.bf16.mxu0 0
        %5031 = vmatpush1.bf16.msra.mxu0 0
        %5032 = vmatprep.subr.bf16.mxu0 0
        %5033 = vmatpush1.bf16.msra.mxu0 0
        %5034 = vmatprep.subr.bf16.mxu0 0
        %5035 = vmatpush1.bf16.msra.mxu0 0
        %5036 = vmatprep.subr.bf16.mxu0 0
        %5037 = vmatpush1.bf16.msra.mxu0 0
        %5038 = vmatprep.subr.bf16.mxu0 0
        %5039 = vmatpush1.bf16.msra.mxu0 0
        %5040 = vmatprep.subr.bf16.mxu0 0
        %5041 = vmatpush1.bf16.msra.mxu0 0
        %5042 = vmatprep.subr.bf16.mxu0 0
        %5043 = vmatpush1.bf16.msra.mxu0 0
        %5044 = vmatprep.subr.bf16.mxu0 0
        %5045 = vmatpush1.bf16.msra.mxu0 0
        %5046 = vmatprep.subr.bf16.mxu0 0
        %5047 = vmatpush1.bf16.msra.mxu0 0
        %5048 = vmatprep.subr.bf16.mxu0 0
        %5049 = vmatpush1.bf16.msra.mxu0 0
        %5050 = vmatprep.subr.bf16.mxu0 0
        %5051 = vmatpush1.bf16.msra.mxu0 0
        %5052 = vmatprep.subr.bf16.mxu0 0
        %5053 = vmatpush1.bf16.msra.mxu0 0
        %5054 = vmatprep.subr.bf16.mxu0 0
        %5055 = vmatpush1.bf16.msra.mxu0 0
        %5056 = vmatprep.subr.bf16.mxu0 0
        %5057 = vmatpush1.bf16.msra.mxu0 0
        %5058 = vmatprep.mubr.bf16.mxu0 0
        %5059 = vmatmul.mubr.bf16.gmra.mrb[0].mxu0 %v5024
        %v5060 = vpop.f32.mrb[0].mxu0
        %v5061 = vadd.f32 0.0, %v5060
        %v5062 = vpop.f32.mrb[0].mxu0
        %v5063 = vpop.f32.mrb[0].mxu0
        %v5064 = vadd.f32 0.0, %v5063
        %v5065 = vpop.f32.mrb[0].mxu0
        %5066 = vdwg.mxu0
        %v5068 = vsel %vm4038, %v4406, 0
        %5070 = vmatprep.subr.bf16.mxu0 0
        %5071 = vmatpush1.bf16.msra.mxu0 %v3378
        %5072 = vmatprep.subr.bf16.mxu0 0
        %5073 = vmatpush1.bf16.msra.mxu0 0
        %5074 = vmatprep.subr.bf16.mxu0 0
        %5075 = vmatpush1.bf16.msra.mxu0 0
        %5076 = vmatprep.subr.bf16.mxu0 0
        %5077 = vmatpush1.bf16.msra.mxu0 0
        %5078 = vmatprep.subr.bf16.mxu0 0
        %5079 = vmatpush1.bf16.msra.mxu0 0
        %5080 = vmatprep.subr.bf16.mxu0 0
        %5081 = vmatpush1.bf16.msra.mxu0 0
        %5082 = vmatprep.subr.bf16.mxu0 0
        %5083 = vmatpush1.bf16.msra.mxu0 0
        %5084 = vmatprep.subr.bf16.mxu0 0
        %5085 = vmatpush1.bf16.msra.mxu0 0
        %5086 = vmatprep.subr.bf16.mxu0 0
        %5087 = vmatpush1.bf16.msra.mxu0 0
        %5088 = vmatprep.subr.bf16.mxu0 0
        %5089 = vmatpush1.bf16.msra.mxu0 0
        %5090 = vmatprep.subr.bf16.mxu0 0
        %5091 = vmatpush1.bf16.msra.mxu0 0
        %5092 = vmatprep.subr.bf16.mxu0 0
        %5093 = vmatpush1.bf16.msra.mxu0 0
        %5094 = vmatprep.subr.bf16.mxu0 0
        %5095 = vmatpush1.bf16.msra.mxu0 0
        %5096 = vmatprep.subr.bf16.mxu0 0
        %5097 = vmatpush1.bf16.msra.mxu0 0
        %5098 = vmatprep.subr.bf16.mxu0 0
        %5099 = vmatpush1.bf16.msra.mxu0 0
        %5100 = vmatprep.subr.bf16.mxu0 0
        %5101 = vmatpush1.bf16.msra.mxu0 0
        %5102 = vmatprep.mubr.bf16.mxu0 0
        %5103 = vmatmul.mubr.bf16.gmra.mrb[0].mxu0 %v5068
        %v5104 = vpop.f32.mrb[0].mxu0
        %v5105 = vadd.f32 0.0, %v5104
        %v5106 = vpop.f32.mrb[0].mxu0
        %v5107 = vpop.f32.mrb[0].mxu0
        %v5108 = vadd.f32 0.0, %v5107
        %v5109 = vpop.f32.mrb[0].mxu0
        %5110 = vdwg.mxu0
        %5111 = vmatprep.subr.bf16.mxu0 0
        %5112 = vmatpush1.bf16.xpose.msra.mxu0 %v3257
        %5113 = vmatprep.subr.bf16.mxu0 0
        %5114 = vmatpush1.bf16.xpose.msra.mxu0 0
        %5115 = vmatprep.subr.bf16.mxu0 0
        %5116 = vmatpush1.bf16.xpose.msra.mxu0 0
        %5117 = vmatprep.subr.bf16.mxu0 0
        %5118 = vmatpush1.bf16.xpose.msra.mxu0 0
        %5119 = vmatprep.subr.bf16.mxu0 0
        %5120 = vmatpush1.bf16.xpose.msra.mxu0 0
        %5121 = vmatprep.subr.bf16.mxu0 0
        %5122 = vmatpush1.bf16.xpose.msra.mxu0 0
        %5123 = vmatprep.subr.bf16.mxu0 0
        %5124 = vmatpush1.bf16.xpose.msra.mxu0 0
        %5125 = vmatprep.subr.bf16.mxu0 0
        %5126 = vmatpush1.bf16.xpose.msra.mxu0 0
        %5127 = vmatprep.subr.bf16.mxu0 0
        %5128 = vmatpush1.bf16.xpose.msra.mxu0 0
        %5129 = vmatprep.subr.bf16.mxu0 0
        %5130 = vmatpush1.bf16.xpose.msra.mxu0 0
        %5131 = vmatprep.subr.bf16.mxu0 0
        %5132 = vmatpush1.bf16.xpose.msra.mxu0 0
        %5133 = vmatprep.subr.bf16.mxu0 0
        %5134 = vmatpush1.bf16.xpose.msra.mxu0 0
        %5135 = vmatprep.subr.bf16.mxu0 0
        %5136 = vmatpush1.bf16.xpose.msra.mxu0 0
        %5137 = vmatprep.subr.bf16.mxu0 0
        %5138 = vmatpush1.bf16.xpose.msra.mxu0 0
        %5139 = vmatprep.subr.bf16.mxu0 0
        %5140 = vmatpush1.bf16.xpose.msra.mxu0 0
        %5141 = vmatprep.subr.bf16.mxu0 0
        %5142 = vmatpush1.bf16.xpose.msra.mxu0 0
        %5143 = vmatprep.mubr.bf16.mxu0 0
        %5144 = vmatmul.mubr.bf16.gmra.mrb[0].mxu0 %v3255
        %v5145 = vpop.f32.mrb[0].mxu0
        %v5146 = vadd.f32 0.0, %v5145
        %v5147 = vpop.f32.mrb[0].mxu0
        %v5148 = vpop.f32.mrb[0].mxu0
        %v5149 = vadd.f32 0.0, %v5148
        %v5150 = vpop.f32.mrb[0].mxu0
        %5151 = vdwg.mxu0
        %5152 = vmatprep.subr.bf16.mxu0 0
        %5153 = vmatpush1.bf16.xpose.msra.mxu0 %v3265
        %5154 = vmatprep.subr.bf16.mxu0 0
        %5155 = vmatpush1.bf16.xpose.msra.mxu0 0
        %5156 = vmatprep.subr.bf16.mxu0 0
        %5157 = vmatpush1.bf16.xpose.msra.mxu0 0
        %5158 = vmatprep.subr.bf16.mxu0 0
        %5159 = vmatpush1.bf16.xpose.msra.mxu0 0
        %5160 = vmatprep.subr.bf16.mxu0 0
        %5161 = vmatpush1.bf16.xpose.msra.mxu0 0
        %5162 = vmatprep.subr.bf16.mxu0 0
        %5163 = vmatpush1.bf16.xpose.msra.mxu0 0
        %5164 = vmatprep.subr.bf16.mxu0 0
        %5165 = vmatpush1.bf16.xpose.msra.mxu0 0
        %5166 = vmatprep.subr.bf16.mxu0 0
        %5167 = vmatpush1.bf16.xpose.msra.mxu0 0
        %5168 = vmatprep.subr.bf16.mxu0 0
        %5169 = vmatpush1.bf16.xpose.msra.mxu0 0
        %5170 = vmatprep.subr.bf16.mxu0 0
        %5171 = vmatpush1.bf16.xpose.msra.mxu0 0
        %5172 = vmatprep.subr.bf16.mxu0 0
        %5173 = vmatpush1.bf16.xpose.msra.mxu0 0
        %5174 = vmatprep.subr.bf16.mxu0 0
        %5175 = vmatpush1.bf16.xpose.msra.mxu0 0
        %5176 = vmatprep.subr.bf16.mxu0 0
        %5177 = vmatpush1.bf16.xpose.msra.mxu0 0
        %5178 = vmatprep.subr.bf16.mxu0 0
        %5179 = vmatpush1.bf16.xpose.msra.mxu0 0
        %5180 = vmatprep.subr.bf16.mxu0 0
        %5181 = vmatpush1.bf16.xpose.msra.mxu0 0
        %5182 = vmatprep.subr.bf16.mxu0 0
        %5183 = vmatpush1.bf16.xpose.msra.mxu0 0
        %5184 = vmatprep.mubr.bf16.mxu0 0
        %5185 = vmatmul.mubr.bf16.gmra.mrb[0].mxu0 %v3263
        %v5186 = vpop.f32.mrb[0].mxu0
        %v5187 = vadd.f32 0.0, %v5186
        %v5188 = vpop.f32.mrb[0].mxu0
        %v5189 = vpop.f32.mrb[0].mxu0
        %v5190 = vadd.f32 0.0, %v5189
        %v5191 = vpop.f32.mrb[0].mxu0
        %5192 = vdwg.mxu0
        %5193 = vmatprep.subr.bf16.mxu0 0
        %5194 = vmatpush1.bf16.xpose.msra.mxu0 %v3273
        %5195 = vmatprep.subr.bf16.mxu0 0
        %5196 = vmatpush1.bf16.xpose.msra.mxu0 0
        %5197 = vmatprep.subr.bf16.mxu0 0
        %5198 = vmatpush1.bf16.xpose.msra.mxu0 0
        %5199 = vmatprep.subr.bf16.mxu0 0
        %5200 = vmatpush1.bf16.xpose.msra.mxu0 0
        %5201 = vmatprep.subr.bf16.mxu0 0
        %5202 = vmatpush1.bf16.xpose.msra.mxu0 0
        %5203 = vmatprep.subr.bf16.mxu0 0
        %5204 = vmatpush1.bf16.xpose.msra.mxu0 0
        %5205 = vmatprep.subr.bf16.mxu0 0
        %5206 = vmatpush1.bf16.xpose.msra.mxu0 0
        %5207 = vmatprep.subr.bf16.mxu0 0
        %5208 = vmatpush1.bf16.xpose.msra.mxu0 0
        %5209 = vmatprep.subr.bf16.mxu0 0
        %5210 = vmatpush1.bf16.xpose.msra.mxu0 0
        %5211 = vmatprep.subr.bf16.mxu0 0
        %5212 = vmatpush1.bf16.xpose.msra.mxu0 0
        %5213 = vmatprep.subr.bf16.mxu0 0
        %5214 = vmatpush1.bf16.xpose.msra.mxu0 0
        %5215 = vmatprep.subr.bf16.mxu0 0
        %5216 = vmatpush1.bf16.xpose.msra.mxu0 0
        %5217 = vmatprep.subr.bf16.mxu0 0
        %5218 = vmatpush1.bf16.xpose.msra.mxu0 0
        %5219 = vmatprep.subr.bf16.mxu0 0
        %5220 = vmatpush1.bf16.xpose.msra.mxu0 0
        %5221 = vmatprep.subr.bf16.mxu0 0
        %5222 = vmatpush1.bf16.xpose.msra.mxu0 0
        %5223 = vmatprep.subr.bf16.mxu0 0
        %5224 = vmatpush1.bf16.xpose.msra.mxu0 0
        %5225 = vmatprep.mubr.bf16.mxu0 0
        %5226 = vmatmul.mubr.bf16.gmra.mrb[0].mxu0 %v3271
        %v5227 = vpop.f32.mrb[0].mxu0
        %v5228 = vadd.f32 0.0, %v5227
        %v5229 = vpop.f32.mrb[0].mxu0
        %v5230 = vpop.f32.mrb[0].mxu0
        %v5231 = vadd.f32 0.0, %v5230
        %v5232 = vpop.f32.mrb[0].mxu0
        %5233 = vdwg.mxu0
        %5234 = vmatprep.subr.bf16.mxu0 0
        %5235 = vmatpush1.bf16.xpose.msra.mxu0 %v3281
        %5236 = vmatprep.subr.bf16.mxu0 0
        %5237 = vmatpush1.bf16.xpose.msra.mxu0 0
        %5238 = vmatprep.subr.bf16.mxu0 0
        %5239 = vmatpush1.bf16.xpose.msra.mxu0 0
        %5240 = vmatprep.subr.bf16.mxu0 0
        %5241 = vmatpush1.bf16.xpose.msra.mxu0 0
        %5242 = vmatprep.subr.bf16.mxu0 0
        %5243 = vmatpush1.bf16.xpose.msra.mxu0 0
        %5244 = vmatprep.subr.bf16.mxu0 0
        %5245 = vmatpush1.bf16.xpose.msra.mxu0 0
        %5246 = vmatprep.subr.bf16.mxu0 0
        %5247 = vmatpush1.bf16.xpose.msra.mxu0 0
        %5248 = vmatprep.subr.bf16.mxu0 0
        %5249 = vmatpush1.bf16.xpose.msra.mxu0 0
        %5250 = vmatprep.subr.bf16.mxu0 0
        %5251 = vmatpush1.bf16.xpose.msra.mxu0 0
        %5252 = vmatprep.subr.bf16.mxu0 0
        %5253 = vmatpush1.bf16.xpose.msra.mxu0 0
        %5254 = vmatprep.subr.bf16.mxu0 0
        %5255 = vmatpush1.bf16.xpose.msra.mxu0 0
        %5256 = vmatprep.subr.bf16.mxu0 0
        %5257 = vmatpush1.bf16.xpose.msra.mxu0 0
        %5258 = vmatprep.subr.bf16.mxu0 0
        %5259 = vmatpush1.bf16.xpose.msra.mxu0 0
        %5260 = vmatprep.subr.bf16.mxu0 0
        %5261 = vmatpush1.bf16.xpose.msra.mxu0 0
        %5262 = vmatprep.subr.bf16.mxu0 0
        %5263 = vmatpush1.bf16.xpose.msra.mxu0 0
        %5264 = vmatprep.subr.bf16.mxu0 0
        %5265 = vmatpush1.bf16.xpose.msra.mxu0 0
        %5266 = vmatprep.mubr.bf16.mxu0 0
        %5267 = vmatmul.mubr.bf16.gmra.mrb[0].mxu0 %v3279
        %v5268 = vpop.f32.mrb[0].mxu0
        %v5269 = vadd.f32 0.0, %v5268
        %v5270 = vpop.f32.mrb[0].mxu0
        %v5271 = vpop.f32.mrb[0].mxu0
        %v5272 = vadd.f32 0.0, %v5271
        %v5273 = vpop.f32.mrb[0].mxu0
        %5274 = vdwg.mxu0
        %5275 = vmatprep.subr.bf16.mxu0 0
        %5276 = vmatpush1.bf16.xpose.msra.mxu0 %v3289
        %5277 = vmatprep.subr.bf16.mxu0 0
        %5278 = vmatpush1.bf16.xpose.msra.mxu0 0
        %5279 = vmatprep.subr.bf16.mxu0 0
        %5280 = vmatpush1.bf16.xpose.msra.mxu0 0
        %5281 = vmatprep.subr.bf16.mxu0 0
        %5282 = vmatpush1.bf16.xpose.msra.mxu0 0
        %5283 = vmatprep.subr.bf16.mxu0 0
        %5284 = vmatpush1.bf16.xpose.msra.mxu0 0
        %5285 = vmatprep.subr.bf16.mxu0 0
        %5286 = vmatpush1.bf16.xpose.msra.mxu0 0
        %5287 = vmatprep.subr.bf16.mxu0 0
        %5288 = vmatpush1.bf16.xpose.msra.mxu0 0
        %5289 = vmatprep.subr.bf16.mxu0 0
        %5290 = vmatpush1.bf16.xpose.msra.mxu0 0
        %5291 = vmatprep.subr.bf16.mxu0 0
        %5292 = vmatpush1.bf16.xpose.msra.mxu0 0
        %5293 = vmatprep.subr.bf16.mxu0 0
        %5294 = vmatpush1.bf16.xpose.msra.mxu0 0
        %5295 = vmatprep.subr.bf16.mxu0 0
        %5296 = vmatpush1.bf16.xpose.msra.mxu0 0
        %5297 = vmatprep.subr.bf16.mxu0 0
        %5298 = vmatpush1.bf16.xpose.msra.mxu0 0
        %5299 = vmatprep.subr.bf16.mxu0 0
        %5300 = vmatpush1.bf16.xpose.msra.mxu0 0
        %5301 = vmatprep.subr.bf16.mxu0 0
        %5302 = vmatpush1.bf16.xpose.msra.mxu0 0
        %5303 = vmatprep.subr.bf16.mxu0 0
        %5304 = vmatpush1.bf16.xpose.msra.mxu0 0
        %5305 = vmatprep.subr.bf16.mxu0 0
        %5306 = vmatpush1.bf16.xpose.msra.mxu0 0
        %5307 = vmatprep.mubr.bf16.mxu0 0
        %5308 = vmatmul.mubr.bf16.gmra.mrb[0].mxu0 %v3287
        %v5309 = vpop.f32.mrb[0].mxu0
        %v5310 = vadd.f32 0.0, %v5309
        %v5311 = vpop.f32.mrb[0].mxu0
        %v5312 = vpop.f32.mrb[0].mxu0
        %v5313 = vadd.f32 0.0, %v5312
        %v5314 = vpop.f32.mrb[0].mxu0
        %5315 = vdwg.mxu0
        %5316 = vmatprep.subr.bf16.mxu0 0
        %5317 = vmatpush1.bf16.xpose.msra.mxu0 %v3297
        %5318 = vmatprep.subr.bf16.mxu0 0
        %5319 = vmatpush1.bf16.xpose.msra.mxu0 0
        %5320 = vmatprep.subr.bf16.mxu0 0
        %5321 = vmatpush1.bf16.xpose.msra.mxu0 0
        %5322 = vmatprep.subr.bf16.mxu0 0
        %5323 = vmatpush1.bf16.xpose.msra.mxu0 0
        %5324 = vmatprep.subr.bf16.mxu0 0
        %5325 = vmatpush1.bf16.xpose.msra.mxu0 0
        %5326 = vmatprep.subr.bf16.mxu0 0
        %5327 = vmatpush1.bf16.xpose.msra.mxu0 0
        %5328 = vmatprep.subr.bf16.mxu0 0
        %5329 = vmatpush1.bf16.xpose.msra.mxu0 0
        %5330 = vmatprep.subr.bf16.mxu0 0
        %5331 = vmatpush1.bf16.xpose.msra.mxu0 0
        %5332 = vmatprep.subr.bf16.mxu0 0
        %5333 = vmatpush1.bf16.xpose.msra.mxu0 0
        %5334 = vmatprep.subr.bf16.mxu0 0
        %5335 = vmatpush1.bf16.xpose.msra.mxu0 0
        %5336 = vmatprep.subr.bf16.mxu0 0
        %5337 = vmatpush1.bf16.xpose.msra.mxu0 0
        %5338 = vmatprep.subr.bf16.mxu0 0
        %5339 = vmatpush1.bf16.xpose.msra.mxu0 0
        %5340 = vmatprep.subr.bf16.mxu0 0
        %5341 = vmatpush1.bf16.xpose.msra.mxu0 0
        %5342 = vmatprep.subr.bf16.mxu0 0
        %5343 = vmatpush1.bf16.xpose.msra.mxu0 0
        %5344 = vmatprep.subr.bf16.mxu0 0
        %5345 = vmatpush1.bf16.xpose.msra.mxu0 0
        %5346 = vmatprep.subr.bf16.mxu0 0
        %5347 = vmatpush1.bf16.xpose.msra.mxu0 0
        %5348 = vmatprep.mubr.bf16.mxu0 0
        %5349 = vmatmul.mubr.bf16.gmra.mrb[0].mxu0 %v3295
        %v5350 = vpop.f32.mrb[0].mxu0
        %v5351 = vadd.f32 0.0, %v5350
        %v5352 = vpop.f32.mrb[0].mxu0
        %v5353 = vpop.f32.mrb[0].mxu0
        %v5354 = vadd.f32 0.0, %v5353
        %v5355 = vpop.f32.mrb[0].mxu0
        %5356 = vdwg.mxu0
        %5357 = vmatprep.subr.bf16.mxu0 0
        %5358 = vmatpush1.bf16.xpose.msra.mxu0 %v3305
        %5359 = vmatprep.subr.bf16.mxu0 0
        %5360 = vmatpush1.bf16.xpose.msra.mxu0 0
        %5361 = vmatprep.subr.bf16.mxu0 0
        %5362 = vmatpush1.bf16.xpose.msra.mxu0 0
        %5363 = vmatprep.subr.bf16.mxu0 0
        %5364 = vmatpush1.bf16.xpose.msra.mxu0 0
        %5365 = vmatprep.subr.bf16.mxu0 0
        %5366 = vmatpush1.bf16.xpose.msra.mxu0 0
        %5367 = vmatprep.subr.bf16.mxu0 0
        %5368 = vmatpush1.bf16.xpose.msra.mxu0 0
        %5369 = vmatprep.subr.bf16.mxu0 0
        %5370 = vmatpush1.bf16.xpose.msra.mxu0 0
        %5371 = vmatprep.subr.bf16.mxu0 0
        %5372 = vmatpush1.bf16.xpose.msra.mxu0 0
        %5373 = vmatprep.subr.bf16.mxu0 0
        %5374 = vmatpush1.bf16.xpose.msra.mxu0 0
        %5375 = vmatprep.subr.bf16.mxu0 0
        %5376 = vmatpush1.bf16.xpose.msra.mxu0 0
        %5377 = vmatprep.subr.bf16.mxu0 0
        %5378 = vmatpush1.bf16.xpose.msra.mxu0 0
        %5379 = vmatprep.subr.bf16.mxu0 0
        %5380 = vmatpush1.bf16.xpose.msra.mxu0 0
        %5381 = vmatprep.subr.bf16.mxu0 0
        %5382 = vmatpush1.bf16.xpose.msra.mxu0 0
        %5383 = vmatprep.subr.bf16.mxu0 0
        %5384 = vmatpush1.bf16.xpose.msra.mxu0 0
        %5385 = vmatprep.subr.bf16.mxu0 0
        %5386 = vmatpush1.bf16.xpose.msra.mxu0 0
        %5387 = vmatprep.subr.bf16.mxu0 0
        %5388 = vmatpush1.bf16.xpose.msra.mxu0 0
        %5389 = vmatprep.mubr.bf16.mxu0 0
        %5390 = vmatmul.mubr.bf16.gmra.mrb[0].mxu0 %v3303
        %v5391 = vpop.f32.mrb[0].mxu0
        %v5392 = vadd.f32 0.0, %v5391
        %v5393 = vpop.f32.mrb[0].mxu0
        %v5394 = vpop.f32.mrb[0].mxu0
        %v5395 = vadd.f32 0.0, %v5394
        %v5396 = vpop.f32.mrb[0].mxu0
        %5397 = vdwg.mxu0
        %5398 = vmatprep.subr.bf16.mxu0 0
        %5399 = vmatpush1.bf16.xpose.msra.mxu0 %v3313
        %5400 = vmatprep.subr.bf16.mxu0 0
        %5401 = vmatpush1.bf16.xpose.msra.mxu0 0
        %5402 = vmatprep.subr.bf16.mxu0 0
        %5403 = vmatpush1.bf16.xpose.msra.mxu0 0
        %5404 = vmatprep.subr.bf16.mxu0 0
        %5405 = vmatpush1.bf16.xpose.msra.mxu0 0
        %5406 = vmatprep.subr.bf16.mxu0 0
        %5407 = vmatpush1.bf16.xpose.msra.mxu0 0
        %5408 = vmatprep.subr.bf16.mxu0 0
        %5409 = vmatpush1.bf16.xpose.msra.mxu0 0
        %5410 = vmatprep.subr.bf16.mxu0 0
        %5411 = vmatpush1.bf16.xpose.msra.mxu0 0
        %5412 = vmatprep.subr.bf16.mxu0 0
        %5413 = vmatpush1.bf16.xpose.msra.mxu0 0
        %5414 = vmatprep.subr.bf16.mxu0 0
        %5415 = vmatpush1.bf16.xpose.msra.mxu0 0
        %5416 = vmatprep.subr.bf16.mxu0 0
        %5417 = vmatpush1.bf16.xpose.msra.mxu0 0
        %5418 = vmatprep.subr.bf16.mxu0 0
        %5419 = vmatpush1.bf16.xpose.msra.mxu0 0
        %5420 = vmatprep.subr.bf16.mxu0 0
        %5421 = vmatpush1.bf16.xpose.msra.mxu0 0
        %5422 = vmatprep.subr.bf16.mxu0 0
        %5423 = vmatpush1.bf16.xpose.msra.mxu0 0
        %5424 = vmatprep.subr.bf16.mxu0 0
        %5425 = vmatpush1.bf16.xpose.msra.mxu0 0
        %5426 = vmatprep.subr.bf16.mxu0 0
        %5427 = vmatpush1.bf16.xpose.msra.mxu0 0
        %5428 = vmatprep.subr.bf16.mxu0 0
        %5429 = vmatpush1.bf16.xpose.msra.mxu0 0
        %5430 = vmatprep.mubr.bf16.mxu0 0
        %5431 = vmatmul.mubr.bf16.gmra.mrb[0].mxu0 %v3311
        %v5432 = vpop.f32.mrb[0].mxu0
        %v5433 = vadd.f32 0.0, %v5432
        %v5434 = vpop.f32.mrb[0].mxu0
        %v5435 = vpop.f32.mrb[0].mxu0
        %v5436 = vadd.f32 0.0, %v5435
        %v5437 = vpop.f32.mrb[0].mxu0
        %5438 = vdwg.mxu0
        %5439 = vmatprep.subr.bf16.mxu0 0
        %5440 = vmatpush1.bf16.xpose.msra.mxu0 %v3321
        %5441 = vmatprep.subr.bf16.mxu0 0
        %5442 = vmatpush1.bf16.xpose.msra.mxu0 0
        %5443 = vmatprep.subr.bf16.mxu0 0
        %5444 = vmatpush1.bf16.xpose.msra.mxu0 0
        %5445 = vmatprep.subr.bf16.mxu0 0
        %5446 = vmatpush1.bf16.xpose.msra.mxu0 0
        %5447 = vmatprep.subr.bf16.mxu0 0
        %5448 = vmatpush1.bf16.xpose.msra.mxu0 0
        %5449 = vmatprep.subr.bf16.mxu0 0
        %5450 = vmatpush1.bf16.xpose.msra.mxu0 0
        %5451 = vmatprep.subr.bf16.mxu0 0
        %5452 = vmatpush1.bf16.xpose.msra.mxu0 0
        %5453 = vmatprep.subr.bf16.mxu0 0
        %5454 = vmatpush1.bf16.xpose.msra.mxu0 0
        %5455 = vmatprep.subr.bf16.mxu0 0
        %5456 = vmatpush1.bf16.xpose.msra.mxu0 0
        %5457 = vmatprep.subr.bf16.mxu0 0
        %5458 = vmatpush1.bf16.xpose.msra.mxu0 0
        %5459 = vmatprep.subr.bf16.mxu0 0
        %5460 = vmatpush1.bf16.xpose.msra.mxu0 0
        %5461 = vmatprep.subr.bf16.mxu0 0
        %5462 = vmatpush1.bf16.xpose.msra.mxu0 0
        %5463 = vmatprep.subr.bf16.mxu0 0
        %5464 = vmatpush1.bf16.xpose.msra.mxu0 0
        %5465 = vmatprep.subr.bf16.mxu0 0
        %5466 = vmatpush1.bf16.xpose.msra.mxu0 0
        %5467 = vmatprep.subr.bf16.mxu0 0
        %5468 = vmatpush1.bf16.xpose.msra.mxu0 0
        %5469 = vmatprep.subr.bf16.mxu0 0
        %5470 = vmatpush1.bf16.xpose.msra.mxu0 0
        %5471 = vmatprep.mubr.bf16.mxu0 0
        %5472 = vmatmul.mubr.bf16.gmra.mrb[0].mxu0 %v3319
        %v5473 = vpop.f32.mrb[0].mxu0
        %v5474 = vadd.f32 0.0, %v5473
        %v5475 = vpop.f32.mrb[0].mxu0
        %v5476 = vpop.f32.mrb[0].mxu0
        %v5477 = vadd.f32 0.0, %v5476
        %v5478 = vpop.f32.mrb[0].mxu0
        %5479 = vdwg.mxu0
        %5480 = vmatprep.subr.bf16.mxu0 0
        %5481 = vmatpush1.bf16.xpose.msra.mxu0 %v3329
        %5482 = vmatprep.subr.bf16.mxu0 0
        %5483 = vmatpush1.bf16.xpose.msra.mxu0 0
        %5484 = vmatprep.subr.bf16.mxu0 0
        %5485 = vmatpush1.bf16.xpose.msra.mxu0 0
        %5486 = vmatprep.subr.bf16.mxu0 0
        %5487 = vmatpush1.bf16.xpose.msra.mxu0 0
        %5488 = vmatprep.subr.bf16.mxu0 0
        %5489 = vmatpush1.bf16.xpose.msra.mxu0 0
        %5490 = vmatprep.subr.bf16.mxu0 0
        %5491 = vmatpush1.bf16.xpose.msra.mxu0 0
        %5492 = vmatprep.subr.bf16.mxu0 0
        %5493 = vmatpush1.bf16.xpose.msra.mxu0 0
        %5494 = vmatprep.subr.bf16.mxu0 0
        %5495 = vmatpush1.bf16.xpose.msra.mxu0 0
        %5496 = vmatprep.subr.bf16.mxu0 0
        %5497 = vmatpush1.bf16.xpose.msra.mxu0 0
        %5498 = vmatprep.subr.bf16.mxu0 0
        %5499 = vmatpush1.bf16.xpose.msra.mxu0 0
        %5500 = vmatprep.subr.bf16.mxu0 0
        %5501 = vmatpush1.bf16.xpose.msra.mxu0 0
        %5502 = vmatprep.subr.bf16.mxu0 0
        %5503 = vmatpush1.bf16.xpose.msra.mxu0 0
        %5504 = vmatprep.subr.bf16.mxu0 0
        %5505 = vmatpush1.bf16.xpose.msra.mxu0 0
        %5506 = vmatprep.subr.bf16.mxu0 0
        %5507 = vmatpush1.bf16.xpose.msra.mxu0 0
        %5508 = vmatprep.subr.bf16.mxu0 0
        %5509 = vmatpush1.bf16.xpose.msra.mxu0 0
        %5510 = vmatprep.subr.bf16.mxu0 0
        %5511 = vmatpush1.bf16.xpose.msra.mxu0 0
        %5512 = vmatprep.mubr.bf16.mxu0 0
        %5513 = vmatmul.mubr.bf16.gmra.mrb[0].mxu0 %v3327
        %v5514 = vpop.f32.mrb[0].mxu0
        %v5515 = vadd.f32 0.0, %v5514
        %v5516 = vpop.f32.mrb[0].mxu0
        %v5517 = vpop.f32.mrb[0].mxu0
        %v5518 = vadd.f32 0.0, %v5517
        %v5519 = vpop.f32.mrb[0].mxu0
        %5520 = vdwg.mxu0
        %5521 = vmatprep.subr.bf16.mxu0 0
        %5522 = vmatpush1.bf16.xpose.msra.mxu0 %v3337
        %5523 = vmatprep.subr.bf16.mxu0 0
        %5524 = vmatpush1.bf16.xpose.msra.mxu0 0
        %5525 = vmatprep.subr.bf16.mxu0 0
        %5526 = vmatpush1.bf16.xpose.msra.mxu0 0
        %5527 = vmatprep.subr.bf16.mxu0 0
        %5528 = vmatpush1.bf16.xpose.msra.mxu0 0
        %5529 = vmatprep.subr.bf16.mxu0 0
        %5530 = vmatpush1.bf16.xpose.msra.mxu0 0
        %5531 = vmatprep.subr.bf16.mxu0 0
        %5532 = vmatpush1.bf16.xpose.msra.mxu0 0
        %5533 = vmatprep.subr.bf16.mxu0 0
        %5534 = vmatpush1.bf16.xpose.msra.mxu0 0
        %5535 = vmatprep.subr.bf16.mxu0 0
        %5536 = vmatpush1.bf16.xpose.msra.mxu0 0
        %5537 = vmatprep.subr.bf16.mxu0 0
        %5538 = vmatpush1.bf16.xpose.msra.mxu0 0
        %5539 = vmatprep.subr.bf16.mxu0 0
        %5540 = vmatpush1.bf16.xpose.msra.mxu0 0
        %5541 = vmatprep.subr.bf16.mxu0 0
        %5542 = vmatpush1.bf16.xpose.msra.mxu0 0
        %5543 = vmatprep.subr.bf16.mxu0 0
        %5544 = vmatpush1.bf16.xpose.msra.mxu0 0
        %5545 = vmatprep.subr.bf16.mxu0 0
        %5546 = vmatpush1.bf16.xpose.msra.mxu0 0
        %5547 = vmatprep.subr.bf16.mxu0 0
        %5548 = vmatpush1.bf16.xpose.msra.mxu0 0
        %5549 = vmatprep.subr.bf16.mxu0 0
        %5550 = vmatpush1.bf16.xpose.msra.mxu0 0
        %5551 = vmatprep.subr.bf16.mxu0 0
        %5552 = vmatpush1.bf16.xpose.msra.mxu0 0
        %5553 = vmatprep.mubr.bf16.mxu0 0
        %5554 = vmatmul.mubr.bf16.gmra.mrb[0].mxu0 %v3335
        %v5555 = vpop.f32.mrb[0].mxu0
        %v5556 = vadd.f32 0.0, %v5555
        %v5557 = vpop.f32.mrb[0].mxu0
        %v5558 = vpop.f32.mrb[0].mxu0
        %v5559 = vadd.f32 0.0, %v5558
        %v5560 = vpop.f32.mrb[0].mxu0
        %5561 = vdwg.mxu0
        %5562 = vmatprep.subr.bf16.mxu0 0
        %5563 = vmatpush1.bf16.xpose.msra.mxu0 %v3345
        %5564 = vmatprep.subr.bf16.mxu0 0
        %5565 = vmatpush1.bf16.xpose.msra.mxu0 0
        %5566 = vmatprep.subr.bf16.mxu0 0
        %5567 = vmatpush1.bf16.xpose.msra.mxu0 0
        %5568 = vmatprep.subr.bf16.mxu0 0
        %5569 = vmatpush1.bf16.xpose.msra.mxu0 0
        %5570 = vmatprep.subr.bf16.mxu0 0
        %5571 = vmatpush1.bf16.xpose.msra.mxu0 0
        %5572 = vmatprep.subr.bf16.mxu0 0
        %5573 = vmatpush1.bf16.xpose.msra.mxu0 0
        %5574 = vmatprep.subr.bf16.mxu0 0
        %5575 = vmatpush1.bf16.xpose.msra.mxu0 0
        %5576 = vmatprep.subr.bf16.mxu0 0
        %5577 = vmatpush1.bf16.xpose.msra.mxu0 0
        %5578 = vmatprep.subr.bf16.mxu0 0
        %5579 = vmatpush1.bf16.xpose.msra.mxu0 0
        %5580 = vmatprep.subr.bf16.mxu0 0
        %5581 = vmatpush1.bf16.xpose.msra.mxu0 0
        %5582 = vmatprep.subr.bf16.mxu0 0
        %5583 = vmatpush1.bf16.xpose.msra.mxu0 0
        %5584 = vmatprep.subr.bf16.mxu0 0
        %5585 = vmatpush1.bf16.xpose.msra.mxu0 0
        %5586 = vmatprep.subr.bf16.mxu0 0
        %5587 = vmatpush1.bf16.xpose.msra.mxu0 0
        %5588 = vmatprep.subr.bf16.mxu0 0
        %5589 = vmatpush1.bf16.xpose.msra.mxu0 0
        %5590 = vmatprep.subr.bf16.mxu0 0
        %5591 = vmatpush1.bf16.xpose.msra.mxu0 0
        %5592 = vmatprep.subr.bf16.mxu0 0
        %5593 = vmatpush1.bf16.xpose.msra.mxu0 0
        %5594 = vmatprep.mubr.bf16.mxu0 0
        %5595 = vmatmul.mubr.bf16.gmra.mrb[0].mxu0 %v3343
        %v5596 = vpop.f32.mrb[0].mxu0
        %v5597 = vadd.f32 0.0, %v5596
        %v5598 = vpop.f32.mrb[0].mxu0
        %v5599 = vpop.f32.mrb[0].mxu0
        %v5600 = vadd.f32 0.0, %v5599
        %v5601 = vpop.f32.mrb[0].mxu0
        %5602 = vdwg.mxu0
        %5603 = vmatprep.subr.bf16.mxu0 0
        %5604 = vmatpush1.bf16.xpose.msra.mxu0 %v3353
        %5605 = vmatprep.subr.bf16.mxu0 0
        %5606 = vmatpush1.bf16.xpose.msra.mxu0 0
        %5607 = vmatprep.subr.bf16.mxu0 0
        %5608 = vmatpush1.bf16.xpose.msra.mxu0 0
        %5609 = vmatprep.subr.bf16.mxu0 0
        %5610 = vmatpush1.bf16.xpose.msra.mxu0 0
        %5611 = vmatprep.subr.bf16.mxu0 0
        %5612 = vmatpush1.bf16.xpose.msra.mxu0 0
        %5613 = vmatprep.subr.bf16.mxu0 0
        %5614 = vmatpush1.bf16.xpose.msra.mxu0 0
        %5615 = vmatprep.subr.bf16.mxu0 0
        %5616 = vmatpush1.bf16.xpose.msra.mxu0 0
        %5617 = vmatprep.subr.bf16.mxu0 0
        %5618 = vmatpush1.bf16.xpose.msra.mxu0 0
        %5619 = vmatprep.subr.bf16.mxu0 0
        %5620 = vmatpush1.bf16.xpose.msra.mxu0 0
        %5621 = vmatprep.subr.bf16.mxu0 0
        %5622 = vmatpush1.bf16.xpose.msra.mxu0 0
        %5623 = vmatprep.subr.bf16.mxu0 0
        %5624 = vmatpush1.bf16.xpose.msra.mxu0 0
        %5625 = vmatprep.subr.bf16.mxu0 0
        %5626 = vmatpush1.bf16.xpose.msra.mxu0 0
        %5627 = vmatprep.subr.bf16.mxu0 0
        %5628 = vmatpush1.bf16.xpose.msra.mxu0 0
        %5629 = vmatprep.subr.bf16.mxu0 0
        %5630 = vmatpush1.bf16.xpose.msra.mxu0 0
        %5631 = vmatprep.subr.bf16.mxu0 0
        %5632 = vmatpush1.bf16.xpose.msra.mxu0 0
        %5633 = vmatprep.subr.bf16.mxu0 0
        %5634 = vmatpush1.bf16.xpose.msra.mxu0 0
        %5635 = vmatprep.mubr.bf16.mxu0 0
        %5636 = vmatmul.mubr.bf16.gmra.mrb[0].mxu0 %v3351
        %v5637 = vpop.f32.mrb[0].mxu0
        %v5638 = vadd.f32 0.0, %v5637
        %v5639 = vpop.f32.mrb[0].mxu0
        %v5640 = vpop.f32.mrb[0].mxu0
        %v5641 = vadd.f32 0.0, %v5640
        %v5642 = vpop.f32.mrb[0].mxu0
        %5643 = vdwg.mxu0
        %5644 = vmatprep.subr.bf16.mxu0 0
        %5645 = vmatpush1.bf16.xpose.msra.mxu0 %v3361
        %5646 = vmatprep.subr.bf16.mxu0 0
        %5647 = vmatpush1.bf16.xpose.msra.mxu0 0
        %5648 = vmatprep.subr.bf16.mxu0 0
        %5649 = vmatpush1.bf16.xpose.msra.mxu0 0
        %5650 = vmatprep.subr.bf16.mxu0 0
        %5651 = vmatpush1.bf16.xpose.msra.mxu0 0
        %5652 = vmatprep.subr.bf16.mxu0 0
        %5653 = vmatpush1.bf16.xpose.msra.mxu0 0
        %5654 = vmatprep.subr.bf16.mxu0 0
        %5655 = vmatpush1.bf16.xpose.msra.mxu0 0
        %5656 = vmatprep.subr.bf16.mxu0 0
        %5657 = vmatpush1.bf16.xpose.msra.mxu0 0
        %5658 = vmatprep.subr.bf16.mxu0 0
        %5659 = vmatpush1.bf16.xpose.msra.mxu0 0
        %5660 = vmatprep.subr.bf16.mxu0 0
        %5661 = vmatpush1.bf16.xpose.msra.mxu0 0
        %5662 = vmatprep.subr.bf16.mxu0 0
        %5663 = vmatpush1.bf16.xpose.msra.mxu0 0
        %5664 = vmatprep.subr.bf16.mxu0 0
        %5665 = vmatpush1.bf16.xpose.msra.mxu0 0
        %5666 = vmatprep.subr.bf16.mxu0 0
        %5667 = vmatpush1.bf16.xpose.msra.mxu0 0
        %5668 = vmatprep.subr.bf16.mxu0 0
        %5669 = vmatpush1.bf16.xpose.msra.mxu0 0
        %5670 = vmatprep.subr.bf16.mxu0 0
        %5671 = vmatpush1.bf16.xpose.msra.mxu0 0
        %5672 = vmatprep.subr.bf16.mxu0 0
        %5673 = vmatpush1.bf16.xpose.msra.mxu0 0
        %5674 = vmatprep.subr.bf16.mxu0 0
        %5675 = vmatpush1.bf16.xpose.msra.mxu0 0
        %5676 = vmatprep.mubr.bf16.mxu0 0
        %5677 = vmatmul.mubr.bf16.gmra.mrb[0].mxu0 %v3359
        %v5678 = vpop.f32.mrb[0].mxu0
        %v5679 = vadd.f32 0.0, %v5678
        %v5680 = vpop.f32.mrb[0].mxu0
        %v5681 = vpop.f32.mrb[0].mxu0
        %v5682 = vadd.f32 0.0, %v5681
        %v5683 = vpop.f32.mrb[0].mxu0
        %5684 = vdwg.mxu0
        %5685 = vmatprep.subr.bf16.mxu0 0
        %5686 = vmatpush1.bf16.xpose.msra.mxu0 %v3369
        %5687 = vmatprep.subr.bf16.mxu0 0
        %5688 = vmatpush1.bf16.xpose.msra.mxu0 0
        %5689 = vmatprep.subr.bf16.mxu0 0
        %5690 = vmatpush1.bf16.xpose.msra.mxu0 0
        %5691 = vmatprep.subr.bf16.mxu0 0
        %5692 = vmatpush1.bf16.xpose.msra.mxu0 0
        %5693 = vmatprep.subr.bf16.mxu0 0
        %5694 = vmatpush1.bf16.xpose.msra.mxu0 0
        %5695 = vmatprep.subr.bf16.mxu0 0
        %5696 = vmatpush1.bf16.xpose.msra.mxu0 0
        %5697 = vmatprep.subr.bf16.mxu0 0
        %5698 = vmatpush1.bf16.xpose.msra.mxu0 0
        %5699 = vmatprep.subr.bf16.mxu0 0
        %5700 = vmatpush1.bf16.xpose.msra.mxu0 0
        %5701 = vmatprep.subr.bf16.mxu0 0
        %5702 = vmatpush1.bf16.xpose.msra.mxu0 0
        %5703 = vmatprep.subr.bf16.mxu0 0
        %5704 = vmatpush1.bf16.xpose.msra.mxu0 0
        %5705 = vmatprep.subr.bf16.mxu0 0
        %5706 = vmatpush1.bf16.xpose.msra.mxu0 0
        %5707 = vmatprep.subr.bf16.mxu0 0
        %5708 = vmatpush1.bf16.xpose.msra.mxu0 0
        %5709 = vmatprep.subr.bf16.mxu0 0
        %5710 = vmatpush1.bf16.xpose.msra.mxu0 0
        %5711 = vmatprep.subr.bf16.mxu0 0
        %5712 = vmatpush1.bf16.xpose.msra.mxu0 0
        %5713 = vmatprep.subr.bf16.mxu0 0
        %5714 = vmatpush1.bf16.xpose.msra.mxu0 0
        %5715 = vmatprep.subr.bf16.mxu0 0
        %5716 = vmatpush1.bf16.xpose.msra.mxu0 0
        %5717 = vmatprep.mubr.bf16.mxu0 0
        %5718 = vmatmul.mubr.bf16.gmra.mrb[0].mxu0 %v3367
        %v5719 = vpop.f32.mrb[0].mxu0
        %v5720 = vadd.f32 0.0, %v5719
        %v5721 = vpop.f32.mrb[0].mxu0
        %v5722 = vpop.f32.mrb[0].mxu0
        %v5723 = vadd.f32 0.0, %v5722
        %v5724 = vpop.f32.mrb[0].mxu0
        %5725 = vdwg.mxu0
        %5726 = vmatprep.subr.bf16.mxu0 0
        %5727 = vmatpush1.bf16.xpose.msra.mxu0 %v3377
        %5728 = vmatprep.subr.bf16.mxu0 0
        %5729 = vmatpush1.bf16.xpose.msra.mxu0 0
        %5730 = vmatprep.subr.bf16.mxu0 0
        %5731 = vmatpush1.bf16.xpose.msra.mxu0 0
        %5732 = vmatprep.subr.bf16.mxu0 0
        %5733 = vmatpush1.bf16.xpose.msra.mxu0 0
        %5734 = vmatprep.subr.bf16.mxu0 0
        %5735 = vmatpush1.bf16.xpose.msra.mxu0 0
        %5736 = vmatprep.subr.bf16.mxu0 0
        %5737 = vmatpush1.bf16.xpose.msra.mxu0 0
        %5738 = vmatprep.subr.bf16.mxu0 0
        %5739 = vmatpush1.bf16.xpose.msra.mxu0 0
        %5740 = vmatprep.subr.bf16.mxu0 0
        %5741 = vmatpush1.bf16.xpose.msra.mxu0 0
        %5742 = vmatprep.subr.bf16.mxu0 0
        %5743 = vmatpush1.bf16.xpose.msra.mxu0 0
        %5744 = vmatprep.subr.bf16.mxu0 0
        %5745 = vmatpush1.bf16.xpose.msra.mxu0 0
        %5746 = vmatprep.subr.bf16.mxu0 0
        %5747 = vmatpush1.bf16.xpose.msra.mxu0 0
        %5748 = vmatprep.subr.bf16.mxu0 0
        %5749 = vmatpush1.bf16.xpose.msra.mxu0 0
        %5750 = vmatprep.subr.bf16.mxu0 0
        %5751 = vmatpush1.bf16.xpose.msra.mxu0 0
        %5752 = vmatprep.subr.bf16.mxu0 0
        %5753 = vmatpush1.bf16.xpose.msra.mxu0 0
        %5754 = vmatprep.subr.bf16.mxu0 0
        %5755 = vmatpush1.bf16.xpose.msra.mxu0 0
        %5756 = vmatprep.subr.bf16.mxu0 0
        %5757 = vmatpush1.bf16.xpose.msra.mxu0 0
        %5758 = vmatprep.mubr.bf16.mxu0 0
        %5759 = vmatmul.mubr.bf16.gmra.mrb[0].mxu0 %v3375
        %v5760 = vpop.f32.mrb[0].mxu0
        %v5761 = vadd.f32 0.0, %v5760
        %v5762 = vpop.f32.mrb[0].mxu0
        %v5763 = vpop.f32.mrb[0].mxu0
        %v5764 = vadd.f32 0.0, %v5763
        %v5765 = vpop.f32.mrb[0].mxu0
        %5766 = vdwg.mxu0
        %v5767 = vsel %vm4038, %v5146, -inf
        %5768 = vmax.xlane.f32.xlu0 %v5767
        %v5769 = vpop.xlane.xlu0 %5768
        %v5770 = vsel %vm4038, %v5149, -inf
        %5771 = vmax.xlane.f32.xlu0 %v5770
        %v5772 = vpop.xlane.xlu0 %5771
        %v5773 = vsel %vm4038, %v5187, -inf
        %5774 = vmax.xlane.f32.xlu0 %v5773
        %v5775 = vpop.xlane.xlu0 %5774
        %v5776 = vsel %vm4038, %v5190, -inf
        %5777 = vmax.xlane.f32.xlu0 %v5776
        %v5778 = vpop.xlane.xlu0 %5777
        %v5779 = vsel %vm4038, %v5228, -inf
        %5780 = vmax.xlane.f32.xlu0 %v5779
        %v5781 = vpop.xlane.xlu0 %5780
        %v5782 = vsel %vm4038, %v5231, -inf
        %5783 = vmax.xlane.f32.xlu0 %v5782
        %v5784 = vpop.xlane.xlu0 %5783
        %v5785 = vsel %vm4038, %v5269, -inf
        %5786 = vmax.xlane.f32.xlu0 %v5785
        %v5787 = vpop.xlane.xlu0 %5786
        %v5788 = vsel %vm4038, %v5272, -inf
        %5789 = vmax.xlane.f32.xlu0 %v5788
        %v5790 = vpop.xlane.xlu0 %5789
        %v5791 = vsel %vm4038, %v5310, -inf
        %5792 = vmax.xlane.f32.xlu0 %v5791
        %v5793 = vpop.xlane.xlu0 %5792
        %v5794 = vsel %vm4038, %v5313, -inf
        %5795 = vmax.xlane.f32.xlu0 %v5794
        %v5796 = vpop.xlane.xlu0 %5795
        %v5797 = vsel %vm4038, %v5351, -inf
        %5798 = vmax.xlane.f32.xlu0 %v5797
        %v5799 = vpop.xlane.xlu0 %5798
        %v5800 = vsel %vm4038, %v5354, -inf
        %5801 = vmax.xlane.f32.xlu0 %v5800
        %v5802 = vpop.xlane.xlu0 %5801
        %v5803 = vsel %vm4038, %v5392, -inf
        %5804 = vmax.xlane.f32.xlu0 %v5803
        %v5805 = vpop.xlane.xlu0 %5804
        %v5806 = vsel %vm4038, %v5395, -inf
        %5807 = vmax.xlane.f32.xlu0 %v5806
        %v5808 = vpop.xlane.xlu0 %5807
        %v5809 = vsel %vm4038, %v5433, -inf
        %5810 = vmax.xlane.f32.xlu0 %v5809
        %v5811 = vpop.xlane.xlu0 %5810
        %v5812 = vsel %vm4038, %v5436, -inf
        %5813 = vmax.xlane.f32.xlu0 %v5812
        %v5814 = vpop.xlane.xlu0 %5813
        %v5815 = vsel %vm4038, %v5474, -inf
        %5816 = vmax.xlane.f32.xlu0 %v5815
        %v5817 = vpop.xlane.xlu0 %5816
        %v5818 = vsel %vm4038, %v5477, -inf
        %5819 = vmax.xlane.f32.xlu0 %v5818
        %v5820 = vpop.xlane.xlu0 %5819
        %v5821 = vsel %vm4038, %v5515, -inf
        %5822 = vmax.xlane.f32.xlu0 %v5821
        %v5823 = vpop.xlane.xlu0 %5822
        %v5824 = vsel %vm4038, %v5518, -inf
        %5825 = vmax.xlane.f32.xlu0 %v5824
        %v5826 = vpop.xlane.xlu0 %5825
        %v5827 = vsel %vm4038, %v5556, -inf
        %5828 = vmax.xlane.f32.xlu0 %v5827
        %v5829 = vpop.xlane.xlu0 %5828
        %v5830 = vsel %vm4038, %v5559, -inf
        %5831 = vmax.xlane.f32.xlu0 %v5830
        %v5832 = vpop.xlane.xlu0 %5831
        %v5833 = vsel %vm4038, %v5597, -inf
        %5834 = vmax.xlane.f32.xlu0 %v5833
        %v5835 = vpop.xlane.xlu0 %5834
        %v5836 = vsel %vm4038, %v5600, -inf
        %5837 = vmax.xlane.f32.xlu0 %v5836
        %v5838 = vpop.xlane.xlu0 %5837
        %v5839 = vsel %vm4038, %v5638, -inf
        %5840 = vmax.xlane.f32.xlu0 %v5839
        %v5841 = vpop.xlane.xlu0 %5840
        %v5842 = vsel %vm4038, %v5641, -inf
        %5843 = vmax.xlane.f32.xlu0 %v5842
        %v5844 = vpop.xlane.xlu0 %5843
        %v5845 = vsel %vm4038, %v5679, -inf
        %5846 = vmax.xlane.f32.xlu0 %v5845
        %v5847 = vpop.xlane.xlu0 %5846
        %v5848 = vsel %vm4038, %v5682, -inf
        %5849 = vmax.xlane.f32.xlu0 %v5848
        %v5850 = vpop.xlane.xlu0 %5849
        %v5851 = vsel %vm4038, %v5720, -inf
        %5852 = vmax.xlane.f32.xlu0 %v5851
        %v5853 = vpop.xlane.xlu0 %5852
        %v5854 = vsel %vm4038, %v5723, -inf
        %5855 = vmax.xlane.f32.xlu0 %v5854
        %v5856 = vpop.xlane.xlu0 %5855
        %v5857 = vsel %vm4038, %v5761, -inf
        %5858 = vmax.xlane.f32.xlu0 %v5857
        %v5859 = vpop.xlane.xlu0 %5858
        %v5860 = vsel %vm4038, %v5764, -inf
        %5861 = vmax.xlane.f32.xlu0 %v5860
        %v5862 = vpop.xlane.xlu0 %5861
        %v5863 = vsub.f32 %v5146, %v5769
        %v5864 = vsub.f32 %v5149, %v5772
        %v5865 = vsub.f32 %v5187, %v5775
        %v5866 = vsub.f32 %v5190, %v5778
        %v5867 = vsub.f32 %v5228, %v5781
        %v5868 = vsub.f32 %v5231, %v5784
        %v5869 = vsub.f32 %v5269, %v5787
        %v5870 = vsub.f32 %v5272, %v5790
        %v5871 = vsub.f32 %v5310, %v5793
        %v5872 = vsub.f32 %v5313, %v5796
        %v5873 = vsub.f32 %v5351, %v5799
        %v5874 = vsub.f32 %v5354, %v5802
        %v5875 = vsub.f32 %v5392, %v5805
        %v5876 = vsub.f32 %v5395, %v5808
        %v5877 = vsub.f32 %v5433, %v5811
        %v5878 = vsub.f32 %v5436, %v5814
        %v5879 = vsub.f32 %v5474, %v5817
        %v5880 = vsub.f32 %v5477, %v5820
        %v5881 = vsub.f32 %v5515, %v5823
        %v5882 = vsub.f32 %v5518, %v5826
        %v5883 = vsub.f32 %v5556, %v5829
        %v5884 = vsub.f32 %v5559, %v5832
        %v5885 = vsub.f32 %v5597, %v5835
        %v5886 = vsub.f32 %v5600, %v5838
        %v5887 = vsub.f32 %v5638, %v5841
        %v5888 = vsub.f32 %v5641, %v5844
        %v5889 = vsub.f32 %v5679, %v5847
        %v5890 = vsub.f32 %v5682, %v5850
        %v5891 = vsub.f32 %v5720, %v5853
        %v5892 = vsub.f32 %v5723, %v5856
        %v5893 = vsub.f32 %v5761, %v5859
        %v5894 = vsub.f32 %v5764, %v5862
        %v5895 = vmul.f32 %v5863, 1.442695
        %v5896 = vpow.pop %v5895
        %v5897 = vmul.f32 %v5864, 1.442695
        %v5898 = vpow.pop %v5897
        %v5899 = vmul.f32 %v5865, 1.442695
        %v5900 = vpow.pop %v5899
        %v5901 = vmul.f32 %v5866, 1.442695
        %v5902 = vpow.pop %v5901
        %v5903 = vmul.f32 %v5867, 1.442695
        %v5904 = vpow.pop %v5903
        %v5905 = vmul.f32 %v5868, 1.442695
        %v5906 = vpow.pop %v5905
        %v5907 = vmul.f32 %v5869, 1.442695
        %v5908 = vpow.pop %v5907
        %v5909 = vmul.f32 %v5870, 1.442695
        %v5910 = vpow.pop %v5909
        %v5911 = vmul.f32 %v5871, 1.442695
        %v5912 = vpow.pop %v5911
        %v5913 = vmul.f32 %v5872, 1.442695
        %v5914 = vpow.pop %v5913
        %v5915 = vmul.f32 %v5873, 1.442695
        %v5916 = vpow.pop %v5915
        %v5917 = vmul.f32 %v5874, 1.442695
        %v5918 = vpow.pop %v5917
        %v5919 = vmul.f32 %v5875, 1.442695
        %v5920 = vpow.pop %v5919
        %v5921 = vmul.f32 %v5876, 1.442695
        %v5922 = vpow.pop %v5921
        %v5923 = vmul.f32 %v5877, 1.442695
        %v5924 = vpow.pop %v5923
        %v5925 = vmul.f32 %v5878, 1.442695
        %v5926 = vpow.pop %v5925
        %v5927 = vmul.f32 %v5879, 1.442695
        %v5928 = vpow.pop %v5927
        %v5929 = vmul.f32 %v5880, 1.442695
        %v5930 = vpow.pop %v5929
        %v5931 = vmul.f32 %v5881, 1.442695
        %v5932 = vpow.pop %v5931
        %v5933 = vmul.f32 %v5882, 1.442695
        %v5934 = vpow.pop %v5933
        %v5935 = vmul.f32 %v5883, 1.442695
        %v5936 = vpow.pop %v5935
        %v5937 = vmul.f32 %v5884, 1.442695
        %v5938 = vpow.pop %v5937
        %v5939 = vmul.f32 %v5885, 1.442695
        %v5940 = vpow.pop %v5939
        %v5941 = vmul.f32 %v5886, 1.442695
        %v5942 = vpow.pop %v5941
        %v5943 = vmul.f32 %v5887, 1.442695
        %v5944 = vpow.pop %v5943
        %v5945 = vmul.f32 %v5888, 1.442695
        %v5946 = vpow.pop %v5945
        %v5947 = vmul.f32 %v5889, 1.442695
        %v5948 = vpow.pop %v5947
        %v5949 = vmul.f32 %v5890, 1.442695
        %v5950 = vpow.pop %v5949
        %v5951 = vmul.f32 %v5891, 1.442695
        %v5952 = vpow.pop %v5951
        %v5953 = vmul.f32 %v5892, 1.442695
        %v5954 = vpow.pop %v5953
        %v5955 = vmul.f32 %v5893, 1.442695
        %v5956 = vpow.pop %v5955
        %v5957 = vmul.f32 %v5894, 1.442695
        %v5958 = vpow.pop %v5957
        %v5959 = vsel %vm4038, %v5896, 0.0
        %5960 = vadd.xlane.f32.xlu0 %v5959
        %v5961 = vpop.xlane.xlu0 %5960
        %v5962 = vsel %vm4038, %v5898, 0.0
        %5963 = vadd.xlane.f32.xlu0 %v5962
        %v5964 = vpop.xlane.xlu0 %5963
        %v5965 = vsel %vm4038, %v5900, 0.0
        %5966 = vadd.xlane.f32.xlu0 %v5965
        %v5967 = vpop.xlane.xlu0 %5966
        %v5968 = vsel %vm4038, %v5902, 0.0
        %5969 = vadd.xlane.f32.xlu0 %v5968
        %v5970 = vpop.xlane.xlu0 %5969
        %v5971 = vsel %vm4038, %v5904, 0.0
        %5972 = vadd.xlane.f32.xlu0 %v5971
        %v5973 = vpop.xlane.xlu0 %5972
        %v5974 = vsel %vm4038, %v5906, 0.0
        %5975 = vadd.xlane.f32.xlu0 %v5974
        %v5976 = vpop.xlane.xlu0 %5975
        %v5977 = vsel %vm4038, %v5908, 0.0
        %5978 = vadd.xlane.f32.xlu0 %v5977
        %v5979 = vpop.xlane.xlu0 %5978
        %v5980 = vsel %vm4038, %v5910, 0.0
        %5981 = vadd.xlane.f32.xlu0 %v5980
        %v5982 = vpop.xlane.xlu0 %5981
        %v5983 = vsel %vm4038, %v5912, 0.0
        %5984 = vadd.xlane.f32.xlu0 %v5983
        %v5985 = vpop.xlane.xlu0 %5984
        %v5986 = vsel %vm4038, %v5914, 0.0
        %5987 = vadd.xlane.f32.xlu0 %v5986
        %v5988 = vpop.xlane.xlu0 %5987
        %v5989 = vsel %vm4038, %v5916, 0.0
        %5990 = vadd.xlane.f32.xlu0 %v5989
        %v5991 = vpop.xlane.xlu0 %5990
        %v5992 = vsel %vm4038, %v5918, 0.0
        %5993 = vadd.xlane.f32.xlu0 %v5992
        %v5994 = vpop.xlane.xlu0 %5993
        %v5995 = vsel %vm4038, %v5920, 0.0
        %5996 = vadd.xlane.f32.xlu0 %v5995
        %v5997 = vpop.xlane.xlu0 %5996
        %v5998 = vsel %vm4038, %v5922, 0.0
        %5999 = vadd.xlane.f32.xlu0 %v5998
        %v6000 = vpop.xlane.xlu0 %5999
        %v6001 = vsel %vm4038, %v5924, 0.0
        %6002 = vadd.xlane.f32.xlu0 %v6001
        %v6003 = vpop.xlane.xlu0 %6002
        %v6004 = vsel %vm4038, %v5926, 0.0
        %6005 = vadd.xlane.f32.xlu0 %v6004
        %v6006 = vpop.xlane.xlu0 %6005
        %v6007 = vsel %vm4038, %v5928, 0.0
        %6008 = vadd.xlane.f32.xlu0 %v6007
        %v6009 = vpop.xlane.xlu0 %6008
        %v6010 = vsel %vm4038, %v5930, 0.0
        %6011 = vadd.xlane.f32.xlu0 %v6010
        %v6012 = vpop.xlane.xlu0 %6011
        %v6013 = vsel %vm4038, %v5932, 0.0
        %6014 = vadd.xlane.f32.xlu0 %v6013
        %v6015 = vpop.xlane.xlu0 %6014
        %v6016 = vsel %vm4038, %v5934, 0.0
        %6017 = vadd.xlane.f32.xlu0 %v6016
        %v6018 = vpop.xlane.xlu0 %6017
        %v6019 = vsel %vm4038, %v5936, 0.0
        %6020 = vadd.xlane.f32.xlu0 %v6019
        %v6021 = vpop.xlane.xlu0 %6020
        %v6022 = vsel %vm4038, %v5938, 0.0
        %6023 = vadd.xlane.f32.xlu0 %v6022
        %v6024 = vpop.xlane.xlu0 %6023
        %v6025 = vsel %vm4038, %v5940, 0.0
        %6026 = vadd.xlane.f32.xlu0 %v6025
        %v6027 = vpop.xlane.xlu0 %6026
        %v6028 = vsel %vm4038, %v5942, 0.0
        %6029 = vadd.xlane.f32.xlu0 %v6028
        %v6030 = vpop.xlane.xlu0 %6029
        %v6031 = vsel %vm4038, %v5944, 0.0
        %6032 = vadd.xlane.f32.xlu0 %v6031
        %v6033 = vpop.xlane.xlu0 %6032
        %v6034 = vsel %vm4038, %v5946, 0.0
        %6035 = vadd.xlane.f32.xlu0 %v6034
        %v6036 = vpop.xlane.xlu0 %6035
        %v6037 = vsel %vm4038, %v5948, 0.0
        %6038 = vadd.xlane.f32.xlu0 %v6037
        %v6039 = vpop.xlane.xlu0 %6038
        %v6040 = vsel %vm4038, %v5950, 0.0
        %6041 = vadd.xlane.f32.xlu0 %v6040
        %v6042 = vpop.xlane.xlu0 %6041
        %v6043 = vsel %vm4038, %v5952, 0.0
        %6044 = vadd.xlane.f32.xlu0 %v6043
        %v6045 = vpop.xlane.xlu0 %6044
        %v6046 = vsel %vm4038, %v5954, 0.0
        %6047 = vadd.xlane.f32.xlu0 %v6046
        %v6048 = vpop.xlane.xlu0 %6047
        %v6049 = vsel %vm4038, %v5956, 0.0
        %6050 = vadd.xlane.f32.xlu0 %v6049
        %v6051 = vpop.xlane.xlu0 %6050
        %v6052 = vsel %vm4038, %v5958, 0.0
        %6053 = vadd.xlane.f32.xlu0 %v6052
        %v6054 = vpop.xlane.xlu0 %6053
        %v6055 = vrcp.pop %v5961
        %v6056 = vrcp.pop %v5964
        %v6057 = vrcp.pop %v5967
        %v6058 = vrcp.pop %v5970
        %v6059 = vrcp.pop %v5973
        %v6060 = vrcp.pop %v5976
        %v6061 = vrcp.pop %v5979
        %v6062 = vrcp.pop %v5982
        %v6063 = vrcp.pop %v5985
        %v6064 = vrcp.pop %v5988
        %v6065 = vrcp.pop %v5991
        %v6066 = vrcp.pop %v5994
        %v6067 = vrcp.pop %v5997
        %v6068 = vrcp.pop %v6000
        %v6069 = vrcp.pop %v6003
        %v6070 = vrcp.pop %v6006
        %v6071 = vrcp.pop %v6009
        %v6072 = vrcp.pop %v6012
        %v6073 = vrcp.pop %v6015
        %v6074 = vrcp.pop %v6018
        %v6075 = vrcp.pop %v6021
        %v6076 = vrcp.pop %v6024
        %v6077 = vrcp.pop %v6027
        %v6078 = vrcp.pop %v6030
        %v6079 = vrcp.pop %v6033
        %v6080 = vrcp.pop %v6036
        %v6081 = vrcp.pop %v6039
        %v6082 = vrcp.pop %v6042
        %v6083 = vrcp.pop %v6045
        %v6084 = vrcp.pop %v6048
        %v6085 = vrcp.pop %v6051
        %v6086 = vrcp.pop %v6054
        %v6087 = vmul.f32 %v5896, %v6055
        %v6088 = vmul.f32 %v5898, %v6056
        %v6089 = vmul.f32 %v5900, %v6057
        %v6090 = vmul.f32 %v5902, %v6058
        %v6091 = vmul.f32 %v5904, %v6059
        %v6092 = vmul.f32 %v5906, %v6060
        %v6093 = vmul.f32 %v5908, %v6061
        %v6094 = vmul.f32 %v5910, %v6062
        %v6095 = vmul.f32 %v5912, %v6063
        %v6096 = vmul.f32 %v5914, %v6064
        %v6097 = vmul.f32 %v5916, %v6065
        %v6098 = vmul.f32 %v5918, %v6066
        %v6099 = vmul.f32 %v5920, %v6067
        %v6100 = vmul.f32 %v5922, %v6068
        %v6101 = vmul.f32 %v5924, %v6069
        %v6102 = vmul.f32 %v5926, %v6070
        %v6103 = vmul.f32 %v5928, %v6071
        %v6104 = vmul.f32 %v5930, %v6072
        %v6105 = vmul.f32 %v5932, %v6073
        %v6106 = vmul.f32 %v5934, %v6074
        %v6107 = vmul.f32 %v5936, %v6075
        %v6108 = vmul.f32 %v5938, %v6076
        %v6109 = vmul.f32 %v5940, %v6077
        %v6110 = vmul.f32 %v5942, %v6078
        %v6111 = vmul.f32 %v5944, %v6079
        %v6112 = vmul.f32 %v5946, %v6080
        %v6113 = vmul.f32 %v5948, %v6081
        %v6114 = vmul.f32 %v5950, %v6082
        %v6115 = vmul.f32 %v5952, %v6083
        %v6116 = vmul.f32 %v5954, %v6084
        %v6117 = vmul.f32 %v5956, %v6085
        %v6118 = vmul.f32 %v5958, %v6086
        %v6119 = vpack.c.bf16 %v6088, %v6087
        %v6120 = vpack.c.bf16 %v6090, %v6089
        %v6121 = vpack.c.bf16 %v6092, %v6091
        %v6122 = vpack.c.bf16 %v6094, %v6093
        %v6123 = vpack.c.bf16 %v6096, %v6095
        %v6124 = vpack.c.bf16 %v6098, %v6097
        %v6125 = vpack.c.bf16 %v6100, %v6099
        %v6126 = vpack.c.bf16 %v6102, %v6101
        %v6127 = vpack.c.bf16 %v6104, %v6103
        %v6128 = vpack.c.bf16 %v6106, %v6105
        %v6129 = vpack.c.bf16 %v6108, %v6107
        %v6130 = vpack.c.bf16 %v6110, %v6109
        %v6131 = vpack.c.bf16 %v6112, %v6111
        %v6132 = vpack.c.bf16 %v6114, %v6113
        %v6133 = vpack.c.bf16 %v6116, %v6115
        %v6134 = vpack.c.bf16 %v6118, %v6117
        %v6136 = vsel %vm4038, %v6119, 0
        %6138 = vmatprep.subr.bf16.mxu0 0
        %6139 = vmatpush1.bf16.msra.mxu0 %v3259
        %6140 = vmatprep.subr.bf16.mxu0 0
        %6141 = vmatpush1.bf16.msra.mxu0 0
        %6142 = vmatprep.subr.bf16.mxu0 0
        %6143 = vmatpush1.bf16.msra.mxu0 0
        %6144 = vmatprep.subr.bf16.mxu0 0
        %6145 = vmatpush1.bf16.msra.mxu0 0
        %6146 = vmatprep.subr.bf16.mxu0 0
        %6147 = vmatpush1.bf16.msra.mxu0 0
        %6148 = vmatprep.subr.bf16.mxu0 0
        %6149 = vmatpush1.bf16.msra.mxu0 0
        %6150 = vmatprep.subr.bf16.mxu0 0
        %6151 = vmatpush1.bf16.msra.mxu0 0
        %6152 = vmatprep.subr.bf16.mxu0 0
        %6153 = vmatpush1.bf16.msra.mxu0 0
        %6154 = vmatprep.subr.bf16.mxu0 0
        %6155 = vmatpush1.bf16.msra.mxu0 0
        %6156 = vmatprep.subr.bf16.mxu0 0
        %6157 = vmatpush1.bf16.msra.mxu0 0
        %6158 = vmatprep.subr.bf16.mxu0 0
        %6159 = vmatpush1.bf16.msra.mxu0 0
        %6160 = vmatprep.subr.bf16.mxu0 0
        %6161 = vmatpush1.bf16.msra.mxu0 0
        %6162 = vmatprep.subr.bf16.mxu0 0
        %6163 = vmatpush1.bf16.msra.mxu0 0
        %6164 = vmatprep.subr.bf16.mxu0 0
        %6165 = vmatpush1.bf16.msra.mxu0 0
        %6166 = vmatprep.subr.bf16.mxu0 0
        %6167 = vmatpush1.bf16.msra.mxu0 0
        %6168 = vmatprep.subr.bf16.mxu0 0
        %6169 = vmatpush1.bf16.msra.mxu0 0
        %6170 = vmatprep.mubr.bf16.mxu0 0
        %6171 = vmatmul.mubr.bf16.gmra.mrb[0].mxu0 %v6136
        %v6172 = vpop.f32.mrb[0].mxu0
        %v6173 = vadd.f32 0.0, %v6172
        %v6174 = vpop.f32.mrb[0].mxu0
        %v6175 = vpop.f32.mrb[0].mxu0
        %v6176 = vadd.f32 0.0, %v6175
        %v6177 = vpop.f32.mrb[0].mxu0
        %6178 = vdwg.mxu0
        %v6180 = vsel %vm4038, %v6120, 0
        %6182 = vmatprep.subr.bf16.mxu0 0
        %6183 = vmatpush1.bf16.msra.mxu0 %v3267
        %6184 = vmatprep.subr.bf16.mxu0 0
        %6185 = vmatpush1.bf16.msra.mxu0 0
        %6186 = vmatprep.subr.bf16.mxu0 0
        %6187 = vmatpush1.bf16.msra.mxu0 0
        %6188 = vmatprep.subr.bf16.mxu0 0
        %6189 = vmatpush1.bf16.msra.mxu0 0
        %6190 = vmatprep.subr.bf16.mxu0 0
        %6191 = vmatpush1.bf16.msra.mxu0 0
        %6192 = vmatprep.subr.bf16.mxu0 0
        %6193 = vmatpush1.bf16.msra.mxu0 0
        %6194 = vmatprep.subr.bf16.mxu0 0
        %6195 = vmatpush1.bf16.msra.mxu0 0
        %6196 = vmatprep.subr.bf16.mxu0 0
        %6197 = vmatpush1.bf16.msra.mxu0 0
        %6198 = vmatprep.subr.bf16.mxu0 0
        %6199 = vmatpush1.bf16.msra.mxu0 0
        %6200 = vmatprep.subr.bf16.mxu0 0
        %6201 = vmatpush1.bf16.msra.mxu0 0
        %6202 = vmatprep.subr.bf16.mxu0 0
        %6203 = vmatpush1.bf16.msra.mxu0 0
        %6204 = vmatprep.subr.bf16.mxu0 0
        %6205 = vmatpush1.bf16.msra.mxu0 0
        %6206 = vmatprep.subr.bf16.mxu0 0
        %6207 = vmatpush1.bf16.msra.mxu0 0
        %6208 = vmatprep.subr.bf16.mxu0 0
        %6209 = vmatpush1.bf16.msra.mxu0 0
        %6210 = vmatprep.subr.bf16.mxu0 0
        %6211 = vmatpush1.bf16.msra.mxu0 0
        %6212 = vmatprep.subr.bf16.mxu0 0
        %6213 = vmatpush1.bf16.msra.mxu0 0
        %6214 = vmatprep.mubr.bf16.mxu0 0
        %6215 = vmatmul.mubr.bf16.gmra.mrb[0].mxu0 %v6180
        %v6216 = vpop.f32.mrb[0].mxu0
        %v6217 = vadd.f32 0.0, %v6216
        %v6218 = vpop.f32.mrb[0].mxu0
        %v6219 = vpop.f32.mrb[0].mxu0
        %v6220 = vadd.f32 0.0, %v6219
        %v6221 = vpop.f32.mrb[0].mxu0
        %6222 = vdwg.mxu0
        %v6224 = vsel %vm4038, %v6121, 0
        %6226 = vmatprep.subr.bf16.mxu0 0
        %6227 = vmatpush1.bf16.msra.mxu0 %v3275
        %6228 = vmatprep.subr.bf16.mxu0 0
        %6229 = vmatpush1.bf16.msra.mxu0 0
        %6230 = vmatprep.subr.bf16.mxu0 0
        %6231 = vmatpush1.bf16.msra.mxu0 0
        %6232 = vmatprep.subr.bf16.mxu0 0
        %6233 = vmatpush1.bf16.msra.mxu0 0
        %6234 = vmatprep.subr.bf16.mxu0 0
        %6235 = vmatpush1.bf16.msra.mxu0 0
        %6236 = vmatprep.subr.bf16.mxu0 0
        %6237 = vmatpush1.bf16.msra.mxu0 0
        %6238 = vmatprep.subr.bf16.mxu0 0
        %6239 = vmatpush1.bf16.msra.mxu0 0
        %6240 = vmatprep.subr.bf16.mxu0 0
        %6241 = vmatpush1.bf16.msra.mxu0 0
        %6242 = vmatprep.subr.bf16.mxu0 0
        %6243 = vmatpush1.bf16.msra.mxu0 0
        %6244 = vmatprep.subr.bf16.mxu0 0
        %6245 = vmatpush1.bf16.msra.mxu0 0
        %6246 = vmatprep.subr.bf16.mxu0 0
        %6247 = vmatpush1.bf16.msra.mxu0 0
        %6248 = vmatprep.subr.bf16.mxu0 0
        %6249 = vmatpush1.bf16.msra.mxu0 0
        %6250 = vmatprep.subr.bf16.mxu0 0
        %6251 = vmatpush1.bf16.msra.mxu0 0
        %6252 = vmatprep.subr.bf16.mxu0 0
        %6253 = vmatpush1.bf16.msra.mxu0 0
        %6254 = vmatprep.subr.bf16.mxu0 0
        %6255 = vmatpush1.bf16.msra.mxu0 0
        %6256 = vmatprep.subr.bf16.mxu0 0
        %6257 = vmatpush1.bf16.msra.mxu0 0
        %6258 = vmatprep.mubr.bf16.mxu0 0
        %6259 = vmatmul.mubr.bf16.gmra.mrb[0].mxu0 %v6224
        %v6260 = vpop.f32.mrb[0].mxu0
        %v6261 = vadd.f32 0.0, %v6260
        %v6262 = vpop.f32.mrb[0].mxu0
        %v6263 = vpop.f32.mrb[0].mxu0
        %v6264 = vadd.f32 0.0, %v6263
        %v6265 = vpop.f32.mrb[0].mxu0
        %6266 = vdwg.mxu0
        %v6268 = vsel %vm4038, %v6122, 0
        %6270 = vmatprep.subr.bf16.mxu0 0
        %6271 = vmatpush1.bf16.msra.mxu0 %v3283
        %6272 = vmatprep.subr.bf16.mxu0 0
        %6273 = vmatpush1.bf16.msra.mxu0 0
        %6274 = vmatprep.subr.bf16.mxu0 0
        %6275 = vmatpush1.bf16.msra.mxu0 0
        %6276 = vmatprep.subr.bf16.mxu0 0
        %6277 = vmatpush1.bf16.msra.mxu0 0
        %6278 = vmatprep.subr.bf16.mxu0 0
        %6279 = vmatpush1.bf16.msra.mxu0 0
        %6280 = vmatprep.subr.bf16.mxu0 0
        %6281 = vmatpush1.bf16.msra.mxu0 0
        %6282 = vmatprep.subr.bf16.mxu0 0
        %6283 = vmatpush1.bf16.msra.mxu0 0
        %6284 = vmatprep.subr.bf16.mxu0 0
        %6285 = vmatpush1.bf16.msra.mxu0 0
        %6286 = vmatprep.subr.bf16.mxu0 0
        %6287 = vmatpush1.bf16.msra.mxu0 0
        %6288 = vmatprep.subr.bf16.mxu0 0
        %6289 = vmatpush1.bf16.msra.mxu0 0
        %6290 = vmatprep.subr.bf16.mxu0 0
        %6291 = vmatpush1.bf16.msra.mxu0 0
        %6292 = vmatprep.subr.bf16.mxu0 0
        %6293 = vmatpush1.bf16.msra.mxu0 0
        %6294 = vmatprep.subr.bf16.mxu0 0
        %6295 = vmatpush1.bf16.msra.mxu0 0
        %6296 = vmatprep.subr.bf16.mxu0 0
        %6297 = vmatpush1.bf16.msra.mxu0 0
        %6298 = vmatprep.subr.bf16.mxu0 0
        %6299 = vmatpush1.bf16.msra.mxu0 0
        %6300 = vmatprep.subr.bf16.mxu0 0
        %6301 = vmatpush1.bf16.msra.mxu0 0
        %6302 = vmatprep.mubr.bf16.mxu0 0
        %6303 = vmatmul.mubr.bf16.gmra.mrb[0].mxu0 %v6268
        %v6304 = vpop.f32.mrb[0].mxu0
        %v6305 = vadd.f32 0.0, %v6304
        %v6306 = vpop.f32.mrb[0].mxu0
        %v6307 = vpop.f32.mrb[0].mxu0
        %v6308 = vadd.f32 0.0, %v6307
        %v6309 = vpop.f32.mrb[0].mxu0
        %6310 = vdwg.mxu0
        %v6312 = vsel %vm4038, %v6123, 0
        %6314 = vmatprep.subr.bf16.mxu0 0
        %6315 = vmatpush1.bf16.msra.mxu0 %v3291
        %6316 = vmatprep.subr.bf16.mxu0 0
        %6317 = vmatpush1.bf16.msra.mxu0 0
        %6318 = vmatprep.subr.bf16.mxu0 0
        %6319 = vmatpush1.bf16.msra.mxu0 0
        %6320 = vmatprep.subr.bf16.mxu0 0
        %6321 = vmatpush1.bf16.msra.mxu0 0
        %6322 = vmatprep.subr.bf16.mxu0 0
        %6323 = vmatpush1.bf16.msra.mxu0 0
        %6324 = vmatprep.subr.bf16.mxu0 0
        %6325 = vmatpush1.bf16.msra.mxu0 0
        %6326 = vmatprep.subr.bf16.mxu0 0
        %6327 = vmatpush1.bf16.msra.mxu0 0
        %6328 = vmatprep.subr.bf16.mxu0 0
        %6329 = vmatpush1.bf16.msra.mxu0 0
        %6330 = vmatprep.subr.bf16.mxu0 0
        %6331 = vmatpush1.bf16.msra.mxu0 0
        %6332 = vmatprep.subr.bf16.mxu0 0
        %6333 = vmatpush1.bf16.msra.mxu0 0
        %6334 = vmatprep.subr.bf16.mxu0 0
        %6335 = vmatpush1.bf16.msra.mxu0 0
        %6336 = vmatprep.subr.bf16.mxu0 0
        %6337 = vmatpush1.bf16.msra.mxu0 0
        %6338 = vmatprep.subr.bf16.mxu0 0
        %6339 = vmatpush1.bf16.msra.mxu0 0
        %6340 = vmatprep.subr.bf16.mxu0 0
        %6341 = vmatpush1.bf16.msra.mxu0 0
        %6342 = vmatprep.subr.bf16.mxu0 0
        %6343 = vmatpush1.bf16.msra.mxu0 0
        %6344 = vmatprep.subr.bf16.mxu0 0
        %6345 = vmatpush1.bf16.msra.mxu0 0
        %6346 = vmatprep.mubr.bf16.mxu0 0
        %6347 = vmatmul.mubr.bf16.gmra.mrb[0].mxu0 %v6312
        %v6348 = vpop.f32.mrb[0].mxu0
        %v6349 = vadd.f32 0.0, %v6348
        %v6350 = vpop.f32.mrb[0].mxu0
        %v6351 = vpop.f32.mrb[0].mxu0
        %v6352 = vadd.f32 0.0, %v6351
        %v6353 = vpop.f32.mrb[0].mxu0
        %6354 = vdwg.mxu0
        %v6356 = vsel %vm4038, %v6124, 0
        %6358 = vmatprep.subr.bf16.mxu0 0
        %6359 = vmatpush1.bf16.msra.mxu0 %v3299
        %6360 = vmatprep.subr.bf16.mxu0 0
        %6361 = vmatpush1.bf16.msra.mxu0 0
        %6362 = vmatprep.subr.bf16.mxu0 0
        %6363 = vmatpush1.bf16.msra.mxu0 0
        %6364 = vmatprep.subr.bf16.mxu0 0
        %6365 = vmatpush1.bf16.msra.mxu0 0
        %6366 = vmatprep.subr.bf16.mxu0 0
        %6367 = vmatpush1.bf16.msra.mxu0 0
        %6368 = vmatprep.subr.bf16.mxu0 0
        %6369 = vmatpush1.bf16.msra.mxu0 0
        %6370 = vmatprep.subr.bf16.mxu0 0
        %6371 = vmatpush1.bf16.msra.mxu0 0
        %6372 = vmatprep.subr.bf16.mxu0 0
        %6373 = vmatpush1.bf16.msra.mxu0 0
        %6374 = vmatprep.subr.bf16.mxu0 0
        %6375 = vmatpush1.bf16.msra.mxu0 0
        %6376 = vmatprep.subr.bf16.mxu0 0
        %6377 = vmatpush1.bf16.msra.mxu0 0
        %6378 = vmatprep.subr.bf16.mxu0 0
        %6379 = vmatpush1.bf16.msra.mxu0 0
        %6380 = vmatprep.subr.bf16.mxu0 0
        %6381 = vmatpush1.bf16.msra.mxu0 0
        %6382 = vmatprep.subr.bf16.mxu0 0
        %6383 = vmatpush1.bf16.msra.mxu0 0
        %6384 = vmatprep.subr.bf16.mxu0 0
        %6385 = vmatpush1.bf16.msra.mxu0 0
        %6386 = vmatprep.subr.bf16.mxu0 0
        %6387 = vmatpush1.bf16.msra.mxu0 0
        %6388 = vmatprep.subr.bf16.mxu0 0
        %6389 = vmatpush1.bf16.msra.mxu0 0
        %6390 = vmatprep.mubr.bf16.mxu0 0
        %6391 = vmatmul.mubr.bf16.gmra.mrb[0].mxu0 %v6356
        %v6392 = vpop.f32.mrb[0].mxu0
        %v6393 = vadd.f32 0.0, %v6392
        %v6394 = vpop.f32.mrb[0].mxu0
        %v6395 = vpop.f32.mrb[0].mxu0
        %v6396 = vadd.f32 0.0, %v6395
        %v6397 = vpop.f32.mrb[0].mxu0
        %6398 = vdwg.mxu0
        %v6400 = vsel %vm4038, %v6125, 0
        %6402 = vmatprep.subr.bf16.mxu0 0
        %6403 = vmatpush1.bf16.msra.mxu0 %v3307
        %6404 = vmatprep.subr.bf16.mxu0 0
        %6405 = vmatpush1.bf16.msra.mxu0 0
        %6406 = vmatprep.subr.bf16.mxu0 0
        %6407 = vmatpush1.bf16.msra.mxu0 0
        %6408 = vmatprep.subr.bf16.mxu0 0
        %6409 = vmatpush1.bf16.msra.mxu0 0
        %6410 = vmatprep.subr.bf16.mxu0 0
        %6411 = vmatpush1.bf16.msra.mxu0 0
        %6412 = vmatprep.subr.bf16.mxu0 0
        %6413 = vmatpush1.bf16.msra.mxu0 0
        %6414 = vmatprep.subr.bf16.mxu0 0
        %6415 = vmatpush1.bf16.msra.mxu0 0
        %6416 = vmatprep.subr.bf16.mxu0 0
        %6417 = vmatpush1.bf16.msra.mxu0 0
        %6418 = vmatprep.subr.bf16.mxu0 0
        %6419 = vmatpush1.bf16.msra.mxu0 0
        %6420 = vmatprep.subr.bf16.mxu0 0
        %6421 = vmatpush1.bf16.msra.mxu0 0
        %6422 = vmatprep.subr.bf16.mxu0 0
        %6423 = vmatpush1.bf16.msra.mxu0 0
        %6424 = vmatprep.subr.bf16.mxu0 0
        %6425 = vmatpush1.bf16.msra.mxu0 0
        %6426 = vmatprep.subr.bf16.mxu0 0
        %6427 = vmatpush1.bf16.msra.mxu0 0
        %6428 = vmatprep.subr.bf16.mxu0 0
        %6429 = vmatpush1.bf16.msra.mxu0 0
        %6430 = vmatprep.subr.bf16.mxu0 0
        %6431 = vmatpush1.bf16.msra.mxu0 0
        %6432 = vmatprep.subr.bf16.mxu0 0
        %6433 = vmatpush1.bf16.msra.mxu0 0
        %6434 = vmatprep.mubr.bf16.mxu0 0
        %6435 = vmatmul.mubr.bf16.gmra.mrb[0].mxu0 %v6400
        %v6436 = vpop.f32.mrb[0].mxu0
        %v6437 = vadd.f32 0.0, %v6436
        %v6438 = vpop.f32.mrb[0].mxu0
        %v6439 = vpop.f32.mrb[0].mxu0
        %v6440 = vadd.f32 0.0, %v6439
        %v6441 = vpop.f32.mrb[0].mxu0
        %6442 = vdwg.mxu0
        %v6444 = vsel %vm4038, %v6126, 0
        %6446 = vmatprep.subr.bf16.mxu0 0
        %6447 = vmatpush1.bf16.msra.mxu0 %v3315
        %6448 = vmatprep.subr.bf16.mxu0 0
        %6449 = vmatpush1.bf16.msra.mxu0 0
        %6450 = vmatprep.subr.bf16.mxu0 0
        %6451 = vmatpush1.bf16.msra.mxu0 0
        %6452 = vmatprep.subr.bf16.mxu0 0
        %6453 = vmatpush1.bf16.msra.mxu0 0
        %6454 = vmatprep.subr.bf16.mxu0 0
        %6455 = vmatpush1.bf16.msra.mxu0 0
        %6456 = vmatprep.subr.bf16.mxu0 0
        %6457 = vmatpush1.bf16.msra.mxu0 0
        %6458 = vmatprep.subr.bf16.mxu0 0
        %6459 = vmatpush1.bf16.msra.mxu0 0
        %6460 = vmatprep.subr.bf16.mxu0 0
        %6461 = vmatpush1.bf16.msra.mxu0 0
        %6462 = vmatprep.subr.bf16.mxu0 0
        %6463 = vmatpush1.bf16.msra.mxu0 0
        %6464 = vmatprep.subr.bf16.mxu0 0
        %6465 = vmatpush1.bf16.msra.mxu0 0
        %6466 = vmatprep.subr.bf16.mxu0 0
        %6467 = vmatpush1.bf16.msra.mxu0 0
        %6468 = vmatprep.subr.bf16.mxu0 0
        %6469 = vmatpush1.bf16.msra.mxu0 0
        %6470 = vmatprep.subr.bf16.mxu0 0
        %6471 = vmatpush1.bf16.msra.mxu0 0
        %6472 = vmatprep.subr.bf16.mxu0 0
        %6473 = vmatpush1.bf16.msra.mxu0 0
        %6474 = vmatprep.subr.bf16.mxu0 0
        %6475 = vmatpush1.bf16.msra.mxu0 0
        %6476 = vmatprep.subr.bf16.mxu0 0
        %6477 = vmatpush1.bf16.msra.mxu0 0
        %6478 = vmatprep.mubr.bf16.mxu0 0
        %6479 = vmatmul.mubr.bf16.gmra.mrb[0].mxu0 %v6444
        %v6480 = vpop.f32.mrb[0].mxu0
        %v6481 = vadd.f32 0.0, %v6480
        %v6482 = vpop.f32.mrb[0].mxu0
        %v6483 = vpop.f32.mrb[0].mxu0
        %v6484 = vadd.f32 0.0, %v6483
        %v6485 = vpop.f32.mrb[0].mxu0
        %6486 = vdwg.mxu0
        %v6488 = vsel %vm4038, %v6127, 0
        %6490 = vmatprep.subr.bf16.mxu0 0
        %6491 = vmatpush1.bf16.msra.mxu0 %v3323
        %6492 = vmatprep.subr.bf16.mxu0 0
        %6493 = vmatpush1.bf16.msra.mxu0 0
        %6494 = vmatprep.subr.bf16.mxu0 0
        %6495 = vmatpush1.bf16.msra.mxu0 0
        %6496 = vmatprep.subr.bf16.mxu0 0
        %6497 = vmatpush1.bf16.msra.mxu0 0
        %6498 = vmatprep.subr.bf16.mxu0 0
        %6499 = vmatpush1.bf16.msra.mxu0 0
        %6500 = vmatprep.subr.bf16.mxu0 0
        %6501 = vmatpush1.bf16.msra.mxu0 0
        %6502 = vmatprep.subr.bf16.mxu0 0
        %6503 = vmatpush1.bf16.msra.mxu0 0
        %6504 = vmatprep.subr.bf16.mxu0 0
        %6505 = vmatpush1.bf16.msra.mxu0 0
        %6506 = vmatprep.subr.bf16.mxu0 0
        %6507 = vmatpush1.bf16.msra.mxu0 0
        %6508 = vmatprep.subr.bf16.mxu0 0
        %6509 = vmatpush1.bf16.msra.mxu0 0
        %6510 = vmatprep.subr.bf16.mxu0 0
        %6511 = vmatpush1.bf16.msra.mxu0 0
        %6512 = vmatprep.subr.bf16.mxu0 0
        %6513 = vmatpush1.bf16.msra.mxu0 0
        %6514 = vmatprep.subr.bf16.mxu0 0
        %6515 = vmatpush1.bf16.msra.mxu0 0
        %6516 = vmatprep.subr.bf16.mxu0 0
        %6517 = vmatpush1.bf16.msra.mxu0 0
        %6518 = vmatprep.subr.bf16.mxu0 0
        %6519 = vmatpush1.bf16.msra.mxu0 0
        %6520 = vmatprep.subr.bf16.mxu0 0
        %6521 = vmatpush1.bf16.msra.mxu0 0
        %6522 = vmatprep.mubr.bf16.mxu0 0
        %6523 = vmatmul.mubr.bf16.gmra.mrb[0].mxu0 %v6488
        %v6524 = vpop.f32.mrb[0].mxu0
        %v6525 = vadd.f32 0.0, %v6524
        %v6526 = vpop.f32.mrb[0].mxu0
        %v6527 = vpop.f32.mrb[0].mxu0
        %v6528 = vadd.f32 0.0, %v6527
        %v6529 = vpop.f32.mrb[0].mxu0
        %6530 = vdwg.mxu0
        %v6532 = vsel %vm4038, %v6128, 0
        %6534 = vmatprep.subr.bf16.mxu0 0
        %6535 = vmatpush1.bf16.msra.mxu0 %v3331
        %6536 = vmatprep.subr.bf16.mxu0 0
        %6537 = vmatpush1.bf16.msra.mxu0 0
        %6538 = vmatprep.subr.bf16.mxu0 0
        %6539 = vmatpush1.bf16.msra.mxu0 0
        %6540 = vmatprep.subr.bf16.mxu0 0
        %6541 = vmatpush1.bf16.msra.mxu0 0
        %6542 = vmatprep.subr.bf16.mxu0 0
        %6543 = vmatpush1.bf16.msra.mxu0 0
        %6544 = vmatprep.subr.bf16.mxu0 0
        %6545 = vmatpush1.bf16.msra.mxu0 0
        %6546 = vmatprep.subr.bf16.mxu0 0
        %6547 = vmatpush1.bf16.msra.mxu0 0
        %6548 = vmatprep.subr.bf16.mxu0 0
        %6549 = vmatpush1.bf16.msra.mxu0 0
        %6550 = vmatprep.subr.bf16.mxu0 0
        %6551 = vmatpush1.bf16.msra.mxu0 0
        %6552 = vmatprep.subr.bf16.mxu0 0
        %6553 = vmatpush1.bf16.msra.mxu0 0
        %6554 = vmatprep.subr.bf16.mxu0 0
        %6555 = vmatpush1.bf16.msra.mxu0 0
        %6556 = vmatprep.subr.bf16.mxu0 0
        %6557 = vmatpush1.bf16.msra.mxu0 0
        %6558 = vmatprep.subr.bf16.mxu0 0
        %6559 = vmatpush1.bf16.msra.mxu0 0
        %6560 = vmatprep.subr.bf16.mxu0 0
        %6561 = vmatpush1.bf16.msra.mxu0 0
        %6562 = vmatprep.subr.bf16.mxu0 0
        %6563 = vmatpush1.bf16.msra.mxu0 0
        %6564 = vmatprep.subr.bf16.mxu0 0
        %6565 = vmatpush1.bf16.msra.mxu0 0
        %6566 = vmatprep.mubr.bf16.mxu0 0
        %6567 = vmatmul.mubr.bf16.gmra.mrb[0].mxu0 %v6532
        %v6568 = vpop.f32.mrb[0].mxu0
        %v6569 = vadd.f32 0.0, %v6568
        %v6570 = vpop.f32.mrb[0].mxu0
        %v6571 = vpop.f32.mrb[0].mxu0
        %v6572 = vadd.f32 0.0, %v6571
        %v6573 = vpop.f32.mrb[0].mxu0
        %6574 = vdwg.mxu0
        %v6576 = vsel %vm4038, %v6129, 0
        %6578 = vmatprep.subr.bf16.mxu0 0
        %6579 = vmatpush1.bf16.msra.mxu0 %v3339
        %6580 = vmatprep.subr.bf16.mxu0 0
        %6581 = vmatpush1.bf16.msra.mxu0 0
        %6582 = vmatprep.subr.bf16.mxu0 0
        %6583 = vmatpush1.bf16.msra.mxu0 0
        %6584 = vmatprep.subr.bf16.mxu0 0
        %6585 = vmatpush1.bf16.msra.mxu0 0
        %6586 = vmatprep.subr.bf16.mxu0 0
        %6587 = vmatpush1.bf16.msra.mxu0 0
        %6588 = vmatprep.subr.bf16.mxu0 0
        %6589 = vmatpush1.bf16.msra.mxu0 0
        %6590 = vmatprep.subr.bf16.mxu0 0
        %6591 = vmatpush1.bf16.msra.mxu0 0
        %6592 = vmatprep.subr.bf16.mxu0 0
        %6593 = vmatpush1.bf16.msra.mxu0 0
        %6594 = vmatprep.subr.bf16.mxu0 0
        %6595 = vmatpush1.bf16.msra.mxu0 0
        %6596 = vmatprep.subr.bf16.mxu0 0
        %6597 = vmatpush1.bf16.msra.mxu0 0
        %6598 = vmatprep.subr.bf16.mxu0 0
        %6599 = vmatpush1.bf16.msra.mxu0 0
        %6600 = vmatprep.subr.bf16.mxu0 0
        %6601 = vmatpush1.bf16.msra.mxu0 0
        %6602 = vmatprep.subr.bf16.mxu0 0
        %6603 = vmatpush1.bf16.msra.mxu0 0
        %6604 = vmatprep.subr.bf16.mxu0 0
        %6605 = vmatpush1.bf16.msra.mxu0 0
        %6606 = vmatprep.subr.bf16.mxu0 0
        %6607 = vmatpush1.bf16.msra.mxu0 0
        %6608 = vmatprep.subr.bf16.mxu0 0
        %6609 = vmatpush1.bf16.msra.mxu0 0
        %6610 = vmatprep.mubr.bf16.mxu0 0
        %6611 = vmatmul.mubr.bf16.gmra.mrb[0].mxu0 %v6576
        %v6612 = vpop.f32.mrb[0].mxu0
        %v6613 = vadd.f32 0.0, %v6612
        %v6614 = vpop.f32.mrb[0].mxu0
        %v6615 = vpop.f32.mrb[0].mxu0
        %v6616 = vadd.f32 0.0, %v6615
        %v6617 = vpop.f32.mrb[0].mxu0
        %6618 = vdwg.mxu0
        %v6620 = vsel %vm4038, %v6130, 0
        %6622 = vmatprep.subr.bf16.mxu0 0
        %6623 = vmatpush1.bf16.msra.mxu0 %v3347
        %6624 = vmatprep.subr.bf16.mxu0 0
        %6625 = vmatpush1.bf16.msra.mxu0 0
        %6626 = vmatprep.subr.bf16.mxu0 0
        %6627 = vmatpush1.bf16.msra.mxu0 0
        %6628 = vmatprep.subr.bf16.mxu0 0
        %6629 = vmatpush1.bf16.msra.mxu0 0
        %6630 = vmatprep.subr.bf16.mxu0 0
        %6631 = vmatpush1.bf16.msra.mxu0 0
        %6632 = vmatprep.subr.bf16.mxu0 0
        %6633 = vmatpush1.bf16.msra.mxu0 0
        %6634 = vmatprep.subr.bf16.mxu0 0
        %6635 = vmatpush1.bf16.msra.mxu0 0
        %6636 = vmatprep.subr.bf16.mxu0 0
        %6637 = vmatpush1.bf16.msra.mxu0 0
        %6638 = vmatprep.subr.bf16.mxu0 0
        %6639 = vmatpush1.bf16.msra.mxu0 0
        %6640 = vmatprep.subr.bf16.mxu0 0
        %6641 = vmatpush1.bf16.msra.mxu0 0
        %6642 = vmatprep.subr.bf16.mxu0 0
        %6643 = vmatpush1.bf16.msra.mxu0 0
        %6644 = vmatprep.subr.bf16.mxu0 0
        %6645 = vmatpush1.bf16.msra.mxu0 0
        %6646 = vmatprep.subr.bf16.mxu0 0
        %6647 = vmatpush1.bf16.msra.mxu0 0
        %6648 = vmatprep.subr.bf16.mxu0 0
        %6649 = vmatpush1.bf16.msra.mxu0 0
        %6650 = vmatprep.subr.bf16.mxu0 0
        %6651 = vmatpush1.bf16.msra.mxu0 0
        %6652 = vmatprep.subr.bf16.mxu0 0
        %6653 = vmatpush1.bf16.msra.mxu0 0
        %6654 = vmatprep.mubr.bf16.mxu0 0
        %6655 = vmatmul.mubr.bf16.gmra.mrb[0].mxu0 %v6620
        %v6656 = vpop.f32.mrb[0].mxu0
        %v6657 = vadd.f32 0.0, %v6656
        %v6658 = vpop.f32.mrb[0].mxu0
        %v6659 = vpop.f32.mrb[0].mxu0
        %v6660 = vadd.f32 0.0, %v6659
        %v6661 = vpop.f32.mrb[0].mxu0
        %6662 = vdwg.mxu0
        %v6664 = vsel %vm4038, %v6131, 0
        %6666 = vmatprep.subr.bf16.mxu0 0
        %6667 = vmatpush1.bf16.msra.mxu0 %v3355
        %6668 = vmatprep.subr.bf16.mxu0 0
        %6669 = vmatpush1.bf16.msra.mxu0 0
        %6670 = vmatprep.subr.bf16.mxu0 0
        %6671 = vmatpush1.bf16.msra.mxu0 0
        %6672 = vmatprep.subr.bf16.mxu0 0
        %6673 = vmatpush1.bf16.msra.mxu0 0
        %6674 = vmatprep.subr.bf16.mxu0 0
        %6675 = vmatpush1.bf16.msra.mxu0 0
        %6676 = vmatprep.subr.bf16.mxu0 0
        %6677 = vmatpush1.bf16.msra.mxu0 0
        %6678 = vmatprep.subr.bf16.mxu0 0
        %6679 = vmatpush1.bf16.msra.mxu0 0
        %6680 = vmatprep.subr.bf16.mxu0 0
        %6681 = vmatpush1.bf16.msra.mxu0 0
        %6682 = vmatprep.subr.bf16.mxu0 0
        %6683 = vmatpush1.bf16.msra.mxu0 0
        %6684 = vmatprep.subr.bf16.mxu0 0
        %6685 = vmatpush1.bf16.msra.mxu0 0
        %6686 = vmatprep.subr.bf16.mxu0 0
        %6687 = vmatpush1.bf16.msra.mxu0 0
        %6688 = vmatprep.subr.bf16.mxu0 0
        %6689 = vmatpush1.bf16.msra.mxu0 0
        %6690 = vmatprep.subr.bf16.mxu0 0
        %6691 = vmatpush1.bf16.msra.mxu0 0
        %6692 = vmatprep.subr.bf16.mxu0 0
        %6693 = vmatpush1.bf16.msra.mxu0 0
        %6694 = vmatprep.subr.bf16.mxu0 0
        %6695 = vmatpush1.bf16.msra.mxu0 0
        %6696 = vmatprep.subr.bf16.mxu0 0
        %6697 = vmatpush1.bf16.msra.mxu0 0
        %6698 = vmatprep.mubr.bf16.mxu0 0
        %6699 = vmatmul.mubr.bf16.gmra.mrb[0].mxu0 %v6664
        %v6700 = vpop.f32.mrb[0].mxu0
        %v6701 = vadd.f32 0.0, %v6700
        %v6702 = vpop.f32.mrb[0].mxu0
        %v6703 = vpop.f32.mrb[0].mxu0
        %v6704 = vadd.f32 0.0, %v6703
        %v6705 = vpop.f32.mrb[0].mxu0
        %6706 = vdwg.mxu0
        %v6708 = vsel %vm4038, %v6132, 0
        %6710 = vmatprep.subr.bf16.mxu0 0
        %6711 = vmatpush1.bf16.msra.mxu0 %v3363
        %6712 = vmatprep.subr.bf16.mxu0 0
        %6713 = vmatpush1.bf16.msra.mxu0 0
        %6714 = vmatprep.subr.bf16.mxu0 0
        %6715 = vmatpush1.bf16.msra.mxu0 0
        %6716 = vmatprep.subr.bf16.mxu0 0
        %6717 = vmatpush1.bf16.msra.mxu0 0
        %6718 = vmatprep.subr.bf16.mxu0 0
        %6719 = vmatpush1.bf16.msra.mxu0 0
        %6720 = vmatprep.subr.bf16.mxu0 0
        %6721 = vmatpush1.bf16.msra.mxu0 0
        %6722 = vmatprep.subr.bf16.mxu0 0
        %6723 = vmatpush1.bf16.msra.mxu0 0
        %6724 = vmatprep.subr.bf16.mxu0 0
        %6725 = vmatpush1.bf16.msra.mxu0 0
        %6726 = vmatprep.subr.bf16.mxu0 0
        %6727 = vmatpush1.bf16.msra.mxu0 0
        %6728 = vmatprep.subr.bf16.mxu0 0
        %6729 = vmatpush1.bf16.msra.mxu0 0
        %6730 = vmatprep.subr.bf16.mxu0 0
        %6731 = vmatpush1.bf16.msra.mxu0 0
        %6732 = vmatprep.subr.bf16.mxu0 0
        %6733 = vmatpush1.bf16.msra.mxu0 0
        %6734 = vmatprep.subr.bf16.mxu0 0
        %6735 = vmatpush1.bf16.msra.mxu0 0
        %6736 = vmatprep.subr.bf16.mxu0 0
        %6737 = vmatpush1.bf16.msra.mxu0 0
        %6738 = vmatprep.subr.bf16.mxu0 0
        %6739 = vmatpush1.bf16.msra.mxu0 0
        %6740 = vmatprep.subr.bf16.mxu0 0
        %6741 = vmatpush1.bf16.msra.mxu0 0
        %6742 = vmatprep.mubr.bf16.mxu0 0
        %6743 = vmatmul.mubr.bf16.gmra.mrb[0].mxu0 %v6708
        %v6744 = vpop.f32.mrb[0].mxu0
        %v6745 = vadd.f32 0.0, %v6744
        %v6746 = vpop.f32.mrb[0].mxu0
        %v6747 = vpop.f32.mrb[0].mxu0
        %v6748 = vadd.f32 0.0, %v6747
        %v6749 = vpop.f32.mrb[0].mxu0
        %6750 = vdwg.mxu0
        %v6752 = vsel %vm4038, %v6133, 0
        %6754 = vmatprep.subr.bf16.mxu0 0
        %6755 = vmatpush1.bf16.msra.mxu0 %v3371
        %6756 = vmatprep.subr.bf16.mxu0 0
        %6757 = vmatpush1.bf16.msra.mxu0 0
        %6758 = vmatprep.subr.bf16.mxu0 0
        %6759 = vmatpush1.bf16.msra.mxu0 0
        %6760 = vmatprep.subr.bf16.mxu0 0
        %6761 = vmatpush1.bf16.msra.mxu0 0
        %6762 = vmatprep.subr.bf16.mxu0 0
        %6763 = vmatpush1.bf16.msra.mxu0 0
        %6764 = vmatprep.subr.bf16.mxu0 0
        %6765 = vmatpush1.bf16.msra.mxu0 0
        %6766 = vmatprep.subr.bf16.mxu0 0
        %6767 = vmatpush1.bf16.msra.mxu0 0
        %6768 = vmatprep.subr.bf16.mxu0 0
        %6769 = vmatpush1.bf16.msra.mxu0 0
        %6770 = vmatprep.subr.bf16.mxu0 0
        %6771 = vmatpush1.bf16.msra.mxu0 0
        %6772 = vmatprep.subr.bf16.mxu0 0
        %6773 = vmatpush1.bf16.msra.mxu0 0
        %6774 = vmatprep.subr.bf16.mxu0 0
        %6775 = vmatpush1.bf16.msra.mxu0 0
        %6776 = vmatprep.subr.bf16.mxu0 0
        %6777 = vmatpush1.bf16.msra.mxu0 0
        %6778 = vmatprep.subr.bf16.mxu0 0
        %6779 = vmatpush1.bf16.msra.mxu0 0
        %6780 = vmatprep.subr.bf16.mxu0 0
        %6781 = vmatpush1.bf16.msra.mxu0 0
        %6782 = vmatprep.subr.bf16.mxu0 0
        %6783 = vmatpush1.bf16.msra.mxu0 0
        %6784 = vmatprep.subr.bf16.mxu0 0
        %6785 = vmatpush1.bf16.msra.mxu0 0
        %6786 = vmatprep.mubr.bf16.mxu0 0
        %6787 = vmatmul.mubr.bf16.gmra.mrb[0].mxu0 %v6752
        %v6788 = vpop.f32.mrb[0].mxu0
        %v6789 = vadd.f32 0.0, %v6788
        %v6790 = vpop.f32.mrb[0].mxu0
        %v6791 = vpop.f32.mrb[0].mxu0
        %v6792 = vadd.f32 0.0, %v6791
        %v6793 = vpop.f32.mrb[0].mxu0
        %6794 = vdwg.mxu0
        %v6796 = vsel %vm4038, %v6134, 0
        %6798 = vmatprep.subr.bf16.mxu0 0
        %6799 = vmatpush1.bf16.msra.mxu0 %v3379
        %6800 = vmatprep.subr.bf16.mxu0 0
        %6801 = vmatpush1.bf16.msra.mxu0 0
        %6802 = vmatprep.subr.bf16.mxu0 0
        %6803 = vmatpush1.bf16.msra.mxu0 0
        %6804 = vmatprep.subr.bf16.mxu0 0
        %6805 = vmatpush1.bf16.msra.mxu0 0
        %6806 = vmatprep.subr.bf16.mxu0 0
        %6807 = vmatpush1.bf16.msra.mxu0 0
        %6808 = vmatprep.subr.bf16.mxu0 0
        %6809 = vmatpush1.bf16.msra.mxu0 0
        %6810 = vmatprep.subr.bf16.mxu0 0
        %6811 = vmatpush1.bf16.msra.mxu0 0
        %6812 = vmatprep.subr.bf16.mxu0 0
        %6813 = vmatpush1.bf16.msra.mxu0 0
        %6814 = vmatprep.subr.bf16.mxu0 0
        %6815 = vmatpush1.bf16.msra.mxu0 0
        %6816 = vmatprep.subr.bf16.mxu0 0
        %6817 = vmatpush1.bf16.msra.mxu0 0
        %6818 = vmatprep.subr.bf16.mxu0 0
        %6819 = vmatpush1.bf16.msra.mxu0 0
        %6820 = vmatprep.subr.bf16.mxu0 0
        %6821 = vmatpush1.bf16.msra.mxu0 0
        %6822 = vmatprep.subr.bf16.mxu0 0
        %6823 = vmatpush1.bf16.msra.mxu0 0
        %6824 = vmatprep.subr.bf16.mxu0 0
        %6825 = vmatpush1.bf16.msra.mxu0 0
        %6826 = vmatprep.subr.bf16.mxu0 0
        %6827 = vmatpush1.bf16.msra.mxu0 0
        %6828 = vmatprep.subr.bf16.mxu0 0
        %6829 = vmatpush1.bf16.msra.mxu0 0
        %6830 = vmatprep.mubr.bf16.mxu0 0
        %6831 = vmatmul.mubr.bf16.gmra.mrb[0].mxu0 %v6796
        %v6832 = vpop.f32.mrb[0].mxu0
        %v6833 = vadd.f32 0.0, %v6832
        %v6834 = vpop.f32.mrb[0].mxu0
        %v6835 = vpop.f32.mrb[0].mxu0
        %v6836 = vadd.f32 0.0, %v6835
        %v6837 = vpop.f32.mrb[0].mxu0
        %6838 = vdwg.mxu0
        %v6839 = vpack.c.bf16 %v4448, %v4445
        %v6840 = vpack.c.bf16 %v6176, %v6173
        %v6841 = vpack.c.bf16 %v4492, %v4489
        %v6842 = vpack.c.bf16 %v6220, %v6217
        %v6843 = vpack.c.bf16 %v4536, %v4533
        %v6844 = vpack.c.bf16 %v6264, %v6261
        %v6845 = vpack.c.bf16 %v4580, %v4577
        %v6846 = vpack.c.bf16 %v6308, %v6305
        %v6847 = vpack.c.bf16 %v4624, %v4621
        %v6848 = vpack.c.bf16 %v6352, %v6349
        %v6849 = vpack.c.bf16 %v4668, %v4665
        %v6850 = vpack.c.bf16 %v6396, %v6393
        %v6851 = vpack.c.bf16 %v4712, %v4709
        %v6852 = vpack.c.bf16 %v6440, %v6437
        %v6853 = vpack.c.bf16 %v4756, %v4753
        %v6854 = vpack.c.bf16 %v6484, %v6481
        %v6855 = vpack.c.bf16 %v4800, %v4797
        %v6856 = vpack.c.bf16 %v6528, %v6525
        %v6857 = vpack.c.bf16 %v4844, %v4841
        %v6858 = vpack.c.bf16 %v6572, %v6569
        %v6859 = vpack.c.bf16 %v4888, %v4885
        %v6860 = vpack.c.bf16 %v6616, %v6613
        %v6861 = vpack.c.bf16 %v4932, %v4929
        %v6862 = vpack.c.bf16 %v6660, %v6657
        %v6863 = vpack.c.bf16 %v4976, %v4973
        %v6864 = vpack.c.bf16 %v6704, %v6701
        %v6865 = vpack.c.bf16 %v5020, %v5017
        %v6866 = vpack.c.bf16 %v6748, %v6745
        %v6867 = vpack.c.bf16 %v5064, %v5061
        %v6868 = vpack.c.bf16 %v6792, %v6789
        %v6869 = vpack.c.bf16 %v5108, %v5105
        %v6870 = vpack.c.bf16 %v6836, %v6833
        %v6871 = vld [vmem:[#allocation5] sm:$0xf]
        %v6872 = vld [vmem:[#allocation5 + $0x4] sm:$0xf]
        %v6875 = vunpack.c.l.b16 %v6871
        %v6876 = vunpack.c.l.b16 %v6872
        %v6877 = vpack.c.b16 %v6876, %v6875
        %v6879 = vsel %vm4038, %v6877, 0
        %6881 = vmatprep.subr.bf16.mxu0 %v3261
        %6882 = vmatpush1.bf16.msra.mxu0 %v3260
        %6883 = vmatprep.subr.bf16.mxu0 0
        %6884 = vmatpush1.bf16.msra.mxu0 0
        %6885 = vmatprep.subr.bf16.mxu0 0
        %6886 = vmatpush1.bf16.msra.mxu0 0
        %6887 = vmatprep.subr.bf16.mxu0 0
        %6888 = vmatpush1.bf16.msra.mxu0 0
        %6889 = vmatprep.subr.bf16.mxu0 0
        %6890 = vmatpush1.bf16.msra.mxu0 0
        %6891 = vmatprep.subr.bf16.mxu0 0
        %6892 = vmatpush1.bf16.msra.mxu0 0
        %6893 = vmatprep.subr.bf16.mxu0 0
        %6894 = vmatpush1.bf16.msra.mxu0 0
        %6895 = vmatprep.subr.bf16.mxu0 0
        %6896 = vmatpush1.bf16.msra.mxu0 0
        %6897 = vmatprep.subr.bf16.mxu0 0
        %6898 = vmatpush1.bf16.msra.mxu0 0
        %6899 = vmatprep.subr.bf16.mxu0 0
        %6900 = vmatpush1.bf16.msra.mxu0 0
        %6901 = vmatprep.subr.bf16.mxu0 0
        %6902 = vmatpush1.bf16.msra.mxu0 0
        %6903 = vmatprep.subr.bf16.mxu0 0
        %6904 = vmatpush1.bf16.msra.mxu0 0
        %6905 = vmatprep.subr.bf16.mxu0 0
        %6906 = vmatpush1.bf16.msra.mxu0 0
        %6907 = vmatprep.subr.bf16.mxu0 0
        %6908 = vmatpush1.bf16.msra.mxu0 0
        %6909 = vmatprep.subr.bf16.mxu0 0
        %6910 = vmatpush1.bf16.msra.mxu0 0
        %6911 = vmatprep.subr.bf16.mxu0 0
        %6912 = vmatpush1.bf16.msra.mxu0 0
        %6913 = vmatprep.mubr.bf16.mxu0 0
        %6914 = vmatmul.mubr.bf16.gmra.mrb[0].mxu0 %v6879
        %v6915 = vpop.f32.mrb[0].mxu0
        %v6916 = vadd.f32 0.0, %v6915
        %v6917 = vpop.f32.mrb[0].mxu0
        %v6918 = vadd.f32 0.0, %v6917
        %v6919 = vpop.f32.mrb[0].mxu0
        %v6920 = vadd.f32 0.0, %v6919
        %v6921 = vpop.f32.mrb[0].mxu0
        %v6922 = vadd.f32 0.0, %v6921
        %6923 = vdwg.mxu0
        %6924 = vmatprep.subr.bf16.mxu0 %v3269
        %6925 = vmatpush1.bf16.msra.mxu0 %v3268
        %6926 = vmatprep.subr.bf16.mxu0 0
        %6927 = vmatpush1.bf16.msra.mxu0 0
        %6928 = vmatprep.subr.bf16.mxu0 0
        %6929 = vmatpush1.bf16.msra.mxu0 0
        %6930 = vmatprep.subr.bf16.mxu0 0
        %6931 = vmatpush1.bf16.msra.mxu0 0
        %6932 = vmatprep.subr.bf16.mxu0 0
        %6933 = vmatpush1.bf16.msra.mxu0 0
        %6934 = vmatprep.subr.bf16.mxu0 0
        %6935 = vmatpush1.bf16.msra.mxu0 0
        %6936 = vmatprep.subr.bf16.mxu0 0
        %6937 = vmatpush1.bf16.msra.mxu0 0
        %6938 = vmatprep.subr.bf16.mxu0 0
        %6939 = vmatpush1.bf16.msra.mxu0 0
        %6940 = vmatprep.subr.bf16.mxu0 0
        %6941 = vmatpush1.bf16.msra.mxu0 0
        %6942 = vmatprep.subr.bf16.mxu0 0
        %6943 = vmatpush1.bf16.msra.mxu0 0
        %6944 = vmatprep.subr.bf16.mxu0 0
        %6945 = vmatpush1.bf16.msra.mxu0 0
        %6946 = vmatprep.subr.bf16.mxu0 0
        %6947 = vmatpush1.bf16.msra.mxu0 0
        %6948 = vmatprep.subr.bf16.mxu0 0
        %6949 = vmatpush1.bf16.msra.mxu0 0
        %6950 = vmatprep.subr.bf16.mxu0 0
        %6951 = vmatpush1.bf16.msra.mxu0 0
        %6952 = vmatprep.subr.bf16.mxu0 0
        %6953 = vmatpush1.bf16.msra.mxu0 0
        %6954 = vmatprep.subr.bf16.mxu0 0
        %6955 = vmatpush1.bf16.msra.mxu0 0
        %6956 = vmatprep.mubr.bf16.mxu0 0
        %6957 = vmatmul.mubr.bf16.gmra.mrb[0].mxu0 %v6879
        %v6958 = vpop.f32.mrb[0].mxu0
        %v6959 = vadd.f32 0.0, %v6958
        %v6960 = vpop.f32.mrb[0].mxu0
        %v6961 = vadd.f32 0.0, %v6960
        %v6962 = vpop.f32.mrb[0].mxu0
        %v6963 = vadd.f32 0.0, %v6962
        %v6964 = vpop.f32.mrb[0].mxu0
        %v6965 = vadd.f32 0.0, %v6964
        %6966 = vdwg.mxu0
        %6967 = vmatprep.subr.bf16.mxu0 %v3277
        %6968 = vmatpush1.bf16.msra.mxu0 %v3276
        %6969 = vmatprep.subr.bf16.mxu0 0
        %6970 = vmatpush1.bf16.msra.mxu0 0
        %6971 = vmatprep.subr.bf16.mxu0 0
        %6972 = vmatpush1.bf16.msra.mxu0 0
        %6973 = vmatprep.subr.bf16.mxu0 0
        %6974 = vmatpush1.bf16.msra.mxu0 0
        %6975 = vmatprep.subr.bf16.mxu0 0
        %6976 = vmatpush1.bf16.msra.mxu0 0
        %6977 = vmatprep.subr.bf16.mxu0 0
        %6978 = vmatpush1.bf16.msra.mxu0 0
        %6979 = vmatprep.subr.bf16.mxu0 0
        %6980 = vmatpush1.bf16.msra.mxu0 0
        %6981 = vmatprep.subr.bf16.mxu0 0
        %6982 = vmatpush1.bf16.msra.mxu0 0
        %6983 = vmatprep.subr.bf16.mxu0 0
        %6984 = vmatpush1.bf16.msra.mxu0 0
        %6985 = vmatprep.subr.bf16.mxu0 0
        %6986 = vmatpush1.bf16.msra.mxu0 0
        %6987 = vmatprep.subr.bf16.mxu0 0
        %6988 = vmatpush1.bf16.msra.mxu0 0
        %6989 = vmatprep.subr.bf16.mxu0 0
        %6990 = vmatpush1.bf16.msra.mxu0 0
        %6991 = vmatprep.subr.bf16.mxu0 0
        %6992 = vmatpush1.bf16.msra.mxu0 0
        %6993 = vmatprep.subr.bf16.mxu0 0
        %6994 = vmatpush1.bf16.msra.mxu0 0
        %6995 = vmatprep.subr.bf16.mxu0 0
        %6996 = vmatpush1.bf16.msra.mxu0 0
        %6997 = vmatprep.subr.bf16.mxu0 0
        %6998 = vmatpush1.bf16.msra.mxu0 0
        %6999 = vmatprep.mubr.bf16.mxu0 0
        %7000 = vmatmul.mubr.bf16.gmra.mrb[0].mxu0 %v6879
        %v7001 = vpop.f32.mrb[0].mxu0
        %v7002 = vadd.f32 0.0, %v7001
        %v7003 = vpop.f32.mrb[0].mxu0
        %v7004 = vadd.f32 0.0, %v7003
        %v7005 = vpop.f32.mrb[0].mxu0
        %v7006 = vadd.f32 0.0, %v7005
        %v7007 = vpop.f32.mrb[0].mxu0
        %v7008 = vadd.f32 0.0, %v7007
        %7009 = vdwg.mxu0
        %7010 = vmatprep.subr.bf16.mxu0 %v3285
        %7011 = vmatpush1.bf16.msra.mxu0 %v3284
        %7012 = vmatprep.subr.bf16.mxu0 0
        %7013 = vmatpush1.bf16.msra.mxu0 0
        %7014 = vmatprep.subr.bf16.mxu0 0
        %7015 = vmatpush1.bf16.msra.mxu0 0
        %7016 = vmatprep.subr.bf16.mxu0 0
        %7017 = vmatpush1.bf16.msra.mxu0 0
        %7018 = vmatprep.subr.bf16.mxu0 0
        %7019 = vmatpush1.bf16.msra.mxu0 0
        %7020 = vmatprep.subr.bf16.mxu0 0
        %7021 = vmatpush1.bf16.msra.mxu0 0
        %7022 = vmatprep.subr.bf16.mxu0 0
        %7023 = vmatpush1.bf16.msra.mxu0 0
        %7024 = vmatprep.subr.bf16.mxu0 0
        %7025 = vmatpush1.bf16.msra.mxu0 0
        %7026 = vmatprep.subr.bf16.mxu0 0
        %7027 = vmatpush1.bf16.msra.mxu0 0
        %7028 = vmatprep.subr.bf16.mxu0 0
        %7029 = vmatpush1.bf16.msra.mxu0 0
        %7030 = vmatprep.subr.bf16.mxu0 0
        %7031 = vmatpush1.bf16.msra.mxu0 0
        %7032 = vmatprep.subr.bf16.mxu0 0
        %7033 = vmatpush1.bf16.msra.mxu0 0
        %7034 = vmatprep.subr.bf16.mxu0 0
        %7035 = vmatpush1.bf16.msra.mxu0 0
        %7036 = vmatprep.subr.bf16.mxu0 0
        %7037 = vmatpush1.bf16.msra.mxu0 0
        %7038 = vmatprep.subr.bf16.mxu0 0
        %7039 = vmatpush1.bf16.msra.mxu0 0
        %7040 = vmatprep.subr.bf16.mxu0 0
        %7041 = vmatpush1.bf16.msra.mxu0 0
        %7042 = vmatprep.mubr.bf16.mxu0 0
        %7043 = vmatmul.mubr.bf16.gmra.mrb[0].mxu0 %v6879
        %v7044 = vpop.f32.mrb[0].mxu0
        %v7045 = vadd.f32 0.0, %v7044
        %v7046 = vpop.f32.mrb[0].mxu0
        %v7047 = vadd.f32 0.0, %v7046
        %v7048 = vpop.f32.mrb[0].mxu0
        %v7049 = vadd.f32 0.0, %v7048
        %v7050 = vpop.f32.mrb[0].mxu0
        %v7051 = vadd.f32 0.0, %v7050
        %7052 = vdwg.mxu0
        %7053 = vmatprep.subr.bf16.mxu0 %v3293
        %7054 = vmatpush1.bf16.msra.mxu0 %v3292
        %7055 = vmatprep.subr.bf16.mxu0 0
        %7056 = vmatpush1.bf16.msra.mxu0 0
        %7057 = vmatprep.subr.bf16.mxu0 0
        %7058 = vmatpush1.bf16.msra.mxu0 0
        %7059 = vmatprep.subr.bf16.mxu0 0
        %7060 = vmatpush1.bf16.msra.mxu0 0
        %7061 = vmatprep.subr.bf16.mxu0 0
        %7062 = vmatpush1.bf16.msra.mxu0 0
        %7063 = vmatprep.subr.bf16.mxu0 0
        %7064 = vmatpush1.bf16.msra.mxu0 0
        %7065 = vmatprep.subr.bf16.mxu0 0
        %7066 = vmatpush1.bf16.msra.mxu0 0
        %7067 = vmatprep.subr.bf16.mxu0 0
        %7068 = vmatpush1.bf16.msra.mxu0 0
        %7069 = vmatprep.subr.bf16.mxu0 0
        %7070 = vmatpush1.bf16.msra.mxu0 0
        %7071 = vmatprep.subr.bf16.mxu0 0
        %7072 = vmatpush1.bf16.msra.mxu0 0
        %7073 = vmatprep.subr.bf16.mxu0 0
        %7074 = vmatpush1.bf16.msra.mxu0 0
        %7075 = vmatprep.subr.bf16.mxu0 0
        %7076 = vmatpush1.bf16.msra.mxu0 0
        %7077 = vmatprep.subr.bf16.mxu0 0
        %7078 = vmatpush1.bf16.msra.mxu0 0
        %7079 = vmatprep.subr.bf16.mxu0 0
        %7080 = vmatpush1.bf16.msra.mxu0 0
        %7081 = vmatprep.subr.bf16.mxu0 0
        %7082 = vmatpush1.bf16.msra.mxu0 0
        %7083 = vmatprep.subr.bf16.mxu0 0
        %7084 = vmatpush1.bf16.msra.mxu0 0
        %7085 = vmatprep.mubr.bf16.mxu0 0
        %7086 = vmatmul.mubr.bf16.gmra.mrb[0].mxu0 %v6879
        %v7087 = vpop.f32.mrb[0].mxu0
        %v7088 = vadd.f32 0.0, %v7087
        %v7089 = vpop.f32.mrb[0].mxu0
        %v7090 = vadd.f32 0.0, %v7089
        %v7091 = vpop.f32.mrb[0].mxu0
        %v7092 = vadd.f32 0.0, %v7091
        %v7093 = vpop.f32.mrb[0].mxu0
        %v7094 = vadd.f32 0.0, %v7093
        %7095 = vdwg.mxu0
        %7096 = vmatprep.subr.bf16.mxu0 %v3301
        %7097 = vmatpush1.bf16.msra.mxu0 %v3300
        %7098 = vmatprep.subr.bf16.mxu0 0
        %7099 = vmatpush1.bf16.msra.mxu0 0
        %7100 = vmatprep.subr.bf16.mxu0 0
        %7101 = vmatpush1.bf16.msra.mxu0 0
        %7102 = vmatprep.subr.bf16.mxu0 0
        %7103 = vmatpush1.bf16.msra.mxu0 0
        %7104 = vmatprep.subr.bf16.mxu0 0
        %7105 = vmatpush1.bf16.msra.mxu0 0
        %7106 = vmatprep.subr.bf16.mxu0 0
        %7107 = vmatpush1.bf16.msra.mxu0 0
        %7108 = vmatprep.subr.bf16.mxu0 0
        %7109 = vmatpush1.bf16.msra.mxu0 0
        %7110 = vmatprep.subr.bf16.mxu0 0
        %7111 = vmatpush1.bf16.msra.mxu0 0
        %7112 = vmatprep.subr.bf16.mxu0 0
        %7113 = vmatpush1.bf16.msra.mxu0 0
        %7114 = vmatprep.subr.bf16.mxu0 0
        %7115 = vmatpush1.bf16.msra.mxu0 0
        %7116 = vmatprep.subr.bf16.mxu0 0
        %7117 = vmatpush1.bf16.msra.mxu0 0
        %7118 = vmatprep.subr.bf16.mxu0 0
        %7119 = vmatpush1.bf16.msra.mxu0 0
        %7120 = vmatprep.subr.bf16.mxu0 0
        %7121 = vmatpush1.bf16.msra.mxu0 0
        %7122 = vmatprep.subr.bf16.mxu0 0
        %7123 = vmatpush1.bf16.msra.mxu0 0
        %7124 = vmatprep.subr.bf16.mxu0 0
        %7125 = vmatpush1.bf16.msra.mxu0 0
        %7126 = vmatprep.subr.bf16.mxu0 0
        %7127 = vmatpush1.bf16.msra.mxu0 0
        %7128 = vmatprep.mubr.bf16.mxu0 0
        %7129 = vmatmul.mubr.bf16.gmra.mrb[0].mxu0 %v6879
        %v7130 = vpop.f32.mrb[0].mxu0
        %v7131 = vadd.f32 0.0, %v7130
        %v7132 = vpop.f32.mrb[0].mxu0
        %v7133 = vadd.f32 0.0, %v7132
        %v7134 = vpop.f32.mrb[0].mxu0
        %v7135 = vadd.f32 0.0, %v7134
        %v7136 = vpop.f32.mrb[0].mxu0
        %v7137 = vadd.f32 0.0, %v7136
        %7138 = vdwg.mxu0
        %7139 = vmatprep.subr.bf16.mxu0 %v3309
        %7140 = vmatpush1.bf16.msra.mxu0 %v3308
        %7141 = vmatprep.subr.bf16.mxu0 0
        %7142 = vmatpush1.bf16.msra.mxu0 0
        %7143 = vmatprep.subr.bf16.mxu0 0
        %7144 = vmatpush1.bf16.msra.mxu0 0
        %7145 = vmatprep.subr.bf16.mxu0 0
        %7146 = vmatpush1.bf16.msra.mxu0 0
        %7147 = vmatprep.subr.bf16.mxu0 0
        %7148 = vmatpush1.bf16.msra.mxu0 0
        %7149 = vmatprep.subr.bf16.mxu0 0
        %7150 = vmatpush1.bf16.msra.mxu0 0
        %7151 = vmatprep.subr.bf16.mxu0 0
        %7152 = vmatpush1.bf16.msra.mxu0 0
        %7153 = vmatprep.subr.bf16.mxu0 0
        %7154 = vmatpush1.bf16.msra.mxu0 0
        %7155 = vmatprep.subr.bf16.mxu0 0
        %7156 = vmatpush1.bf16.msra.mxu0 0
        %7157 = vmatprep.subr.bf16.mxu0 0
        %7158 = vmatpush1.bf16.msra.mxu0 0
        %7159 = vmatprep.subr.bf16.mxu0 0
        %7160 = vmatpush1.bf16.msra.mxu0 0
        %7161 = vmatprep.subr.bf16.mxu0 0
        %7162 = vmatpush1.bf16.msra.mxu0 0
        %7163 = vmatprep.subr.bf16.mxu0 0
        %7164 = vmatpush1.bf16.msra.mxu0 0
        %7165 = vmatprep.subr.bf16.mxu0 0
        %7166 = vmatpush1.bf16.msra.mxu0 0
        %7167 = vmatprep.subr.bf16.mxu0 0
        %7168 = vmatpush1.bf16.msra.mxu0 0
        %7169 = vmatprep.subr.bf16.mxu0 0
        %7170 = vmatpush1.bf16.msra.mxu0 0
        %7171 = vmatprep.mubr.bf16.mxu0 0
        %7172 = vmatmul.mubr.bf16.gmra.mrb[0].mxu0 %v6879
        %v7173 = vpop.f32.mrb[0].mxu0
        %v7174 = vadd.f32 0.0, %v7173
        %v7175 = vpop.f32.mrb[0].mxu0
        %v7176 = vadd.f32 0.0, %v7175
        %v7177 = vpop.f32.mrb[0].mxu0
        %v7178 = vadd.f32 0.0, %v7177
        %v7179 = vpop.f32.mrb[0].mxu0
        %v7180 = vadd.f32 0.0, %v7179
        %7181 = vdwg.mxu0
        %7182 = vmatprep.subr.bf16.mxu0 %v3317
        %7183 = vmatpush1.bf16.msra.mxu0 %v3316
        %7184 = vmatprep.subr.bf16.mxu0 0
        %7185 = vmatpush1.bf16.msra.mxu0 0
        %7186 = vmatprep.subr.bf16.mxu0 0
        %7187 = vmatpush1.bf16.msra.mxu0 0
        %7188 = vmatprep.subr.bf16.mxu0 0
        %7189 = vmatpush1.bf16.msra.mxu0 0
        %7190 = vmatprep.subr.bf16.mxu0 0
        %7191 = vmatpush1.bf16.msra.mxu0 0
        %7192 = vmatprep.subr.bf16.mxu0 0
        %7193 = vmatpush1.bf16.msra.mxu0 0
        %7194 = vmatprep.subr.bf16.mxu0 0
        %7195 = vmatpush1.bf16.msra.mxu0 0
        %7196 = vmatprep.subr.bf16.mxu0 0
        %7197 = vmatpush1.bf16.msra.mxu0 0
        %7198 = vmatprep.subr.bf16.mxu0 0
        %7199 = vmatpush1.bf16.msra.mxu0 0
        %7200 = vmatprep.subr.bf16.mxu0 0
        %7201 = vmatpush1.bf16.msra.mxu0 0
        %7202 = vmatprep.subr.bf16.mxu0 0
        %7203 = vmatpush1.bf16.msra.mxu0 0
        %7204 = vmatprep.subr.bf16.mxu0 0
        %7205 = vmatpush1.bf16.msra.mxu0 0
        %7206 = vmatprep.subr.bf16.mxu0 0
        %7207 = vmatpush1.bf16.msra.mxu0 0
        %7208 = vmatprep.subr.bf16.mxu0 0
        %7209 = vmatpush1.bf16.msra.mxu0 0
        %7210 = vmatprep.subr.bf16.mxu0 0
        %7211 = vmatpush1.bf16.msra.mxu0 0
        %7212 = vmatprep.subr.bf16.mxu0 0
        %7213 = vmatpush1.bf16.msra.mxu0 0
        %7214 = vmatprep.mubr.bf16.mxu0 0
        %7215 = vmatmul.mubr.bf16.gmra.mrb[0].mxu0 %v6879
        %v7216 = vpop.f32.mrb[0].mxu0
        %v7217 = vadd.f32 0.0, %v7216
        %v7218 = vpop.f32.mrb[0].mxu0
        %v7219 = vadd.f32 0.0, %v7218
        %v7220 = vpop.f32.mrb[0].mxu0
        %v7221 = vadd.f32 0.0, %v7220
        %v7222 = vpop.f32.mrb[0].mxu0
        %v7223 = vadd.f32 0.0, %v7222
        %7224 = vdwg.mxu0
        %7225 = vmatprep.subr.bf16.mxu0 %v3325
        %7226 = vmatpush1.bf16.msra.mxu0 %v3324
        %7227 = vmatprep.subr.bf16.mxu0 0
        %7228 = vmatpush1.bf16.msra.mxu0 0
        %7229 = vmatprep.subr.bf16.mxu0 0
        %7230 = vmatpush1.bf16.msra.mxu0 0
        %7231 = vmatprep.subr.bf16.mxu0 0
        %7232 = vmatpush1.bf16.msra.mxu0 0
        %7233 = vmatprep.subr.bf16.mxu0 0
        %7234 = vmatpush1.bf16.msra.mxu0 0
        %7235 = vmatprep.subr.bf16.mxu0 0
        %7236 = vmatpush1.bf16.msra.mxu0 0
        %7237 = vmatprep.subr.bf16.mxu0 0
        %7238 = vmatpush1.bf16.msra.mxu0 0
        %7239 = vmatprep.subr.bf16.mxu0 0
        %7240 = vmatpush1.bf16.msra.mxu0 0
        %7241 = vmatprep.subr.bf16.mxu0 0
        %7242 = vmatpush1.bf16.msra.mxu0 0
        %7243 = vmatprep.subr.bf16.mxu0 0
        %7244 = vmatpush1.bf16.msra.mxu0 0
        %7245 = vmatprep.subr.bf16.mxu0 0
        %7246 = vmatpush1.bf16.msra.mxu0 0
        %7247 = vmatprep.subr.bf16.mxu0 0
        %7248 = vmatpush1.bf16.msra.mxu0 0
        %7249 = vmatprep.subr.bf16.mxu0 0
        %7250 = vmatpush1.bf16.msra.mxu0 0
        %7251 = vmatprep.subr.bf16.mxu0 0
        %7252 = vmatpush1.bf16.msra.mxu0 0
        %7253 = vmatprep.subr.bf16.mxu0 0
        %7254 = vmatpush1.bf16.msra.mxu0 0
        %7255 = vmatprep.subr.bf16.mxu0 0
        %7256 = vmatpush1.bf16.msra.mxu0 0
        %7257 = vmatprep.mubr.bf16.mxu0 0
        %7258 = vmatmul.mubr.bf16.gmra.mrb[0].mxu0 %v6879
        %v7259 = vpop.f32.mrb[0].mxu0
        %v7260 = vadd.f32 0.0, %v7259
        %v7261 = vpop.f32.mrb[0].mxu0
        %v7262 = vadd.f32 0.0, %v7261
        %v7263 = vpop.f32.mrb[0].mxu0
        %v7264 = vadd.f32 0.0, %v7263
        %v7265 = vpop.f32.mrb[0].mxu0
        %v7266 = vadd.f32 0.0, %v7265
        %7267 = vdwg.mxu0
        %7268 = vmatprep.subr.bf16.mxu0 %v3333
        %7269 = vmatpush1.bf16.msra.mxu0 %v3332
        %7270 = vmatprep.subr.bf16.mxu0 0
        %7271 = vmatpush1.bf16.msra.mxu0 0
        %7272 = vmatprep.subr.bf16.mxu0 0
        %7273 = vmatpush1.bf16.msra.mxu0 0
        %7274 = vmatprep.subr.bf16.mxu0 0
        %7275 = vmatpush1.bf16.msra.mxu0 0
        %7276 = vmatprep.subr.bf16.mxu0 0
        %7277 = vmatpush1.bf16.msra.mxu0 0
        %7278 = vmatprep.subr.bf16.mxu0 0
        %7279 = vmatpush1.bf16.msra.mxu0 0
        %7280 = vmatprep.subr.bf16.mxu0 0
        %7281 = vmatpush1.bf16.msra.mxu0 0
        %7282 = vmatprep.subr.bf16.mxu0 0
        %7283 = vmatpush1.bf16.msra.mxu0 0
        %7284 = vmatprep.subr.bf16.mxu0 0
        %7285 = vmatpush1.bf16.msra.mxu0 0
        %7286 = vmatprep.subr.bf16.mxu0 0
        %7287 = vmatpush1.bf16.msra.mxu0 0
        %7288 = vmatprep.subr.bf16.mxu0 0
        %7289 = vmatpush1.bf16.msra.mxu0 0
        %7290 = vmatprep.subr.bf16.mxu0 0
        %7291 = vmatpush1.bf16.msra.mxu0 0
        %7292 = vmatprep.subr.bf16.mxu0 0
        %7293 = vmatpush1.bf16.msra.mxu0 0
        %7294 = vmatprep.subr.bf16.mxu0 0
        %7295 = vmatpush1.bf16.msra.mxu0 0
        %7296 = vmatprep.subr.bf16.mxu0 0
        %7297 = vmatpush1.bf16.msra.mxu0 0
        %7298 = vmatprep.subr.bf16.mxu0 0
        %7299 = vmatpush1.bf16.msra.mxu0 0
        %7300 = vmatprep.mubr.bf16.mxu0 0
        %7301 = vmatmul.mubr.bf16.gmra.mrb[0].mxu0 %v6879
        %v7302 = vpop.f32.mrb[0].mxu0
        %v7303 = vadd.f32 0.0, %v7302
        %v7304 = vpop.f32.mrb[0].mxu0
        %v7305 = vadd.f32 0.0, %v7304
        %v7306 = vpop.f32.mrb[0].mxu0
        %v7307 = vadd.f32 0.0, %v7306
        %v7308 = vpop.f32.mrb[0].mxu0
        %v7309 = vadd.f32 0.0, %v7308
        %7310 = vdwg.mxu0
        %7311 = vmatprep.subr.bf16.mxu0 %v3341
        %7312 = vmatpush1.bf16.msra.mxu0 %v3340
        %7313 = vmatprep.subr.bf16.mxu0 0
        %7314 = vmatpush1.bf16.msra.mxu0 0
        %7315 = vmatprep.subr.bf16.mxu0 0
        %7316 = vmatpush1.bf16.msra.mxu0 0
        %7317 = vmatprep.subr.bf16.mxu0 0
        %7318 = vmatpush1.bf16.msra.mxu0 0
        %7319 = vmatprep.subr.bf16.mxu0 0
        %7320 = vmatpush1.bf16.msra.mxu0 0
        %7321 = vmatprep.subr.bf16.mxu0 0
        %7322 = vmatpush1.bf16.msra.mxu0 0
        %7323 = vmatprep.subr.bf16.mxu0 0
        %7324 = vmatpush1.bf16.msra.mxu0 0
        %7325 = vmatprep.subr.bf16.mxu0 0
        %7326 = vmatpush1.bf16.msra.mxu0 0
        %7327 = vmatprep.subr.bf16.mxu0 0
        %7328 = vmatpush1.bf16.msra.mxu0 0
        %7329 = vmatprep.subr.bf16.mxu0 0
        %7330 = vmatpush1.bf16.msra.mxu0 0
        %7331 = vmatprep.subr.bf16.mxu0 0
        %7332 = vmatpush1.bf16.msra.mxu0 0
        %7333 = vmatprep.subr.bf16.mxu0 0
        %7334 = vmatpush1.bf16.msra.mxu0 0
        %7335 = vmatprep.subr.bf16.mxu0 0
        %7336 = vmatpush1.bf16.msra.mxu0 0
        %7337 = vmatprep.subr.bf16.mxu0 0
        %7338 = vmatpush1.bf16.msra.mxu0 0
        %7339 = vmatprep.subr.bf16.mxu0 0
        %7340 = vmatpush1.bf16.msra.mxu0 0
        %7341 = vmatprep.subr.bf16.mxu0 0
        %7342 = vmatpush1.bf16.msra.mxu0 0
        %7343 = vmatprep.mubr.bf16.mxu0 0
        %7344 = vmatmul.mubr.bf16.gmra.mrb[0].mxu0 %v6879
        %v7345 = vpop.f32.mrb[0].mxu0
        %v7346 = vadd.f32 0.0, %v7345
        %v7347 = vpop.f32.mrb[0].mxu0
        %v7348 = vadd.f32 0.0, %v7347
        %v7349 = vpop.f32.mrb[0].mxu0
        %v7350 = vadd.f32 0.0, %v7349
        %v7351 = vpop.f32.mrb[0].mxu0
        %v7352 = vadd.f32 0.0, %v7351
        %7353 = vdwg.mxu0
        %7354 = vmatprep.subr.bf16.mxu0 %v3349
        %7355 = vmatpush1.bf16.msra.mxu0 %v3348
        %7356 = vmatprep.subr.bf16.mxu0 0
        %7357 = vmatpush1.bf16.msra.mxu0 0
        %7358 = vmatprep.subr.bf16.mxu0 0
        %7359 = vmatpush1.bf16.msra.mxu0 0
        %7360 = vmatprep.subr.bf16.mxu0 0
        %7361 = vmatpush1.bf16.msra.mxu0 0
        %7362 = vmatprep.subr.bf16.mxu0 0
        %7363 = vmatpush1.bf16.msra.mxu0 0
        %7364 = vmatprep.subr.bf16.mxu0 0
        %7365 = vmatpush1.bf16.msra.mxu0 0
        %7366 = vmatprep.subr.bf16.mxu0 0
        %7367 = vmatpush1.bf16.msra.mxu0 0
        %7368 = vmatprep.subr.bf16.mxu0 0
        %7369 = vmatpush1.bf16.msra.mxu0 0
        %7370 = vmatprep.subr.bf16.mxu0 0
        %7371 = vmatpush1.bf16.msra.mxu0 0
        %7372 = vmatprep.subr.bf16.mxu0 0
        %7373 = vmatpush1.bf16.msra.mxu0 0
        %7374 = vmatprep.subr.bf16.mxu0 0
        %7375 = vmatpush1.bf16.msra.mxu0 0
        %7376 = vmatprep.subr.bf16.mxu0 0
        %7377 = vmatpush1.bf16.msra.mxu0 0
        %7378 = vmatprep.subr.bf16.mxu0 0
        %7379 = vmatpush1.bf16.msra.mxu0 0
        %7380 = vmatprep.subr.bf16.mxu0 0
        %7381 = vmatpush1.bf16.msra.mxu0 0
        %7382 = vmatprep.subr.bf16.mxu0 0
        %7383 = vmatpush1.bf16.msra.mxu0 0
        %7384 = vmatprep.subr.bf16.mxu0 0
        %7385 = vmatpush1.bf16.msra.mxu0 0
        %7386 = vmatprep.mubr.bf16.mxu0 0
        %7387 = vmatmul.mubr.bf16.gmra.mrb[0].mxu0 %v6879
        %v7388 = vpop.f32.mrb[0].mxu0
        %v7389 = vadd.f32 0.0, %v7388
        %v7390 = vpop.f32.mrb[0].mxu0
        %v7391 = vadd.f32 0.0, %v7390
        %v7392 = vpop.f32.mrb[0].mxu0
        %v7393 = vadd.f32 0.0, %v7392
        %v7394 = vpop.f32.mrb[0].mxu0
        %v7395 = vadd.f32 0.0, %v7394
        %7396 = vdwg.mxu0
        %7397 = vmatprep.subr.bf16.mxu0 %v3357
        %7398 = vmatpush1.bf16.msra.mxu0 %v3356
        %7399 = vmatprep.subr.bf16.mxu0 0
        %7400 = vmatpush1.bf16.msra.mxu0 0
        %7401 = vmatprep.subr.bf16.mxu0 0
        %7402 = vmatpush1.bf16.msra.mxu0 0
        %7403 = vmatprep.subr.bf16.mxu0 0
        %7404 = vmatpush1.bf16.msra.mxu0 0
        %7405 = vmatprep.subr.bf16.mxu0 0
        %7406 = vmatpush1.bf16.msra.mxu0 0
        %7407 = vmatprep.subr.bf16.mxu0 0
        %7408 = vmatpush1.bf16.msra.mxu0 0
        %7409 = vmatprep.subr.bf16.mxu0 0
        %7410 = vmatpush1.bf16.msra.mxu0 0
        %7411 = vmatprep.subr.bf16.mxu0 0
        %7412 = vmatpush1.bf16.msra.mxu0 0
        %7413 = vmatprep.subr.bf16.mxu0 0
        %7414 = vmatpush1.bf16.msra.mxu0 0
        %7415 = vmatprep.subr.bf16.mxu0 0
        %7416 = vmatpush1.bf16.msra.mxu0 0
        %7417 = vmatprep.subr.bf16.mxu0 0
        %7418 = vmatpush1.bf16.msra.mxu0 0
        %7419 = vmatprep.subr.bf16.mxu0 0
        %7420 = vmatpush1.bf16.msra.mxu0 0
        %7421 = vmatprep.subr.bf16.mxu0 0
        %7422 = vmatpush1.bf16.msra.mxu0 0
        %7423 = vmatprep.subr.bf16.mxu0 0
        %7424 = vmatpush1.bf16.msra.mxu0 0
        %7425 = vmatprep.subr.bf16.mxu0 0
        %7426 = vmatpush1.bf16.msra.mxu0 0
        %7427 = vmatprep.subr.bf16.mxu0 0
        %7428 = vmatpush1.bf16.msra.mxu0 0
        %7429 = vmatprep.mubr.bf16.mxu0 0
        %7430 = vmatmul.mubr.bf16.gmra.mrb[0].mxu0 %v6879
        %v7431 = vpop.f32.mrb[0].mxu0
        %v7432 = vadd.f32 0.0, %v7431
        %v7433 = vpop.f32.mrb[0].mxu0
        %v7434 = vadd.f32 0.0, %v7433
        %v7435 = vpop.f32.mrb[0].mxu0
        %v7436 = vadd.f32 0.0, %v7435
        %v7437 = vpop.f32.mrb[0].mxu0
        %v7438 = vadd.f32 0.0, %v7437
        %7439 = vdwg.mxu0
        %7440 = vmatprep.subr.bf16.mxu0 %v3365
        %7441 = vmatpush1.bf16.msra.mxu0 %v3364
        %7442 = vmatprep.subr.bf16.mxu0 0
        %7443 = vmatpush1.bf16.msra.mxu0 0
        %7444 = vmatprep.subr.bf16.mxu0 0
        %7445 = vmatpush1.bf16.msra.mxu0 0
        %7446 = vmatprep.subr.bf16.mxu0 0
        %7447 = vmatpush1.bf16.msra.mxu0 0
        %7448 = vmatprep.subr.bf16.mxu0 0
        %7449 = vmatpush1.bf16.msra.mxu0 0
        %7450 = vmatprep.subr.bf16.mxu0 0
        %7451 = vmatpush1.bf16.msra.mxu0 0
        %7452 = vmatprep.subr.bf16.mxu0 0
        %7453 = vmatpush1.bf16.msra.mxu0 0
        %7454 = vmatprep.subr.bf16.mxu0 0
        %7455 = vmatpush1.bf16.msra.mxu0 0
        %7456 = vmatprep.subr.bf16.mxu0 0
        %7457 = vmatpush1.bf16.msra.mxu0 0
        %7458 = vmatprep.subr.bf16.mxu0 0
        %7459 = vmatpush1.bf16.msra.mxu0 0
        %7460 = vmatprep.subr.bf16.mxu0 0
        %7461 = vmatpush1.bf16.msra.mxu0 0
        %7462 = vmatprep.subr.bf16.mxu0 0
        %7463 = vmatpush1.bf16.msra.mxu0 0
        %7464 = vmatprep.subr.bf16.mxu0 0
        %7465 = vmatpush1.bf16.msra.mxu0 0
        %7466 = vmatprep.subr.bf16.mxu0 0
        %7467 = vmatpush1.bf16.msra.mxu0 0
        %7468 = vmatprep.subr.bf16.mxu0 0
        %7469 = vmatpush1.bf16.msra.mxu0 0
        %7470 = vmatprep.subr.bf16.mxu0 0
        %7471 = vmatpush1.bf16.msra.mxu0 0
        %7472 = vmatprep.mubr.bf16.mxu0 0
        %7473 = vmatmul.mubr.bf16.gmra.mrb[0].mxu0 %v6879
        %v7474 = vpop.f32.mrb[0].mxu0
        %v7475 = vadd.f32 0.0, %v7474
        %v7476 = vpop.f32.mrb[0].mxu0
        %v7477 = vadd.f32 0.0, %v7476
        %v7478 = vpop.f32.mrb[0].mxu0
        %v7479 = vadd.f32 0.0, %v7478
        %v7480 = vpop.f32.mrb[0].mxu0
        %v7481 = vadd.f32 0.0, %v7480
        %7482 = vdwg.mxu0
        %7483 = vmatprep.subr.bf16.mxu0 %v3373
        %7484 = vmatpush1.bf16.msra.mxu0 %v3372
        %7485 = vmatprep.subr.bf16.mxu0 0
        %7486 = vmatpush1.bf16.msra.mxu0 0
        %7487 = vmatprep.subr.bf16.mxu0 0
        %7488 = vmatpush1.bf16.msra.mxu0 0
        %7489 = vmatprep.subr.bf16.mxu0 0
        %7490 = vmatpush1.bf16.msra.mxu0 0
        %7491 = vmatprep.subr.bf16.mxu0 0
        %7492 = vmatpush1.bf16.msra.mxu0 0
        %7493 = vmatprep.subr.bf16.mxu0 0
        %7494 = vmatpush1.bf16.msra.mxu0 0
        %7495 = vmatprep.subr.bf16.mxu0 0
        %7496 = vmatpush1.bf16.msra.mxu0 0
        %7497 = vmatprep.subr.bf16.mxu0 0
        %7498 = vmatpush1.bf16.msra.mxu0 0
        %7499 = vmatprep.subr.bf16.mxu0 0
        %7500 = vmatpush1.bf16.msra.mxu0 0
        %7501 = vmatprep.subr.bf16.mxu0 0
        %7502 = vmatpush1.bf16.msra.mxu0 0
        %7503 = vmatprep.subr.bf16.mxu0 0
        %7504 = vmatpush1.bf16.msra.mxu0 0
        %7505 = vmatprep.subr.bf16.mxu0 0
        %7506 = vmatpush1.bf16.msra.mxu0 0
        %7507 = vmatprep.subr.bf16.mxu0 0
        %7508 = vmatpush1.bf16.msra.mxu0 0
        %7509 = vmatprep.subr.bf16.mxu0 0
        %7510 = vmatpush1.bf16.msra.mxu0 0
        %7511 = vmatprep.subr.bf16.mxu0 0
        %7512 = vmatpush1.bf16.msra.mxu0 0
        %7513 = vmatprep.subr.bf16.mxu0 0
        %7514 = vmatpush1.bf16.msra.mxu0 0
        %7515 = vmatprep.mubr.bf16.mxu0 0
        %7516 = vmatmul.mubr.bf16.gmra.mrb[0].mxu0 %v6879
        %v7517 = vpop.f32.mrb[0].mxu0
        %v7518 = vadd.f32 0.0, %v7517
        %v7519 = vpop.f32.mrb[0].mxu0
        %v7520 = vadd.f32 0.0, %v7519
        %v7521 = vpop.f32.mrb[0].mxu0
        %v7522 = vadd.f32 0.0, %v7521
        %v7523 = vpop.f32.mrb[0].mxu0
        %v7524 = vadd.f32 0.0, %v7523
        %7525 = vdwg.mxu0
        %7526 = vmatprep.subr.bf16.mxu0 %v3381
        %7527 = vmatpush1.bf16.msra.mxu0 %v3380
        %7528 = vmatprep.subr.bf16.mxu0 0
        %7529 = vmatpush1.bf16.msra.mxu0 0
        %7530 = vmatprep.subr.bf16.mxu0 0
        %7531 = vmatpush1.bf16.msra.mxu0 0
        %7532 = vmatprep.subr.bf16.mxu0 0
        %7533 = vmatpush1.bf16.msra.mxu0 0
        %7534 = vmatprep.subr.bf16.mxu0 0
        %7535 = vmatpush1.bf16.msra.mxu0 0
        %7536 = vmatprep.subr.bf16.mxu0 0
        %7537 = vmatpush1.bf16.msra.mxu0 0
        %7538 = vmatprep.subr.bf16.mxu0 0
        %7539 = vmatpush1.bf16.msra.mxu0 0
        %7540 = vmatprep.subr.bf16.mxu0 0
        %7541 = vmatpush1.bf16.msra.mxu0 0
        %7542 = vmatprep.subr.bf16.mxu0 0
        %7543 = vmatpush1.bf16.msra.mxu0 0
        %7544 = vmatprep.subr.bf16.mxu0 0
        %7545 = vmatpush1.bf16.msra.mxu0 0
        %7546 = vmatprep.subr.bf16.mxu0 0
        %7547 = vmatpush1.bf16.msra.mxu0 0
        %7548 = vmatprep.subr.bf16.mxu0 0
        %7549 = vmatpush1.bf16.msra.mxu0 0
        %7550 = vmatprep.subr.bf16.mxu0 0
        %7551 = vmatpush1.bf16.msra.mxu0 0
        %7552 = vmatprep.subr.bf16.mxu0 0
        %7553 = vmatpush1.bf16.msra.mxu0 0
        %7554 = vmatprep.subr.bf16.mxu0 0
        %7555 = vmatpush1.bf16.msra.mxu0 0
        %7556 = vmatprep.subr.bf16.mxu0 0
        %7557 = vmatpush1.bf16.msra.mxu0 0
        %7558 = vmatprep.mubr.bf16.mxu0 0
        %7559 = vmatmul.mubr.bf16.gmra.mrb[0].mxu0 %v6879
        %v7560 = vpop.f32.mrb[0].mxu0
        %v7561 = vadd.f32 0.0, %v7560
        %v7562 = vpop.f32.mrb[0].mxu0
        %v7563 = vadd.f32 0.0, %v7562
        %v7564 = vpop.f32.mrb[0].mxu0
        %v7565 = vadd.f32 0.0, %v7564
        %v7566 = vpop.f32.mrb[0].mxu0
        %v7567 = vadd.f32 0.0, %v7566
        %7568 = vdwg.mxu0
        %v7569 = vpack.c.bf16 %v6920, %v6916
        %v7570 = vpack.c.bf16 %v6922, %v6918
        %v7571 = vpack.c.bf16 %v6963, %v6959
        %v7572 = vpack.c.bf16 %v6965, %v6961
        %v7573 = vpack.c.bf16 %v7006, %v7002
        %v7574 = vpack.c.bf16 %v7008, %v7004
        %v7575 = vpack.c.bf16 %v7049, %v7045
        %v7576 = vpack.c.bf16 %v7051, %v7047
        %v7577 = vpack.c.bf16 %v7092, %v7088
        %v7578 = vpack.c.bf16 %v7094, %v7090
        %v7579 = vpack.c.bf16 %v7135, %v7131
        %v7580 = vpack.c.bf16 %v7137, %v7133
        %v7581 = vpack.c.bf16 %v7178, %v7174
        %v7582 = vpack.c.bf16 %v7180, %v7176
        %v7583 = vpack.c.bf16 %v7221, %v7217
        %v7584 = vpack.c.bf16 %v7223, %v7219
        %v7585 = vpack.c.bf16 %v7264, %v7260
        %v7586 = vpack.c.bf16 %v7266, %v7262
        %v7587 = vpack.c.bf16 %v7307, %v7303
        %v7588 = vpack.c.bf16 %v7309, %v7305
        %v7589 = vpack.c.bf16 %v7350, %v7346
        %v7590 = vpack.c.bf16 %v7352, %v7348
        %v7591 = vpack.c.bf16 %v7393, %v7389
        %v7592 = vpack.c.bf16 %v7395, %v7391
        %v7593 = vpack.c.bf16 %v7436, %v7432
        %v7594 = vpack.c.bf16 %v7438, %v7434
        %v7595 = vpack.c.bf16 %v7479, %v7475
        %v7596 = vpack.c.bf16 %v7481, %v7477
        %v7597 = vpack.c.bf16 %v7522, %v7518
        %v7598 = vpack.c.bf16 %v7524, %v7520
        %v7599 = vpack.c.bf16 %v7565, %v7561
        %v7600 = vpack.c.bf16 %v7567, %v7563
        %v7601 = vld [vmem:[%s665] sm:$0xff]
        %v7602 = vld [vmem:[%s665 + $0x8] sm:$0xff]
        %v7603 = vld [vmem:[%s665 + $0x10] sm:$0xff]
        %v7604 = vld [vmem:[%s665 + $0x18] sm:$0xff]
        %v7605 = vld [vmem:[%s665 + $0x20] sm:$0xff]
        %v7606 = vld [vmem:[%s665 + $0x28] sm:$0xff]
        %v7607 = vld [vmem:[%s665 + $0x30] sm:$0xff]
        %v7608 = vld [vmem:[%s665 + $0x38] sm:$0xff]
        %v7609 = vld [vmem:[%s665 + $0x40] sm:$0xff]
        %v7610 = vld [vmem:[%s665 + $0x48] sm:$0xff]
        %v7611 = vld [vmem:[%s665 + $0x50] sm:$0xff]
        %v7612 = vld [vmem:[%s665 + $0x58] sm:$0xff]
        %v7613 = vld [vmem:[%s665 + $0x60] sm:$0xff]
        %v7614 = vld [vmem:[%s665 + $0x68] sm:$0xff]
        %v7615 = vld [vmem:[%s665 + $0x70] sm:$0xff]
        %v7616 = vld [vmem:[%s665 + $0x78] sm:$0xff]
        %v7617 = vld [vmem:[%s665 + $0x80] sm:$0xff]
        %v7618 = vld [vmem:[%s665 + $0x88] sm:$0xff]
        %v7619 = vld [vmem:[%s665 + $0x90] sm:$0xff]
        %v7620 = vld [vmem:[%s665 + $0x98] sm:$0xff]
        %v7621 = vld [vmem:[%s665 + $0xa0] sm:$0xff]
        %v7622 = vld [vmem:[%s665 + $0xa8] sm:$0xff]
        %v7623 = vld [vmem:[%s665 + $0xb0] sm:$0xff]
        %v7624 = vld [vmem:[%s665 + $0xb8] sm:$0xff]
        %v7625 = vld [vmem:[%s665 + $0xc0] sm:$0xff]
        %v7626 = vld [vmem:[%s665 + $0xc8] sm:$0xff]
        %v7627 = vld [vmem:[%s665 + $0xd0] sm:$0xff]
        %v7628 = vld [vmem:[%s665 + $0xd8] sm:$0xff]
        %v7629 = vld [vmem:[%s665 + $0xe0] sm:$0xff]
        %v7630 = vld [vmem:[%s665 + $0xe8] sm:$0xff]
        %v7631 = vld [vmem:[%s665 + $0xf0] sm:$0xff]
        %v7632 = vld [vmem:[%s665 + $0xf8] sm:$0xff]
        %v7633 = vld [vmem:[%s674] sm:$0xff]
        %v7634 = vld [vmem:[%s674 + $0x8] sm:$0xff]
        %v7635 = vld [vmem:[%s674 + $0x10] sm:$0xff]
        %v7636 = vld [vmem:[%s674 + $0x18] sm:$0xff]
        %v7637 = vld [vmem:[%s674 + $0x20] sm:$0xff]
        %v7638 = vld [vmem:[%s674 + $0x28] sm:$0xff]
        %v7639 = vld [vmem:[%s674 + $0x30] sm:$0xff]
        %v7640 = vld [vmem:[%s674 + $0x38] sm:$0xff]
        %v7641 = vld [vmem:[%s674 + $0x40] sm:$0xff]
        %v7642 = vld [vmem:[%s674 + $0x48] sm:$0xff]
        %v7643 = vld [vmem:[%s674 + $0x50] sm:$0xff]
        %v7644 = vld [vmem:[%s674 + $0x58] sm:$0xff]
        %v7645 = vld [vmem:[%s674 + $0x60] sm:$0xff]
        %v7646 = vld [vmem:[%s674 + $0x68] sm:$0xff]
        %v7647 = vld [vmem:[%s674 + $0x70] sm:$0xff]
        %v7648 = vld [vmem:[%s674 + $0x78] sm:$0xff]
        %v7649 = vld [vmem:[%s674 + $0x80] sm:$0xff]
        %v7650 = vld [vmem:[%s674 + $0x88] sm:$0xff]
        %v7651 = vld [vmem:[%s674 + $0x90] sm:$0xff]
        %v7652 = vld [vmem:[%s674 + $0x98] sm:$0xff]
        %v7653 = vld [vmem:[%s674 + $0xa0] sm:$0xff]
        %v7654 = vld [vmem:[%s674 + $0xa8] sm:$0xff]
        %v7655 = vld [vmem:[%s674 + $0xb0] sm:$0xff]
        %v7656 = vld [vmem:[%s674 + $0xb8] sm:$0xff]
        %v7657 = vld [vmem:[%s674 + $0xc0] sm:$0xff]
        %v7658 = vld [vmem:[%s674 + $0xc8] sm:$0xff]
        %v7659 = vld [vmem:[%s674 + $0xd0] sm:$0xff]
        %v7660 = vld [vmem:[%s674 + $0xd8] sm:$0xff]
        %v7661 = vld [vmem:[%s674 + $0xe0] sm:$0xff]
        %v7662 = vld [vmem:[%s674 + $0xe8] sm:$0xff]
        %v7663 = vld [vmem:[%s674 + $0xf0] sm:$0xff]
        %v7664 = vld [vmem:[%s674 + $0xf8] sm:$0xff]
        %v7697 = vunpack.c.l.b16 %v7633
        %v7698 = vunpack.c.h.b16 %v7633
        %v7699 = vunpack.c.l.b16 %v7634
        %v7700 = vunpack.c.h.b16 %v7634
        %v7701 = vunpack.c.l.b16 %v7635
        %v7702 = vunpack.c.h.b16 %v7635
        %v7703 = vunpack.c.l.b16 %v7636
        %v7704 = vunpack.c.h.b16 %v7636
        %v7705 = vunpack.c.l.b16 %v7637
        %v7706 = vunpack.c.h.b16 %v7637
        %v7707 = vunpack.c.l.b16 %v7638
        %v7708 = vunpack.c.h.b16 %v7638
        %v7709 = vunpack.c.l.b16 %v7639
        %v7710 = vunpack.c.h.b16 %v7639
        %v7711 = vunpack.c.l.b16 %v7640
        %v7712 = vunpack.c.h.b16 %v7640
        %v7713 = vunpack.c.l.b16 %v7641
        %v7714 = vunpack.c.h.b16 %v7641
        %v7715 = vunpack.c.l.b16 %v7642
        %v7716 = vunpack.c.h.b16 %v7642
        %v7717 = vunpack.c.l.b16 %v7643
        %v7718 = vunpack.c.h.b16 %v7643
        %v7719 = vunpack.c.l.b16 %v7644
        %v7720 = vunpack.c.h.b16 %v7644
        %v7721 = vunpack.c.l.b16 %v7645
        %v7722 = vunpack.c.h.b16 %v7645
        %v7723 = vunpack.c.l.b16 %v7646
        %v7724 = vunpack.c.h.b16 %v7646
        %v7725 = vunpack.c.l.b16 %v7647
        %v7726 = vunpack.c.h.b16 %v7647
        %v7727 = vunpack.c.l.b16 %v7648
        %v7728 = vunpack.c.h.b16 %v7648
        %v7729 = vunpack.c.l.b16 %v7649
        %v7730 = vunpack.c.h.b16 %v7649
        %v7731 = vunpack.c.l.b16 %v7650
        %v7732 = vunpack.c.h.b16 %v7650
        %v7733 = vunpack.c.l.b16 %v7651
        %v7734 = vunpack.c.h.b16 %v7651
        %v7735 = vunpack.c.l.b16 %v7652
        %v7736 = vunpack.c.h.b16 %v7652
        %v7737 = vunpack.c.l.b16 %v7653
        %v7738 = vunpack.c.h.b16 %v7653
        %v7739 = vunpack.c.l.b16 %v7654
        %v7740 = vunpack.c.h.b16 %v7654
        %v7741 = vunpack.c.l.b16 %v7655
        %v7742 = vunpack.c.h.b16 %v7655
        %v7743 = vunpack.c.l.b16 %v7656
        %v7744 = vunpack.c.h.b16 %v7656
        %v7745 = vunpack.c.l.b16 %v7657
        %v7746 = vunpack.c.h.b16 %v7657
        %v7747 = vunpack.c.l.b16 %v7658
        %v7748 = vunpack.c.h.b16 %v7658
        %v7749 = vunpack.c.l.b16 %v7659
        %v7750 = vunpack.c.h.b16 %v7659
        %v7751 = vunpack.c.l.b16 %v7660
        %v7752 = vunpack.c.h.b16 %v7660
        %v7753 = vunpack.c.l.b16 %v7661
        %v7754 = vunpack.c.h.b16 %v7661
        %v7755 = vunpack.c.l.b16 %v7662
        %v7756 = vunpack.c.h.b16 %v7662
        %v7757 = vunpack.c.l.b16 %v7663
        %v7758 = vunpack.c.h.b16 %v7663
        %v7759 = vunpack.c.l.b16 %v7664
        %v7760 = vunpack.c.h.b16 %v7664
        %v7761 = vpack.c.b16 %v7699, %v7697
        %v7762 = vpack.c.b16 %v7700, %v7698
        %v7763 = vpack.c.b16 %v7703, %v7701
        %v7764 = vpack.c.b16 %v7704, %v7702
        %v7765 = vpack.c.b16 %v7707, %v7705
        %v7766 = vpack.c.b16 %v7708, %v7706
        %v7767 = vpack.c.b16 %v7711, %v7709
        %v7768 = vpack.c.b16 %v7712, %v7710
        %v7769 = vpack.c.b16 %v7715, %v7713
        %v7770 = vpack.c.b16 %v7716, %v7714
        %v7771 = vpack.c.b16 %v7719, %v7717
        %v7772 = vpack.c.b16 %v7720, %v7718
        %v7773 = vpack.c.b16 %v7723, %v7721
        %v7774 = vpack.c.b16 %v7724, %v7722
        %v7775 = vpack.c.b16 %v7727, %v7725
        %v7776 = vpack.c.b16 %v7728, %v7726
        %v7777 = vpack.c.b16 %v7731, %v7729
        %v7778 = vpack.c.b16 %v7732, %v7730
        %v7779 = vpack.c.b16 %v7735, %v7733
        %v7780 = vpack.c.b16 %v7736, %v7734
        %v7781 = vpack.c.b16 %v7739, %v7737
        %v7782 = vpack.c.b16 %v7740, %v7738
        %v7783 = vpack.c.b16 %v7743, %v7741
        %v7784 = vpack.c.b16 %v7744, %v7742
        %v7785 = vpack.c.b16 %v7747, %v7745
        %v7786 = vpack.c.b16 %v7748, %v7746
        %v7787 = vpack.c.b16 %v7751, %v7749
        %v7788 = vpack.c.b16 %v7752, %v7750
        %v7789 = vpack.c.b16 %v7755, %v7753
        %v7790 = vpack.c.b16 %v7756, %v7754
        %v7791 = vpack.c.b16 %v7759, %v7757
        %v7792 = vpack.c.b16 %v7760, %v7758
        %7825 = vmatprep.subr.bf16.mxu0 %v7762
        %7826 = vmatpush1.bf16.msra.mxu0 %v7761
        %7827 = vmatprep.subr.bf16.mxu0 %v7764
        %7828 = vmatpush1.bf16.msra.mxu0 %v7763
        %7829 = vmatprep.subr.bf16.mxu0 %v7766
        %7830 = vmatpush1.bf16.msra.mxu0 %v7765
        %7831 = vmatprep.subr.bf16.mxu0 %v7768
        %7832 = vmatpush1.bf16.msra.mxu0 %v7767
        %7833 = vmatprep.subr.bf16.mxu0 %v7770
        %7834 = vmatpush1.bf16.msra.mxu0 %v7769
        %7835 = vmatprep.subr.bf16.mxu0 %v7772
        %7836 = vmatpush1.bf16.msra.mxu0 %v7771
        %7837 = vmatprep.subr.bf16.mxu0 %v7774
        %7838 = vmatpush1.bf16.msra.mxu0 %v7773
        %7839 = vmatprep.subr.bf16.mxu0 %v7776
        %7840 = vmatpush1.bf16.msra.mxu0 %v7775
        %7841 = vmatprep.subr.bf16.mxu0 %v7778
        %7842 = vmatpush1.bf16.msra.mxu0 %v7777
        %7843 = vmatprep.subr.bf16.mxu0 %v7780
        %7844 = vmatpush1.bf16.msra.mxu0 %v7779
        %7845 = vmatprep.subr.bf16.mxu0 %v7782
        %7846 = vmatpush1.bf16.msra.mxu0 %v7781
        %7847 = vmatprep.subr.bf16.mxu0 %v7784
        %7848 = vmatpush1.bf16.msra.mxu0 %v7783
        %7849 = vmatprep.subr.bf16.mxu0 %v7786
        %7850 = vmatpush1.bf16.msra.mxu0 %v7785
        %7851 = vmatprep.subr.bf16.mxu0 %v7788
        %7852 = vmatpush1.bf16.msra.mxu0 %v7787
        %7853 = vmatprep.subr.bf16.mxu0 %v7790
        %7854 = vmatpush1.bf16.msra.mxu0 %v7789
        %7855 = vmatprep.subr.bf16.mxu0 %v7792
        %7856 = vmatpush1.bf16.msra.mxu0 %v7791
        %7857 = vmatprep.mubr.bf16.mxu0 %v7570
        %7858 = vmatmul.mubr.bf16.gmra.mrb[0].mxu0 %v7569
        %v7859 = vpop.f32.mrb[0].mxu0
        %v7860 = vadd.f32 0.0, %v7859
        %v7861 = vpop.f32.mrb[0].mxu0
        %v7862 = vadd.f32 0.0, %v7861
        %v7863 = vpop.f32.mrb[0].mxu0
        %v7864 = vadd.f32 0.0, %v7863
        %v7865 = vpop.f32.mrb[0].mxu0
        %v7866 = vadd.f32 0.0, %v7865
        %7867 = vmatprep.mubr.bf16.mxu0 %v7572
        %7868 = vmatmul.mubr.bf16.gmra.mrb[0].mxu0 %v7571
        %v7869 = vpop.f32.mrb[0].mxu0
        %v7870 = vadd.f32 0.0, %v7869
        %v7871 = vpop.f32.mrb[0].mxu0
        %v7872 = vadd.f32 0.0, %v7871
        %v7873 = vpop.f32.mrb[0].mxu0
        %v7874 = vadd.f32 0.0, %v7873
        %v7875 = vpop.f32.mrb[0].mxu0
        %v7876 = vadd.f32 0.0, %v7875
        %7877 = vmatprep.mubr.bf16.mxu0 %v7574
        %7878 = vmatmul.mubr.bf16.gmra.mrb[0].mxu0 %v7573
        %v7879 = vpop.f32.mrb[0].mxu0
        %v7880 = vadd.f32 0.0, %v7879
        %v7881 = vpop.f32.mrb[0].mxu0
        %v7882 = vadd.f32 0.0, %v7881
        %v7883 = vpop.f32.mrb[0].mxu0
        %v7884 = vadd.f32 0.0, %v7883
        %v7885 = vpop.f32.mrb[0].mxu0
        %v7886 = vadd.f32 0.0, %v7885
        %7887 = vmatprep.mubr.bf16.mxu0 %v7576
        %7888 = vmatmul.mubr.bf16.gmra.mrb[0].mxu0 %v7575
        %v7889 = vpop.f32.mrb[0].mxu0
        %v7890 = vadd.f32 0.0, %v7889
        %v7891 = vpop.f32.mrb[0].mxu0
        %v7892 = vadd.f32 0.0, %v7891
        %v7893 = vpop.f32.mrb[0].mxu0
        %v7894 = vadd.f32 0.0, %v7893
        %v7895 = vpop.f32.mrb[0].mxu0
        %v7896 = vadd.f32 0.0, %v7895
        %7897 = vmatprep.mubr.bf16.mxu0 %v7578
        %7898 = vmatmul.mubr.bf16.gmra.mrb[0].mxu0 %v7577
        %v7899 = vpop.f32.mrb[0].mxu0
        %v7900 = vadd.f32 0.0, %v7899
        %v7901 = vpop.f32.mrb[0].mxu0
        %v7902 = vadd.f32 0.0, %v7901
        %v7903 = vpop.f32.mrb[0].mxu0
        %v7904 = vadd.f32 0.0, %v7903
        %v7905 = vpop.f32.mrb[0].mxu0
        %v7906 = vadd.f32 0.0, %v7905
        %7907 = vmatprep.mubr.bf16.mxu0 %v7580
        %7908 = vmatmul.mubr.bf16.gmra.mrb[0].mxu0 %v7579
        %v7909 = vpop.f32.mrb[0].mxu0
        %v7910 = vadd.f32 0.0, %v7909
        %v7911 = vpop.f32.mrb[0].mxu0
        %v7912 = vadd.f32 0.0, %v7911
        %v7913 = vpop.f32.mrb[0].mxu0
        %v7914 = vadd.f32 0.0, %v7913
        %v7915 = vpop.f32.mrb[0].mxu0
        %v7916 = vadd.f32 0.0, %v7915
        %7917 = vmatprep.mubr.bf16.mxu0 %v7582
        %7918 = vmatmul.mubr.bf16.gmra.mrb[0].mxu0 %v7581
        %v7919 = vpop.f32.mrb[0].mxu0
        %v7920 = vadd.f32 0.0, %v7919
        %v7921 = vpop.f32.mrb[0].mxu0
        %v7922 = vadd.f32 0.0, %v7921
        %v7923 = vpop.f32.mrb[0].mxu0
        %v7924 = vadd.f32 0.0, %v7923
        %v7925 = vpop.f32.mrb[0].mxu0
        %v7926 = vadd.f32 0.0, %v7925
        %7927 = vmatprep.mubr.bf16.mxu0 %v7584
        %7928 = vmatmul.mubr.bf16.gmra.mrb[0].mxu0 %v7583
        %v7929 = vpop.f32.mrb[0].mxu0
        %v7930 = vadd.f32 0.0, %v7929
        %v7931 = vpop.f32.mrb[0].mxu0
        %v7932 = vadd.f32 0.0, %v7931
        %v7933 = vpop.f32.mrb[0].mxu0
        %v7934 = vadd.f32 0.0, %v7933
        %v7935 = vpop.f32.mrb[0].mxu0
        %v7936 = vadd.f32 0.0, %v7935
        %7937 = vmatprep.mubr.bf16.mxu0 %v7586
        %7938 = vmatmul.mubr.bf16.gmra.mrb[0].mxu0 %v7585
        %v7939 = vpop.f32.mrb[0].mxu0
        %v7940 = vadd.f32 0.0, %v7939
        %v7941 = vpop.f32.mrb[0].mxu0
        %v7942 = vadd.f32 0.0, %v7941
        %v7943 = vpop.f32.mrb[0].mxu0
        %v7944 = vadd.f32 0.0, %v7943
        %v7945 = vpop.f32.mrb[0].mxu0
        %v7946 = vadd.f32 0.0, %v7945
        %7947 = vmatprep.mubr.bf16.mxu0 %v7588
        %7948 = vmatmul.mubr.bf16.gmra.mrb[0].mxu0 %v7587
        %v7949 = vpop.f32.mrb[0].mxu0
        %v7950 = vadd.f32 0.0, %v7949
        %v7951 = vpop.f32.mrb[0].mxu0
        %v7952 = vadd.f32 0.0, %v7951
        %v7953 = vpop.f32.mrb[0].mxu0
        %v7954 = vadd.f32 0.0, %v7953
        %v7955 = vpop.f32.mrb[0].mxu0
        %v7956 = vadd.f32 0.0, %v7955
        %7957 = vmatprep.mubr.bf16.mxu0 %v7590
        %7958 = vmatmul.mubr.bf16.gmra.mrb[0].mxu0 %v7589
        %v7959 = vpop.f32.mrb[0].mxu0
        %v7960 = vadd.f32 0.0, %v7959
        %v7961 = vpop.f32.mrb[0].mxu0
        %v7962 = vadd.f32 0.0, %v7961
        %v7963 = vpop.f32.mrb[0].mxu0
        %v7964 = vadd.f32 0.0, %v7963
        %v7965 = vpop.f32.mrb[0].mxu0
        %v7966 = vadd.f32 0.0, %v7965
        %7967 = vmatprep.mubr.bf16.mxu0 %v7592
        %7968 = vmatmul.mubr.bf16.gmra.mrb[0].mxu0 %v7591
        %v7969 = vpop.f32.mrb[0].mxu0
        %v7970 = vadd.f32 0.0, %v7969
        %v7971 = vpop.f32.mrb[0].mxu0
        %v7972 = vadd.f32 0.0, %v7971
        %v7973 = vpop.f32.mrb[0].mxu0
        %v7974 = vadd.f32 0.0, %v7973
        %v7975 = vpop.f32.mrb[0].mxu0
        %v7976 = vadd.f32 0.0, %v7975
        %7977 = vmatprep.mubr.bf16.mxu0 %v7594
        %7978 = vmatmul.mubr.bf16.gmra.mrb[0].mxu0 %v7593
        %v7979 = vpop.f32.mrb[0].mxu0
        %v7980 = vadd.f32 0.0, %v7979
        %v7981 = vpop.f32.mrb[0].mxu0
        %v7982 = vadd.f32 0.0, %v7981
        %v7983 = vpop.f32.mrb[0].mxu0
        %v7984 = vadd.f32 0.0, %v7983
        %v7985 = vpop.f32.mrb[0].mxu0
        %v7986 = vadd.f32 0.0, %v7985
        %7987 = vmatprep.mubr.bf16.mxu0 %v7596
        %7988 = vmatmul.mubr.bf16.gmra.mrb[0].mxu0 %v7595
        %v7989 = vpop.f32.mrb[0].mxu0
        %v7990 = vadd.f32 0.0, %v7989
        %v7991 = vpop.f32.mrb[0].mxu0
        %v7992 = vadd.f32 0.0, %v7991
        %v7993 = vpop.f32.mrb[0].mxu0
        %v7994 = vadd.f32 0.0, %v7993
        %v7995 = vpop.f32.mrb[0].mxu0
        %v7996 = vadd.f32 0.0, %v7995
        %7997 = vmatprep.mubr.bf16.mxu0 %v7598
        %7998 = vmatmul.mubr.bf16.gmra.mrb[0].mxu0 %v7597
        %v7999 = vpop.f32.mrb[0].mxu0
        %v8000 = vadd.f32 0.0, %v7999
        %v8001 = vpop.f32.mrb[0].mxu0
        %v8002 = vadd.f32 0.0, %v8001
        %v8003 = vpop.f32.mrb[0].mxu0
        %v8004 = vadd.f32 0.0, %v8003
        %v8005 = vpop.f32.mrb[0].mxu0
        %v8006 = vadd.f32 0.0, %v8005
        %8007 = vmatprep.mubr.bf16.mxu0 %v7600
        %8008 = vmatmul.mubr.bf16.gmra.mrb[0].mxu0 %v7599
        %v8009 = vpop.f32.mrb[0].mxu0
        %v8010 = vadd.f32 0.0, %v8009
        %v8011 = vpop.f32.mrb[0].mxu0
        %v8012 = vadd.f32 0.0, %v8011
        %v8013 = vpop.f32.mrb[0].mxu0
        %v8014 = vadd.f32 0.0, %v8013
        %v8015 = vpop.f32.mrb[0].mxu0
        %v8016 = vadd.f32 0.0, %v8015
        %8017 = vdwg.mxu0
        %v8050 = vunpack.c.l.b16 %v7601
        %v8051 = vunpack.c.h.b16 %v7601
        %v8052 = vunpack.c.l.b16 %v7602
        %v8053 = vunpack.c.h.b16 %v7602
        %v8054 = vunpack.c.l.b16 %v7603
        %v8055 = vunpack.c.h.b16 %v7603
        %v8056 = vunpack.c.l.b16 %v7604
        %v8057 = vunpack.c.h.b16 %v7604
        %v8058 = vunpack.c.l.b16 %v7605
        %v8059 = vunpack.c.h.b16 %v7605
        %v8060 = vunpack.c.l.b16 %v7606
        %v8061 = vunpack.c.h.b16 %v7606
        %v8062 = vunpack.c.l.b16 %v7607
        %v8063 = vunpack.c.h.b16 %v7607
        %v8064 = vunpack.c.l.b16 %v7608
        %v8065 = vunpack.c.h.b16 %v7608
        %v8066 = vunpack.c.l.b16 %v7609
        %v8067 = vunpack.c.h.b16 %v7609
        %v8068 = vunpack.c.l.b16 %v7610
        %v8069 = vunpack.c.h.b16 %v7610
        %v8070 = vunpack.c.l.b16 %v7611
        %v8071 = vunpack.c.h.b16 %v7611
        %v8072 = vunpack.c.l.b16 %v7612
        %v8073 = vunpack.c.h.b16 %v7612
        %v8074 = vunpack.c.l.b16 %v7613
        %v8075 = vunpack.c.h.b16 %v7613
        %v8076 = vunpack.c.l.b16 %v7614
        %v8077 = vunpack.c.h.b16 %v7614
        %v8078 = vunpack.c.l.b16 %v7615
        %v8079 = vunpack.c.h.b16 %v7615
        %v8080 = vunpack.c.l.b16 %v7616
        %v8081 = vunpack.c.h.b16 %v7616
        %v8082 = vunpack.c.l.b16 %v7617
        %v8083 = vunpack.c.h.b16 %v7617
        %v8084 = vunpack.c.l.b16 %v7618
        %v8085 = vunpack.c.h.b16 %v7618
        %v8086 = vunpack.c.l.b16 %v7619
        %v8087 = vunpack.c.h.b16 %v7619
        %v8088 = vunpack.c.l.b16 %v7620
        %v8089 = vunpack.c.h.b16 %v7620
        %v8090 = vunpack.c.l.b16 %v7621
        %v8091 = vunpack.c.h.b16 %v7621
        %v8092 = vunpack.c.l.b16 %v7622
        %v8093 = vunpack.c.h.b16 %v7622
        %v8094 = vunpack.c.l.b16 %v7623
        %v8095 = vunpack.c.h.b16 %v7623
        %v8096 = vunpack.c.l.b16 %v7624
        %v8097 = vunpack.c.h.b16 %v7624
        %v8098 = vunpack.c.l.b16 %v7625
        %v8099 = vunpack.c.h.b16 %v7625
        %v8100 = vunpack.c.l.b16 %v7626
        %v8101 = vunpack.c.h.b16 %v7626
        %v8102 = vunpack.c.l.b16 %v7627
        %v8103 = vunpack.c.h.b16 %v7627
        %v8104 = vunpack.c.l.b16 %v7628
        %v8105 = vunpack.c.h.b16 %v7628
        %v8106 = vunpack.c.l.b16 %v7629
        %v8107 = vunpack.c.h.b16 %v7629
        %v8108 = vunpack.c.l.b16 %v7630
        %v8109 = vunpack.c.h.b16 %v7630
        %v8110 = vunpack.c.l.b16 %v7631
        %v8111 = vunpack.c.h.b16 %v7631
        %v8112 = vunpack.c.l.b16 %v7632
        %v8113 = vunpack.c.h.b16 %v7632
        %v8114 = vpack.c.b16 %v8052, %v8050
        %v8115 = vpack.c.b16 %v8053, %v8051
        %v8116 = vpack.c.b16 %v8056, %v8054
        %v8117 = vpack.c.b16 %v8057, %v8055
        %v8118 = vpack.c.b16 %v8060, %v8058
        %v8119 = vpack.c.b16 %v8061, %v8059
        %v8120 = vpack.c.b16 %v8064, %v8062
        %v8121 = vpack.c.b16 %v8065, %v8063
        %v8122 = vpack.c.b16 %v8068, %v8066
        %v8123 = vpack.c.b16 %v8069, %v8067
        %v8124 = vpack.c.b16 %v8072, %v8070
        %v8125 = vpack.c.b16 %v8073, %v8071
        %v8126 = vpack.c.b16 %v8076, %v8074
        %v8127 = vpack.c.b16 %v8077, %v8075
        %v8128 = vpack.c.b16 %v8080, %v8078
        %v8129 = vpack.c.b16 %v8081, %v8079
        %v8130 = vpack.c.b16 %v8084, %v8082
        %v8131 = vpack.c.b16 %v8085, %v8083
        %v8132 = vpack.c.b16 %v8088, %v8086
        %v8133 = vpack.c.b16 %v8089, %v8087
        %v8134 = vpack.c.b16 %v8092, %v8090
        %v8135 = vpack.c.b16 %v8093, %v8091
        %v8136 = vpack.c.b16 %v8096, %v8094
        %v8137 = vpack.c.b16 %v8097, %v8095
        %v8138 = vpack.c.b16 %v8100, %v8098
        %v8139 = vpack.c.b16 %v8101, %v8099
        %v8140 = vpack.c.b16 %v8104, %v8102
        %v8141 = vpack.c.b16 %v8105, %v8103
        %v8142 = vpack.c.b16 %v8108, %v8106
        %v8143 = vpack.c.b16 %v8109, %v8107
        %v8144 = vpack.c.b16 %v8112, %v8110
        %v8145 = vpack.c.b16 %v8113, %v8111
        %8178 = vmatprep.subr.bf16.mxu0 %v8115
        %8179 = vmatpush1.bf16.msra.mxu0 %v8114
        %8180 = vmatprep.subr.bf16.mxu0 %v8117
        %8181 = vmatpush1.bf16.msra.mxu0 %v8116
        %8182 = vmatprep.subr.bf16.mxu0 %v8119
        %8183 = vmatpush1.bf16.msra.mxu0 %v8118
        %8184 = vmatprep.subr.bf16.mxu0 %v8121
        %8185 = vmatpush1.bf16.msra.mxu0 %v8120
        %8186 = vmatprep.subr.bf16.mxu0 %v8123
        %8187 = vmatpush1.bf16.msra.mxu0 %v8122
        %8188 = vmatprep.subr.bf16.mxu0 %v8125
        %8189 = vmatpush1.bf16.msra.mxu0 %v8124
        %8190 = vmatprep.subr.bf16.mxu0 %v8127
        %8191 = vmatpush1.bf16.msra.mxu0 %v8126
        %8192 = vmatprep.subr.bf16.mxu0 %v8129
        %8193 = vmatpush1.bf16.msra.mxu0 %v8128
        %8194 = vmatprep.subr.bf16.mxu0 %v8131
        %8195 = vmatpush1.bf16.msra.mxu0 %v8130
        %8196 = vmatprep.subr.bf16.mxu0 %v8133
        %8197 = vmatpush1.bf16.msra.mxu0 %v8132
        %8198 = vmatprep.subr.bf16.mxu0 %v8135
        %8199 = vmatpush1.bf16.msra.mxu0 %v8134
        %8200 = vmatprep.subr.bf16.mxu0 %v8137
        %8201 = vmatpush1.bf16.msra.mxu0 %v8136
        %8202 = vmatprep.subr.bf16.mxu0 %v8139
        %8203 = vmatpush1.bf16.msra.mxu0 %v8138
        %8204 = vmatprep.subr.bf16.mxu0 %v8141
        %8205 = vmatpush1.bf16.msra.mxu0 %v8140
        %8206 = vmatprep.subr.bf16.mxu0 %v8143
        %8207 = vmatpush1.bf16.msra.mxu0 %v8142
        %8208 = vmatprep.subr.bf16.mxu0 %v8145
        %8209 = vmatpush1.bf16.msra.mxu0 %v8144
        %8210 = vmatprep.mubr.bf16.mxu0 %v6840
        %8211 = vmatmul.mubr.bf16.gmra.mrb[0].mxu0 %v6839
        %v8212 = vpop.f32.mrb[0].mxu0
        %v8213 = vadd.f32 %v7860, %v8212
        %v8214 = vpop.f32.mrb[0].mxu0
        %v8215 = vadd.f32 %v7862, %v8214
        %v8216 = vpop.f32.mrb[0].mxu0
        %v8217 = vadd.f32 %v7864, %v8216
        %v8218 = vpop.f32.mrb[0].mxu0
        %v8219 = vadd.f32 %v7866, %v8218
        %8220 = vmatprep.mubr.bf16.mxu0 %v6842
        %8221 = vmatmul.mubr.bf16.gmra.mrb[0].mxu0 %v6841
        %v8222 = vpop.f32.mrb[0].mxu0
        %v8223 = vadd.f32 %v7870, %v8222
        %v8224 = vpop.f32.mrb[0].mxu0
        %v8225 = vadd.f32 %v7872, %v8224
        %v8226 = vpop.f32.mrb[0].mxu0
        %v8227 = vadd.f32 %v7874, %v8226
        %v8228 = vpop.f32.mrb[0].mxu0
        %v8229 = vadd.f32 %v7876, %v8228
        %8230 = vmatprep.mubr.bf16.mxu0 %v6844
        %8231 = vmatmul.mubr.bf16.gmra.mrb[0].mxu0 %v6843
        %v8232 = vpop.f32.mrb[0].mxu0
        %v8233 = vadd.f32 %v7880, %v8232
        %v8234 = vpop.f32.mrb[0].mxu0
        %v8235 = vadd.f32 %v7882, %v8234
        %v8236 = vpop.f32.mrb[0].mxu0
        %v8237 = vadd.f32 %v7884, %v8236
        %v8238 = vpop.f32.mrb[0].mxu0
        %v8239 = vadd.f32 %v7886, %v8238
        %8240 = vmatprep.mubr.bf16.mxu0 %v6846
        %8241 = vmatmul.mubr.bf16.gmra.mrb[0].mxu0 %v6845
        %v8242 = vpop.f32.mrb[0].mxu0
        %v8243 = vadd.f32 %v7890, %v8242
        %v8244 = vpop.f32.mrb[0].mxu0
        %v8245 = vadd.f32 %v7892, %v8244
        %v8246 = vpop.f32.mrb[0].mxu0
        %v8247 = vadd.f32 %v7894, %v8246
        %v8248 = vpop.f32.mrb[0].mxu0
        %v8249 = vadd.f32 %v7896, %v8248
        %8250 = vmatprep.mubr.bf16.mxu0 %v6848
        %8251 = vmatmul.mubr.bf16.gmra.mrb[0].mxu0 %v6847
        %v8252 = vpop.f32.mrb[0].mxu0
        %v8253 = vadd.f32 %v7900, %v8252
        %v8254 = vpop.f32.mrb[0].mxu0
        %v8255 = vadd.f32 %v7902, %v8254
        %v8256 = vpop.f32.mrb[0].mxu0
        %v8257 = vadd.f32 %v7904, %v8256
        %v8258 = vpop.f32.mrb[0].mxu0
        %v8259 = vadd.f32 %v7906, %v8258
        %8260 = vmatprep.mubr.bf16.mxu0 %v6850
        %8261 = vmatmul.mubr.bf16.gmra.mrb[0].mxu0 %v6849
        %v8262 = vpop.f32.mrb[0].mxu0
        %v8263 = vadd.f32 %v7910, %v8262
        %v8264 = vpop.f32.mrb[0].mxu0
        %v8265 = vadd.f32 %v7912, %v8264
        %v8266 = vpop.f32.mrb[0].mxu0
        %v8267 = vadd.f32 %v7914, %v8266
        %v8268 = vpop.f32.mrb[0].mxu0
        %v8269 = vadd.f32 %v7916, %v8268
        %8270 = vmatprep.mubr.bf16.mxu0 %v6852
        %8271 = vmatmul.mubr.bf16.gmra.mrb[0].mxu0 %v6851
        %v8272 = vpop.f32.mrb[0].mxu0
        %v8273 = vadd.f32 %v7920, %v8272
        %v8274 = vpop.f32.mrb[0].mxu0
        %v8275 = vadd.f32 %v7922, %v8274
        %v8276 = vpop.f32.mrb[0].mxu0
        %v8277 = vadd.f32 %v7924, %v8276
        %v8278 = vpop.f32.mrb[0].mxu0
        %v8279 = vadd.f32 %v7926, %v8278
        %8280 = vmatprep.mubr.bf16.mxu0 %v6854
        %8281 = vmatmul.mubr.bf16.gmra.mrb[0].mxu0 %v6853
        %v8282 = vpop.f32.mrb[0].mxu0
        %v8283 = vadd.f32 %v7930, %v8282
        %v8284 = vpop.f32.mrb[0].mxu0
        %v8285 = vadd.f32 %v7932, %v8284
        %v8286 = vpop.f32.mrb[0].mxu0
        %v8287 = vadd.f32 %v7934, %v8286
        %v8288 = vpop.f32.mrb[0].mxu0
        %v8289 = vadd.f32 %v7936, %v8288
        %8290 = vmatprep.mubr.bf16.mxu0 %v6856
        %8291 = vmatmul.mubr.bf16.gmra.mrb[0].mxu0 %v6855
        %v8292 = vpop.f32.mrb[0].mxu0
        %v8293 = vadd.f32 %v7940, %v8292
        %v8294 = vpop.f32.mrb[0].mxu0
        %v8295 = vadd.f32 %v7942, %v8294
        %v8296 = vpop.f32.mrb[0].mxu0
        %v8297 = vadd.f32 %v7944, %v8296
        %v8298 = vpop.f32.mrb[0].mxu0
        %v8299 = vadd.f32 %v7946, %v8298
        %8300 = vmatprep.mubr.bf16.mxu0 %v6858
        %8301 = vmatmul.mubr.bf16.gmra.mrb[0].mxu0 %v6857
        %v8302 = vpop.f32.mrb[0].mxu0
        %v8303 = vadd.f32 %v7950, %v8302
        %v8304 = vpop.f32.mrb[0].mxu0
        %v8305 = vadd.f32 %v7952, %v8304
        %v8306 = vpop.f32.mrb[0].mxu0
        %v8307 = vadd.f32 %v7954, %v8306
        %v8308 = vpop.f32.mrb[0].mxu0
        %v8309 = vadd.f32 %v7956, %v8308
        %8310 = vmatprep.mubr.bf16.mxu0 %v6860
        %8311 = vmatmul.mubr.bf16.gmra.mrb[0].mxu0 %v6859
        %v8312 = vpop.f32.mrb[0].mxu0
        %v8313 = vadd.f32 %v7960, %v8312
        %v8314 = vpop.f32.mrb[0].mxu0
        %v8315 = vadd.f32 %v7962, %v8314
        %v8316 = vpop.f32.mrb[0].mxu0
        %v8317 = vadd.f32 %v7964, %v8316
        %v8318 = vpop.f32.mrb[0].mxu0
        %v8319 = vadd.f32 %v7966, %v8318
        %8320 = vmatprep.mubr.bf16.mxu0 %v6862
        %8321 = vmatmul.mubr.bf16.gmra.mrb[0].mxu0 %v6861
        %v8322 = vpop.f32.mrb[0].mxu0
        %v8323 = vadd.f32 %v7970, %v8322
        %v8324 = vpop.f32.mrb[0].mxu0
        %v8325 = vadd.f32 %v7972, %v8324
        %v8326 = vpop.f32.mrb[0].mxu0
        %v8327 = vadd.f32 %v7974, %v8326
        %v8328 = vpop.f32.mrb[0].mxu0
        %v8329 = vadd.f32 %v7976, %v8328
        %8330 = vmatprep.mubr.bf16.mxu0 %v6864
        %8331 = vmatmul.mubr.bf16.gmra.mrb[0].mxu0 %v6863
        %v8332 = vpop.f32.mrb[0].mxu0
        %v8333 = vadd.f32 %v7980, %v8332
        %v8334 = vpop.f32.mrb[0].mxu0
        %v8335 = vadd.f32 %v7982, %v8334
        %v8336 = vpop.f32.mrb[0].mxu0
        %v8337 = vadd.f32 %v7984, %v8336
        %v8338 = vpop.f32.mrb[0].mxu0
        %v8339 = vadd.f32 %v7986, %v8338
        %8340 = vmatprep.mubr.bf16.mxu0 %v6866
        %8341 = vmatmul.mubr.bf16.gmra.mrb[0].mxu0 %v6865
        %v8342 = vpop.f32.mrb[0].mxu0
        %v8343 = vadd.f32 %v7990, %v8342
        %v8344 = vpop.f32.mrb[0].mxu0
        %v8345 = vadd.f32 %v7992, %v8344
        %v8346 = vpop.f32.mrb[0].mxu0
        %v8347 = vadd.f32 %v7994, %v8346
        %v8348 = vpop.f32.mrb[0].mxu0
        %v8349 = vadd.f32 %v7996, %v8348
        %8350 = vmatprep.mubr.bf16.mxu0 %v6868
        %8351 = vmatmul.mubr.bf16.gmra.mrb[0].mxu0 %v6867
        %v8352 = vpop.f32.mrb[0].mxu0
        %v8353 = vadd.f32 %v8000, %v8352
        %v8354 = vpop.f32.mrb[0].mxu0
        %v8355 = vadd.f32 %v8002, %v8354
        %v8356 = vpop.f32.mrb[0].mxu0
        %v8357 = vadd.f32 %v8004, %v8356
        %v8358 = vpop.f32.mrb[0].mxu0
        %v8359 = vadd.f32 %v8006, %v8358
        %8360 = vmatprep.mubr.bf16.mxu0 %v6870
        %8361 = vmatmul.mubr.bf16.gmra.mrb[0].mxu0 %v6869
        %v8362 = vpop.f32.mrb[0].mxu0
        %v8363 = vadd.f32 %v8010, %v8362
        %v8364 = vpop.f32.mrb[0].mxu0
        %v8365 = vadd.f32 %v8012, %v8364
        %v8366 = vpop.f32.mrb[0].mxu0
        %v8367 = vadd.f32 %v8014, %v8366
        %v8368 = vpop.f32.mrb[0].mxu0
        %v8369 = vadd.f32 %v8016, %v8368
        %8370 = vdwg.mxu0
        %v8371 = vld [vmem:[%s802] sm:$0x3]
        %v8373 = vlaneseq
        %v8374 = vshrl.u32 %v8373, 7
        %v8375 = vsub.s32 0, %v8374
        %v8376 = vrot.slane %v8371, %v8375
        %v8377 = vlaneseq
        %v8378 = vshrl.u32 %v8377, 7
        %v8379 = vsub.s32 1, %v8378
        %v8380 = vrot.slane %v8371, %v8379
        %v8383 = vadd.f32 %v8213, %v8376
        %v8384 = vadd.f32 %v8215, %v8380
        %v8385 = vadd.f32 %v8217, %v8376
        %v8386 = vadd.f32 %v8219, %v8380
        %v8387 = vadd.f32 %v8223, %v8376
        %v8388 = vadd.f32 %v8225, %v8380
        %v8389 = vadd.f32 %v8227, %v8376
        %v8390 = vadd.f32 %v8229, %v8380
        %v8391 = vadd.f32 %v8233, %v8376
        %v8392 = vadd.f32 %v8235, %v8380
        %v8393 = vadd.f32 %v8237, %v8376
        %v8394 = vadd.f32 %v8239, %v8380
        %v8395 = vadd.f32 %v8243, %v8376
        %v8396 = vadd.f32 %v8245, %v8380
        %v8397 = vadd.f32 %v8247, %v8376
        %v8398 = vadd.f32 %v8249, %v8380
        %v8399 = vadd.f32 %v8253, %v8376
        %v8400 = vadd.f32 %v8255, %v8380
        %v8401 = vadd.f32 %v8257, %v8376
        %v8402 = vadd.f32 %v8259, %v8380
        %v8403 = vadd.f32 %v8263, %v8376
        %v8404 = vadd.f32 %v8265, %v8380
        %v8405 = vadd.f32 %v8267, %v8376
        %v8406 = vadd.f32 %v8269, %v8380
        %v8407 = vadd.f32 %v8273, %v8376
        %v8408 = vadd.f32 %v8275, %v8380
        %v8409 = vadd.f32 %v8277, %v8376
        %v8410 = vadd.f32 %v8279, %v8380
        %v8411 = vadd.f32 %v8283, %v8376
        %v8412 = vadd.f32 %v8285, %v8380
        %v8413 = vadd.f32 %v8287, %v8376
        %v8414 = vadd.f32 %v8289, %v8380
        %v8415 = vadd.f32 %v8293, %v8376
        %v8416 = vadd.f32 %v8295, %v8380
        %v8417 = vadd.f32 %v8297, %v8376
        %v8418 = vadd.f32 %v8299, %v8380
        %v8419 = vadd.f32 %v8303, %v8376
        %v8420 = vadd.f32 %v8305, %v8380
        %v8421 = vadd.f32 %v8307, %v8376
        %v8422 = vadd.f32 %v8309, %v8380
        %v8423 = vadd.f32 %v8313, %v8376
        %v8424 = vadd.f32 %v8315, %v8380
        %v8425 = vadd.f32 %v8317, %v8376
        %v8426 = vadd.f32 %v8319, %v8380
        %v8427 = vadd.f32 %v8323, %v8376
        %v8428 = vadd.f32 %v8325, %v8380
        %v8429 = vadd.f32 %v8327, %v8376
        %v8430 = vadd.f32 %v8329, %v8380
        %v8431 = vadd.f32 %v8333, %v8376
        %v8432 = vadd.f32 %v8335, %v8380
        %v8433 = vadd.f32 %v8337, %v8376
        %v8434 = vadd.f32 %v8339, %v8380
        %v8435 = vadd.f32 %v8343, %v8376
        %v8436 = vadd.f32 %v8345, %v8380
        %v8437 = vadd.f32 %v8347, %v8376
        %v8438 = vadd.f32 %v8349, %v8380
        %v8439 = vadd.f32 %v8353, %v8376
        %v8440 = vadd.f32 %v8355, %v8380
        %v8441 = vadd.f32 %v8357, %v8376
        %v8442 = vadd.f32 %v8359, %v8380
        %v8443 = vadd.f32 %v8363, %v8376
        %v8444 = vadd.f32 %v8365, %v8380
        %v8445 = vadd.f32 %v8367, %v8376
        %v8446 = vadd.f32 %v8369, %v8380
        %v8447 = vadd.f32 %v953, %v8383
        %v8448 = vadd.f32 %v954, %v8384
        %v8449 = vadd.f32 %v955, %v8385
        %v8450 = vadd.f32 %v956, %v8386
        %v8451 = vadd.f32 %v957, %v8387
        %v8452 = vadd.f32 %v958, %v8388
        %v8453 = vadd.f32 %v959, %v8389
        %v8454 = vadd.f32 %v960, %v8390
        %v8455 = vadd.f32 %v961, %v8391
        %v8456 = vadd.f32 %v962, %v8392
        %v8457 = vadd.f32 %v963, %v8393
        %v8458 = vadd.f32 %v964, %v8394
        %v8459 = vadd.f32 %v965, %v8395
        %v8460 = vadd.f32 %v966, %v8396
        %v8461 = vadd.f32 %v967, %v8397
        %v8462 = vadd.f32 %v968, %v8398
        %v8463 = vadd.f32 %v969, %v8399
        %v8464 = vadd.f32 %v970, %v8400
        %v8465 = vadd.f32 %v971, %v8401
        %v8466 = vadd.f32 %v972, %v8402
        %v8467 = vadd.f32 %v973, %v8403
        %v8468 = vadd.f32 %v974, %v8404
        %v8469 = vadd.f32 %v975, %v8405
        %v8470 = vadd.f32 %v976, %v8406
        %v8471 = vadd.f32 %v977, %v8407
        %v8472 = vadd.f32 %v978, %v8408
        %v8473 = vadd.f32 %v979, %v8409
        %v8474 = vadd.f32 %v980, %v8410
        %v8475 = vadd.f32 %v981, %v8411
        %v8476 = vadd.f32 %v982, %v8412
        %v8477 = vadd.f32 %v983, %v8413
        %v8478 = vadd.f32 %v984, %v8414
        %v8479 = vadd.f32 %v985, %v8415
        %v8480 = vadd.f32 %v986, %v8416
        %v8481 = vadd.f32 %v987, %v8417
        %v8482 = vadd.f32 %v988, %v8418
        %v8483 = vadd.f32 %v989, %v8419
        %v8484 = vadd.f32 %v990, %v8420
        %v8485 = vadd.f32 %v991, %v8421
        %v8486 = vadd.f32 %v992, %v8422
        %v8487 = vadd.f32 %v993, %v8423
        %v8488 = vadd.f32 %v994, %v8424
        %v8489 = vadd.f32 %v995, %v8425
        %v8490 = vadd.f32 %v996, %v8426
        %v8491 = vadd.f32 %v997, %v8427
        %v8492 = vadd.f32 %v998, %v8428
        %v8493 = vadd.f32 %v999, %v8429
        %v8494 = vadd.f32 %v1000, %v8430
        %v8495 = vadd.f32 %v1001, %v8431
        %v8496 = vadd.f32 %v1002, %v8432
        %v8497 = vadd.f32 %v1003, %v8433
        %v8498 = vadd.f32 %v1004, %v8434
        %v8499 = vadd.f32 %v1005, %v8435
        %v8500 = vadd.f32 %v1006, %v8436
        %v8501 = vadd.f32 %v1007, %v8437
        %v8502 = vadd.f32 %v1008, %v8438
        %v8503 = vadd.f32 %v1009, %v8439
        %v8504 = vadd.f32 %v1010, %v8440
        %v8505 = vadd.f32 %v1011, %v8441
        %v8506 = vadd.f32 %v1012, %v8442
        %v8507 = vadd.f32 %v1013, %v8443
        %v8508 = vadd.f32 %v1014, %v8444
        %v8509 = vadd.f32 %v1015, %v8445
        %v8510 = vadd.f32 %v1016, %v8446
        %v8511 = vld [vmem:[%s806] sm:$0x3]
        %v8512 = vld [vmem:[%s810] sm:$0x3]
        %v8513 = vadd.f32 %v8447, %v8448
        %8514 = vadd.xlane.f32.xlu0 %v8513
        %v8515 = vpop.xlane.xlu0 %8514
        %v8516 = vadd.f32 %v8449, %v8450
        %8517 = vadd.xlane.f32.xlu0 %v8516
        %v8518 = vpop.xlane.xlu0 %8517
        %v8519 = vadd.f32 %v8451, %v8452
        %8520 = vadd.xlane.f32.xlu0 %v8519
        %v8521 = vpop.xlane.xlu0 %8520
        %v8522 = vadd.f32 %v8453, %v8454
        %8523 = vadd.xlane.f32.xlu0 %v8522
        %v8524 = vpop.xlane.xlu0 %8523
        %v8525 = vadd.f32 %v8455, %v8456
        %8526 = vadd.xlane.f32.xlu0 %v8525
        %v8527 = vpop.xlane.xlu0 %8526
        %v8528 = vadd.f32 %v8457, %v8458
        %8529 = vadd.xlane.f32.xlu0 %v8528
        %v8530 = vpop.xlane.xlu0 %8529
        %v8531 = vadd.f32 %v8459, %v8460
        %8532 = vadd.xlane.f32.xlu0 %v8531
        %v8533 = vpop.xlane.xlu0 %8532
        %v8534 = vadd.f32 %v8461, %v8462
        %8535 = vadd.xlane.f32.xlu0 %v8534
        %v8536 = vpop.xlane.xlu0 %8535
        %v8537 = vadd.f32 %v8463, %v8464
        %8538 = vadd.xlane.f32.xlu0 %v8537
        %v8539 = vpop.xlane.xlu0 %8538
        %v8540 = vadd.f32 %v8465, %v8466
        %8541 = vadd.xlane.f32.xlu0 %v8540
        %v8542 = vpop.xlane.xlu0 %8541
        %v8543 = vadd.f32 %v8467, %v8468
        %8544 = vadd.xlane.f32.xlu0 %v8543
        %v8545 = vpop.xlane.xlu0 %8544
        %v8546 = vadd.f32 %v8469, %v8470
        %8547 = vadd.xlane.f32.xlu0 %v8546
        %v8548 = vpop.xlane.xlu0 %8547
        %v8549 = vadd.f32 %v8471, %v8472
        %8550 = vadd.xlane.f32.xlu0 %v8549
        %v8551 = vpop.xlane.xlu0 %8550
        %v8552 = vadd.f32 %v8473, %v8474
        %8553 = vadd.xlane.f32.xlu0 %v8552
        %v8554 = vpop.xlane.xlu0 %8553
        %v8555 = vadd.f32 %v8475, %v8476
        %8556 = vadd.xlane.f32.xlu0 %v8555
        %v8557 = vpop.xlane.xlu0 %8556
        %v8558 = vadd.f32 %v8477, %v8478
        %8559 = vadd.xlane.f32.xlu0 %v8558
        %v8560 = vpop.xlane.xlu0 %8559
        %v8561 = vadd.f32 %v8479, %v8480
        %8562 = vadd.xlane.f32.xlu0 %v8561
        %v8563 = vpop.xlane.xlu0 %8562
        %v8564 = vadd.f32 %v8481, %v8482
        %8565 = vadd.xlane.f32.xlu0 %v8564
        %v8566 = vpop.xlane.xlu0 %8565
        %v8567 = vadd.f32 %v8483, %v8484
        %8568 = vadd.xlane.f32.xlu0 %v8567
        %v8569 = vpop.xlane.xlu0 %8568
        %v8570 = vadd.f32 %v8485, %v8486
        %8571 = vadd.xlane.f32.xlu0 %v8570
        %v8572 = vpop.xlane.xlu0 %8571
        %v8573 = vadd.f32 %v8487, %v8488
        %8574 = vadd.xlane.f32.xlu0 %v8573
        %v8575 = vpop.xlane.xlu0 %8574
        %v8576 = vadd.f32 %v8489, %v8490
        %8577 = vadd.xlane.f32.xlu0 %v8576
        %v8578 = vpop.xlane.xlu0 %8577
        %v8579 = vadd.f32 %v8491, %v8492
        %8580 = vadd.xlane.f32.xlu0 %v8579
        %v8581 = vpop.xlane.xlu0 %8580
        %v8582 = vadd.f32 %v8493, %v8494
        %8583 = vadd.xlane.f32.xlu0 %v8582
        %v8584 = vpop.xlane.xlu0 %8583
        %v8585 = vadd.f32 %v8495, %v8496
        %8586 = vadd.xlane.f32.xlu0 %v8585
        %v8587 = vpop.xlane.xlu0 %8586
        %v8588 = vadd.f32 %v8497, %v8498
        %8589 = vadd.xlane.f32.xlu0 %v8588
        %v8590 = vpop.xlane.xlu0 %8589
        %v8591 = vadd.f32 %v8499, %v8500
        %8592 = vadd.xlane.f32.xlu0 %v8591
        %v8593 = vpop.xlane.xlu0 %8592
        %v8594 = vadd.f32 %v8501, %v8502
        %8595 = vadd.xlane.f32.xlu0 %v8594
        %v8596 = vpop.xlane.xlu0 %8595
        %v8597 = vadd.f32 %v8503, %v8504
        %8598 = vadd.xlane.f32.xlu0 %v8597
        %v8599 = vpop.xlane.xlu0 %8598
        %v8600 = vadd.f32 %v8505, %v8506
        %8601 = vadd.xlane.f32.xlu0 %v8600
        %v8602 = vpop.xlane.xlu0 %8601
        %v8603 = vadd.f32 %v8507, %v8508
        %8604 = vadd.xlane.f32.xlu0 %v8603
        %v8605 = vpop.xlane.xlu0 %8604
        %v8606 = vadd.f32 %v8509, %v8510
        %8607 = vadd.xlane.f32.xlu0 %v8606
        %v8608 = vpop.xlane.xlu0 %8607
        %v8609 = vmul.f32 %v8515, %v1115
        %v8610 = vmul.f32 %v8518, %v1115
        %v8611 = vmul.f32 %v8521, %v1115
        %v8612 = vmul.f32 %v8524, %v1115
        %v8613 = vmul.f32 %v8527, %v1115
        %v8614 = vmul.f32 %v8530, %v1115
        %v8615 = vmul.f32 %v8533, %v1115
        %v8616 = vmul.f32 %v8536, %v1115
        %v8617 = vmul.f32 %v8539, %v1115
        %v8618 = vmul.f32 %v8542, %v1115
        %v8619 = vmul.f32 %v8545, %v1115
        %v8620 = vmul.f32 %v8548, %v1115
        %v8621 = vmul.f32 %v8551, %v1115
        %v8622 = vmul.f32 %v8554, %v1115
        %v8623 = vmul.f32 %v8557, %v1115
        %v8624 = vmul.f32 %v8560, %v1115
        %v8625 = vmul.f32 %v8563, %v1115
        %v8626 = vmul.f32 %v8566, %v1115
        %v8627 = vmul.f32 %v8569, %v1115
        %v8628 = vmul.f32 %v8572, %v1115
        %v8629 = vmul.f32 %v8575, %v1115
        %v8630 = vmul.f32 %v8578, %v1115
        %v8631 = vmul.f32 %v8581, %v1115
        %v8632 = vmul.f32 %v8584, %v1115
        %v8633 = vmul.f32 %v8587, %v1115
        %v8634 = vmul.f32 %v8590, %v1115
        %v8635 = vmul.f32 %v8593, %v1115
        %v8636 = vmul.f32 %v8596, %v1115
        %v8637 = vmul.f32 %v8599, %v1115
        %v8638 = vmul.f32 %v8602, %v1115
        %v8639 = vmul.f32 %v8605, %v1115
        %v8640 = vmul.f32 %v8608, %v1115
        %v8641 = vsub.f32 %v8447, %v8609
        %v8642 = vsub.f32 %v8448, %v8609
        %v8643 = vsub.f32 %v8449, %v8610
        %v8644 = vsub.f32 %v8450, %v8610
        %v8645 = vsub.f32 %v8451, %v8611
        %v8646 = vsub.f32 %v8452, %v8611
        %v8647 = vsub.f32 %v8453, %v8612
        %v8648 = vsub.f32 %v8454, %v8612
        %v8649 = vsub.f32 %v8455, %v8613
        %v8650 = vsub.f32 %v8456, %v8613
        %v8651 = vsub.f32 %v8457, %v8614
        %v8652 = vsub.f32 %v8458, %v8614
        %v8653 = vsub.f32 %v8459, %v8615
        %v8654 = vsub.f32 %v8460, %v8615
        %v8655 = vsub.f32 %v8461, %v8616
        %v8656 = vsub.f32 %v8462, %v8616
        %v8657 = vsub.f32 %v8463, %v8617
        %v8658 = vsub.f32 %v8464, %v8617
        %v8659 = vsub.f32 %v8465, %v8618
        %v8660 = vsub.f32 %v8466, %v8618
        %v8661 = vsub.f32 %v8467, %v8619
        %v8662 = vsub.f32 %v8468, %v8619
        %v8663 = vsub.f32 %v8469, %v8620
        %v8664 = vsub.f32 %v8470, %v8620
        %v8665 = vsub.f32 %v8471, %v8621
        %v8666 = vsub.f32 %v8472, %v8621
        %v8667 = vsub.f32 %v8473, %v8622
        %v8668 = vsub.f32 %v8474, %v8622
        %v8669 = vsub.f32 %v8475, %v8623
        %v8670 = vsub.f32 %v8476, %v8623
        %v8671 = vsub.f32 %v8477, %v8624
        %v8672 = vsub.f32 %v8478, %v8624
        %v8673 = vsub.f32 %v8479, %v8625
        %v8674 = vsub.f32 %v8480, %v8625
        %v8675 = vsub.f32 %v8481, %v8626
        %v8676 = vsub.f32 %v8482, %v8626
        %v8677 = vsub.f32 %v8483, %v8627
        %v8678 = vsub.f32 %v8484, %v8627
        %v8679 = vsub.f32 %v8485, %v8628
        %v8680 = vsub.f32 %v8486, %v8628
        %v8681 = vsub.f32 %v8487, %v8629
        %v8682 = vsub.f32 %v8488, %v8629
        %v8683 = vsub.f32 %v8489, %v8630
        %v8684 = vsub.f32 %v8490, %v8630
        %v8685 = vsub.f32 %v8491, %v8631
        %v8686 = vsub.f32 %v8492, %v8631
        %v8687 = vsub.f32 %v8493, %v8632
        %v8688 = vsub.f32 %v8494, %v8632
        %v8689 = vsub.f32 %v8495, %v8633
        %v8690 = vsub.f32 %v8496, %v8633
        %v8691 = vsub.f32 %v8497, %v8634
        %v8692 = vsub.f32 %v8498, %v8634
        %v8693 = vsub.f32 %v8499, %v8635
        %v8694 = vsub.f32 %v8500, %v8635
        %v8695 = vsub.f32 %v8501, %v8636
        %v8696 = vsub.f32 %v8502, %v8636
        %v8697 = vsub.f32 %v8503, %v8637
        %v8698 = vsub.f32 %v8504, %v8637
        %v8699 = vsub.f32 %v8505, %v8638
        %v8700 = vsub.f32 %v8506, %v8638
        %v8701 = vsub.f32 %v8507, %v8639
        %v8702 = vsub.f32 %v8508, %v8639
        %v8703 = vsub.f32 %v8509, %v8640
        %v8704 = vsub.f32 %v8510, %v8640
        %v8705 = vmul.f32 %v8641, %v8641
        %v8706 = vmul.f32 %v8642, %v8642
        %v8707 = vmul.f32 %v8643, %v8643
        %v8708 = vmul.f32 %v8644, %v8644
        %v8709 = vmul.f32 %v8645, %v8645
        %v8710 = vmul.f32 %v8646, %v8646
        %v8711 = vmul.f32 %v8647, %v8647
        %v8712 = vmul.f32 %v8648, %v8648
        %v8713 = vmul.f32 %v8649, %v8649
        %v8714 = vmul.f32 %v8650, %v8650
        %v8715 = vmul.f32 %v8651, %v8651
        %v8716 = vmul.f32 %v8652, %v8652
        %v8717 = vmul.f32 %v8653, %v8653
        %v8718 = vmul.f32 %v8654, %v8654
        %v8719 = vmul.f32 %v8655, %v8655
        %v8720 = vmul.f32 %v8656, %v8656
        %v8721 = vmul.f32 %v8657, %v8657
        %v8722 = vmul.f32 %v8658, %v8658
        %v8723 = vmul.f32 %v8659, %v8659
        %v8724 = vmul.f32 %v8660, %v8660
        %v8725 = vmul.f32 %v8661, %v8661
        %v8726 = vmul.f32 %v8662, %v8662
        %v8727 = vmul.f32 %v8663, %v8663
        %v8728 = vmul.f32 %v8664, %v8664
        %v8729 = vmul.f32 %v8665, %v8665
        %v8730 = vmul.f32 %v8666, %v8666
        %v8731 = vmul.f32 %v8667, %v8667
        %v8732 = vmul.f32 %v8668, %v8668
        %v8733 = vmul.f32 %v8669, %v8669
        %v8734 = vmul.f32 %v8670, %v8670
        %v8735 = vmul.f32 %v8671, %v8671
        %v8736 = vmul.f32 %v8672, %v8672
        %v8737 = vmul.f32 %v8673, %v8673
        %v8738 = vmul.f32 %v8674, %v8674
        %v8739 = vmul.f32 %v8675, %v8675
        %v8740 = vmul.f32 %v8676, %v8676
        %v8741 = vmul.f32 %v8677, %v8677
        %v8742 = vmul.f32 %v8678, %v8678
        %v8743 = vmul.f32 %v8679, %v8679
        %v8744 = vmul.f32 %v8680, %v8680
        %v8745 = vmul.f32 %v8681, %v8681
        %v8746 = vmul.f32 %v8682, %v8682
        %v8747 = vmul.f32 %v8683, %v8683
        %v8748 = vmul.f32 %v8684, %v8684
        %v8749 = vmul.f32 %v8685, %v8685
        %v8750 = vmul.f32 %v8686, %v8686
        %v8751 = vmul.f32 %v8687, %v8687
        %v8752 = vmul.f32 %v8688, %v8688
        %v8753 = vmul.f32 %v8689, %v8689
        %v8754 = vmul.f32 %v8690, %v8690
        %v8755 = vmul.f32 %v8691, %v8691
        %v8756 = vmul.f32 %v8692, %v8692
        %v8757 = vmul.f32 %v8693, %v8693
        %v8758 = vmul.f32 %v8694, %v8694
        %v8759 = vmul.f32 %v8695, %v8695
        %v8760 = vmul.f32 %v8696, %v8696
        %v8761 = vmul.f32 %v8697, %v8697
        %v8762 = vmul.f32 %v8698, %v8698
        %v8763 = vmul.f32 %v8699, %v8699
        %v8764 = vmul.f32 %v8700, %v8700
        %v8765 = vmul.f32 %v8701, %v8701
        %v8766 = vmul.f32 %v8702, %v8702
        %v8767 = vmul.f32 %v8703, %v8703
        %v8768 = vmul.f32 %v8704, %v8704
        %v8769 = vadd.f32 %v8705, %v8706
        %8770 = vadd.xlane.f32.xlu0 %v8769
        %v8771 = vpop.xlane.xlu0 %8770
        %v8772 = vadd.f32 %v8707, %v8708
        %8773 = vadd.xlane.f32.xlu0 %v8772
        %v8774 = vpop.xlane.xlu0 %8773
        %v8775 = vadd.f32 %v8709, %v8710
        %8776 = vadd.xlane.f32.xlu0 %v8775
        %v8777 = vpop.xlane.xlu0 %8776
        %v8778 = vadd.f32 %v8711, %v8712
        %8779 = vadd.xlane.f32.xlu0 %v8778
        %v8780 = vpop.xlane.xlu0 %8779
        %v8781 = vadd.f32 %v8713, %v8714
        %8782 = vadd.xlane.f32.xlu0 %v8781
        %v8783 = vpop.xlane.xlu0 %8782
        %v8784 = vadd.f32 %v8715, %v8716
        %8785 = vadd.xlane.f32.xlu0 %v8784
        %v8786 = vpop.xlane.xlu0 %8785
        %v8787 = vadd.f32 %v8717, %v8718
        %8788 = vadd.xlane.f32.xlu0 %v8787
        %v8789 = vpop.xlane.xlu0 %8788
        %v8790 = vadd.f32 %v8719, %v8720
        %8791 = vadd.xlane.f32.xlu0 %v8790
        %v8792 = vpop.xlane.xlu0 %8791
        %v8793 = vadd.f32 %v8721, %v8722
        %8794 = vadd.xlane.f32.xlu0 %v8793
        %v8795 = vpop.xlane.xlu0 %8794
        %v8796 = vadd.f32 %v8723, %v8724
        %8797 = vadd.xlane.f32.xlu0 %v8796
        %v8798 = vpop.xlane.xlu0 %8797
        %v8799 = vadd.f32 %v8725, %v8726
        %8800 = vadd.xlane.f32.xlu0 %v8799
        %v8801 = vpop.xlane.xlu0 %8800
        %v8802 = vadd.f32 %v8727, %v8728
        %8803 = vadd.xlane.f32.xlu0 %v8802
        %v8804 = vpop.xlane.xlu0 %8803
        %v8805 = vadd.f32 %v8729, %v8730
        %8806 = vadd.xlane.f32.xlu0 %v8805
        %v8807 = vpop.xlane.xlu0 %8806
        %v8808 = vadd.f32 %v8731, %v8732
        %8809 = vadd.xlane.f32.xlu0 %v8808
        %v8810 = vpop.xlane.xlu0 %8809
        %v8811 = vadd.f32 %v8733, %v8734
        %8812 = vadd.xlane.f32.xlu0 %v8811
        %v8813 = vpop.xlane.xlu0 %8812
        %v8814 = vadd.f32 %v8735, %v8736
        %8815 = vadd.xlane.f32.xlu0 %v8814
        %v8816 = vpop.xlane.xlu0 %8815
        %v8817 = vadd.f32 %v8737, %v8738
        %8818 = vadd.xlane.f32.xlu0 %v8817
        %v8819 = vpop.xlane.xlu0 %8818
        %v8820 = vadd.f32 %v8739, %v8740
        %8821 = vadd.xlane.f32.xlu0 %v8820
        %v8822 = vpop.xlane.xlu0 %8821
        %v8823 = vadd.f32 %v8741, %v8742
        %8824 = vadd.xlane.f32.xlu0 %v8823
        %v8825 = vpop.xlane.xlu0 %8824
        %v8826 = vadd.f32 %v8743, %v8744
        %8827 = vadd.xlane.f32.xlu0 %v8826
        %v8828 = vpop.xlane.xlu0 %8827
        %v8829 = vadd.f32 %v8745, %v8746
        %8830 = vadd.xlane.f32.xlu0 %v8829
        %v8831 = vpop.xlane.xlu0 %8830
        %v8832 = vadd.f32 %v8747, %v8748
        %8833 = vadd.xlane.f32.xlu0 %v8832
        %v8834 = vpop.xlane.xlu0 %8833
        %v8835 = vadd.f32 %v8749, %v8750
        %8836 = vadd.xlane.f32.xlu0 %v8835
        %v8837 = vpop.xlane.xlu0 %8836
        %v8838 = vadd.f32 %v8751, %v8752
        %8839 = vadd.xlane.f32.xlu0 %v8838
        %v8840 = vpop.xlane.xlu0 %8839
        %v8841 = vadd.f32 %v8753, %v8754
        %8842 = vadd.xlane.f32.xlu0 %v8841
        %v8843 = vpop.xlane.xlu0 %8842
        %v8844 = vadd.f32 %v8755, %v8756
        %8845 = vadd.xlane.f32.xlu0 %v8844
        %v8846 = vpop.xlane.xlu0 %8845
        %v8847 = vadd.f32 %v8757, %v8758
        %8848 = vadd.xlane.f32.xlu0 %v8847
        %v8849 = vpop.xlane.xlu0 %8848
        %v8850 = vadd.f32 %v8759, %v8760
        %8851 = vadd.xlane.f32.xlu0 %v8850
        %v8852 = vpop.xlane.xlu0 %8851
        %v8853 = vadd.f32 %v8761, %v8762
        %8854 = vadd.xlane.f32.xlu0 %v8853
        %v8855 = vpop.xlane.xlu0 %8854
        %v8856 = vadd.f32 %v8763, %v8764
        %8857 = vadd.xlane.f32.xlu0 %v8856
        %v8858 = vpop.xlane.xlu0 %8857
        %v8859 = vadd.f32 %v8765, %v8766
        %8860 = vadd.xlane.f32.xlu0 %v8859
        %v8861 = vpop.xlane.xlu0 %8860
        %v8862 = vadd.f32 %v8767, %v8768
        %8863 = vadd.xlane.f32.xlu0 %v8862
        %v8864 = vpop.xlane.xlu0 %8863
        %v8865 = vmul.f32 %v8771, %v1115
        %v8866 = vmul.f32 %v8774, %v1115
        %v8867 = vmul.f32 %v8777, %v1115
        %v8868 = vmul.f32 %v8780, %v1115
        %v8869 = vmul.f32 %v8783, %v1115
        %v8870 = vmul.f32 %v8786, %v1115
        %v8871 = vmul.f32 %v8789, %v1115
        %v8872 = vmul.f32 %v8792, %v1115
        %v8873 = vmul.f32 %v8795, %v1115
        %v8874 = vmul.f32 %v8798, %v1115
        %v8875 = vmul.f32 %v8801, %v1115
        %v8876 = vmul.f32 %v8804, %v1115
        %v8877 = vmul.f32 %v8807, %v1115
        %v8878 = vmul.f32 %v8810, %v1115
        %v8879 = vmul.f32 %v8813, %v1115
        %v8880 = vmul.f32 %v8816, %v1115
        %v8881 = vmul.f32 %v8819, %v1115
        %v8882 = vmul.f32 %v8822, %v1115
        %v8883 = vmul.f32 %v8825, %v1115
        %v8884 = vmul.f32 %v8828, %v1115
        %v8885 = vmul.f32 %v8831, %v1115
        %v8886 = vmul.f32 %v8834, %v1115
        %v8887 = vmul.f32 %v8837, %v1115
        %v8888 = vmul.f32 %v8840, %v1115
        %v8889 = vmul.f32 %v8843, %v1115
        %v8890 = vmul.f32 %v8846, %v1115
        %v8891 = vmul.f32 %v8849, %v1115
        %v8892 = vmul.f32 %v8852, %v1115
        %v8893 = vmul.f32 %v8855, %v1115
        %v8894 = vmul.f32 %v8858, %v1115
        %v8895 = vmul.f32 %v8861, %v1115
        %v8896 = vmul.f32 %v8864, %v1115
        %v8897 = vadd.f32 %v8865, 1e-05
        %v8898 = vadd.f32 %v8866, 1e-05
        %v8899 = vadd.f32 %v8867, 1e-05
        %v8900 = vadd.f32 %v8868, 1e-05
        %v8901 = vadd.f32 %v8869, 1e-05
        %v8902 = vadd.f32 %v8870, 1e-05
        %v8903 = vadd.f32 %v8871, 1e-05
        %v8904 = vadd.f32 %v8872, 1e-05
        %v8905 = vadd.f32 %v8873, 1e-05
        %v8906 = vadd.f32 %v8874, 1e-05
        %v8907 = vadd.f32 %v8875, 1e-05
        %v8908 = vadd.f32 %v8876, 1e-05
        %v8909 = vadd.f32 %v8877, 1e-05
        %v8910 = vadd.f32 %v8878, 1e-05
        %v8911 = vadd.f32 %v8879, 1e-05
        %v8912 = vadd.f32 %v8880, 1e-05
        %v8913 = vadd.f32 %v8881, 1e-05
        %v8914 = vadd.f32 %v8882, 1e-05
        %v8915 = vadd.f32 %v8883, 1e-05
        %v8916 = vadd.f32 %v8884, 1e-05
        %v8917 = vadd.f32 %v8885, 1e-05
        %v8918 = vadd.f32 %v8886, 1e-05
        %v8919 = vadd.f32 %v8887, 1e-05
        %v8920 = vadd.f32 %v8888, 1e-05
        %v8921 = vadd.f32 %v8889, 1e-05
        %v8922 = vadd.f32 %v8890, 1e-05
        %v8923 = vadd.f32 %v8891, 1e-05
        %v8924 = vadd.f32 %v8892, 1e-05
        %v8925 = vadd.f32 %v8893, 1e-05
        %v8926 = vadd.f32 %v8894, 1e-05
        %v8927 = vadd.f32 %v8895, 1e-05
        %v8928 = vadd.f32 %v8896, 1e-05
        %v8929 = vrsqrt.pop %v8897
        %v8930 = vrsqrt.pop %v8898
        %v8931 = vrsqrt.pop %v8899
        %v8932 = vrsqrt.pop %v8900
        %v8933 = vrsqrt.pop %v8901
        %v8934 = vrsqrt.pop %v8902
        %v8935 = vrsqrt.pop %v8903
        %v8936 = vrsqrt.pop %v8904
        %v8937 = vrsqrt.pop %v8905
        %v8938 = vrsqrt.pop %v8906
        %v8939 = vrsqrt.pop %v8907
        %v8940 = vrsqrt.pop %v8908
        %v8941 = vrsqrt.pop %v8909
        %v8942 = vrsqrt.pop %v8910
        %v8943 = vrsqrt.pop %v8911
        %v8944 = vrsqrt.pop %v8912
        %v8945 = vrsqrt.pop %v8913
        %v8946 = vrsqrt.pop %v8914
        %v8947 = vrsqrt.pop %v8915
        %v8948 = vrsqrt.pop %v8916
        %v8949 = vrsqrt.pop %v8917
        %v8950 = vrsqrt.pop %v8918
        %v8951 = vrsqrt.pop %v8919
        %v8952 = vrsqrt.pop %v8920
        %v8953 = vrsqrt.pop %v8921
        %v8954 = vrsqrt.pop %v8922
        %v8955 = vrsqrt.pop %v8923
        %v8956 = vrsqrt.pop %v8924
        %v8957 = vrsqrt.pop %v8925
        %v8958 = vrsqrt.pop %v8926
        %v8959 = vrsqrt.pop %v8927
        %v8960 = vrsqrt.pop %v8928
        %v8961 = vmul.f32 %v8641, %v8929
        %v8962 = vmul.f32 %v8642, %v8929
        %v8963 = vmul.f32 %v8643, %v8930
        %v8964 = vmul.f32 %v8644, %v8930
        %v8965 = vmul.f32 %v8645, %v8931
        %v8966 = vmul.f32 %v8646, %v8931
        %v8967 = vmul.f32 %v8647, %v8932
        %v8968 = vmul.f32 %v8648, %v8932
        %v8969 = vmul.f32 %v8649, %v8933
        %v8970 = vmul.f32 %v8650, %v8933
        %v8971 = vmul.f32 %v8651, %v8934
        %v8972 = vmul.f32 %v8652, %v8934
        %v8973 = vmul.f32 %v8653, %v8935
        %v8974 = vmul.f32 %v8654, %v8935
        %v8975 = vmul.f32 %v8655, %v8936
        %v8976 = vmul.f32 %v8656, %v8936
        %v8977 = vmul.f32 %v8657, %v8937
        %v8978 = vmul.f32 %v8658, %v8937
        %v8979 = vmul.f32 %v8659, %v8938
        %v8980 = vmul.f32 %v8660, %v8938
        %v8981 = vmul.f32 %v8661, %v8939
        %v8982 = vmul.f32 %v8662, %v8939
        %v8983 = vmul.f32 %v8663, %v8940
        %v8984 = vmul.f32 %v8664, %v8940
        %v8985 = vmul.f32 %v8665, %v8941
        %v8986 = vmul.f32 %v8666, %v8941
        %v8987 = vmul.f32 %v8667, %v8942
        %v8988 = vmul.f32 %v8668, %v8942
        %v8989 = vmul.f32 %v8669, %v8943
        %v8990 = vmul.f32 %v8670, %v8943
        %v8991 = vmul.f32 %v8671, %v8944
        %v8992 = vmul.f32 %v8672, %v8944
        %v8993 = vmul.f32 %v8673, %v8945
        %v8994 = vmul.f32 %v8674, %v8945
        %v8995 = vmul.f32 %v8675, %v8946
        %v8996 = vmul.f32 %v8676, %v8946
        %v8997 = vmul.f32 %v8677, %v8947
        %v8998 = vmul.f32 %v8678, %v8947
        %v8999 = vmul.f32 %v8679, %v8948
        %v9000 = vmul.f32 %v8680, %v8948
        %v9001 = vmul.f32 %v8681, %v8949
        %v9002 = vmul.f32 %v8682, %v8949
        %v9003 = vmul.f32 %v8683, %v8950
        %v9004 = vmul.f32 %v8684, %v8950
        %v9005 = vmul.f32 %v8685, %v8951
        %v9006 = vmul.f32 %v8686, %v8951
        %v9007 = vmul.f32 %v8687, %v8952
        %v9008 = vmul.f32 %v8688, %v8952
        %v9009 = vmul.f32 %v8689, %v8953
        %v9010 = vmul.f32 %v8690, %v8953
        %v9011 = vmul.f32 %v8691, %v8954
        %v9012 = vmul.f32 %v8692, %v8954
        %v9013 = vmul.f32 %v8693, %v8955
        %v9014 = vmul.f32 %v8694, %v8955
        %v9015 = vmul.f32 %v8695, %v8956
        %v9016 = vmul.f32 %v8696, %v8956
        %v9017 = vmul.f32 %v8697, %v8957
        %v9018 = vmul.f32 %v8698, %v8957
        %v9019 = vmul.f32 %v8699, %v8958
        %v9020 = vmul.f32 %v8700, %v8958
        %v9021 = vmul.f32 %v8701, %v8959
        %v9022 = vmul.f32 %v8702, %v8959
        %v9023 = vmul.f32 %v8703, %v8960
        %v9024 = vmul.f32 %v8704, %v8960
        %v9026 = vlaneseq
        %v9027 = vshrl.u32 %v9026, 7
        %v9028 = vsub.s32 0, %v9027
        %v9029 = vrot.slane %v8511, %v9028
        %v9030 = vlaneseq
        %v9031 = vshrl.u32 %v9030, 7
        %v9032 = vsub.s32 1, %v9031
        %v9033 = vrot.slane %v8511, %v9032
        %v9036 = vmul.f32 %v8961, %v9029
        %v9037 = vmul.f32 %v8962, %v9033
        %v9038 = vmul.f32 %v8963, %v9029
        %v9039 = vmul.f32 %v8964, %v9033
        %v9040 = vmul.f32 %v8965, %v9029
        %v9041 = vmul.f32 %v8966, %v9033
        %v9042 = vmul.f32 %v8967, %v9029
        %v9043 = vmul.f32 %v8968, %v9033
        %v9044 = vmul.f32 %v8969, %v9029
        %v9045 = vmul.f32 %v8970, %v9033
        %v9046 = vmul.f32 %v8971, %v9029
        %v9047 = vmul.f32 %v8972, %v9033
        %v9048 = vmul.f32 %v8973, %v9029
        %v9049 = vmul.f32 %v8974, %v9033
        %v9050 = vmul.f32 %v8975, %v9029
        %v9051 = vmul.f32 %v8976, %v9033
        %v9052 = vmul.f32 %v8977, %v9029
        %v9053 = vmul.f32 %v8978, %v9033
        %v9054 = vmul.f32 %v8979, %v9029
        %v9055 = vmul.f32 %v8980, %v9033
        %v9056 = vmul.f32 %v8981, %v9029
        %v9057 = vmul.f32 %v8982, %v9033
        %v9058 = vmul.f32 %v8983, %v9029
        %v9059 = vmul.f32 %v8984, %v9033
        %v9060 = vmul.f32 %v8985, %v9029
        %v9061 = vmul.f32 %v8986, %v9033
        %v9062 = vmul.f32 %v8987, %v9029
        %v9063 = vmul.f32 %v8988, %v9033
        %v9064 = vmul.f32 %v8989, %v9029
        %v9065 = vmul.f32 %v8990, %v9033
        %v9066 = vmul.f32 %v8991, %v9029
        %v9067 = vmul.f32 %v8992, %v9033
        %v9068 = vmul.f32 %v8993, %v9029
        %v9069 = vmul.f32 %v8994, %v9033
        %v9070 = vmul.f32 %v8995, %v9029
        %v9071 = vmul.f32 %v8996, %v9033
        %v9072 = vmul.f32 %v8997, %v9029
        %v9073 = vmul.f32 %v8998, %v9033
        %v9074 = vmul.f32 %v8999, %v9029
        %v9075 = vmul.f32 %v9000, %v9033
        %v9076 = vmul.f32 %v9001, %v9029
        %v9077 = vmul.f32 %v9002, %v9033
        %v9078 = vmul.f32 %v9003, %v9029
        %v9079 = vmul.f32 %v9004, %v9033
        %v9080 = vmul.f32 %v9005, %v9029
        %v9081 = vmul.f32 %v9006, %v9033
        %v9082 = vmul.f32 %v9007, %v9029
        %v9083 = vmul.f32 %v9008, %v9033
        %v9084 = vmul.f32 %v9009, %v9029
        %v9085 = vmul.f32 %v9010, %v9033
        %v9086 = vmul.f32 %v9011, %v9029
        %v9087 = vmul.f32 %v9012, %v9033
        %v9088 = vmul.f32 %v9013, %v9029
        %v9089 = vmul.f32 %v9014, %v9033
        %v9090 = vmul.f32 %v9015, %v9029
        %v9091 = vmul.f32 %v9016, %v9033
        %v9092 = vmul.f32 %v9017, %v9029
        %v9093 = vmul.f32 %v9018, %v9033
        %v9094 = vmul.f32 %v9019, %v9029
        %v9095 = vmul.f32 %v9020, %v9033
        %v9096 = vmul.f32 %v9021, %v9029
        %v9097 = vmul.f32 %v9022, %v9033
        %v9098 = vmul.f32 %v9023, %v9029
        %v9099 = vmul.f32 %v9024, %v9033
        %v9101 = vlaneseq
        %v9102 = vshrl.u32 %v9101, 7
        %v9103 = vsub.s32 0, %v9102
        %v9104 = vrot.slane %v8512, %v9103
        %v9105 = vlaneseq
        %v9106 = vshrl.u32 %v9105, 7
        %v9107 = vsub.s32 1, %v9106
        %v9108 = vrot.slane %v8512, %v9107
        %v9111 = vadd.f32 %v9036, %v9104
        %v9112 = vadd.f32 %v9037, %v9108
        %v9113 = vadd.f32 %v9038, %v9104
        %v9114 = vadd.f32 %v9039, %v9108
        %v9115 = vadd.f32 %v9040, %v9104
        %v9116 = vadd.f32 %v9041, %v9108
        %v9117 = vadd.f32 %v9042, %v9104
        %v9118 = vadd.f32 %v9043, %v9108
        %v9119 = vadd.f32 %v9044, %v9104
        %v9120 = vadd.f32 %v9045, %v9108
        %v9121 = vadd.f32 %v9046, %v9104
        %v9122 = vadd.f32 %v9047, %v9108
        %v9123 = vadd.f32 %v9048, %v9104
        %v9124 = vadd.f32 %v9049, %v9108
        %v9125 = vadd.f32 %v9050, %v9104
        %v9126 = vadd.f32 %v9051, %v9108
        %v9127 = vadd.f32 %v9052, %v9104
        %v9128 = vadd.f32 %v9053, %v9108
        %v9129 = vadd.f32 %v9054, %v9104
        %v9130 = vadd.f32 %v9055, %v9108
        %v9131 = vadd.f32 %v9056, %v9104
        %v9132 = vadd.f32 %v9057, %v9108
        %v9133 = vadd.f32 %v9058, %v9104
        %v9134 = vadd.f32 %v9059, %v9108
        %v9135 = vadd.f32 %v9060, %v9104
        %v9136 = vadd.f32 %v9061, %v9108
        %v9137 = vadd.f32 %v9062, %v9104
        %v9138 = vadd.f32 %v9063, %v9108
        %v9139 = vadd.f32 %v9064, %v9104
        %v9140 = vadd.f32 %v9065, %v9108
        %v9141 = vadd.f32 %v9066, %v9104
        %v9142 = vadd.f32 %v9067, %v9108
        %v9143 = vadd.f32 %v9068, %v9104
        %v9144 = vadd.f32 %v9069, %v9108
        %v9145 = vadd.f32 %v9070, %v9104
        %v9146 = vadd.f32 %v9071, %v9108
        %v9147 = vadd.f32 %v9072, %v9104
        %v9148 = vadd.f32 %v9073, %v9108
        %v9149 = vadd.f32 %v9074, %v9104
        %v9150 = vadd.f32 %v9075, %v9108
        %v9151 = vadd.f32 %v9076, %v9104
        %v9152 = vadd.f32 %v9077, %v9108
        %v9153 = vadd.f32 %v9078, %v9104
        %v9154 = vadd.f32 %v9079, %v9108
        %v9155 = vadd.f32 %v9080, %v9104
        %v9156 = vadd.f32 %v9081, %v9108
        %v9157 = vadd.f32 %v9082, %v9104
        %v9158 = vadd.f32 %v9083, %v9108
        %v9159 = vadd.f32 %v9084, %v9104
        %v9160 = vadd.f32 %v9085, %v9108
        %v9161 = vadd.f32 %v9086, %v9104
        %v9162 = vadd.f32 %v9087, %v9108
        %v9163 = vadd.f32 %v9088, %v9104
        %v9164 = vadd.f32 %v9089, %v9108
        %v9165 = vadd.f32 %v9090, %v9104
        %v9166 = vadd.f32 %v9091, %v9108
        %v9167 = vadd.f32 %v9092, %v9104
        %v9168 = vadd.f32 %v9093, %v9108
        %v9169 = vadd.f32 %v9094, %v9104
        %v9170 = vadd.f32 %v9095, %v9108
        %v9171 = vadd.f32 %v9096, %v9104
        %v9172 = vadd.f32 %v9097, %v9108
        %v9173 = vadd.f32 %v9098, %v9104
        %v9174 = vadd.f32 %v9099, %v9108
        %v9175 = vpack.c.bf16 %v9113, %v9111
        %v9176 = vpack.c.bf16 %v9114, %v9112
        %v9177 = vpack.c.bf16 %v9117, %v9115
        %v9178 = vpack.c.bf16 %v9118, %v9116
        %v9179 = vpack.c.bf16 %v9121, %v9119
        %v9180 = vpack.c.bf16 %v9122, %v9120
        %v9181 = vpack.c.bf16 %v9125, %v9123
        %v9182 = vpack.c.bf16 %v9126, %v9124
        %v9183 = vpack.c.bf16 %v9129, %v9127
        %v9184 = vpack.c.bf16 %v9130, %v9128
        %v9185 = vpack.c.bf16 %v9133, %v9131
        %v9186 = vpack.c.bf16 %v9134, %v9132
        %v9187 = vpack.c.bf16 %v9137, %v9135
        %v9188 = vpack.c.bf16 %v9138, %v9136
        %v9189 = vpack.c.bf16 %v9141, %v9139
        %v9190 = vpack.c.bf16 %v9142, %v9140
        %v9191 = vpack.c.bf16 %v9145, %v9143
        %v9192 = vpack.c.bf16 %v9146, %v9144
        %v9193 = vpack.c.bf16 %v9149, %v9147
        %v9194 = vpack.c.bf16 %v9150, %v9148
        %v9195 = vpack.c.bf16 %v9153, %v9151
        %v9196 = vpack.c.bf16 %v9154, %v9152
        %v9197 = vpack.c.bf16 %v9157, %v9155
        %v9198 = vpack.c.bf16 %v9158, %v9156
        %v9199 = vpack.c.bf16 %v9161, %v9159
        %v9200 = vpack.c.bf16 %v9162, %v9160
        %v9201 = vpack.c.bf16 %v9165, %v9163
        %v9202 = vpack.c.bf16 %v9166, %v9164
        %v9203 = vpack.c.bf16 %v9169, %v9167
        %v9204 = vpack.c.bf16 %v9170, %v9168
        %v9205 = vpack.c.bf16 %v9173, %v9171
        %v9206 = vpack.c.bf16 %v9174, %v9172
        %v9207 = vld [vmem:[%s683] sm:$0xff]
        %v9208 = vld [vmem:[%s683 + $0x8] sm:$0xff]
        %v9209 = vld [vmem:[%s683 + $0x10] sm:$0xff]
        %v9210 = vld [vmem:[%s683 + $0x18] sm:$0xff]
        %v9211 = vld [vmem:[%s683 + $0x20] sm:$0xff]
        %v9212 = vld [vmem:[%s683 + $0x28] sm:$0xff]
        %v9213 = vld [vmem:[%s683 + $0x30] sm:$0xff]
        %v9214 = vld [vmem:[%s683 + $0x38] sm:$0xff]
        %v9215 = vld [vmem:[%s683 + $0x40] sm:$0xff]
        %v9216 = vld [vmem:[%s683 + $0x48] sm:$0xff]
        %v9217 = vld [vmem:[%s683 + $0x50] sm:$0xff]
        %v9218 = vld [vmem:[%s683 + $0x58] sm:$0xff]
        %v9219 = vld [vmem:[%s683 + $0x60] sm:$0xff]
        %v9220 = vld [vmem:[%s683 + $0x68] sm:$0xff]
        %v9221 = vld [vmem:[%s683 + $0x70] sm:$0xff]
        %v9222 = vld [vmem:[%s683 + $0x78] sm:$0xff]
        %v9223 = vld [vmem:[%s683 + $0x80] sm:$0xff]
        %v9224 = vld [vmem:[%s683 + $0x88] sm:$0xff]
        %v9225 = vld [vmem:[%s683 + $0x90] sm:$0xff]
        %v9226 = vld [vmem:[%s683 + $0x98] sm:$0xff]
        %v9227 = vld [vmem:[%s683 + $0xa0] sm:$0xff]
        %v9228 = vld [vmem:[%s683 + $0xa8] sm:$0xff]
        %v9229 = vld [vmem:[%s683 + $0xb0] sm:$0xff]
        %v9230 = vld [vmem:[%s683 + $0xb8] sm:$0xff]
        %v9231 = vld [vmem:[%s683 + $0xc0] sm:$0xff]
        %v9232 = vld [vmem:[%s683 + $0xc8] sm:$0xff]
        %v9233 = vld [vmem:[%s683 + $0xd0] sm:$0xff]
        %v9234 = vld [vmem:[%s683 + $0xd8] sm:$0xff]
        %v9235 = vld [vmem:[%s683 + $0xe0] sm:$0xff]
        %v9236 = vld [vmem:[%s683 + $0xe8] sm:$0xff]
        %v9237 = vld [vmem:[%s683 + $0xf0] sm:$0xff]
        %v9238 = vld [vmem:[%s683 + $0xf8] sm:$0xff]
        %v9239 = vld [vmem:[%s814] sm:$0x3]
        %v9241 = vlaneseq
        %v9242 = vshrl.u32 %v9241, 7
        %v9243 = vsub.s32 0, %v9242
        %v9244 = vrot.slane %v9239, %v9243
        %v9245 = vlaneseq
        %v9246 = vshrl.u32 %v9245, 7
        %v9247 = vsub.s32 1, %v9246
        %v9248 = vrot.slane %v9239, %v9247
        %v9283 = vunpack.c.l.b16 %v9207
        %v9284 = vunpack.c.h.b16 %v9207
        %v9285 = vunpack.c.l.b16 %v9208
        %v9286 = vunpack.c.h.b16 %v9208
        %v9287 = vunpack.c.l.b16 %v9209
        %v9288 = vunpack.c.h.b16 %v9209
        %v9289 = vunpack.c.l.b16 %v9210
        %v9290 = vunpack.c.h.b16 %v9210
        %v9291 = vunpack.c.l.b16 %v9211
        %v9292 = vunpack.c.h.b16 %v9211
        %v9293 = vunpack.c.l.b16 %v9212
        %v9294 = vunpack.c.h.b16 %v9212
        %v9295 = vunpack.c.l.b16 %v9213
        %v9296 = vunpack.c.h.b16 %v9213
        %v9297 = vunpack.c.l.b16 %v9214
        %v9298 = vunpack.c.h.b16 %v9214
        %v9299 = vunpack.c.l.b16 %v9215
        %v9300 = vunpack.c.h.b16 %v9215
        %v9301 = vunpack.c.l.b16 %v9216
        %v9302 = vunpack.c.h.b16 %v9216
        %v9303 = vunpack.c.l.b16 %v9217
        %v9304 = vunpack.c.h.b16 %v9217
        %v9305 = vunpack.c.l.b16 %v9218
        %v9306 = vunpack.c.h.b16 %v9218
        %v9307 = vunpack.c.l.b16 %v9219
        %v9308 = vunpack.c.h.b16 %v9219
        %v9309 = vunpack.c.l.b16 %v9220
        %v9310 = vunpack.c.h.b16 %v9220
        %v9311 = vunpack.c.l.b16 %v9221
        %v9312 = vunpack.c.h.b16 %v9221
        %v9313 = vunpack.c.l.b16 %v9222
        %v9314 = vunpack.c.h.b16 %v9222
        %v9315 = vunpack.c.l.b16 %v9223
        %v9316 = vunpack.c.h.b16 %v9223
        %v9317 = vunpack.c.l.b16 %v9224
        %v9318 = vunpack.c.h.b16 %v9224
        %v9319 = vunpack.c.l.b16 %v9225
        %v9320 = vunpack.c.h.b16 %v9225
        %v9321 = vunpack.c.l.b16 %v9226
        %v9322 = vunpack.c.h.b16 %v9226
        %v9323 = vunpack.c.l.b16 %v9227
        %v9324 = vunpack.c.h.b16 %v9227
        %v9325 = vunpack.c.l.b16 %v9228
        %v9326 = vunpack.c.h.b16 %v9228
        %v9327 = vunpack.c.l.b16 %v9229
        %v9328 = vunpack.c.h.b16 %v9229
        %v9329 = vunpack.c.l.b16 %v9230
        %v9330 = vunpack.c.h.b16 %v9230
        %v9331 = vunpack.c.l.b16 %v9231
        %v9332 = vunpack.c.h.b16 %v9231
        %v9333 = vunpack.c.l.b16 %v9232
        %v9334 = vunpack.c.h.b16 %v9232
        %v9335 = vunpack.c.l.b16 %v9233
        %v9336 = vunpack.c.h.b16 %v9233
        %v9337 = vunpack.c.l.b16 %v9234
        %v9338 = vunpack.c.h.b16 %v9234
        %v9339 = vunpack.c.l.b16 %v9235
        %v9340 = vunpack.c.h.b16 %v9235
        %v9341 = vunpack.c.l.b16 %v9236
        %v9342 = vunpack.c.h.b16 %v9236
        %v9343 = vunpack.c.l.b16 %v9237
        %v9344 = vunpack.c.h.b16 %v9237
        %v9345 = vunpack.c.l.b16 %v9238
        %v9346 = vunpack.c.h.b16 %v9238
        %v9347 = vpack.c.b16 %v9285, %v9283
        %v9348 = vpack.c.b16 %v9286, %v9284
        %v9349 = vpack.c.b16 %v9289, %v9287
        %v9350 = vpack.c.b16 %v9290, %v9288
        %v9351 = vpack.c.b16 %v9293, %v9291
        %v9352 = vpack.c.b16 %v9294, %v9292
        %v9353 = vpack.c.b16 %v9297, %v9295
        %v9354 = vpack.c.b16 %v9298, %v9296
        %v9355 = vpack.c.b16 %v9301, %v9299
        %v9356 = vpack.c.b16 %v9302, %v9300
        %v9357 = vpack.c.b16 %v9305, %v9303
        %v9358 = vpack.c.b16 %v9306, %v9304
        %v9359 = vpack.c.b16 %v9309, %v9307
        %v9360 = vpack.c.b16 %v9310, %v9308
        %v9361 = vpack.c.b16 %v9313, %v9311
        %v9362 = vpack.c.b16 %v9314, %v9312
        %v9363 = vpack.c.b16 %v9317, %v9315
        %v9364 = vpack.c.b16 %v9318, %v9316
        %v9365 = vpack.c.b16 %v9321, %v9319
        %v9366 = vpack.c.b16 %v9322, %v9320
        %v9367 = vpack.c.b16 %v9325, %v9323
        %v9368 = vpack.c.b16 %v9326, %v9324
        %v9369 = vpack.c.b16 %v9329, %v9327
        %v9370 = vpack.c.b16 %v9330, %v9328
        %v9371 = vpack.c.b16 %v9333, %v9331
        %v9372 = vpack.c.b16 %v9334, %v9332
        %v9373 = vpack.c.b16 %v9337, %v9335
        %v9374 = vpack.c.b16 %v9338, %v9336
        %v9375 = vpack.c.b16 %v9341, %v9339
        %v9376 = vpack.c.b16 %v9342, %v9340
        %v9377 = vpack.c.b16 %v9345, %v9343
        %v9378 = vpack.c.b16 %v9346, %v9344
        %9411 = vmatprep.subr.bf16.mxu0 %v9348
        %9412 = vmatpush1.bf16.msra.mxu0 %v9347
        %9413 = vmatprep.subr.bf16.mxu0 %v9350
        %9414 = vmatpush1.bf16.msra.mxu0 %v9349
        %9415 = vmatprep.subr.bf16.mxu0 %v9352
        %9416 = vmatpush1.bf16.msra.mxu0 %v9351
        %9417 = vmatprep.subr.bf16.mxu0 %v9354
        %9418 = vmatpush1.bf16.msra.mxu0 %v9353
        %9419 = vmatprep.subr.bf16.mxu0 %v9356
        %9420 = vmatpush1.bf16.msra.mxu0 %v9355
        %9421 = vmatprep.subr.bf16.mxu0 %v9358
        %9422 = vmatpush1.bf16.msra.mxu0 %v9357
        %9423 = vmatprep.subr.bf16.mxu0 %v9360
        %9424 = vmatpush1.bf16.msra.mxu0 %v9359
        %9425 = vmatprep.subr.bf16.mxu0 %v9362
        %9426 = vmatpush1.bf16.msra.mxu0 %v9361
        %9427 = vmatprep.subr.bf16.mxu0 %v9364
        %9428 = vmatpush1.bf16.msra.mxu0 %v9363
        %9429 = vmatprep.subr.bf16.mxu0 %v9366
        %9430 = vmatpush1.bf16.msra.mxu0 %v9365
        %9431 = vmatprep.subr.bf16.mxu0 %v9368
        %9432 = vmatpush1.bf16.msra.mxu0 %v9367
        %9433 = vmatprep.subr.bf16.mxu0 %v9370
        %9434 = vmatpush1.bf16.msra.mxu0 %v9369
        %9435 = vmatprep.subr.bf16.mxu0 %v9372
        %9436 = vmatpush1.bf16.msra.mxu0 %v9371
        %9437 = vmatprep.subr.bf16.mxu0 %v9374
        %9438 = vmatpush1.bf16.msra.mxu0 %v9373
        %9439 = vmatprep.subr.bf16.mxu0 %v9376
        %9440 = vmatpush1.bf16.msra.mxu0 %v9375
        %9441 = vmatprep.subr.bf16.mxu0 %v9378
        %9442 = vmatpush1.bf16.msra.mxu0 %v9377
        %9443 = vmatprep.mubr.bf16.mxu0 %v9176
        %9444 = vmatmul.mubr.bf16.gmra.mrb[0].mxu0 %v9175
        %v9445 = vpop.f32.mrb[0].mxu0
        %v9446 = vadd.f32 %v9244, %v9445
        %v9447 = vpop.f32.mrb[0].mxu0
        %v9448 = vadd.f32 %v9248, %v9447
        %v9449 = vpop.f32.mrb[0].mxu0
        %v9450 = vadd.f32 %v9244, %v9449
        %v9451 = vpop.f32.mrb[0].mxu0
        %v9452 = vadd.f32 %v9248, %v9451
        %9453 = vmatprep.mubr.bf16.mxu0 %v9178
        %9454 = vmatmul.mubr.bf16.gmra.mrb[0].mxu0 %v9177
        %v9455 = vpop.f32.mrb[0].mxu0
        %v9456 = vadd.f32 %v9244, %v9455
        %v9457 = vpop.f32.mrb[0].mxu0
        %v9458 = vadd.f32 %v9248, %v9457
        %v9459 = vpop.f32.mrb[0].mxu0
        %v9460 = vadd.f32 %v9244, %v9459
        %v9461 = vpop.f32.mrb[0].mxu0
        %v9462 = vadd.f32 %v9248, %v9461
        %9463 = vmatprep.mubr.bf16.mxu0 %v9180
        %9464 = vmatmul.mubr.bf16.gmra.mrb[0].mxu0 %v9179
        %v9465 = vpop.f32.mrb[0].mxu0
        %v9466 = vadd.f32 %v9244, %v9465
        %v9467 = vpop.f32.mrb[0].mxu0
        %v9468 = vadd.f32 %v9248, %v9467
        %v9469 = vpop.f32.mrb[0].mxu0
        %v9470 = vadd.f32 %v9244, %v9469
        %v9471 = vpop.f32.mrb[0].mxu0
        %v9472 = vadd.f32 %v9248, %v9471
        %9473 = vmatprep.mubr.bf16.mxu0 %v9182
        %9474 = vmatmul.mubr.bf16.gmra.mrb[0].mxu0 %v9181
        %v9475 = vpop.f32.mrb[0].mxu0
        %v9476 = vadd.f32 %v9244, %v9475
        %v9477 = vpop.f32.mrb[0].mxu0
        %v9478 = vadd.f32 %v9248, %v9477
        %v9479 = vpop.f32.mrb[0].mxu0
        %v9480 = vadd.f32 %v9244, %v9479
        %v9481 = vpop.f32.mrb[0].mxu0
        %v9482 = vadd.f32 %v9248, %v9481
        %9483 = vmatprep.mubr.bf16.mxu0 %v9184
        %9484 = vmatmul.mubr.bf16.gmra.mrb[0].mxu0 %v9183
        %v9485 = vpop.f32.mrb[0].mxu0
        %v9486 = vadd.f32 %v9244, %v9485
        %v9487 = vpop.f32.mrb[0].mxu0
        %v9488 = vadd.f32 %v9248, %v9487
        %v9489 = vpop.f32.mrb[0].mxu0
        %v9490 = vadd.f32 %v9244, %v9489
        %v9491 = vpop.f32.mrb[0].mxu0
        %v9492 = vadd.f32 %v9248, %v9491
        %9493 = vmatprep.mubr.bf16.mxu0 %v9186
        %9494 = vmatmul.mubr.bf16.gmra.mrb[0].mxu0 %v9185
        %v9495 = vpop.f32.mrb[0].mxu0
        %v9496 = vadd.f32 %v9244, %v9495
        %v9497 = vpop.f32.mrb[0].mxu0
        %v9498 = vadd.f32 %v9248, %v9497
        %v9499 = vpop.f32.mrb[0].mxu0
        %v9500 = vadd.f32 %v9244, %v9499
        %v9501 = vpop.f32.mrb[0].mxu0
        %v9502 = vadd.f32 %v9248, %v9501
        %9503 = vmatprep.mubr.bf16.mxu0 %v9188
        %9504 = vmatmul.mubr.bf16.gmra.mrb[0].mxu0 %v9187
        %v9505 = vpop.f32.mrb[0].mxu0
        %v9506 = vadd.f32 %v9244, %v9505
        %v9507 = vpop.f32.mrb[0].mxu0
        %v9508 = vadd.f32 %v9248, %v9507
        %v9509 = vpop.f32.mrb[0].mxu0
        %v9510 = vadd.f32 %v9244, %v9509
        %v9511 = vpop.f32.mrb[0].mxu0
        %v9512 = vadd.f32 %v9248, %v9511
        %9513 = vmatprep.mubr.bf16.mxu0 %v9190
        %9514 = vmatmul.mubr.bf16.gmra.mrb[0].mxu0 %v9189
        %v9515 = vpop.f32.mrb[0].mxu0
        %v9516 = vadd.f32 %v9244, %v9515
        %v9517 = vpop.f32.mrb[0].mxu0
        %v9518 = vadd.f32 %v9248, %v9517
        %v9519 = vpop.f32.mrb[0].mxu0
        %v9520 = vadd.f32 %v9244, %v9519
        %v9521 = vpop.f32.mrb[0].mxu0
        %v9522 = vadd.f32 %v9248, %v9521
        %9523 = vmatprep.mubr.bf16.mxu0 %v9192
        %9524 = vmatmul.mubr.bf16.gmra.mrb[0].mxu0 %v9191
        %v9525 = vpop.f32.mrb[0].mxu0
        %v9526 = vadd.f32 %v9244, %v9525
        %v9527 = vpop.f32.mrb[0].mxu0
        %v9528 = vadd.f32 %v9248, %v9527
        %v9529 = vpop.f32.mrb[0].mxu0
        %v9530 = vadd.f32 %v9244, %v9529
        %v9531 = vpop.f32.mrb[0].mxu0
        %v9532 = vadd.f32 %v9248, %v9531
        %9533 = vmatprep.mubr.bf16.mxu0 %v9194
        %9534 = vmatmul.mubr.bf16.gmra.mrb[0].mxu0 %v9193
        %v9535 = vpop.f32.mrb[0].mxu0
        %v9536 = vadd.f32 %v9244, %v9535
        %v9537 = vpop.f32.mrb[0].mxu0
        %v9538 = vadd.f32 %v9248, %v9537
        %v9539 = vpop.f32.mrb[0].mxu0
        %v9540 = vadd.f32 %v9244, %v9539
        %v9541 = vpop.f32.mrb[0].mxu0
        %v9542 = vadd.f32 %v9248, %v9541
        %9543 = vmatprep.mubr.bf16.mxu0 %v9196
        %9544 = vmatmul.mubr.bf16.gmra.mrb[0].mxu0 %v9195
        %v9545 = vpop.f32.mrb[0].mxu0
        %v9546 = vadd.f32 %v9244, %v9545
        %v9547 = vpop.f32.mrb[0].mxu0
        %v9548 = vadd.f32 %v9248, %v9547
        %v9549 = vpop.f32.mrb[0].mxu0
        %v9550 = vadd.f32 %v9244, %v9549
        %v9551 = vpop.f32.mrb[0].mxu0
        %v9552 = vadd.f32 %v9248, %v9551
        %9553 = vmatprep.mubr.bf16.mxu0 %v9198
        %9554 = vmatmul.mubr.bf16.gmra.mrb[0].mxu0 %v9197
        %v9555 = vpop.f32.mrb[0].mxu0
        %v9556 = vadd.f32 %v9244, %v9555
        %v9557 = vpop.f32.mrb[0].mxu0
        %v9558 = vadd.f32 %v9248, %v9557
        %v9559 = vpop.f32.mrb[0].mxu0
        %v9560 = vadd.f32 %v9244, %v9559
        %v9561 = vpop.f32.mrb[0].mxu0
        %v9562 = vadd.f32 %v9248, %v9561
        %9563 = vmatprep.mubr.bf16.mxu0 %v9200
        %9564 = vmatmul.mubr.bf16.gmra.mrb[0].mxu0 %v9199
        %v9565 = vpop.f32.mrb[0].mxu0
        %v9566 = vadd.f32 %v9244, %v9565
        %v9567 = vpop.f32.mrb[0].mxu0
        %v9568 = vadd.f32 %v9248, %v9567
        %v9569 = vpop.f32.mrb[0].mxu0
        %v9570 = vadd.f32 %v9244, %v9569
        %v9571 = vpop.f32.mrb[0].mxu0
        %v9572 = vadd.f32 %v9248, %v9571
        %9573 = vmatprep.mubr.bf16.mxu0 %v9202
        %9574 = vmatmul.mubr.bf16.gmra.mrb[0].mxu0 %v9201
        %v9575 = vpop.f32.mrb[0].mxu0
        %v9576 = vadd.f32 %v9244, %v9575
        %v9577 = vpop.f32.mrb[0].mxu0
        %v9578 = vadd.f32 %v9248, %v9577
        %v9579 = vpop.f32.mrb[0].mxu0
        %v9580 = vadd.f32 %v9244, %v9579
        %v9581 = vpop.f32.mrb[0].mxu0
        %v9582 = vadd.f32 %v9248, %v9581
        %9583 = vmatprep.mubr.bf16.mxu0 %v9204
        %9584 = vmatmul.mubr.bf16.gmra.mrb[0].mxu0 %v9203
        %v9585 = vpop.f32.mrb[0].mxu0
        %v9586 = vadd.f32 %v9244, %v9585
        %v9587 = vpop.f32.mrb[0].mxu0
        %v9588 = vadd.f32 %v9248, %v9587
        %v9589 = vpop.f32.mrb[0].mxu0
        %v9590 = vadd.f32 %v9244, %v9589
        %v9591 = vpop.f32.mrb[0].mxu0
        %v9592 = vadd.f32 %v9248, %v9591
        %9593 = vmatprep.mubr.bf16.mxu0 %v9206
        %9594 = vmatmul.mubr.bf16.gmra.mrb[0].mxu0 %v9205
        %v9595 = vpop.f32.mrb[0].mxu0
        %v9596 = vadd.f32 %v9244, %v9595
        %v9597 = vpop.f32.mrb[0].mxu0
        %v9598 = vadd.f32 %v9248, %v9597
        %v9599 = vpop.f32.mrb[0].mxu0
        %v9600 = vadd.f32 %v9244, %v9599
        %v9601 = vpop.f32.mrb[0].mxu0
        %v9602 = vadd.f32 %v9248, %v9601
        %9603 = vdwg.mxu0
        %v9604 = vmul.f32 %v9446, 0.5
        %v9605 = vmul.f32 %v9448, 0.5
        %v9606 = vmul.f32 %v9450, 0.5
        %v9607 = vmul.f32 %v9452, 0.5
        %v9608 = vmul.f32 %v9456, 0.5
        %v9609 = vmul.f32 %v9458, 0.5
        %v9610 = vmul.f32 %v9460, 0.5
        %v9611 = vmul.f32 %v9462, 0.5
        %v9612 = vmul.f32 %v9466, 0.5
        %v9613 = vmul.f32 %v9468, 0.5
        %v9614 = vmul.f32 %v9470, 0.5
        %v9615 = vmul.f32 %v9472, 0.5
        %v9616 = vmul.f32 %v9476, 0.5
        %v9617 = vmul.f32 %v9478, 0.5
        %v9618 = vmul.f32 %v9480, 0.5
        %v9619 = vmul.f32 %v9482, 0.5
        %v9620 = vmul.f32 %v9486, 0.5
        %v9621 = vmul.f32 %v9488, 0.5
        %v9622 = vmul.f32 %v9490, 0.5
        %v9623 = vmul.f32 %v9492, 0.5
        %v9624 = vmul.f32 %v9496, 0.5
        %v9625 = vmul.f32 %v9498, 0.5
        %v9626 = vmul.f32 %v9500, 0.5
        %v9627 = vmul.f32 %v9502, 0.5
        %v9628 = vmul.f32 %v9506, 0.5
        %v9629 = vmul.f32 %v9508, 0.5
        %v9630 = vmul.f32 %v9510, 0.5
        %v9631 = vmul.f32 %v9512, 0.5
        %v9632 = vmul.f32 %v9516, 0.5
        %v9633 = vmul.f32 %v9518, 0.5
        %v9634 = vmul.f32 %v9520, 0.5
        %v9635 = vmul.f32 %v9522, 0.5
        %v9636 = vmul.f32 %v9526, 0.5
        %v9637 = vmul.f32 %v9528, 0.5
        %v9638 = vmul.f32 %v9530, 0.5
        %v9639 = vmul.f32 %v9532, 0.5
        %v9640 = vmul.f32 %v9536, 0.5
        %v9641 = vmul.f32 %v9538, 0.5
        %v9642 = vmul.f32 %v9540, 0.5
        %v9643 = vmul.f32 %v9542, 0.5
        %v9644 = vmul.f32 %v9546, 0.5
        %v9645 = vmul.f32 %v9548, 0.5
        %v9646 = vmul.f32 %v9550, 0.5
        %v9647 = vmul.f32 %v9552, 0.5
        %v9648 = vmul.f32 %v9556, 0.5
        %v9649 = vmul.f32 %v9558, 0.5
        %v9650 = vmul.f32 %v9560, 0.5
        %v9651 = vmul.f32 %v9562, 0.5
        %v9652 = vmul.f32 %v9566, 0.5
        %v9653 = vmul.f32 %v9568, 0.5
        %v9654 = vmul.f32 %v9570, 0.5
        %v9655 = vmul.f32 %v9572, 0.5
        %v9656 = vmul.f32 %v9576, 0.5
        %v9657 = vmul.f32 %v9578, 0.5
        %v9658 = vmul.f32 %v9580, 0.5
        %v9659 = vmul.f32 %v9582, 0.5
        %v9660 = vmul.f32 %v9586, 0.5
        %v9661 = vmul.f32 %v9588, 0.5
        %v9662 = vmul.f32 %v9590, 0.5
        %v9663 = vmul.f32 %v9592, 0.5
        %v9664 = vmul.f32 %v9596, 0.5
        %v9665 = vmul.f32 %v9598, 0.5
        %v9666 = vmul.f32 %v9600, 0.5
        %v9667 = vmul.f32 %v9602, 0.5
        %v9668 = vmul.f32 %v9446, 0.70710677
        %v9669 = vmul.f32 %v9448, 0.70710677
        %v9670 = vmul.f32 %v9450, 0.70710677
        %v9671 = vmul.f32 %v9452, 0.70710677
        %v9672 = vmul.f32 %v9456, 0.70710677
        %v9673 = vmul.f32 %v9458, 0.70710677
        %v9674 = vmul.f32 %v9460, 0.70710677
        %v9675 = vmul.f32 %v9462, 0.70710677
        %v9676 = vmul.f32 %v9466, 0.70710677
        %v9677 = vmul.f32 %v9468, 0.70710677
        %v9678 = vmul.f32 %v9470, 0.70710677
        %v9679 = vmul.f32 %v9472, 0.70710677
        %v9680 = vmul.f32 %v9476, 0.70710677
        %v9681 = vmul.f32 %v9478, 0.70710677
        %v9682 = vmul.f32 %v9480, 0.70710677
        %v9683 = vmul.f32 %v9482, 0.70710677
        %v9684 = vmul.f32 %v9486, 0.70710677
        %v9685 = vmul.f32 %v9488, 0.70710677
        %v9686 = vmul.f32 %v9490, 0.70710677
        %v9687 = vmul.f32 %v9492, 0.70710677
        %v9688 = vmul.f32 %v9496, 0.70710677
        %v9689 = vmul.f32 %v9498, 0.70710677
        %v9690 = vmul.f32 %v9500, 0.70710677
        %v9691 = vmul.f32 %v9502, 0.70710677
        %v9692 = vmul.f32 %v9506, 0.70710677
        %v9693 = vmul.f32 %v9508, 0.70710677
        %v9694 = vmul.f32 %v9510, 0.70710677
        %v9695 = vmul.f32 %v9512, 0.70710677
        %v9696 = vmul.f32 %v9516, 0.70710677
        %v9697 = vmul.f32 %v9518, 0.70710677
        %v9698 = vmul.f32 %v9520, 0.70710677
        %v9699 = vmul.f32 %v9522, 0.70710677
        %v9700 = vmul.f32 %v9526, 0.70710677
        %v9701 = vmul.f32 %v9528, 0.70710677
        %v9702 = vmul.f32 %v9530, 0.70710677
        %v9703 = vmul.f32 %v9532, 0.70710677
        %v9704 = vmul.f32 %v9536, 0.70710677
        %v9705 = vmul.f32 %v9538, 0.70710677
        %v9706 = vmul.f32 %v9540, 0.70710677
        %v9707 = vmul.f32 %v9542, 0.70710677
        %v9708 = vmul.f32 %v9546, 0.70710677
        %v9709 = vmul.f32 %v9548, 0.70710677
        %v9710 = vmul.f32 %v9550, 0.70710677
        %v9711 = vmul.f32 %v9552, 0.70710677
        %v9712 = vmul.f32 %v9556, 0.70710677
        %v9713 = vmul.f32 %v9558, 0.70710677
        %v9714 = vmul.f32 %v9560, 0.70710677
        %v9715 = vmul.f32 %v9562, 0.70710677
        %v9716 = vmul.f32 %v9566, 0.70710677
        %v9717 = vmul.f32 %v9568, 0.70710677
        %v9718 = vmul.f32 %v9570, 0.70710677
        %v9719 = vmul.f32 %v9572, 0.70710677
        %v9720 = vmul.f32 %v9576, 0.70710677
        %v9721 = vmul.f32 %v9578, 0.70710677
        %v9722 = vmul.f32 %v9580, 0.70710677
        %v9723 = vmul.f32 %v9582, 0.70710677
        %v9724 = vmul.f32 %v9586, 0.70710677
        %v9725 = vmul.f32 %v9588, 0.70710677
        %v9726 = vmul.f32 %v9590, 0.70710677
        %v9727 = vmul.f32 %v9592, 0.70710677
        %v9728 = vmul.f32 %v9596, 0.70710677
        %v9729 = vmul.f32 %v9598, 0.70710677
        %v9730 = vmul.f32 %v9600, 0.70710677
        %v9731 = vmul.f32 %v9602, 0.70710677
        %v9732 = verf.f32.pop %v9668
        %v9733 = verf.f32.pop %v9669
        %v9734 = verf.f32.pop %v9670
        %v9735 = verf.f32.pop %v9671
        %v9736 = verf.f32.pop %v9672
        %v9737 = verf.f32.pop %v9673
        %v9738 = verf.f32.pop %v9674
        %v9739 = verf.f32.pop %v9675
        %v9740 = verf.f32.pop %v9676
        %v9741 = verf.f32.pop %v9677
        %v9742 = verf.f32.pop %v9678
        %v9743 = verf.f32.pop %v9679
        %v9744 = verf.f32.pop %v9680
        %v9745 = verf.f32.pop %v9681
        %v9746 = verf.f32.pop %v9682
        %v9747 = verf.f32.pop %v9683
        %v9748 = verf.f32.pop %v9684
        %v9749 = verf.f32.pop %v9685
        %v9750 = verf.f32.pop %v9686
        %v9751 = verf.f32.pop %v9687
        %v9752 = verf.f32.pop %v9688
        %v9753 = verf.f32.pop %v9689
        %v9754 = verf.f32.pop %v9690
        %v9755 = verf.f32.pop %v9691
        %v9756 = verf.f32.pop %v9692
        %v9757 = verf.f32.pop %v9693
        %v9758 = verf.f32.pop %v9694
        %v9759 = verf.f32.pop %v9695
        %v9760 = verf.f32.pop %v9696
        %v9761 = verf.f32.pop %v9697
        %v9762 = verf.f32.pop %v9698
        %v9763 = verf.f32.pop %v9699
        %v9764 = verf.f32.pop %v9700
        %v9765 = verf.f32.pop %v9701
        %v9766 = verf.f32.pop %v9702
        %v9767 = verf.f32.pop %v9703
        %v9768 = verf.f32.pop %v9704
        %v9769 = verf.f32.pop %v9705
        %v9770 = verf.f32.pop %v9706
        %v9771 = verf.f32.pop %v9707
        %v9772 = verf.f32.pop %v9708
        %v9773 = verf.f32.pop %v9709
        %v9774 = verf.f32.pop %v9710
        %v9775 = verf.f32.pop %v9711
        %v9776 = verf.f32.pop %v9712
        %v9777 = verf.f32.pop %v9713
        %v9778 = verf.f32.pop %v9714
        %v9779 = verf.f32.pop %v9715
        %v9780 = verf.f32.pop %v9716
        %v9781 = verf.f32.pop %v9717
        %v9782 = verf.f32.pop %v9718
        %v9783 = verf.f32.pop %v9719
        %v9784 = verf.f32.pop %v9720
        %v9785 = verf.f32.pop %v9721
        %v9786 = verf.f32.pop %v9722
        %v9787 = verf.f32.pop %v9723
        %v9788 = verf.f32.pop %v9724
        %v9789 = verf.f32.pop %v9725
        %v9790 = verf.f32.pop %v9726
        %v9791 = verf.f32.pop %v9727
        %v9792 = verf.f32.pop %v9728
        %v9793 = verf.f32.pop %v9729
        %v9794 = verf.f32.pop %v9730
        %v9795 = verf.f32.pop %v9731
        %v9796 = vadd.f32 %v9732, 1.0
        %v9797 = vadd.f32 %v9733, 1.0
        %v9798 = vadd.f32 %v9734, 1.0
        %v9799 = vadd.f32 %v9735, 1.0
        %v9800 = vadd.f32 %v9736, 1.0
        %v9801 = vadd.f32 %v9737, 1.0
        %v9802 = vadd.f32 %v9738, 1.0
        %v9803 = vadd.f32 %v9739, 1.0
        %v9804 = vadd.f32 %v9740, 1.0
        %v9805 = vadd.f32 %v9741, 1.0
        %v9806 = vadd.f32 %v9742, 1.0
        %v9807 = vadd.f32 %v9743, 1.0
        %v9808 = vadd.f32 %v9744, 1.0
        %v9809 = vadd.f32 %v9745, 1.0
        %v9810 = vadd.f32 %v9746, 1.0
        %v9811 = vadd.f32 %v9747, 1.0
        %v9812 = vadd.f32 %v9748, 1.0
        %v9813 = vadd.f32 %v9749, 1.0
        %v9814 = vadd.f32 %v9750, 1.0
        %v9815 = vadd.f32 %v9751, 1.0
        %v9816 = vadd.f32 %v9752, 1.0
        %v9817 = vadd.f32 %v9753, 1.0
        %v9818 = vadd.f32 %v9754, 1.0
        %v9819 = vadd.f32 %v9755, 1.0
        %v9820 = vadd.f32 %v9756, 1.0
        %v9821 = vadd.f32 %v9757, 1.0
        %v9822 = vadd.f32 %v9758, 1.0
        %v9823 = vadd.f32 %v9759, 1.0
        %v9824 = vadd.f32 %v9760, 1.0
        %v9825 = vadd.f32 %v9761, 1.0
        %v9826 = vadd.f32 %v9762, 1.0
        %v9827 = vadd.f32 %v9763, 1.0
        %v9828 = vadd.f32 %v9764, 1.0
        %v9829 = vadd.f32 %v9765, 1.0
        %v9830 = vadd.f32 %v9766, 1.0
        %v9831 = vadd.f32 %v9767, 1.0
        %v9832 = vadd.f32 %v9768, 1.0
        %v9833 = vadd.f32 %v9769, 1.0
        %v9834 = vadd.f32 %v9770, 1.0
        %v9835 = vadd.f32 %v9771, 1.0
        %v9836 = vadd.f32 %v9772, 1.0
        %v9837 = vadd.f32 %v9773, 1.0
        %v9838 = vadd.f32 %v9774, 1.0
        %v9839 = vadd.f32 %v9775, 1.0
        %v9840 = vadd.f32 %v9776, 1.0
        %v9841 = vadd.f32 %v9777, 1.0
        %v9842 = vadd.f32 %v9778, 1.0
        %v9843 = vadd.f32 %v9779, 1.0
        %v9844 = vadd.f32 %v9780, 1.0
        %v9845 = vadd.f32 %v9781, 1.0
        %v9846 = vadd.f32 %v9782, 1.0
        %v9847 = vadd.f32 %v9783, 1.0
        %v9848 = vadd.f32 %v9784, 1.0
        %v9849 = vadd.f32 %v9785, 1.0
        %v9850 = vadd.f32 %v9786, 1.0
        %v9851 = vadd.f32 %v9787, 1.0
        %v9852 = vadd.f32 %v9788, 1.0
        %v9853 = vadd.f32 %v9789, 1.0
        %v9854 = vadd.f32 %v9790, 1.0
        %v9855 = vadd.f32 %v9791, 1.0
        %v9856 = vadd.f32 %v9792, 1.0
        %v9857 = vadd.f32 %v9793, 1.0
        %v9858 = vadd.f32 %v9794, 1.0
        %v9859 = vadd.f32 %v9795, 1.0
        %v9860 = vmul.f32 %v9604, %v9796
        %v9861 = vmul.f32 %v9605, %v9797
        %v9862 = vmul.f32 %v9606, %v9798
        %v9863 = vmul.f32 %v9607, %v9799
        %v9864 = vmul.f32 %v9608, %v9800
        %v9865 = vmul.f32 %v9609, %v9801
        %v9866 = vmul.f32 %v9610, %v9802
        %v9867 = vmul.f32 %v9611, %v9803
        %v9868 = vmul.f32 %v9612, %v9804
        %v9869 = vmul.f32 %v9613, %v9805
        %v9870 = vmul.f32 %v9614, %v9806
        %v9871 = vmul.f32 %v9615, %v9807
        %v9872 = vmul.f32 %v9616, %v9808
        %v9873 = vmul.f32 %v9617, %v9809
        %v9874 = vmul.f32 %v9618, %v9810
        %v9875 = vmul.f32 %v9619, %v9811
        %v9876 = vmul.f32 %v9620, %v9812
        %v9877 = vmul.f32 %v9621, %v9813
        %v9878 = vmul.f32 %v9622, %v9814
        %v9879 = vmul.f32 %v9623, %v9815
        %v9880 = vmul.f32 %v9624, %v9816
        %v9881 = vmul.f32 %v9625, %v9817
        %v9882 = vmul.f32 %v9626, %v9818
        %v9883 = vmul.f32 %v9627, %v9819
        %v9884 = vmul.f32 %v9628, %v9820
        %v9885 = vmul.f32 %v9629, %v9821
        %v9886 = vmul.f32 %v9630, %v9822
        %v9887 = vmul.f32 %v9631, %v9823
        %v9888 = vmul.f32 %v9632, %v9824
        %v9889 = vmul.f32 %v9633, %v9825
        %v9890 = vmul.f32 %v9634, %v9826
        %v9891 = vmul.f32 %v9635, %v9827
        %v9892 = vmul.f32 %v9636, %v9828
        %v9893 = vmul.f32 %v9637, %v9829
        %v9894 = vmul.f32 %v9638, %v9830
        %v9895 = vmul.f32 %v9639, %v9831
        %v9896 = vmul.f32 %v9640, %v9832
        %v9897 = vmul.f32 %v9641, %v9833
        %v9898 = vmul.f32 %v9642, %v9834
        %v9899 = vmul.f32 %v9643, %v9835
        %v9900 = vmul.f32 %v9644, %v9836
        %v9901 = vmul.f32 %v9645, %v9837
        %v9902 = vmul.f32 %v9646, %v9838
        %v9903 = vmul.f32 %v9647, %v9839
        %v9904 = vmul.f32 %v9648, %v9840
        %v9905 = vmul.f32 %v9649, %v9841
        %v9906 = vmul.f32 %v9650, %v9842
        %v9907 = vmul.f32 %v9651, %v9843
        %v9908 = vmul.f32 %v9652, %v9844
        %v9909 = vmul.f32 %v9653, %v9845
        %v9910 = vmul.f32 %v9654, %v9846
        %v9911 = vmul.f32 %v9655, %v9847
        %v9912 = vmul.f32 %v9656, %v9848
        %v9913 = vmul.f32 %v9657, %v9849
        %v9914 = vmul.f32 %v9658, %v9850
        %v9915 = vmul.f32 %v9659, %v9851
        %v9916 = vmul.f32 %v9660, %v9852
        %v9917 = vmul.f32 %v9661, %v9853
        %v9918 = vmul.f32 %v9662, %v9854
        %v9919 = vmul.f32 %v9663, %v9855
        %v9920 = vmul.f32 %v9664, %v9856
        %v9921 = vmul.f32 %v9665, %v9857
        %v9922 = vmul.f32 %v9666, %v9858
        %v9923 = vmul.f32 %v9667, %v9859
        %v9924 = vpack.c.bf16 %v9862, %v9860
        %v9925 = vpack.c.bf16 %v9863, %v9861
        %v9926 = vpack.c.bf16 %v9866, %v9864
        %v9927 = vpack.c.bf16 %v9867, %v9865
        %v9928 = vpack.c.bf16 %v9870, %v9868
        %v9929 = vpack.c.bf16 %v9871, %v9869
        %v9930 = vpack.c.bf16 %v9874, %v9872
        %v9931 = vpack.c.bf16 %v9875, %v9873
        %v9932 = vpack.c.bf16 %v9878, %v9876
        %v9933 = vpack.c.bf16 %v9879, %v9877
        %v9934 = vpack.c.bf16 %v9882, %v9880
        %v9935 = vpack.c.bf16 %v9883, %v9881
        %v9936 = vpack.c.bf16 %v9886, %v9884
        %v9937 = vpack.c.bf16 %v9887, %v9885
        %v9938 = vpack.c.bf16 %v9890, %v9888
        %v9939 = vpack.c.bf16 %v9891, %v9889
        %v9940 = vpack.c.bf16 %v9894, %v9892
        %v9941 = vpack.c.bf16 %v9895, %v9893
        %v9942 = vpack.c.bf16 %v9898, %v9896
        %v9943 = vpack.c.bf16 %v9899, %v9897
        %v9944 = vpack.c.bf16 %v9902, %v9900
        %v9945 = vpack.c.bf16 %v9903, %v9901
        %v9946 = vpack.c.bf16 %v9906, %v9904
        %v9947 = vpack.c.bf16 %v9907, %v9905
        %v9948 = vpack.c.bf16 %v9910, %v9908
        %v9949 = vpack.c.bf16 %v9911, %v9909
        %v9950 = vpack.c.bf16 %v9914, %v9912
        %v9951 = vpack.c.bf16 %v9915, %v9913
        %v9952 = vpack.c.bf16 %v9918, %v9916
        %v9953 = vpack.c.bf16 %v9919, %v9917
        %v9954 = vpack.c.bf16 %v9922, %v9920
        %v9955 = vpack.c.bf16 %v9923, %v9921
        %v9956 = vld [vmem:[%s692] sm:$0xff]
        %v9957 = vld [vmem:[%s692 + $0x8] sm:$0xff]
        %v9958 = vld [vmem:[%s692 + $0x10] sm:$0xff]
        %v9959 = vld [vmem:[%s692 + $0x18] sm:$0xff]
        %v9960 = vld [vmem:[%s692 + $0x20] sm:$0xff]
        %v9961 = vld [vmem:[%s692 + $0x28] sm:$0xff]
        %v9962 = vld [vmem:[%s692 + $0x30] sm:$0xff]
        %v9963 = vld [vmem:[%s692 + $0x38] sm:$0xff]
        %v9964 = vld [vmem:[%s692 + $0x40] sm:$0xff]
        %v9965 = vld [vmem:[%s692 + $0x48] sm:$0xff]
        %v9966 = vld [vmem:[%s692 + $0x50] sm:$0xff]
        %v9967 = vld [vmem:[%s692 + $0x58] sm:$0xff]
        %v9968 = vld [vmem:[%s692 + $0x60] sm:$0xff]
        %v9969 = vld [vmem:[%s692 + $0x68] sm:$0xff]
        %v9970 = vld [vmem:[%s692 + $0x70] sm:$0xff]
        %v9971 = vld [vmem:[%s692 + $0x78] sm:$0xff]
        %v9972 = vld [vmem:[%s692 + $0x80] sm:$0xff]
        %v9973 = vld [vmem:[%s692 + $0x88] sm:$0xff]
        %v9974 = vld [vmem:[%s692 + $0x90] sm:$0xff]
        %v9975 = vld [vmem:[%s692 + $0x98] sm:$0xff]
        %v9976 = vld [vmem:[%s692 + $0xa0] sm:$0xff]
        %v9977 = vld [vmem:[%s692 + $0xa8] sm:$0xff]
        %v9978 = vld [vmem:[%s692 + $0xb0] sm:$0xff]
        %v9979 = vld [vmem:[%s692 + $0xb8] sm:$0xff]
        %v9980 = vld [vmem:[%s692 + $0xc0] sm:$0xff]
        %v9981 = vld [vmem:[%s692 + $0xc8] sm:$0xff]
        %v9982 = vld [vmem:[%s692 + $0xd0] sm:$0xff]
        %v9983 = vld [vmem:[%s692 + $0xd8] sm:$0xff]
        %v9984 = vld [vmem:[%s692 + $0xe0] sm:$0xff]
        %v9985 = vld [vmem:[%s692 + $0xe8] sm:$0xff]
        %v9986 = vld [vmem:[%s692 + $0xf0] sm:$0xff]
        %v9987 = vld [vmem:[%s692 + $0xf8] sm:$0xff]
        %v9988 = vld [vmem:[%s818] sm:$0x3]
        %v9990 = vlaneseq
        %v9991 = vshrl.u32 %v9990, 7
        %v9992 = vsub.s32 0, %v9991
        %v9993 = vrot.slane %v9988, %v9992
        %v9994 = vlaneseq
        %v9995 = vshrl.u32 %v9994, 7
        %v9996 = vsub.s32 1, %v9995
        %v9997 = vrot.slane %v9988, %v9996
        %v10032 = vunpack.c.l.b16 %v9956
        %v10033 = vunpack.c.h.b16 %v9956
        %v10034 = vunpack.c.l.b16 %v9957
        %v10035 = vunpack.c.h.b16 %v9957
        %v10036 = vunpack.c.l.b16 %v9958
        %v10037 = vunpack.c.h.b16 %v9958
        %v10038 = vunpack.c.l.b16 %v9959
        %v10039 = vunpack.c.h.b16 %v9959
        %v10040 = vunpack.c.l.b16 %v9960
        %v10041 = vunpack.c.h.b16 %v9960
        %v10042 = vunpack.c.l.b16 %v9961
        %v10043 = vunpack.c.h.b16 %v9961
        %v10044 = vunpack.c.l.b16 %v9962
        %v10045 = vunpack.c.h.b16 %v9962
        %v10046 = vunpack.c.l.b16 %v9963
        %v10047 = vunpack.c.h.b16 %v9963
        %v10048 = vunpack.c.l.b16 %v9964
        %v10049 = vunpack.c.h.b16 %v9964
        %v10050 = vunpack.c.l.b16 %v9965
        %v10051 = vunpack.c.h.b16 %v9965
        %v10052 = vunpack.c.l.b16 %v9966
        %v10053 = vunpack.c.h.b16 %v9966
        %v10054 = vunpack.c.l.b16 %v9967
        %v10055 = vunpack.c.h.b16 %v9967
        %v10056 = vunpack.c.l.b16 %v9968
        %v10057 = vunpack.c.h.b16 %v9968
        %v10058 = vunpack.c.l.b16 %v9969
        %v10059 = vunpack.c.h.b16 %v9969
        %v10060 = vunpack.c.l.b16 %v9970
        %v10061 = vunpack.c.h.b16 %v9970
        %v10062 = vunpack.c.l.b16 %v9971
        %v10063 = vunpack.c.h.b16 %v9971
        %v10064 = vunpack.c.l.b16 %v9972
        %v10065 = vunpack.c.h.b16 %v9972
        %v10066 = vunpack.c.l.b16 %v9973
        %v10067 = vunpack.c.h.b16 %v9973
        %v10068 = vunpack.c.l.b16 %v9974
        %v10069 = vunpack.c.h.b16 %v9974
        %v10070 = vunpack.c.l.b16 %v9975
        %v10071 = vunpack.c.h.b16 %v9975
        %v10072 = vunpack.c.l.b16 %v9976
        %v10073 = vunpack.c.h.b16 %v9976
        %v10074 = vunpack.c.l.b16 %v9977
        %v10075 = vunpack.c.h.b16 %v9977
        %v10076 = vunpack.c.l.b16 %v9978
        %v10077 = vunpack.c.h.b16 %v9978
        %v10078 = vunpack.c.l.b16 %v9979
        %v10079 = vunpack.c.h.b16 %v9979
        %v10080 = vunpack.c.l.b16 %v9980
        %v10081 = vunpack.c.h.b16 %v9980
        %v10082 = vunpack.c.l.b16 %v9981
        %v10083 = vunpack.c.h.b16 %v9981
        %v10084 = vunpack.c.l.b16 %v9982
        %v10085 = vunpack.c.h.b16 %v9982
        %v10086 = vunpack.c.l.b16 %v9983
        %v10087 = vunpack.c.h.b16 %v9983
        %v10088 = vunpack.c.l.b16 %v9984
        %v10089 = vunpack.c.h.b16 %v9984
        %v10090 = vunpack.c.l.b16 %v9985
        %v10091 = vunpack.c.h.b16 %v9985
        %v10092 = vunpack.c.l.b16 %v9986
        %v10093 = vunpack.c.h.b16 %v9986
        %v10094 = vunpack.c.l.b16 %v9987
        %v10095 = vunpack.c.h.b16 %v9987
        %v10096 = vpack.c.b16 %v10034, %v10032
        %v10097 = vpack.c.b16 %v10035, %v10033
        %v10098 = vpack.c.b16 %v10038, %v10036
        %v10099 = vpack.c.b16 %v10039, %v10037
        %v10100 = vpack.c.b16 %v10042, %v10040
        %v10101 = vpack.c.b16 %v10043, %v10041
        %v10102 = vpack.c.b16 %v10046, %v10044
        %v10103 = vpack.c.b16 %v10047, %v10045
        %v10104 = vpack.c.b16 %v10050, %v10048
        %v10105 = vpack.c.b16 %v10051, %v10049
        %v10106 = vpack.c.b16 %v10054, %v10052
        %v10107 = vpack.c.b16 %v10055, %v10053
        %v10108 = vpack.c.b16 %v10058, %v10056
        %v10109 = vpack.c.b16 %v10059, %v10057
        %v10110 = vpack.c.b16 %v10062, %v10060
        %v10111 = vpack.c.b16 %v10063, %v10061
        %v10112 = vpack.c.b16 %v10066, %v10064
        %v10113 = vpack.c.b16 %v10067, %v10065
        %v10114 = vpack.c.b16 %v10070, %v10068
        %v10115 = vpack.c.b16 %v10071, %v10069
        %v10116 = vpack.c.b16 %v10074, %v10072
        %v10117 = vpack.c.b16 %v10075, %v10073
        %v10118 = vpack.c.b16 %v10078, %v10076
        %v10119 = vpack.c.b16 %v10079, %v10077
        %v10120 = vpack.c.b16 %v10082, %v10080
        %v10121 = vpack.c.b16 %v10083, %v10081
        %v10122 = vpack.c.b16 %v10086, %v10084
        %v10123 = vpack.c.b16 %v10087, %v10085
        %v10124 = vpack.c.b16 %v10090, %v10088
        %v10125 = vpack.c.b16 %v10091, %v10089
        %v10126 = vpack.c.b16 %v10094, %v10092
        %v10127 = vpack.c.b16 %v10095, %v10093
        %10160 = vmatprep.subr.bf16.mxu0 %v10097
        %10161 = vmatpush1.bf16.msra.mxu0 %v10096
        %10162 = vmatprep.subr.bf16.mxu0 %v10099
        %10163 = vmatpush1.bf16.msra.mxu0 %v10098
        %10164 = vmatprep.subr.bf16.mxu0 %v10101
        %10165 = vmatpush1.bf16.msra.mxu0 %v10100
        %10166 = vmatprep.subr.bf16.mxu0 %v10103
        %10167 = vmatpush1.bf16.msra.mxu0 %v10102
        %10168 = vmatprep.subr.bf16.mxu0 %v10105
        %10169 = vmatpush1.bf16.msra.mxu0 %v10104
        %10170 = vmatprep.subr.bf16.mxu0 %v10107
        %10171 = vmatpush1.bf16.msra.mxu0 %v10106
        %10172 = vmatprep.subr.bf16.mxu0 %v10109
        %10173 = vmatpush1.bf16.msra.mxu0 %v10108
        %10174 = vmatprep.subr.bf16.mxu0 %v10111
        %10175 = vmatpush1.bf16.msra.mxu0 %v10110
        %10176 = vmatprep.subr.bf16.mxu0 %v10113
        %10177 = vmatpush1.bf16.msra.mxu0 %v10112
        %10178 = vmatprep.subr.bf16.mxu0 %v10115
        %10179 = vmatpush1.bf16.msra.mxu0 %v10114
        %10180 = vmatprep.subr.bf16.mxu0 %v10117
        %10181 = vmatpush1.bf16.msra.mxu0 %v10116
        %10182 = vmatprep.subr.bf16.mxu0 %v10119
        %10183 = vmatpush1.bf16.msra.mxu0 %v10118
        %10184 = vmatprep.subr.bf16.mxu0 %v10121
        %10185 = vmatpush1.bf16.msra.mxu0 %v10120
        %10186 = vmatprep.subr.bf16.mxu0 %v10123
        %10187 = vmatpush1.bf16.msra.mxu0 %v10122
        %10188 = vmatprep.subr.bf16.mxu0 %v10125
        %10189 = vmatpush1.bf16.msra.mxu0 %v10124
        %10190 = vmatprep.subr.bf16.mxu0 %v10127
        %10191 = vmatpush1.bf16.msra.mxu0 %v10126
        %10192 = vmatprep.mubr.bf16.mxu0 %v9925
        %10193 = vmatmul.mubr.bf16.gmra.mrb[0].mxu0 %v9924
        %v10194 = vpop.f32.mrb[0].mxu0
        %v10195 = vadd.f32 %v9993, %v10194
        %v10196 = vpop.f32.mrb[0].mxu0
        %v10197 = vadd.f32 %v9997, %v10196
        %v10198 = vpop.f32.mrb[0].mxu0
        %v10199 = vadd.f32 %v9993, %v10198
        %v10200 = vpop.f32.mrb[0].mxu0
        %v10201 = vadd.f32 %v9997, %v10200
        %10202 = vmatprep.mubr.bf16.mxu0 %v9927
        %10203 = vmatmul.mubr.bf16.gmra.mrb[0].mxu0 %v9926
        %v10204 = vpop.f32.mrb[0].mxu0
        %v10205 = vadd.f32 %v9993, %v10204
        %v10206 = vpop.f32.mrb[0].mxu0
        %v10207 = vadd.f32 %v9997, %v10206
        %v10208 = vpop.f32.mrb[0].mxu0
        %v10209 = vadd.f32 %v9993, %v10208
        %v10210 = vpop.f32.mrb[0].mxu0
        %v10211 = vadd.f32 %v9997, %v10210
        %10212 = vmatprep.mubr.bf16.mxu0 %v9929
        %10213 = vmatmul.mubr.bf16.gmra.mrb[0].mxu0 %v9928
        %v10214 = vpop.f32.mrb[0].mxu0
        %v10215 = vadd.f32 %v9993, %v10214
        %v10216 = vpop.f32.mrb[0].mxu0
        %v10217 = vadd.f32 %v9997, %v10216
        %v10218 = vpop.f32.mrb[0].mxu0
        %v10219 = vadd.f32 %v9993, %v10218
        %v10220 = vpop.f32.mrb[0].mxu0
        %v10221 = vadd.f32 %v9997, %v10220
        %10222 = vmatprep.mubr.bf16.mxu0 %v9931
        %10223 = vmatmul.mubr.bf16.gmra.mrb[0].mxu0 %v9930
        %v10224 = vpop.f32.mrb[0].mxu0
        %v10225 = vadd.f32 %v9993, %v10224
        %v10226 = vpop.f32.mrb[0].mxu0
        %v10227 = vadd.f32 %v9997, %v10226
        %v10228 = vpop.f32.mrb[0].mxu0
        %v10229 = vadd.f32 %v9993, %v10228
        %v10230 = vpop.f32.mrb[0].mxu0
        %v10231 = vadd.f32 %v9997, %v10230
        %10232 = vmatprep.mubr.bf16.mxu0 %v9933
        %10233 = vmatmul.mubr.bf16.gmra.mrb[0].mxu0 %v9932
        %v10234 = vpop.f32.mrb[0].mxu0
        %v10235 = vadd.f32 %v9993, %v10234
        %v10236 = vpop.f32.mrb[0].mxu0
        %v10237 = vadd.f32 %v9997, %v10236
        %v10238 = vpop.f32.mrb[0].mxu0
        %v10239 = vadd.f32 %v9993, %v10238
        %v10240 = vpop.f32.mrb[0].mxu0
        %v10241 = vadd.f32 %v9997, %v10240
        %10242 = vmatprep.mubr.bf16.mxu0 %v9935
        %10243 = vmatmul.mubr.bf16.gmra.mrb[0].mxu0 %v9934
        %v10244 = vpop.f32.mrb[0].mxu0
        %v10245 = vadd.f32 %v9993, %v10244
        %v10246 = vpop.f32.mrb[0].mxu0
        %v10247 = vadd.f32 %v9997, %v10246
        %v10248 = vpop.f32.mrb[0].mxu0
        %v10249 = vadd.f32 %v9993, %v10248
        %v10250 = vpop.f32.mrb[0].mxu0
        %v10251 = vadd.f32 %v9997, %v10250
        %10252 = vmatprep.mubr.bf16.mxu0 %v9937
        %10253 = vmatmul.mubr.bf16.gmra.mrb[0].mxu0 %v9936
        %v10254 = vpop.f32.mrb[0].mxu0
        %v10255 = vadd.f32 %v9993, %v10254
        %v10256 = vpop.f32.mrb[0].mxu0
        %v10257 = vadd.f32 %v9997, %v10256
        %v10258 = vpop.f32.mrb[0].mxu0
        %v10259 = vadd.f32 %v9993, %v10258
        %v10260 = vpop.f32.mrb[0].mxu0
        %v10261 = vadd.f32 %v9997, %v10260
        %10262 = vmatprep.mubr.bf16.mxu0 %v9939
        %10263 = vmatmul.mubr.bf16.gmra.mrb[0].mxu0 %v9938
        %v10264 = vpop.f32.mrb[0].mxu0
        %v10265 = vadd.f32 %v9993, %v10264
        %v10266 = vpop.f32.mrb[0].mxu0
        %v10267 = vadd.f32 %v9997, %v10266
        %v10268 = vpop.f32.mrb[0].mxu0
        %v10269 = vadd.f32 %v9993, %v10268
        %v10270 = vpop.f32.mrb[0].mxu0
        %v10271 = vadd.f32 %v9997, %v10270
        %10272 = vmatprep.mubr.bf16.mxu0 %v9941
        %10273 = vmatmul.mubr.bf16.gmra.mrb[0].mxu0 %v9940
        %v10274 = vpop.f32.mrb[0].mxu0
        %v10275 = vadd.f32 %v9993, %v10274
        %v10276 = vpop.f32.mrb[0].mxu0
        %v10277 = vadd.f32 %v9997, %v10276
        %v10278 = vpop.f32.mrb[0].mxu0
        %v10279 = vadd.f32 %v9993, %v10278
        %v10280 = vpop.f32.mrb[0].mxu0
        %v10281 = vadd.f32 %v9997, %v10280
        %10282 = vmatprep.mubr.bf16.mxu0 %v9943
        %10283 = vmatmul.mubr.bf16.gmra.mrb[0].mxu0 %v9942
        %v10284 = vpop.f32.mrb[0].mxu0
        %v10285 = vadd.f32 %v9993, %v10284
        %v10286 = vpop.f32.mrb[0].mxu0
        %v10287 = vadd.f32 %v9997, %v10286
        %v10288 = vpop.f32.mrb[0].mxu0
        %v10289 = vadd.f32 %v9993, %v10288
        %v10290 = vpop.f32.mrb[0].mxu0
        %v10291 = vadd.f32 %v9997, %v10290
        %10292 = vmatprep.mubr.bf16.mxu0 %v9945
        %10293 = vmatmul.mubr.bf16.gmra.mrb[0].mxu0 %v9944
        %v10294 = vpop.f32.mrb[0].mxu0
        %v10295 = vadd.f32 %v9993, %v10294
        %v10296 = vpop.f32.mrb[0].mxu0
        %v10297 = vadd.f32 %v9997, %v10296
        %v10298 = vpop.f32.mrb[0].mxu0
        %v10299 = vadd.f32 %v9993, %v10298
        %v10300 = vpop.f32.mrb[0].mxu0
        %v10301 = vadd.f32 %v9997, %v10300
        %10302 = vmatprep.mubr.bf16.mxu0 %v9947
        %10303 = vmatmul.mubr.bf16.gmra.mrb[0].mxu0 %v9946
        %v10304 = vpop.f32.mrb[0].mxu0
        %v10305 = vadd.f32 %v9993, %v10304
        %v10306 = vpop.f32.mrb[0].mxu0
        %v10307 = vadd.f32 %v9997, %v10306
        %v10308 = vpop.f32.mrb[0].mxu0
        %v10309 = vadd.f32 %v9993, %v10308
        %v10310 = vpop.f32.mrb[0].mxu0
        %v10311 = vadd.f32 %v9997, %v10310
        %10312 = vmatprep.mubr.bf16.mxu0 %v9949
        %10313 = vmatmul.mubr.bf16.gmra.mrb[0].mxu0 %v9948
        %v10314 = vpop.f32.mrb[0].mxu0
        %v10315 = vadd.f32 %v9993, %v10314
        %v10316 = vpop.f32.mrb[0].mxu0
        %v10317 = vadd.f32 %v9997, %v10316
        %v10318 = vpop.f32.mrb[0].mxu0
        %v10319 = vadd.f32 %v9993, %v10318
        %v10320 = vpop.f32.mrb[0].mxu0
        %v10321 = vadd.f32 %v9997, %v10320
        %10322 = vmatprep.mubr.bf16.mxu0 %v9951
        %10323 = vmatmul.mubr.bf16.gmra.mrb[0].mxu0 %v9950
        %v10324 = vpop.f32.mrb[0].mxu0
        %v10325 = vadd.f32 %v9993, %v10324
        %v10326 = vpop.f32.mrb[0].mxu0
        %v10327 = vadd.f32 %v9997, %v10326
        %v10328 = vpop.f32.mrb[0].mxu0
        %v10329 = vadd.f32 %v9993, %v10328
        %v10330 = vpop.f32.mrb[0].mxu0
        %v10331 = vadd.f32 %v9997, %v10330
        %10332 = vmatprep.mubr.bf16.mxu0 %v9953
        %10333 = vmatmul.mubr.bf16.gmra.mrb[0].mxu0 %v9952
        %v10334 = vpop.f32.mrb[0].mxu0
        %v10335 = vadd.f32 %v9993, %v10334
        %v10336 = vpop.f32.mrb[0].mxu0
        %v10337 = vadd.f32 %v9997, %v10336
        %v10338 = vpop.f32.mrb[0].mxu0
        %v10339 = vadd.f32 %v9993, %v10338
        %v10340 = vpop.f32.mrb[0].mxu0
        %v10341 = vadd.f32 %v9997, %v10340
        %10342 = vmatprep.mubr.bf16.mxu0 %v9955
        %10343 = vmatmul.mubr.bf16.gmra.mrb[0].mxu0 %v9954
        %v10344 = vpop.f32.mrb[0].mxu0
        %v10345 = vadd.f32 %v9993, %v10344
        %v10346 = vpop.f32.mrb[0].mxu0
        %v10347 = vadd.f32 %v9997, %v10346
        %v10348 = vpop.f32.mrb[0].mxu0
        %v10349 = vadd.f32 %v9993, %v10348
        %v10350 = vpop.f32.mrb[0].mxu0
        %v10351 = vadd.f32 %v9997, %v10350
        %10352 = vdwg.mxu0
        %v10353 = vadd.f32 %v8447, %v10195
        %v10354 = vadd.f32 %v8448, %v10197
        %v10355 = vadd.f32 %v8449, %v10199
        %v10356 = vadd.f32 %v8450, %v10201
        %v10357 = vadd.f32 %v8451, %v10205
        %v10358 = vadd.f32 %v8452, %v10207
        %v10359 = vadd.f32 %v8453, %v10209
        %v10360 = vadd.f32 %v8454, %v10211
        %v10361 = vadd.f32 %v8455, %v10215
        %v10362 = vadd.f32 %v8456, %v10217
        %v10363 = vadd.f32 %v8457, %v10219
        %v10364 = vadd.f32 %v8458, %v10221
        %v10365 = vadd.f32 %v8459, %v10225
        %v10366 = vadd.f32 %v8460, %v10227
        %v10367 = vadd.f32 %v8461, %v10229
        %v10368 = vadd.f32 %v8462, %v10231
        %v10369 = vadd.f32 %v8463, %v10235
        %v10370 = vadd.f32 %v8464, %v10237
        %v10371 = vadd.f32 %v8465, %v10239
        %v10372 = vadd.f32 %v8466, %v10241
        %v10373 = vadd.f32 %v8467, %v10245
        %v10374 = vadd.f32 %v8468, %v10247
        %v10375 = vadd.f32 %v8469, %v10249
        %v10376 = vadd.f32 %v8470, %v10251
        %v10377 = vadd.f32 %v8471, %v10255
        %v10378 = vadd.f32 %v8472, %v10257
        %v10379 = vadd.f32 %v8473, %v10259
        %v10380 = vadd.f32 %v8474, %v10261
        %v10381 = vadd.f32 %v8475, %v10265
        %v10382 = vadd.f32 %v8476, %v10267
        %v10383 = vadd.f32 %v8477, %v10269
        %v10384 = vadd.f32 %v8478, %v10271
        %v10385 = vadd.f32 %v8479, %v10275
        %v10386 = vadd.f32 %v8480, %v10277
        %v10387 = vadd.f32 %v8481, %v10279
        %v10388 = vadd.f32 %v8482, %v10281
        %v10389 = vadd.f32 %v8483, %v10285
        %v10390 = vadd.f32 %v8484, %v10287
        %v10391 = vadd.f32 %v8485, %v10289
        %v10392 = vadd.f32 %v8486, %v10291
        %v10393 = vadd.f32 %v8487, %v10295
        %v10394 = vadd.f32 %v8488, %v10297
        %v10395 = vadd.f32 %v8489, %v10299
        %v10396 = vadd.f32 %v8490, %v10301
        %v10397 = vadd.f32 %v8491, %v10305
        %v10398 = vadd.f32 %v8492, %v10307
        %v10399 = vadd.f32 %v8493, %v10309
        %v10400 = vadd.f32 %v8494, %v10311
        %v10401 = vadd.f32 %v8495, %v10315
        %v10402 = vadd.f32 %v8496, %v10317
        %v10403 = vadd.f32 %v8497, %v10319
        %v10404 = vadd.f32 %v8498, %v10321
        %v10405 = vadd.f32 %v8499, %v10325
        %v10406 = vadd.f32 %v8500, %v10327
        %v10407 = vadd.f32 %v8501, %v10329
        %v10408 = vadd.f32 %v8502, %v10331
        %v10409 = vadd.f32 %v8503, %v10335
        %v10410 = vadd.f32 %v8504, %v10337
        %v10411 = vadd.f32 %v8505, %v10339
        %v10412 = vadd.f32 %v8506, %v10341
        %v10413 = vadd.f32 %v8507, %v10345
        %v10414 = vadd.f32 %v8508, %v10347
        %v10415 = vadd.f32 %v8509, %v10349
        %v10416 = vadd.f32 %v8510, %v10351
        %10417 = vst [vmem:[%s789] sm:$0xff] %v10353
        %10418 = vst [vmem:[%s789 + $0x8] sm:$0xff] %v10354
        %10419 = vst [vmem:[%s789 + $0x10] sm:$0xff] %v10355
        %10420 = vst [vmem:[%s789 + $0x18] sm:$0xff] %v10356
        %10421 = vst [vmem:[%s789 + $0x20] sm:$0xff] %v10357
        %10422 = vst [vmem:[%s789 + $0x28] sm:$0xff] %v10358
        %10423 = vst [vmem:[%s789 + $0x30] sm:$0xff] %v10359
        %10424 = vst [vmem:[%s789 + $0x38] sm:$0xff] %v10360
        %10425 = vst [vmem:[%s789 + $0x40] sm:$0xff] %v10361
        %10426 = vst [vmem:[%s789 + $0x48] sm:$0xff] %v10362
        %10427 = vst [vmem:[%s789 + $0x50] sm:$0xff] %v10363
        %10428 = vst [vmem:[%s789 + $0x58] sm:$0xff] %v10364
        %10429 = vst [vmem:[%s789 + $0x60] sm:$0xff] %v10365
        %10430 = vst [vmem:[%s789 + $0x68] sm:$0xff] %v10366
        %10431 = vst [vmem:[%s789 + $0x70] sm:$0xff] %v10367
        %10432 = vst [vmem:[%s789 + $0x78] sm:$0xff] %v10368
        %10433 = vst [vmem:[%s789 + $0x80] sm:$0xff] %v10369
        %10434 = vst [vmem:[%s789 + $0x88] sm:$0xff] %v10370
        %10435 = vst [vmem:[%s789 + $0x90] sm:$0xff] %v10371
        %10436 = vst [vmem:[%s789 + $0x98] sm:$0xff] %v10372
        %10437 = vst [vmem:[%s789 + $0xa0] sm:$0xff] %v10373
        %10438 = vst [vmem:[%s789 + $0xa8] sm:$0xff] %v10374
        %10439 = vst [vmem:[%s789 + $0xb0] sm:$0xff] %v10375
        %10440 = vst [vmem:[%s789 + $0xb8] sm:$0xff] %v10376
        %10441 = vst [vmem:[%s789 + $0xc0] sm:$0xff] %v10377
        %10442 = vst [vmem:[%s789 + $0xc8] sm:$0xff] %v10378
        %10443 = vst [vmem:[%s789 + $0xd0] sm:$0xff] %v10379
        %10444 = vst [vmem:[%s789 + $0xd8] sm:$0xff] %v10380
        %10445 = vst [vmem:[%s789 + $0xe0] sm:$0xff] %v10381
        %10446 = vst [vmem:[%s789 + $0xe8] sm:$0xff] %v10382
        %10447 = vst [vmem:[%s789 + $0xf0] sm:$0xff] %v10383
        %10448 = vst [vmem:[%s789 + $0xf8] sm:$0xff] %v10384
        %10449 = vst [vmem:[%s789 + $0x100] sm:$0xff] %v10385
        %10450 = vst [vmem:[%s789 + $0x108] sm:$0xff] %v10386
        %10451 = vst [vmem:[%s789 + $0x110] sm:$0xff] %v10387
        %10452 = vst [vmem:[%s789 + $0x118] sm:$0xff] %v10388
        %10453 = vst [vmem:[%s789 + $0x120] sm:$0xff] %v10389
        %10454 = vst [vmem:[%s789 + $0x128] sm:$0xff] %v10390
        %10455 = vst [vmem:[%s789 + $0x130] sm:$0xff] %v10391
        %10456 = vst [vmem:[%s789 + $0x138] sm:$0xff] %v10392
        %10457 = vst [vmem:[%s789 + $0x140] sm:$0xff] %v10393
        %10458 = vst [vmem:[%s789 + $0x148] sm:$0xff] %v10394
        %10459 = vst [vmem:[%s789 + $0x150] sm:$0xff] %v10395
        %10460 = vst [vmem:[%s789 + $0x158] sm:$0xff] %v10396
        %10461 = vst [vmem:[%s789 + $0x160] sm:$0xff] %v10397
        %10462 = vst [vmem:[%s789 + $0x168] sm:$0xff] %v10398
        %10463 = vst [vmem:[%s789 + $0x170] sm:$0xff] %v10399
        %10464 = vst [vmem:[%s789 + $0x178] sm:$0xff] %v10400
        %10465 = vst [vmem:[%s789 + $0x180] sm:$0xff] %v10401
        %10466 = vst [vmem:[%s789 + $0x188] sm:$0xff] %v10402
        %10467 = vst [vmem:[%s789 + $0x190] sm:$0xff] %v10403
        %10468 = vst [vmem:[%s789 + $0x198] sm:$0xff] %v10404
        %10469 = vst [vmem:[%s789 + $0x1a0] sm:$0xff] %v10405
        %10470 = vst [vmem:[%s789 + $0x1a8] sm:$0xff] %v10406
        %10471 = vst [vmem:[%s789 + $0x1b0] sm:$0xff] %v10407
        %10472 = vst [vmem:[%s789 + $0x1b8] sm:$0xff] %v10408
        %10473 = vst [vmem:[%s789 + $0x1c0] sm:$0xff] %v10409
        %10474 = vst [vmem:[%s789 + $0x1c8] sm:$0xff] %v10410
        %10475 = vst [vmem:[%s789 + $0x1d0] sm:$0xff] %v10411
        %10476 = vst [vmem:[%s789 + $0x1d8] sm:$0xff] %v10412
        %10477 = vst [vmem:[%s789 + $0x1e0] sm:$0xff] %v10413
        %10478 = vst [vmem:[%s789 + $0x1e8] sm:$0xff] %v10414
        %10479 = vst [vmem:[%s789 + $0x1f0] sm:$0xff] %v10415
        %10480 = vst [vmem:[%s789 + $0x1f8] sm:$0xff] %v10416
        %s10481 = sand.u32 %s411, 1
        %s10482 = scalar_lea.sflag [#allocation4], %s10481
        %s10483 = sand.u32 %s411, 1
        %s10484 = smul.addr %s10483, 512
        %s10485 = scalar_lea.vmem [#allocation12], %s10484
        // Predicated region
        $region109: #{tpu_custom_call.1} parent=75 // pred_check
          %p10486 = pneg %p421
        $region110: #{tpu_custom_call.1} parent=75 // pred_check_branch
          %10488 = sbr.rel (%p10486) target = $region112
        $region111: #{tpu_custom_call.1} parent=75 // pred_region
          %s10489 = smul.u32 16, %s36
          %s10491 = ssub.s32 8192, 8192
          %10492 = vsyncadd %s10482, %s10491
          %s10493 = smul.addr %s10489, 4
          %s10494 = smul.addr %s10493, 128
          %s10495 = scalar_lea.hbm %s14, %s10494
          %s10496 = sshll.u32 %s10485, 4
          %s10497 = int_to_ptr.vmem [resolvable:$true] %s10496
          %10502 = dma.vmem_to_hbm [thread:$0]  %s10497, 8192, %s10495, %s10482, 256, 256, 16
        $region112: #{tpu_custom_call.1} parent=75 // pred_fallthru
          _
      $region76: #{tpu_custom_call.1} parent=5 // pred_fallthru
        _
      %p10503 = scmp.le.s32.totalorder 2, %s27
      // Predicated region
      $region113: #{tpu_custom_call.1} parent=5 // pred_check
        %p10504 = pneg %p10503
      $region114: #{tpu_custom_call.1} parent=5 // pred_check_branch
        %10506 = sbr.rel (%p10504) target = $region116
      $region115: #{tpu_custom_call.1} parent=5 // pred_region
        %s10507 = ssub.s32 %s27, 2
        // Predicated region
        $region117: #{tpu_custom_call.1} parent=115 // pred_check
          %p10508 = pneg %p427
        $region118: #{tpu_custom_call.1} parent=115 // pred_check_branch
          %10510 = sbr.rel (%p10508) target = $region120
        $region119: #{tpu_custom_call.1} parent=115 // pred_region
          %s10511 = sand.u32 %s412, 1
          %s10512 = scalar_lea.sflag [#allocation4], %s10511
          %s10513 = sand.u32 %s412, 1
          %s10514 = smul.addr %s10513, 512
          %s10515 = scalar_lea.vmem [#allocation12], %s10514
          %10516 = dma.done %s10512, 8192
        $region120: #{tpu_custom_call.1} parent=115 // pred_fallthru
          _
      $region116: #{tpu_custom_call.1} parent=5 // pred_fallthru
        _
    $region6: #{tpu_custom_call.1} parent=1 // loop_footer
      %s31 = sadd.s32 1, %s27
    $region7: #{tpu_custom_call.1} parent=1 // loop_footer_branch
      %26 = sbr.rel target = $region3
    $region8: #{tpu_custom_call.1} parent=1 // loop_exit
      _
    %10517 = vsyncpa [#allocation3], 1
    %s10518 = scalar_lea.sflag [#allocation3], 1
    %10519 = vsyncpa %s10518, 1
    %10520 = vsyncpa [#allocation6], 1
    %10521 = vsyncpa [#allocation4], 1
    %s10522 = scalar_lea.sflag [#allocation4], 1
    %10523 = vsyncpa %s10522, 1

</llo_original>
